<compile_context>
chip_gen: v7x
topology: tpu7x:2x2x1
jax: 0.10.0
libtpu: 0.0.40
codegen_flags: <defaults>
</compile_context>

<pallas_src>
import jax
import jax.numpy as jnp
from jax.experimental import pallas as pl
from jax.experimental.pallas import tpu as pltpu


def _round_up(x, m):
    return ((x + m - 1) // m) * m


def _texel_kernel(range_ref, pix_ref, bary_ref, face_ref, out_ref, acc_ref):
    # range_ref: SMEM (num_pixel_tiles, 2) int32  per-tile [min_face, max_face]
    # pix_ref  : (TP, 1)        int32   pix_to_face indices (-1 == background)
    # bary_ref : (TP, 3)        float32 barycentric coords
    # face_ref : (3, TF, CP)    float32 vertex-major, lane-padded face chunk
    # out_ref  : (TP, C)        float32 interpolated texels
    # acc_ref  : (TP, CP)       float32 VMEM accumulator (lane-dense)
    i = pl.program_id(0)
    kf = pl.program_id(1)

    tp = pix_ref.shape[0]
    tf = face_ref.shape[1]                      # faces in this chunk (static)
    chunk_lo = kf * tf                          # int32; 3*F << 2^31 so no overflow

    @pl.when(kf == 0)
    def _init():
        acc_ref[...] = jnp.zeros_like(acc_ref)

    # Skip face chunks that cannot contain any face referenced by this pixel
    # tile (background-only tiles have min > max and skip every chunk).
    tile_min = range_ref[i, 0]
    tile_max = range_ref[i, 1]
    overlap = jnp.logical_and(tile_max >= chunk_lo, tile_min < chunk_lo + tf)

    @pl.when(overlap)
    def _compute():
        idx = pix_ref[...]                      # (TP, 1) int32
        bary = bary_ref[...]                    # (TP, 3) f32
        local = idx - chunk_lo                  # (TP, 1); bg / out-of-chunk -> no match
        col = jax.lax.broadcasted_iota(jnp.int32, (tp, tf), 1)
        onehot = (col == local).astype(jnp.float32)   # (TP, TF) one-hot face match

        acc = acc_ref[...]
        for v in range(3):                      # static unroll over vertices
            pv = jnp.dot(onehot, face_ref[v],
                         preferred_element_type=jnp.float32)   # (TP, CP)
            acc = acc + bary[:, v:v + 1] * pv
        acc_ref[...] = acc

    @pl.when(kf == pl.num_programs(1) - 1)
    def _finalize():
        out_ref[...] = acc_ref[:, :out_ref.shape[1]]


def sample_textures_pallas(pix_to_face, bary_coords, face_feats,
                           *, tile_p=512, tile_f=512):
    """pix_to_face: (N,H,W,K) int32; bary_coords: (N,H,W,K,3) f32;
    face_feats: (F,3,C) f32  ->  texels (N,H,W,K,C) f32."""
    n, h, w, k = pix_to_face.shape
    f, three, c = face_feats.shape
    assert three == 3

    p = n * h * w * k
    c_pad = _round_up(c, 128)                   # lane-dense channels

    # Clamp/align tiles: sublane constraint needs multiples of 8.
    tile_f = _round_up(min(tile_f, _round_up(f, 8)), 8)
    f_pad = _round_up(f, tile_f)
    tile_p = _round_up(min(tile_p, _round_up(p, 8)), 8)
    p_pad = _round_up(p, tile_p)

    # Flattened pixel inputs; padded pixels are background (-1).
    pix_flat = pix_to_face.reshape(p, 1).astype(jnp.int32)
    bary_flat = bary_coords.reshape(p, 3).astype(jnp.float32)
    if p_pad != p:
        pix_flat = jnp.pad(pix_flat, ((0, p_pad - p), (0, 0)), constant_values=-1)
        bary_flat = jnp.pad(bary_flat, ((0, p_pad - p), (0, 0)))

    # Vertex-major, lane-padded face table: (3, F_pad, C_pad).  Padded faces /
    # channels are zero and never match a valid pix_to_face index.
    face_vm = jnp.transpose(face_feats.astype(jnp.float32), (1, 0, 2))
    face_vm = jnp.pad(face_vm, ((0, 0), (0, f_pad - f), (0, c_pad - c)))

    num_p_tiles = p_pad // tile_p
    num_f_tiles = f_pad // tile_f

    # Per-pixel-tile face range for chunk skipping (scalar prefetch -> SMEM).
    pix_tiles = pix_flat.reshape(num_p_tiles, tile_p)
    valid = pix_tiles >= 0
    tile_min = jnp.min(jnp.where(valid, pix_tiles, jnp.int32(2**31 - 1)), axis=1)
    tile_max = jnp.max(jnp.where(valid, pix_tiles, jnp.int32(-1)), axis=1)
    tile_range = jnp.stack([tile_min, tile_max], axis=1).astype(jnp.int32)

    flops = int(2 * p_pad * 3 * f_pad * c_pad)                 # worst case (no skipping)
    bytes_accessed = int(pix_flat.size * 4 + bary_flat.size * 4
                         + face_vm.size * 4 * num_p_tiles + p_pad * c * 4)

    out = pl.pallas_call(
        _texel_kernel,
        out_shape=jax.ShapeDtypeStruct((p_pad, c), jnp.float32),
        grid_spec=pltpu.PrefetchScalarGridSpec(
            num_scalar_prefetch=1,
            grid=(num_p_tiles, num_f_tiles),
            in_specs=[
                pl.BlockSpec((tile_p, 1), lambda i, kf, rng: (i, 0)),
                pl.BlockSpec((tile_p, 3), lambda i, kf, rng: (i, 0)),
                pl.BlockSpec((3, tile_f, c_pad), lambda i, kf, rng: (0, kf, 0)),
            ],
            out_specs=pl.BlockSpec((tile_p, c), lambda i, kf, rng: (i, 0)),
            scratch_shapes=[pltpu.VMEM((tile_p, c_pad), jnp.float32)],
        ),
        compiler_params=pltpu.CompilerParams(
            # pixel axis shards across TensorCores; face-chunk reduction axis is
            # last and "arbitrary" so the accumulator/output stays resident.
            dimension_semantics=("parallel", "arbitrary"),
            vmem_limit_bytes=32 * 1024 * 1024),
        cost_estimate=pl.CostEstimate(flops=flops, transcendentals=0,
                                      bytes_accessed=bytes_accessed),
    )(tile_range, pix_flat, bary_flat, face_vm)

    return out[:p].reshape(n, h, w, k, c)


def _reference(pix_to_face, bary_coords, face_feats):
    # pure-JAX reference of interpolate_face_attributes semantics
    mask = pix_to_face >= 0
    safe_idx = jnp.where(mask, pix_to_face, 0)
    gathered = jnp.take(face_feats, safe_idx, axis=0)             # (N,H,W,K,3,C)
    texels = jnp.sum(bary_coords[..., None] * gathered, axis=-2)  # (N,H,W,K,C)
    return jnp.where(mask[..., None], texels, 0.0)


if __name__ == "__main__":
    key = jax.random.PRNGKey(0)
    k1, k2, k3, k4 = jax.random.split(key, 4)

    # Small synthetic "fragments" / "meshes" consistent with the forward.
    N, H, W, K = 2, 32, 32, 2       # P = 4096 -> 8 pixel tiles at tile_p=512
    F, C = 800, 3                   # 800 faces -> 2 face chunks at tile_f=512

    # fragments.pix_to_face: -1 marks background pixels.
    pix_to_face = jax.random.randint(k1, (N, H, W, K), minval=-1, maxval=F,
                                     dtype=jnp.int32)
    # fragments.bary_coords: positive, rows sum to 1.
    raw = jax.random.uniform(k2, (N, H, W, K, 3), dtype=jnp.float32) + 1e-3
    bary_coords = raw / jnp.sum(raw, axis=-1, keepdims=True)
    # meshes' per-face vertex texture features (deterministic init).
    face_feats = jax.random.uniform(k3, (F, 3, C), dtype=jnp.float32)

    texels = sample_textures_pallas(pix_to_face, bary_coords, face_feats)
    texels = jax.block_until_ready(texels)

    ref = _reference(pix_to_face, bary_coords, face_feats)
    assert texels.shape == (N, H, W, K, C)
    assert jnp.allclose(texels, ref, atol=1e-5, rtol=1e-5)

    # Second check: faces localized to [600, 800) so chunk 0 is skipped for
    # every pixel tile (exercises the scalar-prefetch chunk-skip path).
    pix_local = jax.random.randint(k4, (N, H, W, K), minval=600, maxval=F,
                                   dtype=jnp.int32)
    pix_local = jnp.where(pix_to_face < 0, -1, pix_local)   # keep some background
    texels2 = jax.block_until_ready(
        sample_textures_pallas(pix_local, bary_coords, face_feats))
    ref2 = _reference(pix_local, bary_coords, face_feats)
    assert jnp.allclose(texels2, ref2, atol=1e-5, rtol=1e-5)

    print("KERNEL_OK")
</pallas_src>

<mosaic_0001>
module attributes {stable_mosaic.version = 11 : i64} {
  func.func @_texel_kernel(%arg0: i32, %arg1: i32, %arg2: memref<8x2xi32, #tpu.memory_space<smem>>, %arg3: memref<512x1xi32, #tpu.memory_space<vmem>>, %arg4: memref<512x3xf32, #tpu.memory_space<vmem>>, %arg5: memref<3x512x128xf32, #tpu.memory_space<vmem>>, %arg6: memref<512x3xf32, #tpu.memory_space<vmem>>, %arg7: memref<512x128xf32, #tpu.memory_space<vmem>>) attributes {dimension_semantics = [#tpu.dimension_semantics<parallel>, #tpu.dimension_semantics<arbitrary>], iteration_bounds = array<i64: 8, 2>, scalar_prefetch = 1 : i64, scratch_operands = 1 : i64, tpu.core_type = #tpu.core_type<tc>, window_params = [{transform_indices = @transform_0, window_bounds = array<i64: 512, 1>}, {transform_indices = @transform_1, window_bounds = array<i64: 512, 3>}, {transform_indices = @transform_2, window_bounds = array<i64: 3, 512, 128>}, {transform_indices = @transform_3, window_bounds = array<i64: 512, 3>}]} {
    %c512_i32 = arith.constant 512 : i32
    %0 = arith.muli %arg1, %c512_i32 : i32
    %c0_i32 = arith.constant 0 : i32
    %1 = arith.cmpi eq, %arg1, %c0_i32 : i32
    %2 = arith.extui %1 : i1 to i32
    %c0_i32_0 = arith.constant 0 : i32
    %3 = arith.cmpi ne, %2, %c0_i32_0 : i32
    scf.if %3 {
      %cst = arith.constant 0.000000e+00 : f32
      %17 = vector.broadcast %cst : f32 to vector<512x128xf32>
      %c0_4 = arith.constant 0 : index
      %c0_5 = arith.constant 0 : index
      %18 = vector.load %arg7[%c0_4, %c0_5] : memref<512x128xf32, #tpu.memory_space<vmem>>, vector<512x128xf32>
      tpu.vector_store %arg7[%c0_4, %c0_5], %17 {strides = array<i32>} : memref<512x128xf32, #tpu.memory_space<vmem>>, vector<512x128xf32>,
    } else {
    }
    %4 = arith.index_cast %arg0 : i32 to index
    %c0 = arith.constant 0 : index
    %5 = memref.load %arg2[%4, %c0] : memref<8x2xi32, #tpu.memory_space<smem>>
    %6 = arith.index_cast %arg0 : i32 to index
    %c1 = arith.constant 1 : index
    %7 = memref.load %arg2[%6, %c1] : memref<8x2xi32, #tpu.memory_space<smem>>
    %8 = arith.cmpi sge, %7, %0 : i32
    %c512_i32_1 = arith.constant 512 : i32
    %9 = arith.addi %0, %c512_i32_1 : i32
    %10 = arith.cmpi slt, %5, %9 : i32
    %11 = arith.andi %8, %10 : i1
    %12 = arith.extui %11 : i1 to i32
    %c0_i32_2 = arith.constant 0 : i32
    %13 = arith.cmpi ne, %12, %c0_i32_2 : i32
    scf.if %13 {
      %c0_4 = arith.constant 0 : index
      %c0_5 = arith.constant 0 : index
      %17 = vector.load %arg3[%c0_4, %c0_5] : memref<512x1xi32, #tpu.memory_space<vmem>>, vector<512x1xi32>
      %c0_6 = arith.constant 0 : index
      %c0_7 = arith.constant 0 : index
      %18 = vector.load %arg4[%c0_6, %c0_7] : memref<512x3xf32, #tpu.memory_space<vmem>>, vector<512x3xf32>
      %19 = vector.broadcast %0 : i32 to vector<512x1xi32>
      %20 = arith.subi %17, %19 : vector<512x1xi32>
      %21 = tpu.iota {dimensions = array<i32: 1>} : vector<512x512xi32>
      %22 = vector.broadcast %20 : vector<512x1xi32> to vector<512x512xi32>
      %23 = arith.cmpi eq, %21, %22 : vector<512x512xi32>
      %24 = arith.extui %23 : vector<512x512xi1> to vector<512x512xi32>
      %25 = arith.sitofp %24 : vector<512x512xi32> to vector<512x512xf32>
      %c0_8 = arith.constant 0 : index
      %c0_9 = arith.constant 0 : index
      %26 = vector.load %arg7[%c0_8, %c0_9] : memref<512x128xf32, #tpu.memory_space<vmem>>, vector<512x128xf32>
      %c0_10 = arith.constant 0 : index
      %c0_11 = arith.constant 0 : index
      %c0_12 = arith.constant 0 : index
      %27 = vector.load %arg5[%c0_10, %c0_11, %c0_12] : memref<3x512x128xf32, #tpu.memory_space<vmem>>, vector<1x512x128xf32>
      %28 = vector.shape_cast %27 : vector<1x512x128xf32> to vector<512x128xf32>
      %cst = arith.constant dense<0.000000e+00> : vector<512x128xf32>
      %29 = tpu.matmul %25, %28, %cst {dimension_numbers = #tpu.dot_dimension_numbers<[1], [0], [0], [1], [0, 0, 1, 1], [], []>} : vector<512x512xf32>, vector<512x128xf32>, vector<512x128xf32> -> vector<512x128xf32>
      %30 = vector.extract_strided_slice %18 {offsets = [0, 0], sizes = [512, 1], strides = [1, 1]} : vector<512x3xf32> to vector<512x1xf32>
      %31 = vector.broadcast %30 : vector<512x1xf32> to vector<512x128xf32>
      %32 = arith.mulf %31, %29 : vector<512x128xf32>
      %33 = arith.addf %26, %32 : vector<512x128xf32>
      %c1_13 = arith.constant 1 : index
      %c0_14 = arith.constant 0 : index
      %c0_15 = arith.constant 0 : index
      %34 = vector.load %arg5[%c1_13, %c0_14, %c0_15] : memref<3x512x128xf32, #tpu.memory_space<vmem>>, vector<1x512x128xf32>
      %35 = vector.shape_cast %34 : vector<1x512x128xf32> to vector<512x128xf32>
      %cst_16 = arith.constant dense<0.000000e+00> : vector<512x128xf32>
      %36 = tpu.matmul %25, %35, %cst_16 {dimension_numbers = #tpu.dot_dimension_numbers<[1], [0], [0], [1], [0, 0, 1, 1], [], []>} : vector<512x512xf32>, vector<512x128xf32>, vector<512x128xf32> -> vector<512x128xf32>
      %37 = vector.extract_strided_slice %18 {offsets = [0, 1], sizes = [512, 1], strides = [1, 1]} : vector<512x3xf32> to vector<512x1xf32>
      %38 = vector.broadcast %37 : vector<512x1xf32> to vector<512x128xf32>
      %39 = arith.mulf %38, %36 : vector<512x128xf32>
      %40 = arith.addf %33, %39 : vector<512x128xf32>
      %c2 = arith.constant 2 : index
      %c0_17 = arith.constant 0 : index
      %c0_18 = arith.constant 0 : index
      %41 = vector.load %arg5[%c2, %c0_17, %c0_18] : memref<3x512x128xf32, #tpu.memory_space<vmem>>, vector<1x512x128xf32>
      %42 = vector.shape_cast %41 : vector<1x512x128xf32> to vector<512x128xf32>
      %cst_19 = arith.constant dense<0.000000e+00> : vector<512x128xf32>
      %43 = tpu.matmul %25, %42, %cst_19 {dimension_numbers = #tpu.dot_dimension_numbers<[1], [0], [0], [1], [0, 0, 1, 1], [], []>} : vector<512x512xf32>, vector<512x128xf32>, vector<512x128xf32> -> vector<512x128xf32>
      %44 = vector.extract_strided_slice %18 {offsets = [0, 2], sizes = [512, 1], strides = [1, 1]} : vector<512x3xf32> to vector<512x1xf32>
      %45 = vector.broadcast %44 : vector<512x1xf32> to vector<512x128xf32>
      %46 = arith.mulf %45, %43 : vector<512x128xf32>
      %47 = arith.addf %40, %46 : vector<512x128xf32>
      %c0_20 = arith.constant 0 : index
      %c0_21 = arith.constant 0 : index
      %48 = vector.load %arg7[%c0_20, %c0_21] : memref<512x128xf32, #tpu.memory_space<vmem>>, vector<512x128xf32>
      tpu.vector_store %arg7[%c0_20, %c0_21], %47 {strides = array<i32>} : memref<512x128xf32, #tpu.memory_space<vmem>>, vector<512x128xf32>,
    } else {
    }
    %c1_i32 = arith.constant 1 : i32
    %14 = arith.cmpi eq, %arg1, %c1_i32 : i32
    %15 = arith.extui %14 : i1 to i32
    %c0_i32_3 = arith.constant 0 : i32
    %16 = arith.cmpi ne, %15, %c0_i32_3 : i32
    scf.if %16 {
      %c0_4 = arith.constant 0 : index
      %c0_5 = arith.constant 0 : index
      %17 = vector.load %arg7[%c0_4, %c0_5] : memref<512x128xf32, #tpu.memory_space<vmem>>, vector<512x3xf32>
      %c0_6 = arith.constant 0 : index
      %c0_7 = arith.constant 0 : index
      %18 = vector.load %arg6[%c0_6, %c0_7] : memref<512x3xf32, #tpu.memory_space<vmem>>, vector<512x3xf32>
      tpu.vector_store %arg6[%c0_6, %c0_7], %17 {strides = array<i32>} : memref<512x3xf32, #tpu.memory_space<vmem>>, vector<512x3xf32>,
    } else {
    }
    return
  }
  func.func @transform_0(%arg0: i32, %arg1: i32, %arg2: memref<8x2xi32, #tpu.memory_space<smem>>) -> (i32, i32) {
    %c0_i32 = arith.constant 0 : i32
    %c0_i32_0 = arith.constant 0 : i32
    return %arg0, %c0_i32 : i32, i32
  }
  func.func @transform_1(%arg0: i32, %arg1: i32, %arg2: memref<8x2xi32, #tpu.memory_space<smem>>) -> (i32, i32) {
    %c0_i32 = arith.constant 0 : i32
    %c0_i32_0 = arith.constant 0 : i32
    return %arg0, %c0_i32 : i32, i32
  }
  func.func @transform_2(%arg0: i32, %arg1: i32, %arg2: memref<8x2xi32, #tpu.memory_space<smem>>) -> (i32, i32, i32) {
    %c0_i32 = arith.constant 0 : i32
    %c0_i32_0 = arith.constant 0 : i32
    %c0_i32_1 = arith.constant 0 : i32
    return %c0_i32, %arg1, %c0_i32_0 : i32, i32, i32
  }
  func.func @transform_3(%arg0: i32, %arg1: i32, %arg2: memref<8x2xi32, #tpu.memory_space<smem>>) -> (i32, i32) {
    %c0_i32 = arith.constant 0 : i32
    %c0_i32_0 = arith.constant 0 : i32
    return %arg0, %c0_i32 : i32, i32
  }
}

</mosaic_0001>

<llo_original>
// kernel: tpu_custom_call.1
$region0: #{tpu_custom_call.1}
  #allocation0 [shape = 'u32[]', space=smem, size = 0x4, offset = 0x4, fixed_abs, tag = 'smem constant byte address 0x4 - core index']
  #allocation1 [shape = 'u32[144,128]{1,0:T(1,128)}', space=vmem, size = 0x12000, scoped, tag = 'internal scratch']
  #allocation2 [shape = 'f32[512,128]{1,0:T(8,128)}', space=vmem, size = 0x40000, scoped, tag = 'scratch operand']
  #allocation3 [shape = 's32[1]{0}', space=sflag, size = 0x4, scoped, tag = 'scoped memory for tpu_custom_call.1']
  #allocation4 [shape = 'u8[4096]{0}', space=smem, size = 0x1000, scoped, tag = 'prefetched SMEM operand 0']
  %s0 = inlined_call_operand.vmem [shape: s32[8,2], index: 0, kind: input, shape index: {}]
  %s1 = inlined_call_operand.vmem [shape: s32[4096,1], index: 1, kind: input, shape index: {}]
  %s2 = inlined_call_operand.vmem [shape: f32[4096,3], index: 2, kind: input, shape index: {}]
  %s3 = inlined_call_operand.vmem [shape: f32[3,1024,128], index: 3, kind: input, shape index: {}]
  %s4 = inlined_call_operand.vmem [shape: f32[4096,3], index: 4, kind: output, shape index: {}]
  %s5 = sld [smem:[#allocation0]]
  $region95: #{tpu_custom_call.1} parent=0
    _
  %s7 = ssub.s32 1, %s5
  %s8 = scalar_select 0, %s7, %s5
  %s9 = sshll.u32 %s0, 4
  %s10 = int_to_ptr.vmem [resolvable:$true] %s9
  %12 = dma.vmem_to_smem %s10, 128, [#allocation4], [#allocation3]
  %13 = dma.done [#allocation3], 128
  %14 = sfence
  $region1: #{tpu_custom_call.1} parent=0
    #allocation5 [shape = 'u8[1572864]{0}', space=vmem, size = 0x180000, scoped, tag = 'input window, operand 3']
    loop: start=0, step=1, limit=18
    $region2: #{tpu_custom_call.1} parent=1 // loop_pre_header
      _
    $region3: #{tpu_custom_call.1} parent=1 // loop_header
      %s16 = sphi 0, %s20
      %p17 = scmp.ge.s32.totalorder %s16, 18
      %s23 = sphi 0, %s35
      %s24 = sphi 0, %s31
      %s25 = sphi 0, %s23
      %s26 = sphi 0, %s24
      %s27 = sphi 0, %s25
      %s28 = sphi 0, %s26
      %s38 = sphi 0, %s40
      %s41 = sphi 0, %s38
      %s42 = sphi 0, %s41
      %s58 = sphi 0, %s42
      %s64 = sphi 0, %s66
      %s67 = sphi 0, %s64
      %s68 = sphi 0, %s67
      %s84 = sphi 0, %s68
      %s90 = sphi 0, %s92
      %s93 = sphi 0, %s90
      %s94 = sphi 0, %s93
      %s110 = sphi 0, %s94
      %s116 = sphi 0, %s118
      %s119 = sphi 0, %s116
      %s120 = sphi 0, %s119
      %s136 = sphi 0, %s120
    $region4: #{tpu_custom_call.1} parent=1 // loop_header_branch
      %19 = sbr.rel (%p17) target = $region8
    $region5: #{tpu_custom_call.1} parent=1 // loop_body
      %s21 = ssub.s32 %s16, 1
      %s22 = ssub.s32 %s16, 2
      %s29 = sadd.s32 1, %s24
      %p30 = scmp.ge.s32.totalorder %s29, 2
      %s31 = scalar_select %p30, 0, %s29
      %s32 = sadd.s32 1, %s23
      %s33 = scalar_select %p30, %s32, %s23
      %p34 = scmp.ge.s32.totalorder %s33, 8
      %s35 = scalar_select %p34, 0, %s33
      %s36 = ssub.s32 %s23, %s35
      %p37 = scmp.eq.s32.totalorder %s36, 0
      %s39 = sadd.s32 %s38, 1
      %s40 = scalar_select %p37, %s38, %s39
      %p43 = pneg %p37
      %p44 = scmp.eq.s32.totalorder %s16, 15
      %p45 = por %p43, %p44
      %p46 = scmp.ne.s32.totalorder %s38, %s41
      %p47 = scmp.eq.s32.totalorder %s16, 0
      %p48 = por %p46, %p47
      %p49 = scmp.ne.s32.totalorder %s38, %s41
      %p50 = scmp.eq.s32.totalorder %s21, 15
      %p51 = por %p49, %p50
      %p52 = scmp.ne.s32.totalorder %s41, %s42
      %p53 = scmp.eq.s32.totalorder %s21, 0
      %p54 = por %p52, %p53
      %p55 = scmp.ne.s32.totalorder %s41, %s42
      %p56 = scmp.eq.s32.totalorder %s22, 15
      %p57 = por %p55, %p56
      %p59 = scmp.ne.s32.totalorder %s42, %s58
      %p60 = scmp.eq.s32.totalorder %s22, 0
      %p61 = por %p59, %p60
      %s62 = ssub.s32 %s23, %s35
      %p63 = scmp.eq.s32.totalorder %s62, 0
      %s65 = sadd.s32 %s64, 1
      %s66 = scalar_select %p63, %s64, %s65
      %p69 = pneg %p63
      %p70 = scmp.eq.s32.totalorder %s16, 15
      %p71 = por %p69, %p70
      %p72 = scmp.ne.s32.totalorder %s64, %s67
      %p73 = scmp.eq.s32.totalorder %s16, 0
      %p74 = por %p72, %p73
      %p75 = scmp.ne.s32.totalorder %s64, %s67
      %p76 = scmp.eq.s32.totalorder %s21, 15
      %p77 = por %p75, %p76
      %p78 = scmp.ne.s32.totalorder %s67, %s68
      %p79 = scmp.eq.s32.totalorder %s21, 0
      %p80 = por %p78, %p79
      %p81 = scmp.ne.s32.totalorder %s67, %s68
      %p82 = scmp.eq.s32.totalorder %s22, 15
      %p83 = por %p81, %p82
      %p85 = scmp.ne.s32.totalorder %s68, %s84
      %p86 = scmp.eq.s32.totalorder %s22, 0
      %p87 = por %p85, %p86
      %s88 = ssub.s32 %s24, %s31
      %p89 = scmp.eq.s32.totalorder %s88, 0
      %s91 = sadd.s32 %s90, 1
      %s92 = scalar_select %p89, %s90, %s91
      %p95 = pneg %p89
      %p96 = scmp.eq.s32.totalorder %s16, 15
      %p97 = por %p95, %p96
      %p98 = scmp.ne.s32.totalorder %s90, %s93
      %p99 = scmp.eq.s32.totalorder %s16, 0
      %p100 = por %p98, %p99
      %p101 = scmp.ne.s32.totalorder %s90, %s93
      %p102 = scmp.eq.s32.totalorder %s21, 15
      %p103 = por %p101, %p102
      %p104 = scmp.ne.s32.totalorder %s93, %s94
      %p105 = scmp.eq.s32.totalorder %s21, 0
      %p106 = por %p104, %p105
      %p107 = scmp.ne.s32.totalorder %s93, %s94
      %p108 = scmp.eq.s32.totalorder %s22, 15
      %p109 = por %p107, %p108
      %p111 = scmp.ne.s32.totalorder %s94, %s110
      %p112 = scmp.eq.s32.totalorder %s22, 0
      %p113 = por %p111, %p112
      %s114 = ssub.s32 %s23, %s35
      %p115 = scmp.eq.s32.totalorder %s114, 0
      %s117 = sadd.s32 %s116, 1
      %s118 = scalar_select %p115, %s116, %s117
      %p121 = pneg %p115
      %p122 = scmp.eq.s32.totalorder %s16, 15
      %p123 = por %p121, %p122
      %p124 = scmp.ne.s32.totalorder %s116, %s119
      %p125 = scmp.eq.s32.totalorder %s16, 0
      %p126 = por %p124, %p125
      %p127 = scmp.ne.s32.totalorder %s116, %s119
      %p128 = scmp.eq.s32.totalorder %s21, 15
      %p129 = por %p127, %p128
      %p130 = scmp.ne.s32.totalorder %s119, %s120
      %p131 = scmp.eq.s32.totalorder %s21, 0
      %p132 = por %p130, %p131
      %p133 = scmp.ne.s32.totalorder %s119, %s120
      %p134 = scmp.eq.s32.totalorder %s22, 15
      %p135 = por %p133, %p134
      %p137 = scmp.ne.s32.totalorder %s120, %s136
      %p138 = scmp.eq.s32.totalorder %s22, 0
      %p139 = por %p137, %p138
      %p140 = scmp.le.s32.totalorder 1, %s16
      %p141 = scmp.lt.s32.totalorder %s16, 17
      %p142 = pnand %p140, %p141
      %p143 = pneg %p142
      // Predicated region
      $region9: #{tpu_custom_call.1} parent=5 // pred_check
        _
      $region10: #{tpu_custom_call.1} parent=5 // pred_check_branch
        %145 = sbr.rel (%p142) target = $region12
      $region11: #{tpu_custom_call.1} parent=5 // pred_region
        %s146 = ssub.s32 %s16, 1
      $region12: #{tpu_custom_call.1} parent=5 // pred_fallthru
        _
      %p147 = scmp.lt.s32.totalorder %s16, 16
      // Predicated region
      $region13: #{tpu_custom_call.1} parent=5 // pred_check
        %p148 = pneg %p147
      $region14: #{tpu_custom_call.1} parent=5 // pred_check_branch
        %150 = sbr.rel (%p148) target = $region16
      $region15: #{tpu_custom_call.1} parent=5 // pred_region
        // Predicated region
        $region17: #{tpu_custom_call.1} parent=15 // pred_check
          %p151 = pneg %p48
        $region18: #{tpu_custom_call.1} parent=15 // pred_check_branch
          %153 = sbr.rel (%p151) target = $region20
        $region19: #{tpu_custom_call.1} parent=15 // pred_region
          %s154 = smul.u32 64, %s23
          %p155 = scmp.lt.s32.totalorder %s154, 511
          %s156 = scalar_select %p155, %s154, 511
          %s157 = smul.addr %s156, 8
          %s158 = scalar_lea.vmem %s1, %s157
          %s159 = smul.u32 64, %s23
        $region20: #{tpu_custom_call.1} parent=15 // pred_fallthru
          _
        // Predicated region
        $region21: #{tpu_custom_call.1} parent=15 // pred_check
          %p160 = pneg %p74
        $region22: #{tpu_custom_call.1} parent=15 // pred_check_branch
          %162 = sbr.rel (%p160) target = $region24
        $region23: #{tpu_custom_call.1} parent=15 // pred_region
          %s163 = smul.u32 64, %s23
          %p164 = scmp.lt.s32.totalorder %s163, 511
          %s165 = scalar_select %p164, %s163, 511
          %s166 = smul.addr %s165, 8
          %s167 = scalar_lea.vmem %s2, %s166
          %s168 = smul.u32 64, %s23
        $region24: #{tpu_custom_call.1} parent=15 // pred_fallthru
          _
        // Predicated region
        $region25: #{tpu_custom_call.1} parent=15 // pred_check
          %p169 = pneg %p100
        $region26: #{tpu_custom_call.1} parent=15 // pred_check_branch
          %171 = sbr.rel (%p169) target = $region28
        $region27: #{tpu_custom_call.1} parent=15 // pred_region
          %s172 = sand.u32 %s90, 1
          %s173 = sand.u32 %s90, 1
          %s174 = smul.addr %s173, 1536
          %s175 = scalar_lea.vmem [#allocation5], %s174
          %s176 = smul.u32 64, %s24
          %s177 = smul.addr %s176, 8
          %s178 = scalar_lea.vmem %s3, %s177
          // Predicated region
          $region29: #{tpu_custom_call.1} parent=27 // pred_check
            _
          $region30: #{tpu_custom_call.1} parent=27 // pred_check_branch
            %180 = sbr.rel (0) target = $region32
          $region31: #{tpu_custom_call.1} parent=27 // pred_region
            // Predicated region
            $region33: #{tpu_custom_call.1} parent=31 // pred_check
              _
            $region34: #{tpu_custom_call.1} parent=31 // pred_check_branch
              %182 = sbr.rel (0) target = $region36
            $region35: #{tpu_custom_call.1} parent=31 // pred_region
              // Predicated region
              $region48: #{tpu_custom_call.1} parent=35 // pred_check
                _
              $region49: #{tpu_custom_call.1} parent=35 // pred_check_branch
                %579 = sbr.rel (0) target = $region51
              $region50: #{tpu_custom_call.1} parent=35 // pred_region
                loop: start=0, step=1, limit=1
                $region52: #{tpu_custom_call.1} parent=50 // loop_pre_header
                  _
                $region53: #{tpu_custom_call.1} parent=50 // loop_header
                  %s581 = sphi 0, %s585
                  %p582 = scmp.ge.s32.totalorder %s581, 1
                  %s586 = sphi %s178, %s178
                  %s587 = sphi %s175, %s175
                $region54: #{tpu_custom_call.1} parent=50 // loop_header_branch
                  %584 = sbr.rel (%p582) target = $region58
                $region55: #{tpu_custom_call.1} parent=50 // loop_body
                  %v588 = vld [vmem:[%s586] sm:$0xff]
                  %589 = vst [vmem:[%s587] sm:$0xff] %v588
                  %v590 = vld [vmem:[%s586 + $0x8] sm:$0xff]
                  %591 = vst [vmem:[%s587 + $0x8] sm:$0xff] %v590
                  %v592 = vld [vmem:[%s586 + $0x10] sm:$0xff]
                  %593 = vst [vmem:[%s587 + $0x10] sm:$0xff] %v592
                  %v594 = vld [vmem:[%s586 + $0x18] sm:$0xff]
                  %595 = vst [vmem:[%s587 + $0x18] sm:$0xff] %v594
                  %v596 = vld [vmem:[%s586 + $0x20] sm:$0xff]
                  %597 = vst [vmem:[%s587 + $0x20] sm:$0xff] %v596
                  %v598 = vld [vmem:[%s586 + $0x28] sm:$0xff]
                  %599 = vst [vmem:[%s587 + $0x28] sm:$0xff] %v598
                  %v600 = vld [vmem:[%s586 + $0x30] sm:$0xff]
                  %601 = vst [vmem:[%s587 + $0x30] sm:$0xff] %v600
                  %v602 = vld [vmem:[%s586 + $0x38] sm:$0xff]
                  %603 = vst [vmem:[%s587 + $0x38] sm:$0xff] %v602
                  %v604 = vld [vmem:[%s586 + $0x40] sm:$0xff]
                  %605 = vst [vmem:[%s587 + $0x40] sm:$0xff] %v604
                  %v606 = vld [vmem:[%s586 + $0x48] sm:$0xff]
                  %607 = vst [vmem:[%s587 + $0x48] sm:$0xff] %v606
                  %v608 = vld [vmem:[%s586 + $0x50] sm:$0xff]
                  %609 = vst [vmem:[%s587 + $0x50] sm:$0xff] %v608
                  %v610 = vld [vmem:[%s586 + $0x58] sm:$0xff]
                  %611 = vst [vmem:[%s587 + $0x58] sm:$0xff] %v610
                  %v612 = vld [vmem:[%s586 + $0x60] sm:$0xff]
                  %613 = vst [vmem:[%s587 + $0x60] sm:$0xff] %v612
                  %v614 = vld [vmem:[%s586 + $0x68] sm:$0xff]
                  %615 = vst [vmem:[%s587 + $0x68] sm:$0xff] %v614
                  %v616 = vld [vmem:[%s586 + $0x70] sm:$0xff]
                  %617 = vst [vmem:[%s587 + $0x70] sm:$0xff] %v616
                  %v618 = vld [vmem:[%s586 + $0x78] sm:$0xff]
                  %619 = vst [vmem:[%s587 + $0x78] sm:$0xff] %v618
                  %v620 = vld [vmem:[%s586 + $0x80] sm:$0xff]
                  %621 = vst [vmem:[%s587 + $0x80] sm:$0xff] %v620
                  %v622 = vld [vmem:[%s586 + $0x88] sm:$0xff]
                  %623 = vst [vmem:[%s587 + $0x88] sm:$0xff] %v622
                  %v624 = vld [vmem:[%s586 + $0x90] sm:$0xff]
                  %625 = vst [vmem:[%s587 + $0x90] sm:$0xff] %v624
                  %v626 = vld [vmem:[%s586 + $0x98] sm:$0xff]
                  %627 = vst [vmem:[%s587 + $0x98] sm:$0xff] %v626
                  %v628 = vld [vmem:[%s586 + $0xa0] sm:$0xff]
                  %629 = vst [vmem:[%s587 + $0xa0] sm:$0xff] %v628
                  %v630 = vld [vmem:[%s586 + $0xa8] sm:$0xff]
                  %631 = vst [vmem:[%s587 + $0xa8] sm:$0xff] %v630
                  %v632 = vld [vmem:[%s586 + $0xb0] sm:$0xff]
                  %633 = vst [vmem:[%s587 + $0xb0] sm:$0xff] %v632
                  %v634 = vld [vmem:[%s586 + $0xb8] sm:$0xff]
                  %635 = vst [vmem:[%s587 + $0xb8] sm:$0xff] %v634
                  %v636 = vld [vmem:[%s586 + $0xc0] sm:$0xff]
                  %637 = vst [vmem:[%s587 + $0xc0] sm:$0xff] %v636
                  %v638 = vld [vmem:[%s586 + $0xc8] sm:$0xff]
                  %639 = vst [vmem:[%s587 + $0xc8] sm:$0xff] %v638
                  %v640 = vld [vmem:[%s586 + $0xd0] sm:$0xff]
                  %641 = vst [vmem:[%s587 + $0xd0] sm:$0xff] %v640
                  %v642 = vld [vmem:[%s586 + $0xd8] sm:$0xff]
                  %643 = vst [vmem:[%s587 + $0xd8] sm:$0xff] %v642
                  %v644 = vld [vmem:[%s586 + $0xe0] sm:$0xff]
                  %645 = vst [vmem:[%s587 + $0xe0] sm:$0xff] %v644
                  %v646 = vld [vmem:[%s586 + $0xe8] sm:$0xff]
                  %647 = vst [vmem:[%s587 + $0xe8] sm:$0xff] %v646
                  %v648 = vld [vmem:[%s586 + $0xf0] sm:$0xff]
                  %649 = vst [vmem:[%s587 + $0xf0] sm:$0xff] %v648
                  %v650 = vld [vmem:[%s586 + $0xf8] sm:$0xff]
                  %651 = vst [vmem:[%s587 + $0xf8] sm:$0xff] %v650
                  %v652 = vld [vmem:[%s586 + $0x100] sm:$0xff]
                  %653 = vst [vmem:[%s587 + $0x100] sm:$0xff] %v652
                  %v654 = vld [vmem:[%s586 + $0x108] sm:$0xff]
                  %655 = vst [vmem:[%s587 + $0x108] sm:$0xff] %v654
                  %v656 = vld [vmem:[%s586 + $0x110] sm:$0xff]
                  %657 = vst [vmem:[%s587 + $0x110] sm:$0xff] %v656
                  %v658 = vld [vmem:[%s586 + $0x118] sm:$0xff]
                  %659 = vst [vmem:[%s587 + $0x118] sm:$0xff] %v658
                  %v660 = vld [vmem:[%s586 + $0x120] sm:$0xff]
                  %661 = vst [vmem:[%s587 + $0x120] sm:$0xff] %v660
                  %v662 = vld [vmem:[%s586 + $0x128] sm:$0xff]
                  %663 = vst [vmem:[%s587 + $0x128] sm:$0xff] %v662
                  %v664 = vld [vmem:[%s586 + $0x130] sm:$0xff]
                  %665 = vst [vmem:[%s587 + $0x130] sm:$0xff] %v664
                  %v666 = vld [vmem:[%s586 + $0x138] sm:$0xff]
                  %667 = vst [vmem:[%s587 + $0x138] sm:$0xff] %v666
                  %v668 = vld [vmem:[%s586 + $0x140] sm:$0xff]
                  %669 = vst [vmem:[%s587 + $0x140] sm:$0xff] %v668
                  %v670 = vld [vmem:[%s586 + $0x148] sm:$0xff]
                  %671 = vst [vmem:[%s587 + $0x148] sm:$0xff] %v670
                  %v672 = vld [vmem:[%s586 + $0x150] sm:$0xff]
                  %673 = vst [vmem:[%s587 + $0x150] sm:$0xff] %v672
                  %v674 = vld [vmem:[%s586 + $0x158] sm:$0xff]
                  %675 = vst [vmem:[%s587 + $0x158] sm:$0xff] %v674
                  %v676 = vld [vmem:[%s586 + $0x160] sm:$0xff]
                  %677 = vst [vmem:[%s587 + $0x160] sm:$0xff] %v676
                  %v678 = vld [vmem:[%s586 + $0x168] sm:$0xff]
                  %679 = vst [vmem:[%s587 + $0x168] sm:$0xff] %v678
                  %v680 = vld [vmem:[%s586 + $0x170] sm:$0xff]
                  %681 = vst [vmem:[%s587 + $0x170] sm:$0xff] %v680
                  %v682 = vld [vmem:[%s586 + $0x178] sm:$0xff]
                  %683 = vst [vmem:[%s587 + $0x178] sm:$0xff] %v682
                  %v684 = vld [vmem:[%s586 + $0x180] sm:$0xff]
                  %685 = vst [vmem:[%s587 + $0x180] sm:$0xff] %v684
                  %v686 = vld [vmem:[%s586 + $0x188] sm:$0xff]
                  %687 = vst [vmem:[%s587 + $0x188] sm:$0xff] %v686
                  %v688 = vld [vmem:[%s586 + $0x190] sm:$0xff]
                  %689 = vst [vmem:[%s587 + $0x190] sm:$0xff] %v688
                  %v690 = vld [vmem:[%s586 + $0x198] sm:$0xff]
                  %691 = vst [vmem:[%s587 + $0x198] sm:$0xff] %v690
                  %v692 = vld [vmem:[%s586 + $0x1a0] sm:$0xff]
                  %693 = vst [vmem:[%s587 + $0x1a0] sm:$0xff] %v692
                  %v694 = vld [vmem:[%s586 + $0x1a8] sm:$0xff]
                  %695 = vst [vmem:[%s587 + $0x1a8] sm:$0xff] %v694
                  %v696 = vld [vmem:[%s586 + $0x1b0] sm:$0xff]
                  %697 = vst [vmem:[%s587 + $0x1b0] sm:$0xff] %v696
                  %v698 = vld [vmem:[%s586 + $0x1b8] sm:$0xff]
                  %699 = vst [vmem:[%s587 + $0x1b8] sm:$0xff] %v698
                  %v700 = vld [vmem:[%s586 + $0x1c0] sm:$0xff]
                  %701 = vst [vmem:[%s587 + $0x1c0] sm:$0xff] %v700
                  %v702 = vld [vmem:[%s586 + $0x1c8] sm:$0xff]
                  %703 = vst [vmem:[%s587 + $0x1c8] sm:$0xff] %v702
                  %v704 = vld [vmem:[%s586 + $0x1d0] sm:$0xff]
                  %705 = vst [vmem:[%s587 + $0x1d0] sm:$0xff] %v704
                  %v706 = vld [vmem:[%s586 + $0x1d8] sm:$0xff]
                  %707 = vst [vmem:[%s587 + $0x1d8] sm:$0xff] %v706
                  %v708 = vld [vmem:[%s586 + $0x1e0] sm:$0xff]
                  %709 = vst [vmem:[%s587 + $0x1e0] sm:$0xff] %v708
                  %v710 = vld [vmem:[%s586 + $0x1e8] sm:$0xff]
                  %711 = vst [vmem:[%s587 + $0x1e8] sm:$0xff] %v710
                  %v712 = vld [vmem:[%s586 + $0x1f0] sm:$0xff]
                  %713 = vst [vmem:[%s587 + $0x1f0] sm:$0xff] %v712
                  %v714 = vld [vmem:[%s586 + $0x1f8] sm:$0xff]
                  %715 = vst [vmem:[%s587 + $0x1f8] sm:$0xff] %v714
                  %v716 = vld [vmem:[%s586 + $0x400] sm:$0xff]
                  %717 = vst [vmem:[%s587 + $0x200] sm:$0xff] %v716
                  %v718 = vld [vmem:[%s586 + $0x408] sm:$0xff]
                  %719 = vst [vmem:[%s587 + $0x208] sm:$0xff] %v718
                  %v720 = vld [vmem:[%s586 + $0x410] sm:$0xff]
                  %721 = vst [vmem:[%s587 + $0x210] sm:$0xff] %v720
                  %v722 = vld [vmem:[%s586 + $0x418] sm:$0xff]
                  %723 = vst [vmem:[%s587 + $0x218] sm:$0xff] %v722
                  %v724 = vld [vmem:[%s586 + $0x420] sm:$0xff]
                  %725 = vst [vmem:[%s587 + $0x220] sm:$0xff] %v724
                  %v726 = vld [vmem:[%s586 + $0x428] sm:$0xff]
                  %727 = vst [vmem:[%s587 + $0x228] sm:$0xff] %v726
                  %v728 = vld [vmem:[%s586 + $0x430] sm:$0xff]
                  %729 = vst [vmem:[%s587 + $0x230] sm:$0xff] %v728
                  %v730 = vld [vmem:[%s586 + $0x438] sm:$0xff]
                  %731 = vst [vmem:[%s587 + $0x238] sm:$0xff] %v730
                  %v732 = vld [vmem:[%s586 + $0x440] sm:$0xff]
                  %733 = vst [vmem:[%s587 + $0x240] sm:$0xff] %v732
                  %v734 = vld [vmem:[%s586 + $0x448] sm:$0xff]
                  %735 = vst [vmem:[%s587 + $0x248] sm:$0xff] %v734
                  %v736 = vld [vmem:[%s586 + $0x450] sm:$0xff]
                  %737 = vst [vmem:[%s587 + $0x250] sm:$0xff] %v736
                  %v738 = vld [vmem:[%s586 + $0x458] sm:$0xff]
                  %739 = vst [vmem:[%s587 + $0x258] sm:$0xff] %v738
                  %v740 = vld [vmem:[%s586 + $0x460] sm:$0xff]
                  %741 = vst [vmem:[%s587 + $0x260] sm:$0xff] %v740
                  %v742 = vld [vmem:[%s586 + $0x468] sm:$0xff]
                  %743 = vst [vmem:[%s587 + $0x268] sm:$0xff] %v742
                  %v744 = vld [vmem:[%s586 + $0x470] sm:$0xff]
                  %745 = vst [vmem:[%s587 + $0x270] sm:$0xff] %v744
                  %v746 = vld [vmem:[%s586 + $0x478] sm:$0xff]
                  %747 = vst [vmem:[%s587 + $0x278] sm:$0xff] %v746
                  %v748 = vld [vmem:[%s586 + $0x480] sm:$0xff]
                  %749 = vst [vmem:[%s587 + $0x280] sm:$0xff] %v748
                  %v750 = vld [vmem:[%s586 + $0x488] sm:$0xff]
                  %751 = vst [vmem:[%s587 + $0x288] sm:$0xff] %v750
                  %v752 = vld [vmem:[%s586 + $0x490] sm:$0xff]
                  %753 = vst [vmem:[%s587 + $0x290] sm:$0xff] %v752
                  %v754 = vld [vmem:[%s586 + $0x498] sm:$0xff]
                  %755 = vst [vmem:[%s587 + $0x298] sm:$0xff] %v754
                  %v756 = vld [vmem:[%s586 + $0x4a0] sm:$0xff]
                  %757 = vst [vmem:[%s587 + $0x2a0] sm:$0xff] %v756
                  %v758 = vld [vmem:[%s586 + $0x4a8] sm:$0xff]
                  %759 = vst [vmem:[%s587 + $0x2a8] sm:$0xff] %v758
                  %v760 = vld [vmem:[%s586 + $0x4b0] sm:$0xff]
                  %761 = vst [vmem:[%s587 + $0x2b0] sm:$0xff] %v760
                  %v762 = vld [vmem:[%s586 + $0x4b8] sm:$0xff]
                  %763 = vst [vmem:[%s587 + $0x2b8] sm:$0xff] %v762
                  %v764 = vld [vmem:[%s586 + $0x4c0] sm:$0xff]
                  %765 = vst [vmem:[%s587 + $0x2c0] sm:$0xff] %v764
                  %v766 = vld [vmem:[%s586 + $0x4c8] sm:$0xff]
                  %767 = vst [vmem:[%s587 + $0x2c8] sm:$0xff] %v766
                  %v768 = vld [vmem:[%s586 + $0x4d0] sm:$0xff]
                  %769 = vst [vmem:[%s587 + $0x2d0] sm:$0xff] %v768
                  %v770 = vld [vmem:[%s586 + $0x4d8] sm:$0xff]
                  %771 = vst [vmem:[%s587 + $0x2d8] sm:$0xff] %v770
                  %v772 = vld [vmem:[%s586 + $0x4e0] sm:$0xff]
                  %773 = vst [vmem:[%s587 + $0x2e0] sm:$0xff] %v772
                  %v774 = vld [vmem:[%s586 + $0x4e8] sm:$0xff]
                  %775 = vst [vmem:[%s587 + $0x2e8] sm:$0xff] %v774
                  %v776 = vld [vmem:[%s586 + $0x4f0] sm:$0xff]
                  %777 = vst [vmem:[%s587 + $0x2f0] sm:$0xff] %v776
                  %v778 = vld [vmem:[%s586 + $0x4f8] sm:$0xff]
                  %779 = vst [vmem:[%s587 + $0x2f8] sm:$0xff] %v778
                  %v780 = vld [vmem:[%s586 + $0x500] sm:$0xff]
                  %781 = vst [vmem:[%s587 + $0x300] sm:$0xff] %v780
                  %v782 = vld [vmem:[%s586 + $0x508] sm:$0xff]
                  %783 = vst [vmem:[%s587 + $0x308] sm:$0xff] %v782
                  %v784 = vld [vmem:[%s586 + $0x510] sm:$0xff]
                  %785 = vst [vmem:[%s587 + $0x310] sm:$0xff] %v784
                  %v786 = vld [vmem:[%s586 + $0x518] sm:$0xff]
                  %787 = vst [vmem:[%s587 + $0x318] sm:$0xff] %v786
                  %v788 = vld [vmem:[%s586 + $0x520] sm:$0xff]
                  %789 = vst [vmem:[%s587 + $0x320] sm:$0xff] %v788
                  %v790 = vld [vmem:[%s586 + $0x528] sm:$0xff]
                  %791 = vst [vmem:[%s587 + $0x328] sm:$0xff] %v790
                  %v792 = vld [vmem:[%s586 + $0x530] sm:$0xff]
                  %793 = vst [vmem:[%s587 + $0x330] sm:$0xff] %v792
                  %v794 = vld [vmem:[%s586 + $0x538] sm:$0xff]
                  %795 = vst [vmem:[%s587 + $0x338] sm:$0xff] %v794
                  %v796 = vld [vmem:[%s586 + $0x540] sm:$0xff]
                  %797 = vst [vmem:[%s587 + $0x340] sm:$0xff] %v796
                  %v798 = vld [vmem:[%s586 + $0x548] sm:$0xff]
                  %799 = vst [vmem:[%s587 + $0x348] sm:$0xff] %v798
                  %v800 = vld [vmem:[%s586 + $0x550] sm:$0xff]
                  %801 = vst [vmem:[%s587 + $0x350] sm:$0xff] %v800
                  %v802 = vld [vmem:[%s586 + $0x558] sm:$0xff]
                  %803 = vst [vmem:[%s587 + $0x358] sm:$0xff] %v802
                  %v804 = vld [vmem:[%s586 + $0x560] sm:$0xff]
                  %805 = vst [vmem:[%s587 + $0x360] sm:$0xff] %v804
                  %v806 = vld [vmem:[%s586 + $0x568] sm:$0xff]
                  %807 = vst [vmem:[%s587 + $0x368] sm:$0xff] %v806
                  %v808 = vld [vmem:[%s586 + $0x570] sm:$0xff]
                  %809 = vst [vmem:[%s587 + $0x370] sm:$0xff] %v808
                  %v810 = vld [vmem:[%s586 + $0x578] sm:$0xff]
                  %811 = vst [vmem:[%s587 + $0x378] sm:$0xff] %v810
                  %v812 = vld [vmem:[%s586 + $0x580] sm:$0xff]
                  %813 = vst [vmem:[%s587 + $0x380] sm:$0xff] %v812
                  %v814 = vld [vmem:[%s586 + $0x588] sm:$0xff]
                  %815 = vst [vmem:[%s587 + $0x388] sm:$0xff] %v814
                  %v816 = vld [vmem:[%s586 + $0x590] sm:$0xff]
                  %817 = vst [vmem:[%s587 + $0x390] sm:$0xff] %v816
                  %v818 = vld [vmem:[%s586 + $0x598] sm:$0xff]
                  %819 = vst [vmem:[%s587 + $0x398] sm:$0xff] %v818
                  %v820 = vld [vmem:[%s586 + $0x5a0] sm:$0xff]
                  %821 = vst [vmem:[%s587 + $0x3a0] sm:$0xff] %v820
                  %v822 = vld [vmem:[%s586 + $0x5a8] sm:$0xff]
                  %823 = vst [vmem:[%s587 + $0x3a8] sm:$0xff] %v822
                  %v824 = vld [vmem:[%s586 + $0x5b0] sm:$0xff]
                  %825 = vst [vmem:[%s587 + $0x3b0] sm:$0xff] %v824
                  %v826 = vld [vmem:[%s586 + $0x5b8] sm:$0xff]
                  %827 = vst [vmem:[%s587 + $0x3b8] sm:$0xff] %v826
                  %v828 = vld [vmem:[%s586 + $0x5c0] sm:$0xff]
                  %829 = vst [vmem:[%s587 + $0x3c0] sm:$0xff] %v828
                  %v830 = vld [vmem:[%s586 + $0x5c8] sm:$0xff]
                  %831 = vst [vmem:[%s587 + $0x3c8] sm:$0xff] %v830
                  %v832 = vld [vmem:[%s586 + $0x5d0] sm:$0xff]
                  %833 = vst [vmem:[%s587 + $0x3d0] sm:$0xff] %v832
                  %v834 = vld [vmem:[%s586 + $0x5d8] sm:$0xff]
                  %835 = vst [vmem:[%s587 + $0x3d8] sm:$0xff] %v834
                  %v836 = vld [vmem:[%s586 + $0x5e0] sm:$0xff]
                  %837 = vst [vmem:[%s587 + $0x3e0] sm:$0xff] %v836
                  %v838 = vld [vmem:[%s586 + $0x5e8] sm:$0xff]
                  %839 = vst [vmem:[%s587 + $0x3e8] sm:$0xff] %v838
                  %v840 = vld [vmem:[%s586 + $0x5f0] sm:$0xff]
                  %841 = vst [vmem:[%s587 + $0x3f0] sm:$0xff] %v840
                  %v842 = vld [vmem:[%s586 + $0x5f8] sm:$0xff]
                  %843 = vst [vmem:[%s587 + $0x3f8] sm:$0xff] %v842
                  %v844 = vld [vmem:[%s586 + $0x800] sm:$0xff]
                  %845 = vst [vmem:[%s587 + $0x400] sm:$0xff] %v844
                  %v846 = vld [vmem:[%s586 + $0x808] sm:$0xff]
                  %847 = vst [vmem:[%s587 + $0x408] sm:$0xff] %v846
                  %v848 = vld [vmem:[%s586 + $0x810] sm:$0xff]
                  %849 = vst [vmem:[%s587 + $0x410] sm:$0xff] %v848
                  %v850 = vld [vmem:[%s586 + $0x818] sm:$0xff]
                  %851 = vst [vmem:[%s587 + $0x418] sm:$0xff] %v850
                  %v852 = vld [vmem:[%s586 + $0x820] sm:$0xff]
                  %853 = vst [vmem:[%s587 + $0x420] sm:$0xff] %v852
                  %v854 = vld [vmem:[%s586 + $0x828] sm:$0xff]
                  %855 = vst [vmem:[%s587 + $0x428] sm:$0xff] %v854
                  %v856 = vld [vmem:[%s586 + $0x830] sm:$0xff]
                  %857 = vst [vmem:[%s587 + $0x430] sm:$0xff] %v856
                  %v858 = vld [vmem:[%s586 + $0x838] sm:$0xff]
                  %859 = vst [vmem:[%s587 + $0x438] sm:$0xff] %v858
                  %v860 = vld [vmem:[%s586 + $0x840] sm:$0xff]
                  %861 = vst [vmem:[%s587 + $0x440] sm:$0xff] %v860
                  %v862 = vld [vmem:[%s586 + $0x848] sm:$0xff]
                  %863 = vst [vmem:[%s587 + $0x448] sm:$0xff] %v862
                  %v864 = vld [vmem:[%s586 + $0x850] sm:$0xff]
                  %865 = vst [vmem:[%s587 + $0x450] sm:$0xff] %v864
                  %v866 = vld [vmem:[%s586 + $0x858] sm:$0xff]
                  %867 = vst [vmem:[%s587 + $0x458] sm:$0xff] %v866
                  %v868 = vld [vmem:[%s586 + $0x860] sm:$0xff]
                  %869 = vst [vmem:[%s587 + $0x460] sm:$0xff] %v868
                  %v870 = vld [vmem:[%s586 + $0x868] sm:$0xff]
                  %871 = vst [vmem:[%s587 + $0x468] sm:$0xff] %v870
                  %v872 = vld [vmem:[%s586 + $0x870] sm:$0xff]
                  %873 = vst [vmem:[%s587 + $0x470] sm:$0xff] %v872
                  %v874 = vld [vmem:[%s586 + $0x878] sm:$0xff]
                  %875 = vst [vmem:[%s587 + $0x478] sm:$0xff] %v874
                  %v876 = vld [vmem:[%s586 + $0x880] sm:$0xff]
                  %877 = vst [vmem:[%s587 + $0x480] sm:$0xff] %v876
                  %v878 = vld [vmem:[%s586 + $0x888] sm:$0xff]
                  %879 = vst [vmem:[%s587 + $0x488] sm:$0xff] %v878
                  %v880 = vld [vmem:[%s586 + $0x890] sm:$0xff]
                  %881 = vst [vmem:[%s587 + $0x490] sm:$0xff] %v880
                  %v882 = vld [vmem:[%s586 + $0x898] sm:$0xff]
                  %883 = vst [vmem:[%s587 + $0x498] sm:$0xff] %v882
                  %v884 = vld [vmem:[%s586 + $0x8a0] sm:$0xff]
                  %885 = vst [vmem:[%s587 + $0x4a0] sm:$0xff] %v884
                  %v886 = vld [vmem:[%s586 + $0x8a8] sm:$0xff]
                  %887 = vst [vmem:[%s587 + $0x4a8] sm:$0xff] %v886
                  %v888 = vld [vmem:[%s586 + $0x8b0] sm:$0xff]
                  %889 = vst [vmem:[%s587 + $0x4b0] sm:$0xff] %v888
                  %v890 = vld [vmem:[%s586 + $0x8b8] sm:$0xff]
                  %891 = vst [vmem:[%s587 + $0x4b8] sm:$0xff] %v890
                  %v892 = vld [vmem:[%s586 + $0x8c0] sm:$0xff]
                  %893 = vst [vmem:[%s587 + $0x4c0] sm:$0xff] %v892
                  %v894 = vld [vmem:[%s586 + $0x8c8] sm:$0xff]
                  %895 = vst [vmem:[%s587 + $0x4c8] sm:$0xff] %v894
                  %v896 = vld [vmem:[%s586 + $0x8d0] sm:$0xff]
                  %897 = vst [vmem:[%s587 + $0x4d0] sm:$0xff] %v896
                  %v898 = vld [vmem:[%s586 + $0x8d8] sm:$0xff]
                  %899 = vst [vmem:[%s587 + $0x4d8] sm:$0xff] %v898
                  %v900 = vld [vmem:[%s586 + $0x8e0] sm:$0xff]
                  %901 = vst [vmem:[%s587 + $0x4e0] sm:$0xff] %v900
                  %v902 = vld [vmem:[%s586 + $0x8e8] sm:$0xff]
                  %903 = vst [vmem:[%s587 + $0x4e8] sm:$0xff] %v902
                  %v904 = vld [vmem:[%s586 + $0x8f0] sm:$0xff]
                  %905 = vst [vmem:[%s587 + $0x4f0] sm:$0xff] %v904
                  %v906 = vld [vmem:[%s586 + $0x8f8] sm:$0xff]
                  %907 = vst [vmem:[%s587 + $0x4f8] sm:$0xff] %v906
                  %v908 = vld [vmem:[%s586 + $0x900] sm:$0xff]
                  %909 = vst [vmem:[%s587 + $0x500] sm:$0xff] %v908
                  %v910 = vld [vmem:[%s586 + $0x908] sm:$0xff]
                  %911 = vst [vmem:[%s587 + $0x508] sm:$0xff] %v910
                  %v912 = vld [vmem:[%s586 + $0x910] sm:$0xff]
                  %913 = vst [vmem:[%s587 + $0x510] sm:$0xff] %v912
                  %v914 = vld [vmem:[%s586 + $0x918] sm:$0xff]
                  %915 = vst [vmem:[%s587 + $0x518] sm:$0xff] %v914
                  %v916 = vld [vmem:[%s586 + $0x920] sm:$0xff]
                  %917 = vst [vmem:[%s587 + $0x520] sm:$0xff] %v916
                  %v918 = vld [vmem:[%s586 + $0x928] sm:$0xff]
                  %919 = vst [vmem:[%s587 + $0x528] sm:$0xff] %v918
                  %v920 = vld [vmem:[%s586 + $0x930] sm:$0xff]
                  %921 = vst [vmem:[%s587 + $0x530] sm:$0xff] %v920
                  %v922 = vld [vmem:[%s586 + $0x938] sm:$0xff]
                  %923 = vst [vmem:[%s587 + $0x538] sm:$0xff] %v922
                  %v924 = vld [vmem:[%s586 + $0x940] sm:$0xff]
                  %925 = vst [vmem:[%s587 + $0x540] sm:$0xff] %v924
                  %v926 = vld [vmem:[%s586 + $0x948] sm:$0xff]
                  %927 = vst [vmem:[%s587 + $0x548] sm:$0xff] %v926
                  %v928 = vld [vmem:[%s586 + $0x950] sm:$0xff]
                  %929 = vst [vmem:[%s587 + $0x550] sm:$0xff] %v928
                  %v930 = vld [vmem:[%s586 + $0x958] sm:$0xff]
                  %931 = vst [vmem:[%s587 + $0x558] sm:$0xff] %v930
                  %v932 = vld [vmem:[%s586 + $0x960] sm:$0xff]
                  %933 = vst [vmem:[%s587 + $0x560] sm:$0xff] %v932
                  %v934 = vld [vmem:[%s586 + $0x968] sm:$0xff]
                  %935 = vst [vmem:[%s587 + $0x568] sm:$0xff] %v934
                  %v936 = vld [vmem:[%s586 + $0x970] sm:$0xff]
                  %937 = vst [vmem:[%s587 + $0x570] sm:$0xff] %v936
                  %v938 = vld [vmem:[%s586 + $0x978] sm:$0xff]
                  %939 = vst [vmem:[%s587 + $0x578] sm:$0xff] %v938
                  %v940 = vld [vmem:[%s586 + $0x980] sm:$0xff]
                  %941 = vst [vmem:[%s587 + $0x580] sm:$0xff] %v940
                  %v942 = vld [vmem:[%s586 + $0x988] sm:$0xff]
                  %943 = vst [vmem:[%s587 + $0x588] sm:$0xff] %v942
                  %v944 = vld [vmem:[%s586 + $0x990] sm:$0xff]
                  %945 = vst [vmem:[%s587 + $0x590] sm:$0xff] %v944
                  %v946 = vld [vmem:[%s586 + $0x998] sm:$0xff]
                  %947 = vst [vmem:[%s587 + $0x598] sm:$0xff] %v946
                  %v948 = vld [vmem:[%s586 + $0x9a0] sm:$0xff]
                  %949 = vst [vmem:[%s587 + $0x5a0] sm:$0xff] %v948
                  %v950 = vld [vmem:[%s586 + $0x9a8] sm:$0xff]
                  %951 = vst [vmem:[%s587 + $0x5a8] sm:$0xff] %v950
                  %v952 = vld [vmem:[%s586 + $0x9b0] sm:$0xff]
                  %953 = vst [vmem:[%s587 + $0x5b0] sm:$0xff] %v952
                  %v954 = vld [vmem:[%s586 + $0x9b8] sm:$0xff]
                  %955 = vst [vmem:[%s587 + $0x5b8] sm:$0xff] %v954
                  %v956 = vld [vmem:[%s586 + $0x9c0] sm:$0xff]
                  %957 = vst [vmem:[%s587 + $0x5c0] sm:$0xff] %v956
                  %v958 = vld [vmem:[%s586 + $0x9c8] sm:$0xff]
                  %959 = vst [vmem:[%s587 + $0x5c8] sm:$0xff] %v958
                  %v960 = vld [vmem:[%s586 + $0x9d0] sm:$0xff]
                  %961 = vst [vmem:[%s587 + $0x5d0] sm:$0xff] %v960
                  %v962 = vld [vmem:[%s586 + $0x9d8] sm:$0xff]
                  %963 = vst [vmem:[%s587 + $0x5d8] sm:$0xff] %v962
                  %v964 = vld [vmem:[%s586 + $0x9e0] sm:$0xff]
                  %965 = vst [vmem:[%s587 + $0x5e0] sm:$0xff] %v964
                  %v966 = vld [vmem:[%s586 + $0x9e8] sm:$0xff]
                  %967 = vst [vmem:[%s587 + $0x5e8] sm:$0xff] %v966
                  %v968 = vld [vmem:[%s586 + $0x9f0] sm:$0xff]
                  %969 = vst [vmem:[%s587 + $0x5f0] sm:$0xff] %v968
                  %v970 = vld [vmem:[%s586 + $0x9f8] sm:$0xff]
                  %971 = vst [vmem:[%s587 + $0x5f8] sm:$0xff] %v970
                $region56: #{tpu_custom_call.1} parent=50 // loop_footer
                  %s585 = sadd.s32 1, %s581
                $region57: #{tpu_custom_call.1} parent=50 // loop_footer_branch
                  %580 = sbr.rel target = $region53
                $region58: #{tpu_custom_call.1} parent=50 // loop_exit
                  _
              $region51: #{tpu_custom_call.1} parent=35 // pred_fallthru
                _
              // Predicated region
              $region59: #{tpu_custom_call.1} parent=35 // pred_check
                _
              $region60: #{tpu_custom_call.1} parent=35 // pred_check_branch
                %973 = sbr.rel target = $region62
              $region61: #{tpu_custom_call.1} parent=35 // pred_region
                _
              $region62: #{tpu_custom_call.1} parent=35 // pred_fallthru
                _
            $region36: #{tpu_custom_call.1} parent=31 // pred_fallthru
              _
            // Predicated region
            $region37: #{tpu_custom_call.1} parent=31 // pred_check
              _
            $region38: #{tpu_custom_call.1} parent=31 // pred_check_branch
              %184 = sbr.rel target = $region40
            $region39: #{tpu_custom_call.1} parent=31 // pred_region
              loop: start=0, step=1, limit=1
              $region41: #{tpu_custom_call.1} parent=39 // loop_pre_header
                _
              $region42: #{tpu_custom_call.1} parent=39 // loop_header
                %s187 = sphi 0, %s191
                %p188 = scmp.ge.s32.totalorder %s187, 1
                %s192 = sphi %s178, %s178
                %s193 = sphi %s175, %s175
              $region43: #{tpu_custom_call.1} parent=39 // loop_header_branch
                %190 = sbr.rel (%p188) target = $region47
              $region44: #{tpu_custom_call.1} parent=39 // loop_body
                %v194 = vld [vmem:[%s192] sm:$0xff]
                %195 = vst [vmem:[%s193] sm:$0xff] %v194
                %v196 = vld [vmem:[%s192 + $0x8] sm:$0xff]
                %197 = vst [vmem:[%s193 + $0x8] sm:$0xff] %v196
                %v198 = vld [vmem:[%s192 + $0x10] sm:$0xff]
                %199 = vst [vmem:[%s193 + $0x10] sm:$0xff] %v198
                %v200 = vld [vmem:[%s192 + $0x18] sm:$0xff]
                %201 = vst [vmem:[%s193 + $0x18] sm:$0xff] %v200
                %v202 = vld [vmem:[%s192 + $0x20] sm:$0xff]
                %203 = vst [vmem:[%s193 + $0x20] sm:$0xff] %v202
                %v204 = vld [vmem:[%s192 + $0x28] sm:$0xff]
                %205 = vst [vmem:[%s193 + $0x28] sm:$0xff] %v204
                %v206 = vld [vmem:[%s192 + $0x30] sm:$0xff]
                %207 = vst [vmem:[%s193 + $0x30] sm:$0xff] %v206
                %v208 = vld [vmem:[%s192 + $0x38] sm:$0xff]
                %209 = vst [vmem:[%s193 + $0x38] sm:$0xff] %v208
                %v210 = vld [vmem:[%s192 + $0x40] sm:$0xff]
                %211 = vst [vmem:[%s193 + $0x40] sm:$0xff] %v210
                %v212 = vld [vmem:[%s192 + $0x48] sm:$0xff]
                %213 = vst [vmem:[%s193 + $0x48] sm:$0xff] %v212
                %v214 = vld [vmem:[%s192 + $0x50] sm:$0xff]
                %215 = vst [vmem:[%s193 + $0x50] sm:$0xff] %v214
                %v216 = vld [vmem:[%s192 + $0x58] sm:$0xff]
                %217 = vst [vmem:[%s193 + $0x58] sm:$0xff] %v216
                %v218 = vld [vmem:[%s192 + $0x60] sm:$0xff]
                %219 = vst [vmem:[%s193 + $0x60] sm:$0xff] %v218
                %v220 = vld [vmem:[%s192 + $0x68] sm:$0xff]
                %221 = vst [vmem:[%s193 + $0x68] sm:$0xff] %v220
                %v222 = vld [vmem:[%s192 + $0x70] sm:$0xff]
                %223 = vst [vmem:[%s193 + $0x70] sm:$0xff] %v222
                %v224 = vld [vmem:[%s192 + $0x78] sm:$0xff]
                %225 = vst [vmem:[%s193 + $0x78] sm:$0xff] %v224
                %v226 = vld [vmem:[%s192 + $0x80] sm:$0xff]
                %227 = vst [vmem:[%s193 + $0x80] sm:$0xff] %v226
                %v228 = vld [vmem:[%s192 + $0x88] sm:$0xff]
                %229 = vst [vmem:[%s193 + $0x88] sm:$0xff] %v228
                %v230 = vld [vmem:[%s192 + $0x90] sm:$0xff]
                %231 = vst [vmem:[%s193 + $0x90] sm:$0xff] %v230
                %v232 = vld [vmem:[%s192 + $0x98] sm:$0xff]
                %233 = vst [vmem:[%s193 + $0x98] sm:$0xff] %v232
                %v234 = vld [vmem:[%s192 + $0xa0] sm:$0xff]
                %235 = vst [vmem:[%s193 + $0xa0] sm:$0xff] %v234
                %v236 = vld [vmem:[%s192 + $0xa8] sm:$0xff]
                %237 = vst [vmem:[%s193 + $0xa8] sm:$0xff] %v236
                %v238 = vld [vmem:[%s192 + $0xb0] sm:$0xff]
                %239 = vst [vmem:[%s193 + $0xb0] sm:$0xff] %v238
                %v240 = vld [vmem:[%s192 + $0xb8] sm:$0xff]
                %241 = vst [vmem:[%s193 + $0xb8] sm:$0xff] %v240
                %v242 = vld [vmem:[%s192 + $0xc0] sm:$0xff]
                %243 = vst [vmem:[%s193 + $0xc0] sm:$0xff] %v242
                %v244 = vld [vmem:[%s192 + $0xc8] sm:$0xff]
                %245 = vst [vmem:[%s193 + $0xc8] sm:$0xff] %v244
                %v246 = vld [vmem:[%s192 + $0xd0] sm:$0xff]
                %247 = vst [vmem:[%s193 + $0xd0] sm:$0xff] %v246
                %v248 = vld [vmem:[%s192 + $0xd8] sm:$0xff]
                %249 = vst [vmem:[%s193 + $0xd8] sm:$0xff] %v248
                %v250 = vld [vmem:[%s192 + $0xe0] sm:$0xff]
                %251 = vst [vmem:[%s193 + $0xe0] sm:$0xff] %v250
                %v252 = vld [vmem:[%s192 + $0xe8] sm:$0xff]
                %253 = vst [vmem:[%s193 + $0xe8] sm:$0xff] %v252
                %v254 = vld [vmem:[%s192 + $0xf0] sm:$0xff]
                %255 = vst [vmem:[%s193 + $0xf0] sm:$0xff] %v254
                %v256 = vld [vmem:[%s192 + $0xf8] sm:$0xff]
                %257 = vst [vmem:[%s193 + $0xf8] sm:$0xff] %v256
                %v258 = vld [vmem:[%s192 + $0x100] sm:$0xff]
                %259 = vst [vmem:[%s193 + $0x100] sm:$0xff] %v258
                %v260 = vld [vmem:[%s192 + $0x108] sm:$0xff]
                %261 = vst [vmem:[%s193 + $0x108] sm:$0xff] %v260
                %v262 = vld [vmem:[%s192 + $0x110] sm:$0xff]
                %263 = vst [vmem:[%s193 + $0x110] sm:$0xff] %v262
                %v264 = vld [vmem:[%s192 + $0x118] sm:$0xff]
                %265 = vst [vmem:[%s193 + $0x118] sm:$0xff] %v264
                %v266 = vld [vmem:[%s192 + $0x120] sm:$0xff]
                %267 = vst [vmem:[%s193 + $0x120] sm:$0xff] %v266
                %v268 = vld [vmem:[%s192 + $0x128] sm:$0xff]
                %269 = vst [vmem:[%s193 + $0x128] sm:$0xff] %v268
                %v270 = vld [vmem:[%s192 + $0x130] sm:$0xff]
                %271 = vst [vmem:[%s193 + $0x130] sm:$0xff] %v270
                %v272 = vld [vmem:[%s192 + $0x138] sm:$0xff]
                %273 = vst [vmem:[%s193 + $0x138] sm:$0xff] %v272
                %v274 = vld [vmem:[%s192 + $0x140] sm:$0xff]
                %275 = vst [vmem:[%s193 + $0x140] sm:$0xff] %v274
                %v276 = vld [vmem:[%s192 + $0x148] sm:$0xff]
                %277 = vst [vmem:[%s193 + $0x148] sm:$0xff] %v276
                %v278 = vld [vmem:[%s192 + $0x150] sm:$0xff]
                %279 = vst [vmem:[%s193 + $0x150] sm:$0xff] %v278
                %v280 = vld [vmem:[%s192 + $0x158] sm:$0xff]
                %281 = vst [vmem:[%s193 + $0x158] sm:$0xff] %v280
                %v282 = vld [vmem:[%s192 + $0x160] sm:$0xff]
                %283 = vst [vmem:[%s193 + $0x160] sm:$0xff] %v282
                %v284 = vld [vmem:[%s192 + $0x168] sm:$0xff]
                %285 = vst [vmem:[%s193 + $0x168] sm:$0xff] %v284
                %v286 = vld [vmem:[%s192 + $0x170] sm:$0xff]
                %287 = vst [vmem:[%s193 + $0x170] sm:$0xff] %v286
                %v288 = vld [vmem:[%s192 + $0x178] sm:$0xff]
                %289 = vst [vmem:[%s193 + $0x178] sm:$0xff] %v288
                %v290 = vld [vmem:[%s192 + $0x180] sm:$0xff]
                %291 = vst [vmem:[%s193 + $0x180] sm:$0xff] %v290
                %v292 = vld [vmem:[%s192 + $0x188] sm:$0xff]
                %293 = vst [vmem:[%s193 + $0x188] sm:$0xff] %v292
                %v294 = vld [vmem:[%s192 + $0x190] sm:$0xff]
                %295 = vst [vmem:[%s193 + $0x190] sm:$0xff] %v294
                %v296 = vld [vmem:[%s192 + $0x198] sm:$0xff]
                %297 = vst [vmem:[%s193 + $0x198] sm:$0xff] %v296
                %v298 = vld [vmem:[%s192 + $0x1a0] sm:$0xff]
                %299 = vst [vmem:[%s193 + $0x1a0] sm:$0xff] %v298
                %v300 = vld [vmem:[%s192 + $0x1a8] sm:$0xff]
                %301 = vst [vmem:[%s193 + $0x1a8] sm:$0xff] %v300
                %v302 = vld [vmem:[%s192 + $0x1b0] sm:$0xff]
                %303 = vst [vmem:[%s193 + $0x1b0] sm:$0xff] %v302
                %v304 = vld [vmem:[%s192 + $0x1b8] sm:$0xff]
                %305 = vst [vmem:[%s193 + $0x1b8] sm:$0xff] %v304
                %v306 = vld [vmem:[%s192 + $0x1c0] sm:$0xff]
                %307 = vst [vmem:[%s193 + $0x1c0] sm:$0xff] %v306
                %v308 = vld [vmem:[%s192 + $0x1c8] sm:$0xff]
                %309 = vst [vmem:[%s193 + $0x1c8] sm:$0xff] %v308
                %v310 = vld [vmem:[%s192 + $0x1d0] sm:$0xff]
                %311 = vst [vmem:[%s193 + $0x1d0] sm:$0xff] %v310
                %v312 = vld [vmem:[%s192 + $0x1d8] sm:$0xff]
                %313 = vst [vmem:[%s193 + $0x1d8] sm:$0xff] %v312
                %v314 = vld [vmem:[%s192 + $0x1e0] sm:$0xff]
                %315 = vst [vmem:[%s193 + $0x1e0] sm:$0xff] %v314
                %v316 = vld [vmem:[%s192 + $0x1e8] sm:$0xff]
                %317 = vst [vmem:[%s193 + $0x1e8] sm:$0xff] %v316
                %v318 = vld [vmem:[%s192 + $0x1f0] sm:$0xff]
                %319 = vst [vmem:[%s193 + $0x1f0] sm:$0xff] %v318
                %v320 = vld [vmem:[%s192 + $0x1f8] sm:$0xff]
                %321 = vst [vmem:[%s193 + $0x1f8] sm:$0xff] %v320
                %v322 = vld [vmem:[%s192 + $0x400] sm:$0xff]
                %323 = vst [vmem:[%s193 + $0x200] sm:$0xff] %v322
                %v324 = vld [vmem:[%s192 + $0x408] sm:$0xff]
                %325 = vst [vmem:[%s193 + $0x208] sm:$0xff] %v324
                %v326 = vld [vmem:[%s192 + $0x410] sm:$0xff]
                %327 = vst [vmem:[%s193 + $0x210] sm:$0xff] %v326
                %v328 = vld [vmem:[%s192 + $0x418] sm:$0xff]
                %329 = vst [vmem:[%s193 + $0x218] sm:$0xff] %v328
                %v330 = vld [vmem:[%s192 + $0x420] sm:$0xff]
                %331 = vst [vmem:[%s193 + $0x220] sm:$0xff] %v330
                %v332 = vld [vmem:[%s192 + $0x428] sm:$0xff]
                %333 = vst [vmem:[%s193 + $0x228] sm:$0xff] %v332
                %v334 = vld [vmem:[%s192 + $0x430] sm:$0xff]
                %335 = vst [vmem:[%s193 + $0x230] sm:$0xff] %v334
                %v336 = vld [vmem:[%s192 + $0x438] sm:$0xff]
                %337 = vst [vmem:[%s193 + $0x238] sm:$0xff] %v336
                %v338 = vld [vmem:[%s192 + $0x440] sm:$0xff]
                %339 = vst [vmem:[%s193 + $0x240] sm:$0xff] %v338
                %v340 = vld [vmem:[%s192 + $0x448] sm:$0xff]
                %341 = vst [vmem:[%s193 + $0x248] sm:$0xff] %v340
                %v342 = vld [vmem:[%s192 + $0x450] sm:$0xff]
                %343 = vst [vmem:[%s193 + $0x250] sm:$0xff] %v342
                %v344 = vld [vmem:[%s192 + $0x458] sm:$0xff]
                %345 = vst [vmem:[%s193 + $0x258] sm:$0xff] %v344
                %v346 = vld [vmem:[%s192 + $0x460] sm:$0xff]
                %347 = vst [vmem:[%s193 + $0x260] sm:$0xff] %v346
                %v348 = vld [vmem:[%s192 + $0x468] sm:$0xff]
                %349 = vst [vmem:[%s193 + $0x268] sm:$0xff] %v348
                %v350 = vld [vmem:[%s192 + $0x470] sm:$0xff]
                %351 = vst [vmem:[%s193 + $0x270] sm:$0xff] %v350
                %v352 = vld [vmem:[%s192 + $0x478] sm:$0xff]
                %353 = vst [vmem:[%s193 + $0x278] sm:$0xff] %v352
                %v354 = vld [vmem:[%s192 + $0x480] sm:$0xff]
                %355 = vst [vmem:[%s193 + $0x280] sm:$0xff] %v354
                %v356 = vld [vmem:[%s192 + $0x488] sm:$0xff]
                %357 = vst [vmem:[%s193 + $0x288] sm:$0xff] %v356
                %v358 = vld [vmem:[%s192 + $0x490] sm:$0xff]
                %359 = vst [vmem:[%s193 + $0x290] sm:$0xff] %v358
                %v360 = vld [vmem:[%s192 + $0x498] sm:$0xff]
                %361 = vst [vmem:[%s193 + $0x298] sm:$0xff] %v360
                %v362 = vld [vmem:[%s192 + $0x4a0] sm:$0xff]
                %363 = vst [vmem:[%s193 + $0x2a0] sm:$0xff] %v362
                %v364 = vld [vmem:[%s192 + $0x4a8] sm:$0xff]
                %365 = vst [vmem:[%s193 + $0x2a8] sm:$0xff] %v364
                %v366 = vld [vmem:[%s192 + $0x4b0] sm:$0xff]
                %367 = vst [vmem:[%s193 + $0x2b0] sm:$0xff] %v366
                %v368 = vld [vmem:[%s192 + $0x4b8] sm:$0xff]
                %369 = vst [vmem:[%s193 + $0x2b8] sm:$0xff] %v368
                %v370 = vld [vmem:[%s192 + $0x4c0] sm:$0xff]
                %371 = vst [vmem:[%s193 + $0x2c0] sm:$0xff] %v370
                %v372 = vld [vmem:[%s192 + $0x4c8] sm:$0xff]
                %373 = vst [vmem:[%s193 + $0x2c8] sm:$0xff] %v372
                %v374 = vld [vmem:[%s192 + $0x4d0] sm:$0xff]
                %375 = vst [vmem:[%s193 + $0x2d0] sm:$0xff] %v374
                %v376 = vld [vmem:[%s192 + $0x4d8] sm:$0xff]
                %377 = vst [vmem:[%s193 + $0x2d8] sm:$0xff] %v376
                %v378 = vld [vmem:[%s192 + $0x4e0] sm:$0xff]
                %379 = vst [vmem:[%s193 + $0x2e0] sm:$0xff] %v378
                %v380 = vld [vmem:[%s192 + $0x4e8] sm:$0xff]
                %381 = vst [vmem:[%s193 + $0x2e8] sm:$0xff] %v380
                %v382 = vld [vmem:[%s192 + $0x4f0] sm:$0xff]
                %383 = vst [vmem:[%s193 + $0x2f0] sm:$0xff] %v382
                %v384 = vld [vmem:[%s192 + $0x4f8] sm:$0xff]
                %385 = vst [vmem:[%s193 + $0x2f8] sm:$0xff] %v384
                %v386 = vld [vmem:[%s192 + $0x500] sm:$0xff]
                %387 = vst [vmem:[%s193 + $0x300] sm:$0xff] %v386
                %v388 = vld [vmem:[%s192 + $0x508] sm:$0xff]
                %389 = vst [vmem:[%s193 + $0x308] sm:$0xff] %v388
                %v390 = vld [vmem:[%s192 + $0x510] sm:$0xff]
                %391 = vst [vmem:[%s193 + $0x310] sm:$0xff] %v390
                %v392 = vld [vmem:[%s192 + $0x518] sm:$0xff]
                %393 = vst [vmem:[%s193 + $0x318] sm:$0xff] %v392
                %v394 = vld [vmem:[%s192 + $0x520] sm:$0xff]
                %395 = vst [vmem:[%s193 + $0x320] sm:$0xff] %v394
                %v396 = vld [vmem:[%s192 + $0x528] sm:$0xff]
                %397 = vst [vmem:[%s193 + $0x328] sm:$0xff] %v396
                %v398 = vld [vmem:[%s192 + $0x530] sm:$0xff]
                %399 = vst [vmem:[%s193 + $0x330] sm:$0xff] %v398
                %v400 = vld [vmem:[%s192 + $0x538] sm:$0xff]
                %401 = vst [vmem:[%s193 + $0x338] sm:$0xff] %v400
                %v402 = vld [vmem:[%s192 + $0x540] sm:$0xff]
                %403 = vst [vmem:[%s193 + $0x340] sm:$0xff] %v402
                %v404 = vld [vmem:[%s192 + $0x548] sm:$0xff]
                %405 = vst [vmem:[%s193 + $0x348] sm:$0xff] %v404
                %v406 = vld [vmem:[%s192 + $0x550] sm:$0xff]
                %407 = vst [vmem:[%s193 + $0x350] sm:$0xff] %v406
                %v408 = vld [vmem:[%s192 + $0x558] sm:$0xff]
                %409 = vst [vmem:[%s193 + $0x358] sm:$0xff] %v408
                %v410 = vld [vmem:[%s192 + $0x560] sm:$0xff]
                %411 = vst [vmem:[%s193 + $0x360] sm:$0xff] %v410
                %v412 = vld [vmem:[%s192 + $0x568] sm:$0xff]
                %413 = vst [vmem:[%s193 + $0x368] sm:$0xff] %v412
                %v414 = vld [vmem:[%s192 + $0x570] sm:$0xff]
                %415 = vst [vmem:[%s193 + $0x370] sm:$0xff] %v414
                %v416 = vld [vmem:[%s192 + $0x578] sm:$0xff]
                %417 = vst [vmem:[%s193 + $0x378] sm:$0xff] %v416
                %v418 = vld [vmem:[%s192 + $0x580] sm:$0xff]
                %419 = vst [vmem:[%s193 + $0x380] sm:$0xff] %v418
                %v420 = vld [vmem:[%s192 + $0x588] sm:$0xff]
                %421 = vst [vmem:[%s193 + $0x388] sm:$0xff] %v420
                %v422 = vld [vmem:[%s192 + $0x590] sm:$0xff]
                %423 = vst [vmem:[%s193 + $0x390] sm:$0xff] %v422
                %v424 = vld [vmem:[%s192 + $0x598] sm:$0xff]
                %425 = vst [vmem:[%s193 + $0x398] sm:$0xff] %v424
                %v426 = vld [vmem:[%s192 + $0x5a0] sm:$0xff]
                %427 = vst [vmem:[%s193 + $0x3a0] sm:$0xff] %v426
                %v428 = vld [vmem:[%s192 + $0x5a8] sm:$0xff]
                %429 = vst [vmem:[%s193 + $0x3a8] sm:$0xff] %v428
                %v430 = vld [vmem:[%s192 + $0x5b0] sm:$0xff]
                %431 = vst [vmem:[%s193 + $0x3b0] sm:$0xff] %v430
                %v432 = vld [vmem:[%s192 + $0x5b8] sm:$0xff]
                %433 = vst [vmem:[%s193 + $0x3b8] sm:$0xff] %v432
                %v434 = vld [vmem:[%s192 + $0x5c0] sm:$0xff]
                %435 = vst [vmem:[%s193 + $0x3c0] sm:$0xff] %v434
                %v436 = vld [vmem:[%s192 + $0x5c8] sm:$0xff]
                %437 = vst [vmem:[%s193 + $0x3c8] sm:$0xff] %v436
                %v438 = vld [vmem:[%s192 + $0x5d0] sm:$0xff]
                %439 = vst [vmem:[%s193 + $0x3d0] sm:$0xff] %v438
                %v440 = vld [vmem:[%s192 + $0x5d8] sm:$0xff]
                %441 = vst [vmem:[%s193 + $0x3d8] sm:$0xff] %v440
                %v442 = vld [vmem:[%s192 + $0x5e0] sm:$0xff]
                %443 = vst [vmem:[%s193 + $0x3e0] sm:$0xff] %v442
                %v444 = vld [vmem:[%s192 + $0x5e8] sm:$0xff]
                %445 = vst [vmem:[%s193 + $0x3e8] sm:$0xff] %v444
                %v446 = vld [vmem:[%s192 + $0x5f0] sm:$0xff]
                %447 = vst [vmem:[%s193 + $0x3f0] sm:$0xff] %v446
                %v448 = vld [vmem:[%s192 + $0x5f8] sm:$0xff]
                %449 = vst [vmem:[%s193 + $0x3f8] sm:$0xff] %v448
                %v450 = vld [vmem:[%s192 + $0x800] sm:$0xff]
                %451 = vst [vmem:[%s193 + $0x400] sm:$0xff] %v450
                %v452 = vld [vmem:[%s192 + $0x808] sm:$0xff]
                %453 = vst [vmem:[%s193 + $0x408] sm:$0xff] %v452
                %v454 = vld [vmem:[%s192 + $0x810] sm:$0xff]
                %455 = vst [vmem:[%s193 + $0x410] sm:$0xff] %v454
                %v456 = vld [vmem:[%s192 + $0x818] sm:$0xff]
                %457 = vst [vmem:[%s193 + $0x418] sm:$0xff] %v456
                %v458 = vld [vmem:[%s192 + $0x820] sm:$0xff]
                %459 = vst [vmem:[%s193 + $0x420] sm:$0xff] %v458
                %v460 = vld [vmem:[%s192 + $0x828] sm:$0xff]
                %461 = vst [vmem:[%s193 + $0x428] sm:$0xff] %v460
                %v462 = vld [vmem:[%s192 + $0x830] sm:$0xff]
                %463 = vst [vmem:[%s193 + $0x430] sm:$0xff] %v462
                %v464 = vld [vmem:[%s192 + $0x838] sm:$0xff]
                %465 = vst [vmem:[%s193 + $0x438] sm:$0xff] %v464
                %v466 = vld [vmem:[%s192 + $0x840] sm:$0xff]
                %467 = vst [vmem:[%s193 + $0x440] sm:$0xff] %v466
                %v468 = vld [vmem:[%s192 + $0x848] sm:$0xff]
                %469 = vst [vmem:[%s193 + $0x448] sm:$0xff] %v468
                %v470 = vld [vmem:[%s192 + $0x850] sm:$0xff]
                %471 = vst [vmem:[%s193 + $0x450] sm:$0xff] %v470
                %v472 = vld [vmem:[%s192 + $0x858] sm:$0xff]
                %473 = vst [vmem:[%s193 + $0x458] sm:$0xff] %v472
                %v474 = vld [vmem:[%s192 + $0x860] sm:$0xff]
                %475 = vst [vmem:[%s193 + $0x460] sm:$0xff] %v474
                %v476 = vld [vmem:[%s192 + $0x868] sm:$0xff]
                %477 = vst [vmem:[%s193 + $0x468] sm:$0xff] %v476
                %v478 = vld [vmem:[%s192 + $0x870] sm:$0xff]
                %479 = vst [vmem:[%s193 + $0x470] sm:$0xff] %v478
                %v480 = vld [vmem:[%s192 + $0x878] sm:$0xff]
                %481 = vst [vmem:[%s193 + $0x478] sm:$0xff] %v480
                %v482 = vld [vmem:[%s192 + $0x880] sm:$0xff]
                %483 = vst [vmem:[%s193 + $0x480] sm:$0xff] %v482
                %v484 = vld [vmem:[%s192 + $0x888] sm:$0xff]
                %485 = vst [vmem:[%s193 + $0x488] sm:$0xff] %v484
                %v486 = vld [vmem:[%s192 + $0x890] sm:$0xff]
                %487 = vst [vmem:[%s193 + $0x490] sm:$0xff] %v486
                %v488 = vld [vmem:[%s192 + $0x898] sm:$0xff]
                %489 = vst [vmem:[%s193 + $0x498] sm:$0xff] %v488
                %v490 = vld [vmem:[%s192 + $0x8a0] sm:$0xff]
                %491 = vst [vmem:[%s193 + $0x4a0] sm:$0xff] %v490
                %v492 = vld [vmem:[%s192 + $0x8a8] sm:$0xff]
                %493 = vst [vmem:[%s193 + $0x4a8] sm:$0xff] %v492
                %v494 = vld [vmem:[%s192 + $0x8b0] sm:$0xff]
                %495 = vst [vmem:[%s193 + $0x4b0] sm:$0xff] %v494
                %v496 = vld [vmem:[%s192 + $0x8b8] sm:$0xff]
                %497 = vst [vmem:[%s193 + $0x4b8] sm:$0xff] %v496
                %v498 = vld [vmem:[%s192 + $0x8c0] sm:$0xff]
                %499 = vst [vmem:[%s193 + $0x4c0] sm:$0xff] %v498
                %v500 = vld [vmem:[%s192 + $0x8c8] sm:$0xff]
                %501 = vst [vmem:[%s193 + $0x4c8] sm:$0xff] %v500
                %v502 = vld [vmem:[%s192 + $0x8d0] sm:$0xff]
                %503 = vst [vmem:[%s193 + $0x4d0] sm:$0xff] %v502
                %v504 = vld [vmem:[%s192 + $0x8d8] sm:$0xff]
                %505 = vst [vmem:[%s193 + $0x4d8] sm:$0xff] %v504
                %v506 = vld [vmem:[%s192 + $0x8e0] sm:$0xff]
                %507 = vst [vmem:[%s193 + $0x4e0] sm:$0xff] %v506
                %v508 = vld [vmem:[%s192 + $0x8e8] sm:$0xff]
                %509 = vst [vmem:[%s193 + $0x4e8] sm:$0xff] %v508
                %v510 = vld [vmem:[%s192 + $0x8f0] sm:$0xff]
                %511 = vst [vmem:[%s193 + $0x4f0] sm:$0xff] %v510
                %v512 = vld [vmem:[%s192 + $0x8f8] sm:$0xff]
                %513 = vst [vmem:[%s193 + $0x4f8] sm:$0xff] %v512
                %v514 = vld [vmem:[%s192 + $0x900] sm:$0xff]
                %515 = vst [vmem:[%s193 + $0x500] sm:$0xff] %v514
                %v516 = vld [vmem:[%s192 + $0x908] sm:$0xff]
                %517 = vst [vmem:[%s193 + $0x508] sm:$0xff] %v516
                %v518 = vld [vmem:[%s192 + $0x910] sm:$0xff]
                %519 = vst [vmem:[%s193 + $0x510] sm:$0xff] %v518
                %v520 = vld [vmem:[%s192 + $0x918] sm:$0xff]
                %521 = vst [vmem:[%s193 + $0x518] sm:$0xff] %v520
                %v522 = vld [vmem:[%s192 + $0x920] sm:$0xff]
                %523 = vst [vmem:[%s193 + $0x520] sm:$0xff] %v522
                %v524 = vld [vmem:[%s192 + $0x928] sm:$0xff]
                %525 = vst [vmem:[%s193 + $0x528] sm:$0xff] %v524
                %v526 = vld [vmem:[%s192 + $0x930] sm:$0xff]
                %527 = vst [vmem:[%s193 + $0x530] sm:$0xff] %v526
                %v528 = vld [vmem:[%s192 + $0x938] sm:$0xff]
                %529 = vst [vmem:[%s193 + $0x538] sm:$0xff] %v528
                %v530 = vld [vmem:[%s192 + $0x940] sm:$0xff]
                %531 = vst [vmem:[%s193 + $0x540] sm:$0xff] %v530
                %v532 = vld [vmem:[%s192 + $0x948] sm:$0xff]
                %533 = vst [vmem:[%s193 + $0x548] sm:$0xff] %v532
                %v534 = vld [vmem:[%s192 + $0x950] sm:$0xff]
                %535 = vst [vmem:[%s193 + $0x550] sm:$0xff] %v534
                %v536 = vld [vmem:[%s192 + $0x958] sm:$0xff]
                %537 = vst [vmem:[%s193 + $0x558] sm:$0xff] %v536
                %v538 = vld [vmem:[%s192 + $0x960] sm:$0xff]
                %539 = vst [vmem:[%s193 + $0x560] sm:$0xff] %v538
                %v540 = vld [vmem:[%s192 + $0x968] sm:$0xff]
                %541 = vst [vmem:[%s193 + $0x568] sm:$0xff] %v540
                %v542 = vld [vmem:[%s192 + $0x970] sm:$0xff]
                %543 = vst [vmem:[%s193 + $0x570] sm:$0xff] %v542
                %v544 = vld [vmem:[%s192 + $0x978] sm:$0xff]
                %545 = vst [vmem:[%s193 + $0x578] sm:$0xff] %v544
                %v546 = vld [vmem:[%s192 + $0x980] sm:$0xff]
                %547 = vst [vmem:[%s193 + $0x580] sm:$0xff] %v546
                %v548 = vld [vmem:[%s192 + $0x988] sm:$0xff]
                %549 = vst [vmem:[%s193 + $0x588] sm:$0xff] %v548
                %v550 = vld [vmem:[%s192 + $0x990] sm:$0xff]
                %551 = vst [vmem:[%s193 + $0x590] sm:$0xff] %v550
                %v552 = vld [vmem:[%s192 + $0x998] sm:$0xff]
                %553 = vst [vmem:[%s193 + $0x598] sm:$0xff] %v552
                %v554 = vld [vmem:[%s192 + $0x9a0] sm:$0xff]
                %555 = vst [vmem:[%s193 + $0x5a0] sm:$0xff] %v554
                %v556 = vld [vmem:[%s192 + $0x9a8] sm:$0xff]
                %557 = vst [vmem:[%s193 + $0x5a8] sm:$0xff] %v556
                %v558 = vld [vmem:[%s192 + $0x9b0] sm:$0xff]
                %559 = vst [vmem:[%s193 + $0x5b0] sm:$0xff] %v558
                %v560 = vld [vmem:[%s192 + $0x9b8] sm:$0xff]
                %561 = vst [vmem:[%s193 + $0x5b8] sm:$0xff] %v560
                %v562 = vld [vmem:[%s192 + $0x9c0] sm:$0xff]
                %563 = vst [vmem:[%s193 + $0x5c0] sm:$0xff] %v562
                %v564 = vld [vmem:[%s192 + $0x9c8] sm:$0xff]
                %565 = vst [vmem:[%s193 + $0x5c8] sm:$0xff] %v564
                %v566 = vld [vmem:[%s192 + $0x9d0] sm:$0xff]
                %567 = vst [vmem:[%s193 + $0x5d0] sm:$0xff] %v566
                %v568 = vld [vmem:[%s192 + $0x9d8] sm:$0xff]
                %569 = vst [vmem:[%s193 + $0x5d8] sm:$0xff] %v568
                %v570 = vld [vmem:[%s192 + $0x9e0] sm:$0xff]
                %571 = vst [vmem:[%s193 + $0x5e0] sm:$0xff] %v570
                %v572 = vld [vmem:[%s192 + $0x9e8] sm:$0xff]
                %573 = vst [vmem:[%s193 + $0x5e8] sm:$0xff] %v572
                %v574 = vld [vmem:[%s192 + $0x9f0] sm:$0xff]
                %575 = vst [vmem:[%s193 + $0x5f0] sm:$0xff] %v574
                %v576 = vld [vmem:[%s192 + $0x9f8] sm:$0xff]
                %577 = vst [vmem:[%s193 + $0x5f8] sm:$0xff] %v576
              $region45: #{tpu_custom_call.1} parent=39 // loop_footer
                %s191 = sadd.s32 1, %s187
              $region46: #{tpu_custom_call.1} parent=39 // loop_footer_branch
                %186 = sbr.rel target = $region42
              $region47: #{tpu_custom_call.1} parent=39 // loop_exit
                _
            $region40: #{tpu_custom_call.1} parent=31 // pred_fallthru
              _
          $region32: #{tpu_custom_call.1} parent=27 // pred_fallthru
            _
          %974 = vnop
        $region28: #{tpu_custom_call.1} parent=15 // pred_fallthru
          _
      $region16: #{tpu_custom_call.1} parent=5 // pred_fallthru
        _
      %p975 = scmp.le.s32.totalorder 1, %s16
      %p976 = scmp.lt.s32.totalorder %s16, 17
      %p977 = pnand %p975, %p976
      %p978 = pneg %p977
      // Predicated region
      $region63: #{tpu_custom_call.1} parent=5 // pred_check
        _
      $region64: #{tpu_custom_call.1} parent=5 // pred_check_branch
        %980 = sbr.rel (%p977) target = $region66
      $region65: #{tpu_custom_call.1} parent=5 // pred_region
        %s981 = ssub.s32 %s16, 1
        %s982 = sand.u32 %s93, 1
        %s983 = sand.u32 %s93, 1
        %s984 = smul.addr %s983, 1536
        %s985 = scalar_lea.vmem [#allocation5], %s984
        // Predicated region
        $region67: #{tpu_custom_call.1} parent=65 // pred_check
          %p986 = pneg %p106
        $region68: #{tpu_custom_call.1} parent=65 // pred_check_branch
          %988 = sbr.rel (%p986) target = $region70
        $region69: #{tpu_custom_call.1} parent=65 // pred_region
          _
        $region70: #{tpu_custom_call.1} parent=65 // pred_fallthru
          _
        %s989 = smul.u32 64, %s25
        %p990 = scmp.lt.s32.totalorder %s989, 511
        %s991 = scalar_select %p990, %s989, 511
        %s992 = smul.addr %s991, 8
        %s993 = scalar_lea.vmem %s1, %s992
        %p994 = pneg %p54
        %p995 = pneg %p51
        %s996 = smul.u32 64, %s25
        %p997 = scmp.lt.s32.totalorder %s996, 511
        %s998 = scalar_select %p997, %s996, 511
        %s999 = smul.addr %s998, 8
        %s1000 = scalar_lea.vmem %s2, %s999
        %p1001 = pneg %p80
        %p1002 = pneg %p77
        %s1003 = sand.u32 %s93, 1
        %s1004 = sand.u32 %s93, 1
        %s1005 = smul.addr %s1004, 1536
        %s1006 = scalar_lea.vmem [#allocation5], %s1005
        %p1007 = pneg %p106
        %p1008 = pneg %p103
        %p1009 = pneg %p132
        %p1010 = pneg %p129
        %s1011 = smul.u32 64, %s25
        %p1012 = scmp.lt.s32.totalorder %s1011, 511
        %s1013 = scalar_select %p1012, %s1011, 511
        %s1014 = smul.addr %s1013, 8
        %s1015 = scalar_lea.vmem %s4, %s1014
        %s1016 = smul.u32 64, %s25
        %p1017 = scmp.lt.s32.totalorder %s1016, 511
        %s1018 = scalar_select %p1017, %s1016, 511
        %s1019 = smul.addr %s1018, 8
        %s1020 = scalar_lea.vmem %s1, %s1019
        %s1021 = smul.u32 64, %s25
        %s1022 = smul.u32 64, %s25
        %p1023 = scmp.lt.s32.totalorder %s1022, 511
        %s1024 = scalar_select %p1023, %s1022, 511
        %s1025 = smul.addr %s1024, 8
        %s1026 = scalar_lea.vmem %s2, %s1025
        %s1027 = smul.u32 64, %s25
        %s1028 = smul.u32 64, %s26
        %s1029 = smul.u32 64, %s25
        %p1030 = scmp.lt.s32.totalorder %s1029, 511
        %s1031 = scalar_select %p1030, %s1029, 511
        %s1032 = smul.addr %s1031, 8
        %s1033 = scalar_lea.vmem %s4, %s1032
        %s1034 = smul.u32 64, %s25
        %s1035 = smul.u32 %s26, 512
        %p1036 = scmp.eq.s32.totalorder %s26, 0
        // Predicated region
        $region71: #{tpu_custom_call.1} parent=65 // pred_check
          %p1037 = pneg %p1036
        $region72: #{tpu_custom_call.1} parent=65 // pred_check_branch
          %1039 = sbr.rel (%p1037) target = $region74
        $region73: #{tpu_custom_call.1} parent=65 // pred_region
          %1040 = vst [vmem:[#allocation2] sm:$0xff] 0.0
          %1041 = vst [vmem:[#allocation2 + $0x8] sm:$0xff] 0.0
          %1042 = vst [vmem:[#allocation2 + $0x10] sm:$0xff] 0.0
          %1043 = vst [vmem:[#allocation2 + $0x18] sm:$0xff] 0.0
          %1044 = vst [vmem:[#allocation2 + $0x20] sm:$0xff] 0.0
          %1045 = vst [vmem:[#allocation2 + $0x28] sm:$0xff] 0.0
          %1046 = vst [vmem:[#allocation2 + $0x30] sm:$0xff] 0.0
          %1047 = vst [vmem:[#allocation2 + $0x38] sm:$0xff] 0.0
          %1048 = vst [vmem:[#allocation2 + $0x40] sm:$0xff] 0.0
          %1049 = vst [vmem:[#allocation2 + $0x48] sm:$0xff] 0.0
          %1050 = vst [vmem:[#allocation2 + $0x50] sm:$0xff] 0.0
          %1051 = vst [vmem:[#allocation2 + $0x58] sm:$0xff] 0.0
          %1052 = vst [vmem:[#allocation2 + $0x60] sm:$0xff] 0.0
          %1053 = vst [vmem:[#allocation2 + $0x68] sm:$0xff] 0.0
          %1054 = vst [vmem:[#allocation2 + $0x70] sm:$0xff] 0.0
          %1055 = vst [vmem:[#allocation2 + $0x78] sm:$0xff] 0.0
          %1056 = vst [vmem:[#allocation2 + $0x80] sm:$0xff] 0.0
          %1057 = vst [vmem:[#allocation2 + $0x88] sm:$0xff] 0.0
          %1058 = vst [vmem:[#allocation2 + $0x90] sm:$0xff] 0.0
          %1059 = vst [vmem:[#allocation2 + $0x98] sm:$0xff] 0.0
          %1060 = vst [vmem:[#allocation2 + $0xa0] sm:$0xff] 0.0
          %1061 = vst [vmem:[#allocation2 + $0xa8] sm:$0xff] 0.0
          %1062 = vst [vmem:[#allocation2 + $0xb0] sm:$0xff] 0.0
          %1063 = vst [vmem:[#allocation2 + $0xb8] sm:$0xff] 0.0
          %1064 = vst [vmem:[#allocation2 + $0xc0] sm:$0xff] 0.0
          %1065 = vst [vmem:[#allocation2 + $0xc8] sm:$0xff] 0.0
          %1066 = vst [vmem:[#allocation2 + $0xd0] sm:$0xff] 0.0
          %1067 = vst [vmem:[#allocation2 + $0xd8] sm:$0xff] 0.0
          %1068 = vst [vmem:[#allocation2 + $0xe0] sm:$0xff] 0.0
          %1069 = vst [vmem:[#allocation2 + $0xe8] sm:$0xff] 0.0
          %1070 = vst [vmem:[#allocation2 + $0xf0] sm:$0xff] 0.0
          %1071 = vst [vmem:[#allocation2 + $0xf8] sm:$0xff] 0.0
          %1072 = vst [vmem:[#allocation2 + $0x100] sm:$0xff] 0.0
          %1073 = vst [vmem:[#allocation2 + $0x108] sm:$0xff] 0.0
          %1074 = vst [vmem:[#allocation2 + $0x110] sm:$0xff] 0.0
          %1075 = vst [vmem:[#allocation2 + $0x118] sm:$0xff] 0.0
          %1076 = vst [vmem:[#allocation2 + $0x120] sm:$0xff] 0.0
          %1077 = vst [vmem:[#allocation2 + $0x128] sm:$0xff] 0.0
          %1078 = vst [vmem:[#allocation2 + $0x130] sm:$0xff] 0.0
          %1079 = vst [vmem:[#allocation2 + $0x138] sm:$0xff] 0.0
          %1080 = vst [vmem:[#allocation2 + $0x140] sm:$0xff] 0.0
          %1081 = vst [vmem:[#allocation2 + $0x148] sm:$0xff] 0.0
          %1082 = vst [vmem:[#allocation2 + $0x150] sm:$0xff] 0.0
          %1083 = vst [vmem:[#allocation2 + $0x158] sm:$0xff] 0.0
          %1084 = vst [vmem:[#allocation2 + $0x160] sm:$0xff] 0.0
          %1085 = vst [vmem:[#allocation2 + $0x168] sm:$0xff] 0.0
          %1086 = vst [vmem:[#allocation2 + $0x170] sm:$0xff] 0.0
          %1087 = vst [vmem:[#allocation2 + $0x178] sm:$0xff] 0.0
          %1088 = vst [vmem:[#allocation2 + $0x180] sm:$0xff] 0.0
          %1089 = vst [vmem:[#allocation2 + $0x188] sm:$0xff] 0.0
          %1090 = vst [vmem:[#allocation2 + $0x190] sm:$0xff] 0.0
          %1091 = vst [vmem:[#allocation2 + $0x198] sm:$0xff] 0.0
          %1092 = vst [vmem:[#allocation2 + $0x1a0] sm:$0xff] 0.0
          %1093 = vst [vmem:[#allocation2 + $0x1a8] sm:$0xff] 0.0
          %1094 = vst [vmem:[#allocation2 + $0x1b0] sm:$0xff] 0.0
          %1095 = vst [vmem:[#allocation2 + $0x1b8] sm:$0xff] 0.0
          %1096 = vst [vmem:[#allocation2 + $0x1c0] sm:$0xff] 0.0
          %1097 = vst [vmem:[#allocation2 + $0x1c8] sm:$0xff] 0.0
          %1098 = vst [vmem:[#allocation2 + $0x1d0] sm:$0xff] 0.0
          %1099 = vst [vmem:[#allocation2 + $0x1d8] sm:$0xff] 0.0
          %1100 = vst [vmem:[#allocation2 + $0x1e0] sm:$0xff] 0.0
          %1101 = vst [vmem:[#allocation2 + $0x1e8] sm:$0xff] 0.0
          %1102 = vst [vmem:[#allocation2 + $0x1f0] sm:$0xff] 0.0
          %1103 = vst [vmem:[#allocation2 + $0x1f8] sm:$0xff] 0.0
        $region74: #{tpu_custom_call.1} parent=65 // pred_fallthru
          _
        %s1104 = smul.u32 %s25, 128
        %s1105 = sld [smem:[#allocation4 + %s1104]]
        %s1106 = sadd.s32 %s1104, 1
        %s1107 = sld [smem:[#allocation4 + %s1106]]
        %p1108 = scmp.ge.s32.totalorder %s1107, %s1035
        %s1109 = sadd.s32 %s1035, 512
        %p1110 = scmp.lt.s32.totalorder %s1105, %s1109
        %p1111 = pnand %p1108, %p1110
        %p1112 = pneg %p1111
        // Predicated region
        $region75: #{tpu_custom_call.1} parent=65 // pred_check
          _
        $region76: #{tpu_custom_call.1} parent=65 // pred_check_branch
          %1114 = sbr.rel (%p1111) target = $region78
        $region77: #{tpu_custom_call.1} parent=65 // pred_region
          %v1115 = vld [vmem:[%s1020] sm:$0xff]
          %v1116 = vld [vmem:[%s1020 + $0x8] sm:$0xff]
          %v1117 = vld [vmem:[%s1020 + $0x10] sm:$0xff]
          %v1118 = vld [vmem:[%s1020 + $0x18] sm:$0xff]
          %v1119 = vld [vmem:[%s1020 + $0x20] sm:$0xff]
          %v1120 = vld [vmem:[%s1020 + $0x28] sm:$0xff]
          %v1121 = vld [vmem:[%s1020 + $0x30] sm:$0xff]
          %v1122 = vld [vmem:[%s1020 + $0x38] sm:$0xff]
          %v1123 = vld [vmem:[%s1020 + $0x40] sm:$0xff]
          %v1124 = vld [vmem:[%s1020 + $0x48] sm:$0xff]
          %v1125 = vld [vmem:[%s1020 + $0x50] sm:$0xff]
          %v1126 = vld [vmem:[%s1020 + $0x58] sm:$0xff]
          %v1127 = vld [vmem:[%s1020 + $0x60] sm:$0xff]
          %v1128 = vld [vmem:[%s1020 + $0x68] sm:$0xff]
          %v1129 = vld [vmem:[%s1020 + $0x70] sm:$0xff]
          %v1130 = vld [vmem:[%s1020 + $0x78] sm:$0xff]
          %v1131 = vld [vmem:[%s1020 + $0x80] sm:$0xff]
          %v1132 = vld [vmem:[%s1020 + $0x88] sm:$0xff]
          %v1133 = vld [vmem:[%s1020 + $0x90] sm:$0xff]
          %v1134 = vld [vmem:[%s1020 + $0x98] sm:$0xff]
          %v1135 = vld [vmem:[%s1020 + $0xa0] sm:$0xff]
          %v1136 = vld [vmem:[%s1020 + $0xa8] sm:$0xff]
          %v1137 = vld [vmem:[%s1020 + $0xb0] sm:$0xff]
          %v1138 = vld [vmem:[%s1020 + $0xb8] sm:$0xff]
          %v1139 = vld [vmem:[%s1020 + $0xc0] sm:$0xff]
          %v1140 = vld [vmem:[%s1020 + $0xc8] sm:$0xff]
          %v1141 = vld [vmem:[%s1020 + $0xd0] sm:$0xff]
          %v1142 = vld [vmem:[%s1020 + $0xd8] sm:$0xff]
          %v1143 = vld [vmem:[%s1020 + $0xe0] sm:$0xff]
          %v1144 = vld [vmem:[%s1020 + $0xe8] sm:$0xff]
          %v1145 = vld [vmem:[%s1020 + $0xf0] sm:$0xff]
          %v1146 = vld [vmem:[%s1020 + $0xf8] sm:$0xff]
          %v1147 = vld [vmem:[%s1020 + $0x100] sm:$0xff]
          %v1148 = vld [vmem:[%s1020 + $0x108] sm:$0xff]
          %v1149 = vld [vmem:[%s1020 + $0x110] sm:$0xff]
          %v1150 = vld [vmem:[%s1020 + $0x118] sm:$0xff]
          %v1151 = vld [vmem:[%s1020 + $0x120] sm:$0xff]
          %v1152 = vld [vmem:[%s1020 + $0x128] sm:$0xff]
          %v1153 = vld [vmem:[%s1020 + $0x130] sm:$0xff]
          %v1154 = vld [vmem:[%s1020 + $0x138] sm:$0xff]
          %v1155 = vld [vmem:[%s1020 + $0x140] sm:$0xff]
          %v1156 = vld [vmem:[%s1020 + $0x148] sm:$0xff]
          %v1157 = vld [vmem:[%s1020 + $0x150] sm:$0xff]
          %v1158 = vld [vmem:[%s1020 + $0x158] sm:$0xff]
          %v1159 = vld [vmem:[%s1020 + $0x160] sm:$0xff]
          %v1160 = vld [vmem:[%s1020 + $0x168] sm:$0xff]
          %v1161 = vld [vmem:[%s1020 + $0x170] sm:$0xff]
          %v1162 = vld [vmem:[%s1020 + $0x178] sm:$0xff]
          %v1163 = vld [vmem:[%s1020 + $0x180] sm:$0xff]
          %v1164 = vld [vmem:[%s1020 + $0x188] sm:$0xff]
          %v1165 = vld [vmem:[%s1020 + $0x190] sm:$0xff]
          %v1166 = vld [vmem:[%s1020 + $0x198] sm:$0xff]
          %v1167 = vld [vmem:[%s1020 + $0x1a0] sm:$0xff]
          %v1168 = vld [vmem:[%s1020 + $0x1a8] sm:$0xff]
          %v1169 = vld [vmem:[%s1020 + $0x1b0] sm:$0xff]
          %v1170 = vld [vmem:[%s1020 + $0x1b8] sm:$0xff]
          %v1171 = vld [vmem:[%s1020 + $0x1c0] sm:$0xff]
          %v1172 = vld [vmem:[%s1020 + $0x1c8] sm:$0xff]
          %v1173 = vld [vmem:[%s1020 + $0x1d0] sm:$0xff]
          %v1174 = vld [vmem:[%s1020 + $0x1d8] sm:$0xff]
          %v1175 = vld [vmem:[%s1020 + $0x1e0] sm:$0xff]
          %v1176 = vld [vmem:[%s1020 + $0x1e8] sm:$0xff]
          %v1177 = vld [vmem:[%s1020 + $0x1f0] sm:$0xff]
          %v1178 = vld [vmem:[%s1020 + $0x1f8] sm:$0xff]
          %v1179 = vld [vmem:[%s1026] sm:$0xff]
          %v1180 = vld [vmem:[%s1026 + $0x8] sm:$0xff]
          %v1181 = vld [vmem:[%s1026 + $0x10] sm:$0xff]
          %v1182 = vld [vmem:[%s1026 + $0x18] sm:$0xff]
          %v1183 = vld [vmem:[%s1026 + $0x20] sm:$0xff]
          %v1184 = vld [vmem:[%s1026 + $0x28] sm:$0xff]
          %v1185 = vld [vmem:[%s1026 + $0x30] sm:$0xff]
          %v1186 = vld [vmem:[%s1026 + $0x38] sm:$0xff]
          %v1187 = vld [vmem:[%s1026 + $0x40] sm:$0xff]
          %v1188 = vld [vmem:[%s1026 + $0x48] sm:$0xff]
          %v1189 = vld [vmem:[%s1026 + $0x50] sm:$0xff]
          %v1190 = vld [vmem:[%s1026 + $0x58] sm:$0xff]
          %v1191 = vld [vmem:[%s1026 + $0x60] sm:$0xff]
          %v1192 = vld [vmem:[%s1026 + $0x68] sm:$0xff]
          %v1193 = vld [vmem:[%s1026 + $0x70] sm:$0xff]
          %v1194 = vld [vmem:[%s1026 + $0x78] sm:$0xff]
          %v1195 = vld [vmem:[%s1026 + $0x80] sm:$0xff]
          %v1196 = vld [vmem:[%s1026 + $0x88] sm:$0xff]
          %v1197 = vld [vmem:[%s1026 + $0x90] sm:$0xff]
          %v1198 = vld [vmem:[%s1026 + $0x98] sm:$0xff]
          %v1199 = vld [vmem:[%s1026 + $0xa0] sm:$0xff]
          %v1200 = vld [vmem:[%s1026 + $0xa8] sm:$0xff]
          %v1201 = vld [vmem:[%s1026 + $0xb0] sm:$0xff]
          %v1202 = vld [vmem:[%s1026 + $0xb8] sm:$0xff]
          %v1203 = vld [vmem:[%s1026 + $0xc0] sm:$0xff]
          %v1204 = vld [vmem:[%s1026 + $0xc8] sm:$0xff]
          %v1205 = vld [vmem:[%s1026 + $0xd0] sm:$0xff]
          %v1206 = vld [vmem:[%s1026 + $0xd8] sm:$0xff]
          %v1207 = vld [vmem:[%s1026 + $0xe0] sm:$0xff]
          %v1208 = vld [vmem:[%s1026 + $0xe8] sm:$0xff]
          %v1209 = vld [vmem:[%s1026 + $0xf0] sm:$0xff]
          %v1210 = vld [vmem:[%s1026 + $0xf8] sm:$0xff]
          %v1211 = vld [vmem:[%s1026 + $0x100] sm:$0xff]
          %v1212 = vld [vmem:[%s1026 + $0x108] sm:$0xff]
          %v1213 = vld [vmem:[%s1026 + $0x110] sm:$0xff]
          %v1214 = vld [vmem:[%s1026 + $0x118] sm:$0xff]
          %v1215 = vld [vmem:[%s1026 + $0x120] sm:$0xff]
          %v1216 = vld [vmem:[%s1026 + $0x128] sm:$0xff]
          %v1217 = vld [vmem:[%s1026 + $0x130] sm:$0xff]
          %v1218 = vld [vmem:[%s1026 + $0x138] sm:$0xff]
          %v1219 = vld [vmem:[%s1026 + $0x140] sm:$0xff]
          %v1220 = vld [vmem:[%s1026 + $0x148] sm:$0xff]
          %v1221 = vld [vmem:[%s1026 + $0x150] sm:$0xff]
          %v1222 = vld [vmem:[%s1026 + $0x158] sm:$0xff]
          %v1223 = vld [vmem:[%s1026 + $0x160] sm:$0xff]
          %v1224 = vld [vmem:[%s1026 + $0x168] sm:$0xff]
          %v1225 = vld [vmem:[%s1026 + $0x170] sm:$0xff]
          %v1226 = vld [vmem:[%s1026 + $0x178] sm:$0xff]
          %v1227 = vld [vmem:[%s1026 + $0x180] sm:$0xff]
          %v1228 = vld [vmem:[%s1026 + $0x188] sm:$0xff]
          %v1229 = vld [vmem:[%s1026 + $0x190] sm:$0xff]
          %v1230 = vld [vmem:[%s1026 + $0x198] sm:$0xff]
          %v1231 = vld [vmem:[%s1026 + $0x1a0] sm:$0xff]
          %v1232 = vld [vmem:[%s1026 + $0x1a8] sm:$0xff]
          %v1233 = vld [vmem:[%s1026 + $0x1b0] sm:$0xff]
          %v1234 = vld [vmem:[%s1026 + $0x1b8] sm:$0xff]
          %v1235 = vld [vmem:[%s1026 + $0x1c0] sm:$0xff]
          %v1236 = vld [vmem:[%s1026 + $0x1c8] sm:$0xff]
          %v1237 = vld [vmem:[%s1026 + $0x1d0] sm:$0xff]
          %v1238 = vld [vmem:[%s1026 + $0x1d8] sm:$0xff]
          %v1239 = vld [vmem:[%s1026 + $0x1e0] sm:$0xff]
          %v1240 = vld [vmem:[%s1026 + $0x1e8] sm:$0xff]
          %v1241 = vld [vmem:[%s1026 + $0x1f0] sm:$0xff]
          %v1242 = vld [vmem:[%s1026 + $0x1f8] sm:$0xff]
          %v1243 = vstv %s1035
          %v1244 = vsub.s32 %v1115, %v1243
          %v1245 = vsub.s32 %v1116, %v1243
          %v1246 = vsub.s32 %v1117, %v1243
          %v1247 = vsub.s32 %v1118, %v1243
          %v1248 = vsub.s32 %v1119, %v1243
          %v1249 = vsub.s32 %v1120, %v1243
          %v1250 = vsub.s32 %v1121, %v1243
          %v1251 = vsub.s32 %v1122, %v1243
          %v1252 = vsub.s32 %v1123, %v1243
          %v1253 = vsub.s32 %v1124, %v1243
          %v1254 = vsub.s32 %v1125, %v1243
          %v1255 = vsub.s32 %v1126, %v1243
          %v1256 = vsub.s32 %v1127, %v1243
          %v1257 = vsub.s32 %v1128, %v1243
          %v1258 = vsub.s32 %v1129, %v1243
          %v1259 = vsub.s32 %v1130, %v1243
          %v1260 = vsub.s32 %v1131, %v1243
          %v1261 = vsub.s32 %v1132, %v1243
          %v1262 = vsub.s32 %v1133, %v1243
          %v1263 = vsub.s32 %v1134, %v1243
          %v1264 = vsub.s32 %v1135, %v1243
          %v1265 = vsub.s32 %v1136, %v1243
          %v1266 = vsub.s32 %v1137, %v1243
          %v1267 = vsub.s32 %v1138, %v1243
          %v1268 = vsub.s32 %v1139, %v1243
          %v1269 = vsub.s32 %v1140, %v1243
          %v1270 = vsub.s32 %v1141, %v1243
          %v1271 = vsub.s32 %v1142, %v1243
          %v1272 = vsub.s32 %v1143, %v1243
          %v1273 = vsub.s32 %v1144, %v1243
          %v1274 = vsub.s32 %v1145, %v1243
          %v1275 = vsub.s32 %v1146, %v1243
          %v1276 = vsub.s32 %v1147, %v1243
          %v1277 = vsub.s32 %v1148, %v1243
          %v1278 = vsub.s32 %v1149, %v1243
          %v1279 = vsub.s32 %v1150, %v1243
          %v1280 = vsub.s32 %v1151, %v1243
          %v1281 = vsub.s32 %v1152, %v1243
          %v1282 = vsub.s32 %v1153, %v1243
          %v1283 = vsub.s32 %v1154, %v1243
          %v1284 = vsub.s32 %v1155, %v1243
          %v1285 = vsub.s32 %v1156, %v1243
          %v1286 = vsub.s32 %v1157, %v1243
          %v1287 = vsub.s32 %v1158, %v1243
          %v1288 = vsub.s32 %v1159, %v1243
          %v1289 = vsub.s32 %v1160, %v1243
          %v1290 = vsub.s32 %v1161, %v1243
          %v1291 = vsub.s32 %v1162, %v1243
          %v1292 = vsub.s32 %v1163, %v1243
          %v1293 = vsub.s32 %v1164, %v1243
          %v1294 = vsub.s32 %v1165, %v1243
          %v1295 = vsub.s32 %v1166, %v1243
          %v1296 = vsub.s32 %v1167, %v1243
          %v1297 = vsub.s32 %v1168, %v1243
          %v1298 = vsub.s32 %v1169, %v1243
          %v1299 = vsub.s32 %v1170, %v1243
          %v1300 = vsub.s32 %v1171, %v1243
          %v1301 = vsub.s32 %v1172, %v1243
          %v1302 = vsub.s32 %v1173, %v1243
          %v1303 = vsub.s32 %v1174, %v1243
          %v1304 = vsub.s32 %v1175, %v1243
          %v1305 = vsub.s32 %v1176, %v1243
          %v1306 = vsub.s32 %v1177, %v1243
          %v1307 = vsub.s32 %v1178, %v1243
          %v1308 = vlaneseq
          %v1309 = vand.u32 %v1308, 127
          %v1310 = vadd.s32 %v1309, 128
          %v1311 = vadd.s32 %v1309, 256
          %v1312 = vadd.s32 %v1309, 384
          %1313 = vset.pattern.permute.xlu0 0
          %1314 = vperm.xlu0 %1313, %v1244
          %v1315 = vpop.permute.xlu0 %1314
          %1316 = vset.pattern.permute.xlu0 0
          %1317 = vperm.xlu0 %1316, %v1245
          %v1318 = vpop.permute.xlu0 %1317
          %1319 = vset.pattern.permute.xlu0 0
          %1320 = vperm.xlu0 %1319, %v1246
          %v1321 = vpop.permute.xlu0 %1320
          %1322 = vset.pattern.permute.xlu0 0
          %1323 = vperm.xlu0 %1322, %v1247
          %v1324 = vpop.permute.xlu0 %1323
          %1325 = vset.pattern.permute.xlu0 0
          %1326 = vperm.xlu0 %1325, %v1248
          %v1327 = vpop.permute.xlu0 %1326
          %1328 = vset.pattern.permute.xlu0 0
          %1329 = vperm.xlu0 %1328, %v1249
          %v1330 = vpop.permute.xlu0 %1329
          %1331 = vset.pattern.permute.xlu0 0
          %1332 = vperm.xlu0 %1331, %v1250
          %v1333 = vpop.permute.xlu0 %1332
          %1334 = vset.pattern.permute.xlu0 0
          %1335 = vperm.xlu0 %1334, %v1251
          %v1336 = vpop.permute.xlu0 %1335
          %1337 = vset.pattern.permute.xlu0 0
          %1338 = vperm.xlu0 %1337, %v1252
          %v1339 = vpop.permute.xlu0 %1338
          %1340 = vset.pattern.permute.xlu0 0
          %1341 = vperm.xlu0 %1340, %v1253
          %v1342 = vpop.permute.xlu0 %1341
          %1343 = vset.pattern.permute.xlu0 0
          %1344 = vperm.xlu0 %1343, %v1254
          %v1345 = vpop.permute.xlu0 %1344
          %1346 = vset.pattern.permute.xlu0 0
          %1347 = vperm.xlu0 %1346, %v1255
          %v1348 = vpop.permute.xlu0 %1347
          %1349 = vset.pattern.permute.xlu0 0
          %1350 = vperm.xlu0 %1349, %v1256
          %v1351 = vpop.permute.xlu0 %1350
          %1352 = vset.pattern.permute.xlu0 0
          %1353 = vperm.xlu0 %1352, %v1257
          %v1354 = vpop.permute.xlu0 %1353
          %1355 = vset.pattern.permute.xlu0 0
          %1356 = vperm.xlu0 %1355, %v1258
          %v1357 = vpop.permute.xlu0 %1356
          %1358 = vset.pattern.permute.xlu0 0
          %1359 = vperm.xlu0 %1358, %v1259
          %v1360 = vpop.permute.xlu0 %1359
          %1361 = vset.pattern.permute.xlu0 0
          %1362 = vperm.xlu0 %1361, %v1260
          %v1363 = vpop.permute.xlu0 %1362
          %1364 = vset.pattern.permute.xlu0 0
          %1365 = vperm.xlu0 %1364, %v1261
          %v1366 = vpop.permute.xlu0 %1365
          %1367 = vset.pattern.permute.xlu0 0
          %1368 = vperm.xlu0 %1367, %v1262
          %v1369 = vpop.permute.xlu0 %1368
          %1370 = vset.pattern.permute.xlu0 0
          %1371 = vperm.xlu0 %1370, %v1263
          %v1372 = vpop.permute.xlu0 %1371
          %1373 = vset.pattern.permute.xlu0 0
          %1374 = vperm.xlu0 %1373, %v1264
          %v1375 = vpop.permute.xlu0 %1374
          %1376 = vset.pattern.permute.xlu0 0
          %1377 = vperm.xlu0 %1376, %v1265
          %v1378 = vpop.permute.xlu0 %1377
          %1379 = vset.pattern.permute.xlu0 0
          %1380 = vperm.xlu0 %1379, %v1266
          %v1381 = vpop.permute.xlu0 %1380
          %1382 = vset.pattern.permute.xlu0 0
          %1383 = vperm.xlu0 %1382, %v1267
          %v1384 = vpop.permute.xlu0 %1383
          %1385 = vset.pattern.permute.xlu0 0
          %1386 = vperm.xlu0 %1385, %v1268
          %v1387 = vpop.permute.xlu0 %1386
          %1388 = vset.pattern.permute.xlu0 0
          %1389 = vperm.xlu0 %1388, %v1269
          %v1390 = vpop.permute.xlu0 %1389
          %1391 = vset.pattern.permute.xlu0 0
          %1392 = vperm.xlu0 %1391, %v1270
          %v1393 = vpop.permute.xlu0 %1392
          %1394 = vset.pattern.permute.xlu0 0
          %1395 = vperm.xlu0 %1394, %v1271
          %v1396 = vpop.permute.xlu0 %1395
          %1397 = vset.pattern.permute.xlu0 0
          %1398 = vperm.xlu0 %1397, %v1272
          %v1399 = vpop.permute.xlu0 %1398
          %1400 = vset.pattern.permute.xlu0 0
          %1401 = vperm.xlu0 %1400, %v1273
          %v1402 = vpop.permute.xlu0 %1401
          %1403 = vset.pattern.permute.xlu0 0
          %1404 = vperm.xlu0 %1403, %v1274
          %v1405 = vpop.permute.xlu0 %1404
          %1406 = vset.pattern.permute.xlu0 0
          %1407 = vperm.xlu0 %1406, %v1275
          %v1408 = vpop.permute.xlu0 %1407
          %1409 = vset.pattern.permute.xlu0 0
          %1410 = vperm.xlu0 %1409, %v1276
          %v1411 = vpop.permute.xlu0 %1410
          %1412 = vset.pattern.permute.xlu0 0
          %1413 = vperm.xlu0 %1412, %v1277
          %v1414 = vpop.permute.xlu0 %1413
          %1415 = vset.pattern.permute.xlu0 0
          %1416 = vperm.xlu0 %1415, %v1278
          %v1417 = vpop.permute.xlu0 %1416
          %1418 = vset.pattern.permute.xlu0 0
          %1419 = vperm.xlu0 %1418, %v1279
          %v1420 = vpop.permute.xlu0 %1419
          %1421 = vset.pattern.permute.xlu0 0
          %1422 = vperm.xlu0 %1421, %v1280
          %v1423 = vpop.permute.xlu0 %1422
          %1424 = vset.pattern.permute.xlu0 0
          %1425 = vperm.xlu0 %1424, %v1281
          %v1426 = vpop.permute.xlu0 %1425
          %1427 = vset.pattern.permute.xlu0 0
          %1428 = vperm.xlu0 %1427, %v1282
          %v1429 = vpop.permute.xlu0 %1428
          %1430 = vset.pattern.permute.xlu0 0
          %1431 = vperm.xlu0 %1430, %v1283
          %v1432 = vpop.permute.xlu0 %1431
          %1433 = vset.pattern.permute.xlu0 0
          %1434 = vperm.xlu0 %1433, %v1284
          %v1435 = vpop.permute.xlu0 %1434
          %1436 = vset.pattern.permute.xlu0 0
          %1437 = vperm.xlu0 %1436, %v1285
          %v1438 = vpop.permute.xlu0 %1437
          %1439 = vset.pattern.permute.xlu0 0
          %1440 = vperm.xlu0 %1439, %v1286
          %v1441 = vpop.permute.xlu0 %1440
          %1442 = vset.pattern.permute.xlu0 0
          %1443 = vperm.xlu0 %1442, %v1287
          %v1444 = vpop.permute.xlu0 %1443
          %1445 = vset.pattern.permute.xlu0 0
          %1446 = vperm.xlu0 %1445, %v1288
          %v1447 = vpop.permute.xlu0 %1446
          %1448 = vset.pattern.permute.xlu0 0
          %1449 = vperm.xlu0 %1448, %v1289
          %v1450 = vpop.permute.xlu0 %1449
          %1451 = vset.pattern.permute.xlu0 0
          %1452 = vperm.xlu0 %1451, %v1290
          %v1453 = vpop.permute.xlu0 %1452
          %1454 = vset.pattern.permute.xlu0 0
          %1455 = vperm.xlu0 %1454, %v1291
          %v1456 = vpop.permute.xlu0 %1455
          %1457 = vset.pattern.permute.xlu0 0
          %1458 = vperm.xlu0 %1457, %v1292
          %v1459 = vpop.permute.xlu0 %1458
          %1460 = vset.pattern.permute.xlu0 0
          %1461 = vperm.xlu0 %1460, %v1293
          %v1462 = vpop.permute.xlu0 %1461
          %1463 = vset.pattern.permute.xlu0 0
          %1464 = vperm.xlu0 %1463, %v1294
          %v1465 = vpop.permute.xlu0 %1464
          %1466 = vset.pattern.permute.xlu0 0
          %1467 = vperm.xlu0 %1466, %v1295
          %v1468 = vpop.permute.xlu0 %1467
          %1469 = vset.pattern.permute.xlu0 0
          %1470 = vperm.xlu0 %1469, %v1296
          %v1471 = vpop.permute.xlu0 %1470
          %1472 = vset.pattern.permute.xlu0 0
          %1473 = vperm.xlu0 %1472, %v1297
          %v1474 = vpop.permute.xlu0 %1473
          %1475 = vset.pattern.permute.xlu0 0
          %1476 = vperm.xlu0 %1475, %v1298
          %v1477 = vpop.permute.xlu0 %1476
          %1478 = vset.pattern.permute.xlu0 0
          %1479 = vperm.xlu0 %1478, %v1299
          %v1480 = vpop.permute.xlu0 %1479
          %1481 = vset.pattern.permute.xlu0 0
          %1482 = vperm.xlu0 %1481, %v1300
          %v1483 = vpop.permute.xlu0 %1482
          %1484 = vset.pattern.permute.xlu0 0
          %1485 = vperm.xlu0 %1484, %v1301
          %v1486 = vpop.permute.xlu0 %1485
          %1487 = vset.pattern.permute.xlu0 0
          %1488 = vperm.xlu0 %1487, %v1302
          %v1489 = vpop.permute.xlu0 %1488
          %1490 = vset.pattern.permute.xlu0 0
          %1491 = vperm.xlu0 %1490, %v1303
          %v1492 = vpop.permute.xlu0 %1491
          %1493 = vset.pattern.permute.xlu0 0
          %1494 = vperm.xlu0 %1493, %v1304
          %v1495 = vpop.permute.xlu0 %1494
          %1496 = vset.pattern.permute.xlu0 0
          %1497 = vperm.xlu0 %1496, %v1305
          %v1498 = vpop.permute.xlu0 %1497
          %1499 = vset.pattern.permute.xlu0 0
          %1500 = vperm.xlu0 %1499, %v1306
          %v1501 = vpop.permute.xlu0 %1500
          %1502 = vset.pattern.permute.xlu0 0
          %1503 = vperm.xlu0 %1502, %v1307
          %v1504 = vpop.permute.xlu0 %1503
          %vm1505 = vcmp.eq.s32.totalorder %v1309, %v1315
          %vm1506 = vcmp.eq.s32.totalorder %v1310, %v1315
          %vm1507 = vcmp.eq.s32.totalorder %v1311, %v1315
          %vm1508 = vcmp.eq.s32.totalorder %v1312, %v1315
          %vm1509 = vcmp.eq.s32.totalorder %v1309, %v1318
          %vm1510 = vcmp.eq.s32.totalorder %v1310, %v1318
          %vm1511 = vcmp.eq.s32.totalorder %v1311, %v1318
          %vm1512 = vcmp.eq.s32.totalorder %v1312, %v1318
          %vm1513 = vcmp.eq.s32.totalorder %v1309, %v1321
          %vm1514 = vcmp.eq.s32.totalorder %v1310, %v1321
          %vm1515 = vcmp.eq.s32.totalorder %v1311, %v1321
          %vm1516 = vcmp.eq.s32.totalorder %v1312, %v1321
          %vm1517 = vcmp.eq.s32.totalorder %v1309, %v1324
          %vm1518 = vcmp.eq.s32.totalorder %v1310, %v1324
          %vm1519 = vcmp.eq.s32.totalorder %v1311, %v1324
          %vm1520 = vcmp.eq.s32.totalorder %v1312, %v1324
          %vm1521 = vcmp.eq.s32.totalorder %v1309, %v1327
          %vm1522 = vcmp.eq.s32.totalorder %v1310, %v1327
          %vm1523 = vcmp.eq.s32.totalorder %v1311, %v1327
          %vm1524 = vcmp.eq.s32.totalorder %v1312, %v1327
          %vm1525 = vcmp.eq.s32.totalorder %v1309, %v1330
          %vm1526 = vcmp.eq.s32.totalorder %v1310, %v1330
          %vm1527 = vcmp.eq.s32.totalorder %v1311, %v1330
          %vm1528 = vcmp.eq.s32.totalorder %v1312, %v1330
          %vm1529 = vcmp.eq.s32.totalorder %v1309, %v1333
          %vm1530 = vcmp.eq.s32.totalorder %v1310, %v1333
          %vm1531 = vcmp.eq.s32.totalorder %v1311, %v1333
          %vm1532 = vcmp.eq.s32.totalorder %v1312, %v1333
          %vm1533 = vcmp.eq.s32.totalorder %v1309, %v1336
          %vm1534 = vcmp.eq.s32.totalorder %v1310, %v1336
          %vm1535 = vcmp.eq.s32.totalorder %v1311, %v1336
          %vm1536 = vcmp.eq.s32.totalorder %v1312, %v1336
          %vm1537 = vcmp.eq.s32.totalorder %v1309, %v1339
          %vm1538 = vcmp.eq.s32.totalorder %v1310, %v1339
          %vm1539 = vcmp.eq.s32.totalorder %v1311, %v1339
          %vm1540 = vcmp.eq.s32.totalorder %v1312, %v1339
          %vm1541 = vcmp.eq.s32.totalorder %v1309, %v1342
          %vm1542 = vcmp.eq.s32.totalorder %v1310, %v1342
          %vm1543 = vcmp.eq.s32.totalorder %v1311, %v1342
          %vm1544 = vcmp.eq.s32.totalorder %v1312, %v1342
          %vm1545 = vcmp.eq.s32.totalorder %v1309, %v1345
          %vm1546 = vcmp.eq.s32.totalorder %v1310, %v1345
          %vm1547 = vcmp.eq.s32.totalorder %v1311, %v1345
          %vm1548 = vcmp.eq.s32.totalorder %v1312, %v1345
          %vm1549 = vcmp.eq.s32.totalorder %v1309, %v1348
          %vm1550 = vcmp.eq.s32.totalorder %v1310, %v1348
          %vm1551 = vcmp.eq.s32.totalorder %v1311, %v1348
          %vm1552 = vcmp.eq.s32.totalorder %v1312, %v1348
          %vm1553 = vcmp.eq.s32.totalorder %v1309, %v1351
          %vm1554 = vcmp.eq.s32.totalorder %v1310, %v1351
          %vm1555 = vcmp.eq.s32.totalorder %v1311, %v1351
          %vm1556 = vcmp.eq.s32.totalorder %v1312, %v1351
          %vm1557 = vcmp.eq.s32.totalorder %v1309, %v1354
          %vm1558 = vcmp.eq.s32.totalorder %v1310, %v1354
          %vm1559 = vcmp.eq.s32.totalorder %v1311, %v1354
          %vm1560 = vcmp.eq.s32.totalorder %v1312, %v1354
          %vm1561 = vcmp.eq.s32.totalorder %v1309, %v1357
          %vm1562 = vcmp.eq.s32.totalorder %v1310, %v1357
          %vm1563 = vcmp.eq.s32.totalorder %v1311, %v1357
          %vm1564 = vcmp.eq.s32.totalorder %v1312, %v1357
          %vm1565 = vcmp.eq.s32.totalorder %v1309, %v1360
          %vm1566 = vcmp.eq.s32.totalorder %v1310, %v1360
          %vm1567 = vcmp.eq.s32.totalorder %v1311, %v1360
          %vm1568 = vcmp.eq.s32.totalorder %v1312, %v1360
          %vm1569 = vcmp.eq.s32.totalorder %v1309, %v1363
          %vm1570 = vcmp.eq.s32.totalorder %v1310, %v1363
          %vm1571 = vcmp.eq.s32.totalorder %v1311, %v1363
          %vm1572 = vcmp.eq.s32.totalorder %v1312, %v1363
          %vm1573 = vcmp.eq.s32.totalorder %v1309, %v1366
          %vm1574 = vcmp.eq.s32.totalorder %v1310, %v1366
          %vm1575 = vcmp.eq.s32.totalorder %v1311, %v1366
          %vm1576 = vcmp.eq.s32.totalorder %v1312, %v1366
          %vm1577 = vcmp.eq.s32.totalorder %v1309, %v1369
          %vm1578 = vcmp.eq.s32.totalorder %v1310, %v1369
          %vm1579 = vcmp.eq.s32.totalorder %v1311, %v1369
          %vm1580 = vcmp.eq.s32.totalorder %v1312, %v1369
          %vm1581 = vcmp.eq.s32.totalorder %v1309, %v1372
          %vm1582 = vcmp.eq.s32.totalorder %v1310, %v1372
          %vm1583 = vcmp.eq.s32.totalorder %v1311, %v1372
          %vm1584 = vcmp.eq.s32.totalorder %v1312, %v1372
          %vm1585 = vcmp.eq.s32.totalorder %v1309, %v1375
          %vm1586 = vcmp.eq.s32.totalorder %v1310, %v1375
          %vm1587 = vcmp.eq.s32.totalorder %v1311, %v1375
          %vm1588 = vcmp.eq.s32.totalorder %v1312, %v1375
          %vm1589 = vcmp.eq.s32.totalorder %v1309, %v1378
          %vm1590 = vcmp.eq.s32.totalorder %v1310, %v1378
          %vm1591 = vcmp.eq.s32.totalorder %v1311, %v1378
          %vm1592 = vcmp.eq.s32.totalorder %v1312, %v1378
          %vm1593 = vcmp.eq.s32.totalorder %v1309, %v1381
          %vm1594 = vcmp.eq.s32.totalorder %v1310, %v1381
          %vm1595 = vcmp.eq.s32.totalorder %v1311, %v1381
          %vm1596 = vcmp.eq.s32.totalorder %v1312, %v1381
          %vm1597 = vcmp.eq.s32.totalorder %v1309, %v1384
          %vm1598 = vcmp.eq.s32.totalorder %v1310, %v1384
          %vm1599 = vcmp.eq.s32.totalorder %v1311, %v1384
          %vm1600 = vcmp.eq.s32.totalorder %v1312, %v1384
          %vm1601 = vcmp.eq.s32.totalorder %v1309, %v1387
          %vm1602 = vcmp.eq.s32.totalorder %v1310, %v1387
          %vm1603 = vcmp.eq.s32.totalorder %v1311, %v1387
          %vm1604 = vcmp.eq.s32.totalorder %v1312, %v1387
          %vm1605 = vcmp.eq.s32.totalorder %v1309, %v1390
          %vm1606 = vcmp.eq.s32.totalorder %v1310, %v1390
          %vm1607 = vcmp.eq.s32.totalorder %v1311, %v1390
          %vm1608 = vcmp.eq.s32.totalorder %v1312, %v1390
          %vm1609 = vcmp.eq.s32.totalorder %v1309, %v1393
          %vm1610 = vcmp.eq.s32.totalorder %v1310, %v1393
          %vm1611 = vcmp.eq.s32.totalorder %v1311, %v1393
          %vm1612 = vcmp.eq.s32.totalorder %v1312, %v1393
          %vm1613 = vcmp.eq.s32.totalorder %v1309, %v1396
          %vm1614 = vcmp.eq.s32.totalorder %v1310, %v1396
          %vm1615 = vcmp.eq.s32.totalorder %v1311, %v1396
          %vm1616 = vcmp.eq.s32.totalorder %v1312, %v1396
          %vm1617 = vcmp.eq.s32.totalorder %v1309, %v1399
          %vm1618 = vcmp.eq.s32.totalorder %v1310, %v1399
          %vm1619 = vcmp.eq.s32.totalorder %v1311, %v1399
          %vm1620 = vcmp.eq.s32.totalorder %v1312, %v1399
          %vm1621 = vcmp.eq.s32.totalorder %v1309, %v1402
          %vm1622 = vcmp.eq.s32.totalorder %v1310, %v1402
          %vm1623 = vcmp.eq.s32.totalorder %v1311, %v1402
          %vm1624 = vcmp.eq.s32.totalorder %v1312, %v1402
          %vm1625 = vcmp.eq.s32.totalorder %v1309, %v1405
          %vm1626 = vcmp.eq.s32.totalorder %v1310, %v1405
          %vm1627 = vcmp.eq.s32.totalorder %v1311, %v1405
          %vm1628 = vcmp.eq.s32.totalorder %v1312, %v1405
          %vm1629 = vcmp.eq.s32.totalorder %v1309, %v1408
          %vm1630 = vcmp.eq.s32.totalorder %v1310, %v1408
          %vm1631 = vcmp.eq.s32.totalorder %v1311, %v1408
          %vm1632 = vcmp.eq.s32.totalorder %v1312, %v1408
          %vm1633 = vcmp.eq.s32.totalorder %v1309, %v1411
          %vm1634 = vcmp.eq.s32.totalorder %v1310, %v1411
          %vm1635 = vcmp.eq.s32.totalorder %v1311, %v1411
          %vm1636 = vcmp.eq.s32.totalorder %v1312, %v1411
          %vm1637 = vcmp.eq.s32.totalorder %v1309, %v1414
          %vm1638 = vcmp.eq.s32.totalorder %v1310, %v1414
          %vm1639 = vcmp.eq.s32.totalorder %v1311, %v1414
          %vm1640 = vcmp.eq.s32.totalorder %v1312, %v1414
          %vm1641 = vcmp.eq.s32.totalorder %v1309, %v1417
          %vm1642 = vcmp.eq.s32.totalorder %v1310, %v1417
          %vm1643 = vcmp.eq.s32.totalorder %v1311, %v1417
          %vm1644 = vcmp.eq.s32.totalorder %v1312, %v1417
          %vm1645 = vcmp.eq.s32.totalorder %v1309, %v1420
          %vm1646 = vcmp.eq.s32.totalorder %v1310, %v1420
          %vm1647 = vcmp.eq.s32.totalorder %v1311, %v1420
          %vm1648 = vcmp.eq.s32.totalorder %v1312, %v1420
          %vm1649 = vcmp.eq.s32.totalorder %v1309, %v1423
          %vm1650 = vcmp.eq.s32.totalorder %v1310, %v1423
          %vm1651 = vcmp.eq.s32.totalorder %v1311, %v1423
          %vm1652 = vcmp.eq.s32.totalorder %v1312, %v1423
          %vm1653 = vcmp.eq.s32.totalorder %v1309, %v1426
          %vm1654 = vcmp.eq.s32.totalorder %v1310, %v1426
          %vm1655 = vcmp.eq.s32.totalorder %v1311, %v1426
          %vm1656 = vcmp.eq.s32.totalorder %v1312, %v1426
          %vm1657 = vcmp.eq.s32.totalorder %v1309, %v1429
          %vm1658 = vcmp.eq.s32.totalorder %v1310, %v1429
          %vm1659 = vcmp.eq.s32.totalorder %v1311, %v1429
          %vm1660 = vcmp.eq.s32.totalorder %v1312, %v1429
          %vm1661 = vcmp.eq.s32.totalorder %v1309, %v1432
          %vm1662 = vcmp.eq.s32.totalorder %v1310, %v1432
          %vm1663 = vcmp.eq.s32.totalorder %v1311, %v1432
          %vm1664 = vcmp.eq.s32.totalorder %v1312, %v1432
          %vm1665 = vcmp.eq.s32.totalorder %v1309, %v1435
          %vm1666 = vcmp.eq.s32.totalorder %v1310, %v1435
          %vm1667 = vcmp.eq.s32.totalorder %v1311, %v1435
          %vm1668 = vcmp.eq.s32.totalorder %v1312, %v1435
          %vm1669 = vcmp.eq.s32.totalorder %v1309, %v1438
          %vm1670 = vcmp.eq.s32.totalorder %v1310, %v1438
          %vm1671 = vcmp.eq.s32.totalorder %v1311, %v1438
          %vm1672 = vcmp.eq.s32.totalorder %v1312, %v1438
          %vm1673 = vcmp.eq.s32.totalorder %v1309, %v1441
          %vm1674 = vcmp.eq.s32.totalorder %v1310, %v1441
          %vm1675 = vcmp.eq.s32.totalorder %v1311, %v1441
          %vm1676 = vcmp.eq.s32.totalorder %v1312, %v1441
          %vm1677 = vcmp.eq.s32.totalorder %v1309, %v1444
          %vm1678 = vcmp.eq.s32.totalorder %v1310, %v1444
          %vm1679 = vcmp.eq.s32.totalorder %v1311, %v1444
          %vm1680 = vcmp.eq.s32.totalorder %v1312, %v1444
          %vm1681 = vcmp.eq.s32.totalorder %v1309, %v1447
          %vm1682 = vcmp.eq.s32.totalorder %v1310, %v1447
          %vm1683 = vcmp.eq.s32.totalorder %v1311, %v1447
          %vm1684 = vcmp.eq.s32.totalorder %v1312, %v1447
          %vm1685 = vcmp.eq.s32.totalorder %v1309, %v1450
          %vm1686 = vcmp.eq.s32.totalorder %v1310, %v1450
          %vm1687 = vcmp.eq.s32.totalorder %v1311, %v1450
          %vm1688 = vcmp.eq.s32.totalorder %v1312, %v1450
          %vm1689 = vcmp.eq.s32.totalorder %v1309, %v1453
          %vm1690 = vcmp.eq.s32.totalorder %v1310, %v1453
          %vm1691 = vcmp.eq.s32.totalorder %v1311, %v1453
          %vm1692 = vcmp.eq.s32.totalorder %v1312, %v1453
          %vm1693 = vcmp.eq.s32.totalorder %v1309, %v1456
          %vm1694 = vcmp.eq.s32.totalorder %v1310, %v1456
          %vm1695 = vcmp.eq.s32.totalorder %v1311, %v1456
          %vm1696 = vcmp.eq.s32.totalorder %v1312, %v1456
          %vm1697 = vcmp.eq.s32.totalorder %v1309, %v1459
          %vm1698 = vcmp.eq.s32.totalorder %v1310, %v1459
          %vm1699 = vcmp.eq.s32.totalorder %v1311, %v1459
          %vm1700 = vcmp.eq.s32.totalorder %v1312, %v1459
          %vm1701 = vcmp.eq.s32.totalorder %v1309, %v1462
          %vm1702 = vcmp.eq.s32.totalorder %v1310, %v1462
          %vm1703 = vcmp.eq.s32.totalorder %v1311, %v1462
          %vm1704 = vcmp.eq.s32.totalorder %v1312, %v1462
          %vm1705 = vcmp.eq.s32.totalorder %v1309, %v1465
          %vm1706 = vcmp.eq.s32.totalorder %v1310, %v1465
          %vm1707 = vcmp.eq.s32.totalorder %v1311, %v1465
          %vm1708 = vcmp.eq.s32.totalorder %v1312, %v1465
          %vm1709 = vcmp.eq.s32.totalorder %v1309, %v1468
          %vm1710 = vcmp.eq.s32.totalorder %v1310, %v1468
          %vm1711 = vcmp.eq.s32.totalorder %v1311, %v1468
          %vm1712 = vcmp.eq.s32.totalorder %v1312, %v1468
          %vm1713 = vcmp.eq.s32.totalorder %v1309, %v1471
          %vm1714 = vcmp.eq.s32.totalorder %v1310, %v1471
          %vm1715 = vcmp.eq.s32.totalorder %v1311, %v1471
          %vm1716 = vcmp.eq.s32.totalorder %v1312, %v1471
          %vm1717 = vcmp.eq.s32.totalorder %v1309, %v1474
          %vm1718 = vcmp.eq.s32.totalorder %v1310, %v1474
          %vm1719 = vcmp.eq.s32.totalorder %v1311, %v1474
          %vm1720 = vcmp.eq.s32.totalorder %v1312, %v1474
          %vm1721 = vcmp.eq.s32.totalorder %v1309, %v1477
          %vm1722 = vcmp.eq.s32.totalorder %v1310, %v1477
          %vm1723 = vcmp.eq.s32.totalorder %v1311, %v1477
          %vm1724 = vcmp.eq.s32.totalorder %v1312, %v1477
          %vm1725 = vcmp.eq.s32.totalorder %v1309, %v1480
          %vm1726 = vcmp.eq.s32.totalorder %v1310, %v1480
          %vm1727 = vcmp.eq.s32.totalorder %v1311, %v1480
          %vm1728 = vcmp.eq.s32.totalorder %v1312, %v1480
          %vm1729 = vcmp.eq.s32.totalorder %v1309, %v1483
          %vm1730 = vcmp.eq.s32.totalorder %v1310, %v1483
          %vm1731 = vcmp.eq.s32.totalorder %v1311, %v1483
          %vm1732 = vcmp.eq.s32.totalorder %v1312, %v1483
          %vm1733 = vcmp.eq.s32.totalorder %v1309, %v1486
          %vm1734 = vcmp.eq.s32.totalorder %v1310, %v1486
          %vm1735 = vcmp.eq.s32.totalorder %v1311, %v1486
          %vm1736 = vcmp.eq.s32.totalorder %v1312, %v1486
          %vm1737 = vcmp.eq.s32.totalorder %v1309, %v1489
          %vm1738 = vcmp.eq.s32.totalorder %v1310, %v1489
          %vm1739 = vcmp.eq.s32.totalorder %v1311, %v1489
          %vm1740 = vcmp.eq.s32.totalorder %v1312, %v1489
          %vm1741 = vcmp.eq.s32.totalorder %v1309, %v1492
          %vm1742 = vcmp.eq.s32.totalorder %v1310, %v1492
          %vm1743 = vcmp.eq.s32.totalorder %v1311, %v1492
          %vm1744 = vcmp.eq.s32.totalorder %v1312, %v1492
          %vm1745 = vcmp.eq.s32.totalorder %v1309, %v1495
          %vm1746 = vcmp.eq.s32.totalorder %v1310, %v1495
          %vm1747 = vcmp.eq.s32.totalorder %v1311, %v1495
          %vm1748 = vcmp.eq.s32.totalorder %v1312, %v1495
          %vm1749 = vcmp.eq.s32.totalorder %v1309, %v1498
          %vm1750 = vcmp.eq.s32.totalorder %v1310, %v1498
          %vm1751 = vcmp.eq.s32.totalorder %v1311, %v1498
          %vm1752 = vcmp.eq.s32.totalorder %v1312, %v1498
          %vm1753 = vcmp.eq.s32.totalorder %v1309, %v1501
          %vm1754 = vcmp.eq.s32.totalorder %v1310, %v1501
          %vm1755 = vcmp.eq.s32.totalorder %v1311, %v1501
          %vm1756 = vcmp.eq.s32.totalorder %v1312, %v1501
          %vm1757 = vcmp.eq.s32.totalorder %v1309, %v1504
          %vm1758 = vcmp.eq.s32.totalorder %v1310, %v1504
          %vm1759 = vcmp.eq.s32.totalorder %v1311, %v1504
          %vm1760 = vcmp.eq.s32.totalorder %v1312, %v1504
          %v1761 = vsel %vm1505, 1, 0
          %v1762 = vsel %vm1506, 1, 0
          %v1763 = vsel %vm1507, 1, 0
          %v1764 = vsel %vm1508, 1, 0
          %v1765 = vsel %vm1509, 1, 0
          %v1766 = vsel %vm1510, 1, 0
          %v1767 = vsel %vm1511, 1, 0
          %v1768 = vsel %vm1512, 1, 0
          %v1769 = vsel %vm1513, 1, 0
          %v1770 = vsel %vm1514, 1, 0
          %v1771 = vsel %vm1515, 1, 0
          %v1772 = vsel %vm1516, 1, 0
          %v1773 = vsel %vm1517, 1, 0
          %v1774 = vsel %vm1518, 1, 0
          %v1775 = vsel %vm1519, 1, 0
          %v1776 = vsel %vm1520, 1, 0
          %v1777 = vsel %vm1521, 1, 0
          %v1778 = vsel %vm1522, 1, 0
          %v1779 = vsel %vm1523, 1, 0
          %v1780 = vsel %vm1524, 1, 0
          %v1781 = vsel %vm1525, 1, 0
          %v1782 = vsel %vm1526, 1, 0
          %v1783 = vsel %vm1527, 1, 0
          %v1784 = vsel %vm1528, 1, 0
          %v1785 = vsel %vm1529, 1, 0
          %v1786 = vsel %vm1530, 1, 0
          %v1787 = vsel %vm1531, 1, 0
          %v1788 = vsel %vm1532, 1, 0
          %v1789 = vsel %vm1533, 1, 0
          %v1790 = vsel %vm1534, 1, 0
          %v1791 = vsel %vm1535, 1, 0
          %v1792 = vsel %vm1536, 1, 0
          %v1793 = vsel %vm1537, 1, 0
          %v1794 = vsel %vm1538, 1, 0
          %v1795 = vsel %vm1539, 1, 0
          %v1796 = vsel %vm1540, 1, 0
          %v1797 = vsel %vm1541, 1, 0
          %v1798 = vsel %vm1542, 1, 0
          %v1799 = vsel %vm1543, 1, 0
          %v1800 = vsel %vm1544, 1, 0
          %v1801 = vsel %vm1545, 1, 0
          %v1802 = vsel %vm1546, 1, 0
          %v1803 = vsel %vm1547, 1, 0
          %v1804 = vsel %vm1548, 1, 0
          %v1805 = vsel %vm1549, 1, 0
          %v1806 = vsel %vm1550, 1, 0
          %v1807 = vsel %vm1551, 1, 0
          %v1808 = vsel %vm1552, 1, 0
          %v1809 = vsel %vm1553, 1, 0
          %v1810 = vsel %vm1554, 1, 0
          %v1811 = vsel %vm1555, 1, 0
          %v1812 = vsel %vm1556, 1, 0
          %v1813 = vsel %vm1557, 1, 0
          %v1814 = vsel %vm1558, 1, 0
          %v1815 = vsel %vm1559, 1, 0
          %v1816 = vsel %vm1560, 1, 0
          %v1817 = vsel %vm1561, 1, 0
          %v1818 = vsel %vm1562, 1, 0
          %v1819 = vsel %vm1563, 1, 0
          %v1820 = vsel %vm1564, 1, 0
          %v1821 = vsel %vm1565, 1, 0
          %v1822 = vsel %vm1566, 1, 0
          %v1823 = vsel %vm1567, 1, 0
          %v1824 = vsel %vm1568, 1, 0
          %v1825 = vsel %vm1569, 1, 0
          %v1826 = vsel %vm1570, 1, 0
          %v1827 = vsel %vm1571, 1, 0
          %v1828 = vsel %vm1572, 1, 0
          %v1829 = vsel %vm1573, 1, 0
          %v1830 = vsel %vm1574, 1, 0
          %v1831 = vsel %vm1575, 1, 0
          %v1832 = vsel %vm1576, 1, 0
          %v1833 = vsel %vm1577, 1, 0
          %v1834 = vsel %vm1578, 1, 0
          %v1835 = vsel %vm1579, 1, 0
          %v1836 = vsel %vm1580, 1, 0
          %v1837 = vsel %vm1581, 1, 0
          %v1838 = vsel %vm1582, 1, 0
          %v1839 = vsel %vm1583, 1, 0
          %v1840 = vsel %vm1584, 1, 0
          %v1841 = vsel %vm1585, 1, 0
          %v1842 = vsel %vm1586, 1, 0
          %v1843 = vsel %vm1587, 1, 0
          %v1844 = vsel %vm1588, 1, 0
          %v1845 = vsel %vm1589, 1, 0
          %v1846 = vsel %vm1590, 1, 0
          %v1847 = vsel %vm1591, 1, 0
          %v1848 = vsel %vm1592, 1, 0
          %v1849 = vsel %vm1593, 1, 0
          %v1850 = vsel %vm1594, 1, 0
          %v1851 = vsel %vm1595, 1, 0
          %v1852 = vsel %vm1596, 1, 0
          %v1853 = vsel %vm1597, 1, 0
          %v1854 = vsel %vm1598, 1, 0
          %v1855 = vsel %vm1599, 1, 0
          %v1856 = vsel %vm1600, 1, 0
          %v1857 = vsel %vm1601, 1, 0
          %v1858 = vsel %vm1602, 1, 0
          %v1859 = vsel %vm1603, 1, 0
          %v1860 = vsel %vm1604, 1, 0
          %v1861 = vsel %vm1605, 1, 0
          %v1862 = vsel %vm1606, 1, 0
          %v1863 = vsel %vm1607, 1, 0
          %v1864 = vsel %vm1608, 1, 0
          %v1865 = vsel %vm1609, 1, 0
          %v1866 = vsel %vm1610, 1, 0
          %v1867 = vsel %vm1611, 1, 0
          %v1868 = vsel %vm1612, 1, 0
          %v1869 = vsel %vm1613, 1, 0
          %v1870 = vsel %vm1614, 1, 0
          %v1871 = vsel %vm1615, 1, 0
          %v1872 = vsel %vm1616, 1, 0
          %v1873 = vsel %vm1617, 1, 0
          %v1874 = vsel %vm1618, 1, 0
          %v1875 = vsel %vm1619, 1, 0
          %v1876 = vsel %vm1620, 1, 0
          %v1877 = vsel %vm1621, 1, 0
          %v1878 = vsel %vm1622, 1, 0
          %v1879 = vsel %vm1623, 1, 0
          %v1880 = vsel %vm1624, 1, 0
          %v1881 = vsel %vm1625, 1, 0
          %v1882 = vsel %vm1626, 1, 0
          %v1883 = vsel %vm1627, 1, 0
          %v1884 = vsel %vm1628, 1, 0
          %v1885 = vsel %vm1629, 1, 0
          %v1886 = vsel %vm1630, 1, 0
          %v1887 = vsel %vm1631, 1, 0
          %v1888 = vsel %vm1632, 1, 0
          %v1889 = vsel %vm1633, 1, 0
          %v1890 = vsel %vm1634, 1, 0
          %v1891 = vsel %vm1635, 1, 0
          %v1892 = vsel %vm1636, 1, 0
          %v1893 = vsel %vm1637, 1, 0
          %v1894 = vsel %vm1638, 1, 0
          %v1895 = vsel %vm1639, 1, 0
          %v1896 = vsel %vm1640, 1, 0
          %v1897 = vsel %vm1641, 1, 0
          %v1898 = vsel %vm1642, 1, 0
          %v1899 = vsel %vm1643, 1, 0
          %v1900 = vsel %vm1644, 1, 0
          %v1901 = vsel %vm1645, 1, 0
          %v1902 = vsel %vm1646, 1, 0
          %v1903 = vsel %vm1647, 1, 0
          %v1904 = vsel %vm1648, 1, 0
          %v1905 = vsel %vm1649, 1, 0
          %v1906 = vsel %vm1650, 1, 0
          %v1907 = vsel %vm1651, 1, 0
          %v1908 = vsel %vm1652, 1, 0
          %v1909 = vsel %vm1653, 1, 0
          %v1910 = vsel %vm1654, 1, 0
          %v1911 = vsel %vm1655, 1, 0
          %v1912 = vsel %vm1656, 1, 0
          %v1913 = vsel %vm1657, 1, 0
          %v1914 = vsel %vm1658, 1, 0
          %v1915 = vsel %vm1659, 1, 0
          %v1916 = vsel %vm1660, 1, 0
          %v1917 = vsel %vm1661, 1, 0
          %v1918 = vsel %vm1662, 1, 0
          %v1919 = vsel %vm1663, 1, 0
          %v1920 = vsel %vm1664, 1, 0
          %v1921 = vsel %vm1665, 1, 0
          %v1922 = vsel %vm1666, 1, 0
          %v1923 = vsel %vm1667, 1, 0
          %v1924 = vsel %vm1668, 1, 0
          %v1925 = vsel %vm1669, 1, 0
          %v1926 = vsel %vm1670, 1, 0
          %v1927 = vsel %vm1671, 1, 0
          %v1928 = vsel %vm1672, 1, 0
          %v1929 = vsel %vm1673, 1, 0
          %v1930 = vsel %vm1674, 1, 0
          %v1931 = vsel %vm1675, 1, 0
          %v1932 = vsel %vm1676, 1, 0
          %v1933 = vsel %vm1677, 1, 0
          %v1934 = vsel %vm1678, 1, 0
          %v1935 = vsel %vm1679, 1, 0
          %v1936 = vsel %vm1680, 1, 0
          %v1937 = vsel %vm1681, 1, 0
          %v1938 = vsel %vm1682, 1, 0
          %v1939 = vsel %vm1683, 1, 0
          %v1940 = vsel %vm1684, 1, 0
          %v1941 = vsel %vm1685, 1, 0
          %v1942 = vsel %vm1686, 1, 0
          %v1943 = vsel %vm1687, 1, 0
          %v1944 = vsel %vm1688, 1, 0
          %v1945 = vsel %vm1689, 1, 0
          %v1946 = vsel %vm1690, 1, 0
          %v1947 = vsel %vm1691, 1, 0
          %v1948 = vsel %vm1692, 1, 0
          %v1949 = vsel %vm1693, 1, 0
          %v1950 = vsel %vm1694, 1, 0
          %v1951 = vsel %vm1695, 1, 0
          %v1952 = vsel %vm1696, 1, 0
          %v1953 = vsel %vm1697, 1, 0
          %v1954 = vsel %vm1698, 1, 0
          %v1955 = vsel %vm1699, 1, 0
          %v1956 = vsel %vm1700, 1, 0
          %v1957 = vsel %vm1701, 1, 0
          %v1958 = vsel %vm1702, 1, 0
          %v1959 = vsel %vm1703, 1, 0
          %v1960 = vsel %vm1704, 1, 0
          %v1961 = vsel %vm1705, 1, 0
          %v1962 = vsel %vm1706, 1, 0
          %v1963 = vsel %vm1707, 1, 0
          %v1964 = vsel %vm1708, 1, 0
          %v1965 = vsel %vm1709, 1, 0
          %v1966 = vsel %vm1710, 1, 0
          %v1967 = vsel %vm1711, 1, 0
          %v1968 = vsel %vm1712, 1, 0
          %v1969 = vsel %vm1713, 1, 0
          %v1970 = vsel %vm1714, 1, 0
          %v1971 = vsel %vm1715, 1, 0
          %v1972 = vsel %vm1716, 1, 0
          %v1973 = vsel %vm1717, 1, 0
          %v1974 = vsel %vm1718, 1, 0
          %v1975 = vsel %vm1719, 1, 0
          %v1976 = vsel %vm1720, 1, 0
          %v1977 = vsel %vm1721, 1, 0
          %v1978 = vsel %vm1722, 1, 0
          %v1979 = vsel %vm1723, 1, 0
          %v1980 = vsel %vm1724, 1, 0
          %v1981 = vsel %vm1725, 1, 0
          %v1982 = vsel %vm1726, 1, 0
          %v1983 = vsel %vm1727, 1, 0
          %v1984 = vsel %vm1728, 1, 0
          %v1985 = vsel %vm1729, 1, 0
          %v1986 = vsel %vm1730, 1, 0
          %v1987 = vsel %vm1731, 1, 0
          %v1988 = vsel %vm1732, 1, 0
          %v1989 = vsel %vm1733, 1, 0
          %v1990 = vsel %vm1734, 1, 0
          %v1991 = vsel %vm1735, 1, 0
          %v1992 = vsel %vm1736, 1, 0
          %v1993 = vsel %vm1737, 1, 0
          %v1994 = vsel %vm1738, 1, 0
          %v1995 = vsel %vm1739, 1, 0
          %v1996 = vsel %vm1740, 1, 0
          %v1997 = vsel %vm1741, 1, 0
          %v1998 = vsel %vm1742, 1, 0
          %v1999 = vsel %vm1743, 1, 0
          %v2000 = vsel %vm1744, 1, 0
          %v2001 = vsel %vm1745, 1, 0
          %v2002 = vsel %vm1746, 1, 0
          %v2003 = vsel %vm1747, 1, 0
          %v2004 = vsel %vm1748, 1, 0
          %v2005 = vsel %vm1749, 1, 0
          %v2006 = vsel %vm1750, 1, 0
          %v2007 = vsel %vm1751, 1, 0
          %v2008 = vsel %vm1752, 1, 0
          %v2009 = vsel %vm1753, 1, 0
          %v2010 = vsel %vm1754, 1, 0
          %v2011 = vsel %vm1755, 1, 0
          %v2012 = vsel %vm1756, 1, 0
          %v2013 = vsel %vm1757, 1, 0
          %v2014 = vsel %vm1758, 1, 0
          %v2015 = vsel %vm1759, 1, 0
          %v2016 = vsel %vm1760, 1, 0
          %v2017 = vcvt.s32.f32 %v1761
          %v2018 = vcvt.s32.f32 %v1762
          %v2019 = vcvt.s32.f32 %v1763
          %v2020 = vcvt.s32.f32 %v1764
          %v2021 = vcvt.s32.f32 %v1765
          %v2022 = vcvt.s32.f32 %v1766
          %v2023 = vcvt.s32.f32 %v1767
          %v2024 = vcvt.s32.f32 %v1768
          %v2025 = vcvt.s32.f32 %v1769
          %v2026 = vcvt.s32.f32 %v1770
          %v2027 = vcvt.s32.f32 %v1771
          %v2028 = vcvt.s32.f32 %v1772
          %v2029 = vcvt.s32.f32 %v1773
          %v2030 = vcvt.s32.f32 %v1774
          %v2031 = vcvt.s32.f32 %v1775
          %v2032 = vcvt.s32.f32 %v1776
          %v2033 = vcvt.s32.f32 %v1777
          %v2034 = vcvt.s32.f32 %v1778
          %v2035 = vcvt.s32.f32 %v1779
          %v2036 = vcvt.s32.f32 %v1780
          %v2037 = vcvt.s32.f32 %v1781
          %v2038 = vcvt.s32.f32 %v1782
          %v2039 = vcvt.s32.f32 %v1783
          %v2040 = vcvt.s32.f32 %v1784
          %v2041 = vcvt.s32.f32 %v1785
          %v2042 = vcvt.s32.f32 %v1786
          %v2043 = vcvt.s32.f32 %v1787
          %v2044 = vcvt.s32.f32 %v1788
          %v2045 = vcvt.s32.f32 %v1789
          %v2046 = vcvt.s32.f32 %v1790
          %v2047 = vcvt.s32.f32 %v1791
          %v2048 = vcvt.s32.f32 %v1792
          %v2049 = vcvt.s32.f32 %v1793
          %v2050 = vcvt.s32.f32 %v1794
          %v2051 = vcvt.s32.f32 %v1795
          %v2052 = vcvt.s32.f32 %v1796
          %v2053 = vcvt.s32.f32 %v1797
          %v2054 = vcvt.s32.f32 %v1798
          %v2055 = vcvt.s32.f32 %v1799
          %v2056 = vcvt.s32.f32 %v1800
          %v2057 = vcvt.s32.f32 %v1801
          %v2058 = vcvt.s32.f32 %v1802
          %v2059 = vcvt.s32.f32 %v1803
          %v2060 = vcvt.s32.f32 %v1804
          %v2061 = vcvt.s32.f32 %v1805
          %v2062 = vcvt.s32.f32 %v1806
          %v2063 = vcvt.s32.f32 %v1807
          %v2064 = vcvt.s32.f32 %v1808
          %v2065 = vcvt.s32.f32 %v1809
          %v2066 = vcvt.s32.f32 %v1810
          %v2067 = vcvt.s32.f32 %v1811
          %v2068 = vcvt.s32.f32 %v1812
          %v2069 = vcvt.s32.f32 %v1813
          %v2070 = vcvt.s32.f32 %v1814
          %v2071 = vcvt.s32.f32 %v1815
          %v2072 = vcvt.s32.f32 %v1816
          %v2073 = vcvt.s32.f32 %v1817
          %v2074 = vcvt.s32.f32 %v1818
          %v2075 = vcvt.s32.f32 %v1819
          %v2076 = vcvt.s32.f32 %v1820
          %v2077 = vcvt.s32.f32 %v1821
          %v2078 = vcvt.s32.f32 %v1822
          %v2079 = vcvt.s32.f32 %v1823
          %v2080 = vcvt.s32.f32 %v1824
          %v2081 = vcvt.s32.f32 %v1825
          %v2082 = vcvt.s32.f32 %v1826
          %v2083 = vcvt.s32.f32 %v1827
          %v2084 = vcvt.s32.f32 %v1828
          %v2085 = vcvt.s32.f32 %v1829
          %v2086 = vcvt.s32.f32 %v1830
          %v2087 = vcvt.s32.f32 %v1831
          %v2088 = vcvt.s32.f32 %v1832
          %v2089 = vcvt.s32.f32 %v1833
          %v2090 = vcvt.s32.f32 %v1834
          %v2091 = vcvt.s32.f32 %v1835
          %v2092 = vcvt.s32.f32 %v1836
          %v2093 = vcvt.s32.f32 %v1837
          %v2094 = vcvt.s32.f32 %v1838
          %v2095 = vcvt.s32.f32 %v1839
          %v2096 = vcvt.s32.f32 %v1840
          %v2097 = vcvt.s32.f32 %v1841
          %v2098 = vcvt.s32.f32 %v1842
          %v2099 = vcvt.s32.f32 %v1843
          %v2100 = vcvt.s32.f32 %v1844
          %v2101 = vcvt.s32.f32 %v1845
          %v2102 = vcvt.s32.f32 %v1846
          %v2103 = vcvt.s32.f32 %v1847
          %v2104 = vcvt.s32.f32 %v1848
          %v2105 = vcvt.s32.f32 %v1849
          %v2106 = vcvt.s32.f32 %v1850
          %v2107 = vcvt.s32.f32 %v1851
          %v2108 = vcvt.s32.f32 %v1852
          %v2109 = vcvt.s32.f32 %v1853
          %v2110 = vcvt.s32.f32 %v1854
          %v2111 = vcvt.s32.f32 %v1855
          %v2112 = vcvt.s32.f32 %v1856
          %v2113 = vcvt.s32.f32 %v1857
          %v2114 = vcvt.s32.f32 %v1858
          %v2115 = vcvt.s32.f32 %v1859
          %v2116 = vcvt.s32.f32 %v1860
          %v2117 = vcvt.s32.f32 %v1861
          %v2118 = vcvt.s32.f32 %v1862
          %v2119 = vcvt.s32.f32 %v1863
          %v2120 = vcvt.s32.f32 %v1864
          %v2121 = vcvt.s32.f32 %v1865
          %v2122 = vcvt.s32.f32 %v1866
          %v2123 = vcvt.s32.f32 %v1867
          %v2124 = vcvt.s32.f32 %v1868
          %v2125 = vcvt.s32.f32 %v1869
          %v2126 = vcvt.s32.f32 %v1870
          %v2127 = vcvt.s32.f32 %v1871
          %v2128 = vcvt.s32.f32 %v1872
          %v2129 = vcvt.s32.f32 %v1873
          %v2130 = vcvt.s32.f32 %v1874
          %v2131 = vcvt.s32.f32 %v1875
          %v2132 = vcvt.s32.f32 %v1876
          %v2133 = vcvt.s32.f32 %v1877
          %v2134 = vcvt.s32.f32 %v1878
          %v2135 = vcvt.s32.f32 %v1879
          %v2136 = vcvt.s32.f32 %v1880
          %v2137 = vcvt.s32.f32 %v1881
          %v2138 = vcvt.s32.f32 %v1882
          %v2139 = vcvt.s32.f32 %v1883
          %v2140 = vcvt.s32.f32 %v1884
          %v2141 = vcvt.s32.f32 %v1885
          %v2142 = vcvt.s32.f32 %v1886
          %v2143 = vcvt.s32.f32 %v1887
          %v2144 = vcvt.s32.f32 %v1888
          %v2145 = vcvt.s32.f32 %v1889
          %v2146 = vcvt.s32.f32 %v1890
          %v2147 = vcvt.s32.f32 %v1891
          %v2148 = vcvt.s32.f32 %v1892
          %v2149 = vcvt.s32.f32 %v1893
          %v2150 = vcvt.s32.f32 %v1894
          %v2151 = vcvt.s32.f32 %v1895
          %v2152 = vcvt.s32.f32 %v1896
          %v2153 = vcvt.s32.f32 %v1897
          %v2154 = vcvt.s32.f32 %v1898
          %v2155 = vcvt.s32.f32 %v1899
          %v2156 = vcvt.s32.f32 %v1900
          %v2157 = vcvt.s32.f32 %v1901
          %v2158 = vcvt.s32.f32 %v1902
          %v2159 = vcvt.s32.f32 %v1903
          %v2160 = vcvt.s32.f32 %v1904
          %v2161 = vcvt.s32.f32 %v1905
          %v2162 = vcvt.s32.f32 %v1906
          %v2163 = vcvt.s32.f32 %v1907
          %v2164 = vcvt.s32.f32 %v1908
          %v2165 = vcvt.s32.f32 %v1909
          %v2166 = vcvt.s32.f32 %v1910
          %v2167 = vcvt.s32.f32 %v1911
          %v2168 = vcvt.s32.f32 %v1912
          %v2169 = vcvt.s32.f32 %v1913
          %v2170 = vcvt.s32.f32 %v1914
          %v2171 = vcvt.s32.f32 %v1915
          %v2172 = vcvt.s32.f32 %v1916
          %v2173 = vcvt.s32.f32 %v1917
          %v2174 = vcvt.s32.f32 %v1918
          %v2175 = vcvt.s32.f32 %v1919
          %v2176 = vcvt.s32.f32 %v1920
          %v2177 = vcvt.s32.f32 %v1921
          %v2178 = vcvt.s32.f32 %v1922
          %v2179 = vcvt.s32.f32 %v1923
          %v2180 = vcvt.s32.f32 %v1924
          %v2181 = vcvt.s32.f32 %v1925
          %v2182 = vcvt.s32.f32 %v1926
          %v2183 = vcvt.s32.f32 %v1927
          %v2184 = vcvt.s32.f32 %v1928
          %v2185 = vcvt.s32.f32 %v1929
          %v2186 = vcvt.s32.f32 %v1930
          %v2187 = vcvt.s32.f32 %v1931
          %v2188 = vcvt.s32.f32 %v1932
          %v2189 = vcvt.s32.f32 %v1933
          %v2190 = vcvt.s32.f32 %v1934
          %v2191 = vcvt.s32.f32 %v1935
          %v2192 = vcvt.s32.f32 %v1936
          %v2193 = vcvt.s32.f32 %v1937
          %v2194 = vcvt.s32.f32 %v1938
          %v2195 = vcvt.s32.f32 %v1939
          %v2196 = vcvt.s32.f32 %v1940
          %v2197 = vcvt.s32.f32 %v1941
          %v2198 = vcvt.s32.f32 %v1942
          %v2199 = vcvt.s32.f32 %v1943
          %v2200 = vcvt.s32.f32 %v1944
          %v2201 = vcvt.s32.f32 %v1945
          %v2202 = vcvt.s32.f32 %v1946
          %v2203 = vcvt.s32.f32 %v1947
          %v2204 = vcvt.s32.f32 %v1948
          %v2205 = vcvt.s32.f32 %v1949
          %v2206 = vcvt.s32.f32 %v1950
          %v2207 = vcvt.s32.f32 %v1951
          %v2208 = vcvt.s32.f32 %v1952
          %v2209 = vcvt.s32.f32 %v1953
          %v2210 = vcvt.s32.f32 %v1954
          %v2211 = vcvt.s32.f32 %v1955
          %v2212 = vcvt.s32.f32 %v1956
          %v2213 = vcvt.s32.f32 %v1957
          %v2214 = vcvt.s32.f32 %v1958
          %v2215 = vcvt.s32.f32 %v1959
          %v2216 = vcvt.s32.f32 %v1960
          %v2217 = vcvt.s32.f32 %v1961
          %v2218 = vcvt.s32.f32 %v1962
          %v2219 = vcvt.s32.f32 %v1963
          %v2220 = vcvt.s32.f32 %v1964
          %v2221 = vcvt.s32.f32 %v1965
          %v2222 = vcvt.s32.f32 %v1966
          %v2223 = vcvt.s32.f32 %v1967
          %v2224 = vcvt.s32.f32 %v1968
          %v2225 = vcvt.s32.f32 %v1969
          %v2226 = vcvt.s32.f32 %v1970
          %v2227 = vcvt.s32.f32 %v1971
          %v2228 = vcvt.s32.f32 %v1972
          %v2229 = vcvt.s32.f32 %v1973
          %v2230 = vcvt.s32.f32 %v1974
          %v2231 = vcvt.s32.f32 %v1975
          %v2232 = vcvt.s32.f32 %v1976
          %v2233 = vcvt.s32.f32 %v1977
          %v2234 = vcvt.s32.f32 %v1978
          %v2235 = vcvt.s32.f32 %v1979
          %v2236 = vcvt.s32.f32 %v1980
          %v2237 = vcvt.s32.f32 %v1981
          %v2238 = vcvt.s32.f32 %v1982
          %v2239 = vcvt.s32.f32 %v1983
          %v2240 = vcvt.s32.f32 %v1984
          %v2241 = vcvt.s32.f32 %v1985
          %v2242 = vcvt.s32.f32 %v1986
          %v2243 = vcvt.s32.f32 %v1987
          %v2244 = vcvt.s32.f32 %v1988
          %v2245 = vcvt.s32.f32 %v1989
          %v2246 = vcvt.s32.f32 %v1990
          %v2247 = vcvt.s32.f32 %v1991
          %v2248 = vcvt.s32.f32 %v1992
          %v2249 = vcvt.s32.f32 %v1993
          %v2250 = vcvt.s32.f32 %v1994
          %v2251 = vcvt.s32.f32 %v1995
          %v2252 = vcvt.s32.f32 %v1996
          %v2253 = vcvt.s32.f32 %v1997
          %v2254 = vcvt.s32.f32 %v1998
          %v2255 = vcvt.s32.f32 %v1999
          %v2256 = vcvt.s32.f32 %v2000
          %v2257 = vcvt.s32.f32 %v2001
          %v2258 = vcvt.s32.f32 %v2002
          %v2259 = vcvt.s32.f32 %v2003
          %v2260 = vcvt.s32.f32 %v2004
          %v2261 = vcvt.s32.f32 %v2005
          %v2262 = vcvt.s32.f32 %v2006
          %v2263 = vcvt.s32.f32 %v2007
          %v2264 = vcvt.s32.f32 %v2008
          %v2265 = vcvt.s32.f32 %v2009
          %v2266 = vcvt.s32.f32 %v2010
          %v2267 = vcvt.s32.f32 %v2011
          %v2268 = vcvt.s32.f32 %v2012
          %v2269 = vcvt.s32.f32 %v2013
          %v2270 = vcvt.s32.f32 %v2014
          %v2271 = vcvt.s32.f32 %v2015
          %v2272 = vcvt.s32.f32 %v2016
          %v2273 = vld [vmem:[#allocation2] sm:$0xff]
          %v2274 = vld [vmem:[#allocation2 + $0x8] sm:$0xff]
          %v2275 = vld [vmem:[#allocation2 + $0x10] sm:$0xff]
          %v2276 = vld [vmem:[#allocation2 + $0x18] sm:$0xff]
          %v2277 = vld [vmem:[#allocation2 + $0x20] sm:$0xff]
          %v2278 = vld [vmem:[#allocation2 + $0x28] sm:$0xff]
          %v2279 = vld [vmem:[#allocation2 + $0x30] sm:$0xff]
          %v2280 = vld [vmem:[#allocation2 + $0x38] sm:$0xff]
          %v2281 = vld [vmem:[#allocation2 + $0x40] sm:$0xff]
          %v2282 = vld [vmem:[#allocation2 + $0x48] sm:$0xff]
          %v2283 = vld [vmem:[#allocation2 + $0x50] sm:$0xff]
          %v2284 = vld [vmem:[#allocation2 + $0x58] sm:$0xff]
          %v2285 = vld [vmem:[#allocation2 + $0x60] sm:$0xff]
          %v2286 = vld [vmem:[#allocation2 + $0x68] sm:$0xff]
          %v2287 = vld [vmem:[#allocation2 + $0x70] sm:$0xff]
          %v2288 = vld [vmem:[#allocation2 + $0x78] sm:$0xff]
          %v2289 = vld [vmem:[#allocation2 + $0x80] sm:$0xff]
          %v2290 = vld [vmem:[#allocation2 + $0x88] sm:$0xff]
          %v2291 = vld [vmem:[#allocation2 + $0x90] sm:$0xff]
          %v2292 = vld [vmem:[#allocation2 + $0x98] sm:$0xff]
          %v2293 = vld [vmem:[#allocation2 + $0xa0] sm:$0xff]
          %v2294 = vld [vmem:[#allocation2 + $0xa8] sm:$0xff]
          %v2295 = vld [vmem:[#allocation2 + $0xb0] sm:$0xff]
          %v2296 = vld [vmem:[#allocation2 + $0xb8] sm:$0xff]
          %v2297 = vld [vmem:[#allocation2 + $0xc0] sm:$0xff]
          %v2298 = vld [vmem:[#allocation2 + $0xc8] sm:$0xff]
          %v2299 = vld [vmem:[#allocation2 + $0xd0] sm:$0xff]
          %v2300 = vld [vmem:[#allocation2 + $0xd8] sm:$0xff]
          %v2301 = vld [vmem:[#allocation2 + $0xe0] sm:$0xff]
          %v2302 = vld [vmem:[#allocation2 + $0xe8] sm:$0xff]
          %v2303 = vld [vmem:[#allocation2 + $0xf0] sm:$0xff]
          %v2304 = vld [vmem:[#allocation2 + $0xf8] sm:$0xff]
          %v2305 = vld [vmem:[#allocation2 + $0x100] sm:$0xff]
          %v2306 = vld [vmem:[#allocation2 + $0x108] sm:$0xff]
          %v2307 = vld [vmem:[#allocation2 + $0x110] sm:$0xff]
          %v2308 = vld [vmem:[#allocation2 + $0x118] sm:$0xff]
          %v2309 = vld [vmem:[#allocation2 + $0x120] sm:$0xff]
          %v2310 = vld [vmem:[#allocation2 + $0x128] sm:$0xff]
          %v2311 = vld [vmem:[#allocation2 + $0x130] sm:$0xff]
          %v2312 = vld [vmem:[#allocation2 + $0x138] sm:$0xff]
          %v2313 = vld [vmem:[#allocation2 + $0x140] sm:$0xff]
          %v2314 = vld [vmem:[#allocation2 + $0x148] sm:$0xff]
          %v2315 = vld [vmem:[#allocation2 + $0x150] sm:$0xff]
          %v2316 = vld [vmem:[#allocation2 + $0x158] sm:$0xff]
          %v2317 = vld [vmem:[#allocation2 + $0x160] sm:$0xff]
          %v2318 = vld [vmem:[#allocation2 + $0x168] sm:$0xff]
          %v2319 = vld [vmem:[#allocation2 + $0x170] sm:$0xff]
          %v2320 = vld [vmem:[#allocation2 + $0x178] sm:$0xff]
          %v2321 = vld [vmem:[#allocation2 + $0x180] sm:$0xff]
          %v2322 = vld [vmem:[#allocation2 + $0x188] sm:$0xff]
          %v2323 = vld [vmem:[#allocation2 + $0x190] sm:$0xff]
          %v2324 = vld [vmem:[#allocation2 + $0x198] sm:$0xff]
          %v2325 = vld [vmem:[#allocation2 + $0x1a0] sm:$0xff]
          %v2326 = vld [vmem:[#allocation2 + $0x1a8] sm:$0xff]
          %v2327 = vld [vmem:[#allocation2 + $0x1b0] sm:$0xff]
          %v2328 = vld [vmem:[#allocation2 + $0x1b8] sm:$0xff]
          %v2329 = vld [vmem:[#allocation2 + $0x1c0] sm:$0xff]
          %v2330 = vld [vmem:[#allocation2 + $0x1c8] sm:$0xff]
          %v2331 = vld [vmem:[#allocation2 + $0x1d0] sm:$0xff]
          %v2332 = vld [vmem:[#allocation2 + $0x1d8] sm:$0xff]
          %v2333 = vld [vmem:[#allocation2 + $0x1e0] sm:$0xff]
          %v2334 = vld [vmem:[#allocation2 + $0x1e8] sm:$0xff]
          %v2335 = vld [vmem:[#allocation2 + $0x1f0] sm:$0xff]
          %v2336 = vld [vmem:[#allocation2 + $0x1f8] sm:$0xff]
          %v2337 = vld [vmem:[%s985] sm:$0xff]
          %v2338 = vld [vmem:[%s985 + $0x8] sm:$0xff]
          %v2339 = vld [vmem:[%s985 + $0x10] sm:$0xff]
          %v2340 = vld [vmem:[%s985 + $0x18] sm:$0xff]
          %v2341 = vld [vmem:[%s985 + $0x20] sm:$0xff]
          %v2342 = vld [vmem:[%s985 + $0x28] sm:$0xff]
          %v2343 = vld [vmem:[%s985 + $0x30] sm:$0xff]
          %v2344 = vld [vmem:[%s985 + $0x38] sm:$0xff]
          %v2345 = vld [vmem:[%s985 + $0x40] sm:$0xff]
          %v2346 = vld [vmem:[%s985 + $0x48] sm:$0xff]
          %v2347 = vld [vmem:[%s985 + $0x50] sm:$0xff]
          %v2348 = vld [vmem:[%s985 + $0x58] sm:$0xff]
          %v2349 = vld [vmem:[%s985 + $0x60] sm:$0xff]
          %v2350 = vld [vmem:[%s985 + $0x68] sm:$0xff]
          %v2351 = vld [vmem:[%s985 + $0x70] sm:$0xff]
          %v2352 = vld [vmem:[%s985 + $0x78] sm:$0xff]
          %v2353 = vld [vmem:[%s985 + $0x80] sm:$0xff]
          %v2354 = vld [vmem:[%s985 + $0x88] sm:$0xff]
          %v2355 = vld [vmem:[%s985 + $0x90] sm:$0xff]
          %v2356 = vld [vmem:[%s985 + $0x98] sm:$0xff]
          %v2357 = vld [vmem:[%s985 + $0xa0] sm:$0xff]
          %v2358 = vld [vmem:[%s985 + $0xa8] sm:$0xff]
          %v2359 = vld [vmem:[%s985 + $0xb0] sm:$0xff]
          %v2360 = vld [vmem:[%s985 + $0xb8] sm:$0xff]
          %v2361 = vld [vmem:[%s985 + $0xc0] sm:$0xff]
          %v2362 = vld [vmem:[%s985 + $0xc8] sm:$0xff]
          %v2363 = vld [vmem:[%s985 + $0xd0] sm:$0xff]
          %v2364 = vld [vmem:[%s985 + $0xd8] sm:$0xff]
          %v2365 = vld [vmem:[%s985 + $0xe0] sm:$0xff]
          %v2366 = vld [vmem:[%s985 + $0xe8] sm:$0xff]
          %v2367 = vld [vmem:[%s985 + $0xf0] sm:$0xff]
          %v2368 = vld [vmem:[%s985 + $0xf8] sm:$0xff]
          %v2369 = vld [vmem:[%s985 + $0x100] sm:$0xff]
          %v2370 = vld [vmem:[%s985 + $0x108] sm:$0xff]
          %v2371 = vld [vmem:[%s985 + $0x110] sm:$0xff]
          %v2372 = vld [vmem:[%s985 + $0x118] sm:$0xff]
          %v2373 = vld [vmem:[%s985 + $0x120] sm:$0xff]
          %v2374 = vld [vmem:[%s985 + $0x128] sm:$0xff]
          %v2375 = vld [vmem:[%s985 + $0x130] sm:$0xff]
          %v2376 = vld [vmem:[%s985 + $0x138] sm:$0xff]
          %v2377 = vld [vmem:[%s985 + $0x140] sm:$0xff]
          %v2378 = vld [vmem:[%s985 + $0x148] sm:$0xff]
          %v2379 = vld [vmem:[%s985 + $0x150] sm:$0xff]
          %v2380 = vld [vmem:[%s985 + $0x158] sm:$0xff]
          %v2381 = vld [vmem:[%s985 + $0x160] sm:$0xff]
          %v2382 = vld [vmem:[%s985 + $0x168] sm:$0xff]
          %v2383 = vld [vmem:[%s985 + $0x170] sm:$0xff]
          %v2384 = vld [vmem:[%s985 + $0x178] sm:$0xff]
          %v2385 = vld [vmem:[%s985 + $0x180] sm:$0xff]
          %v2386 = vld [vmem:[%s985 + $0x188] sm:$0xff]
          %v2387 = vld [vmem:[%s985 + $0x190] sm:$0xff]
          %v2388 = vld [vmem:[%s985 + $0x198] sm:$0xff]
          %v2389 = vld [vmem:[%s985 + $0x1a0] sm:$0xff]
          %v2390 = vld [vmem:[%s985 + $0x1a8] sm:$0xff]
          %v2391 = vld [vmem:[%s985 + $0x1b0] sm:$0xff]
          %v2392 = vld [vmem:[%s985 + $0x1b8] sm:$0xff]
          %v2393 = vld [vmem:[%s985 + $0x1c0] sm:$0xff]
          %v2394 = vld [vmem:[%s985 + $0x1c8] sm:$0xff]
          %v2395 = vld [vmem:[%s985 + $0x1d0] sm:$0xff]
          %v2396 = vld [vmem:[%s985 + $0x1d8] sm:$0xff]
          %v2397 = vld [vmem:[%s985 + $0x1e0] sm:$0xff]
          %v2398 = vld [vmem:[%s985 + $0x1e8] sm:$0xff]
          %v2399 = vld [vmem:[%s985 + $0x1f0] sm:$0xff]
          %v2400 = vld [vmem:[%s985 + $0x1f8] sm:$0xff]
          %2401 = vmatprep.subr.mxu0 0.0
          %2402 = vmatpush1.msra.mxu0 %v2337
          %2403 = vmatprep.subr.mxu0 0.0
          %2404 = vmatpush1.msra.mxu0 %v2338
          %2405 = vmatprep.subr.mxu0 0.0
          %2406 = vmatpush1.msra.mxu0 %v2339
          %2407 = vmatprep.subr.mxu0 0.0
          %2408 = vmatpush1.msra.mxu0 %v2340
          %2409 = vmatprep.subr.mxu0 0.0
          %2410 = vmatpush1.msra.mxu0 %v2341
          %2411 = vmatprep.subr.mxu0 0.0
          %2412 = vmatpush1.msra.mxu0 %v2342
          %2413 = vmatprep.subr.mxu0 0.0
          %2414 = vmatpush1.msra.mxu0 %v2343
          %2415 = vmatprep.subr.mxu0 0.0
          %2416 = vmatpush1.msra.mxu0 %v2344
          %2417 = vmatprep.subr.mxu0 0.0
          %2418 = vmatpush1.msra.mxu0 %v2345
          %2419 = vmatprep.subr.mxu0 0.0
          %2420 = vmatpush1.msra.mxu0 %v2346
          %2421 = vmatprep.subr.mxu0 0.0
          %2422 = vmatpush1.msra.mxu0 %v2347
          %2423 = vmatprep.subr.mxu0 0.0
          %2424 = vmatpush1.msra.mxu0 %v2348
          %2425 = vmatprep.subr.mxu0 0.0
          %2426 = vmatpush1.msra.mxu0 %v2349
          %2427 = vmatprep.subr.mxu0 0.0
          %2428 = vmatpush1.msra.mxu0 %v2350
          %2429 = vmatprep.subr.mxu0 0.0
          %2430 = vmatpush1.msra.mxu0 %v2351
          %2431 = vmatprep.subr.mxu0 0.0
          %2432 = vmatpush1.msra.mxu0 %v2352
          %2433 = vmatprep.subr.mxu0 0.0
          %2434 = vmatpush1.msra.mxu0 %v2353
          %2435 = vmatprep.subr.mxu0 0.0
          %2436 = vmatpush1.msra.mxu0 %v2354
          %2437 = vmatprep.subr.mxu0 0.0
          %2438 = vmatpush1.msra.mxu0 %v2355
          %2439 = vmatprep.subr.mxu0 0.0
          %2440 = vmatpush1.msra.mxu0 %v2356
          %2441 = vmatprep.subr.mxu0 0.0
          %2442 = vmatpush1.msra.mxu0 %v2357
          %2443 = vmatprep.subr.mxu0 0.0
          %2444 = vmatpush1.msra.mxu0 %v2358
          %2445 = vmatprep.subr.mxu0 0.0
          %2446 = vmatpush1.msra.mxu0 %v2359
          %2447 = vmatprep.subr.mxu0 0.0
          %2448 = vmatpush1.msra.mxu0 %v2360
          %2449 = vmatprep.subr.mxu0 0.0
          %2450 = vmatpush1.msra.mxu0 %v2361
          %2451 = vmatprep.subr.mxu0 0.0
          %2452 = vmatpush1.msra.mxu0 %v2362
          %2453 = vmatprep.subr.mxu0 0.0
          %2454 = vmatpush1.msra.mxu0 %v2363
          %2455 = vmatprep.subr.mxu0 0.0
          %2456 = vmatpush1.msra.mxu0 %v2364
          %2457 = vmatprep.subr.mxu0 0.0
          %2458 = vmatpush1.msra.mxu0 %v2365
          %2459 = vmatprep.subr.mxu0 0.0
          %2460 = vmatpush1.msra.mxu0 %v2366
          %2461 = vmatprep.subr.mxu0 0.0
          %2462 = vmatpush1.msra.mxu0 %v2367
          %2463 = vmatprep.subr.mxu0 0.0
          %2464 = vmatpush1.msra.mxu0 %v2368
          %2465 = vmatprep.mubr.f32.mxu0 %v2018
          %2466 = vmatmul.mubr.f32.gmra.mrb[0].mxu0 %v2017
          %v2467 = vpop.f32.mrb[0].mxu0
          %v2468 = vadd.f32 0.0, %v2467
          %v2469 = vpop.f32.mrb[0].mxu0
          %2470 = vmatprep.mubr.f32.mxu0 %v2022
          %2471 = vmatmul.mubr.f32.gmra.mrb[0].mxu0 %v2021
          %v2472 = vpop.f32.mrb[0].mxu0
          %v2473 = vadd.f32 0.0, %v2472
          %v2474 = vpop.f32.mrb[0].mxu0
          %2475 = vmatprep.mubr.f32.mxu0 %v2026
          %2476 = vmatmul.mubr.f32.gmra.mrb[0].mxu0 %v2025
          %v2477 = vpop.f32.mrb[0].mxu0
          %v2478 = vadd.f32 0.0, %v2477
          %v2479 = vpop.f32.mrb[0].mxu0
          %2480 = vmatprep.mubr.f32.mxu0 %v2030
          %2481 = vmatmul.mubr.f32.gmra.mrb[0].mxu0 %v2029
          %v2482 = vpop.f32.mrb[0].mxu0
          %v2483 = vadd.f32 0.0, %v2482
          %v2484 = vpop.f32.mrb[0].mxu0
          %2485 = vmatprep.mubr.f32.mxu0 %v2034
          %2486 = vmatmul.mubr.f32.gmra.mrb[0].mxu0 %v2033
          %v2487 = vpop.f32.mrb[0].mxu0
          %v2488 = vadd.f32 0.0, %v2487
          %v2489 = vpop.f32.mrb[0].mxu0
          %2490 = vmatprep.mubr.f32.mxu0 %v2038
          %2491 = vmatmul.mubr.f32.gmra.mrb[0].mxu0 %v2037
          %v2492 = vpop.f32.mrb[0].mxu0
          %v2493 = vadd.f32 0.0, %v2492
          %v2494 = vpop.f32.mrb[0].mxu0
          %2495 = vmatprep.mubr.f32.mxu0 %v2042
          %2496 = vmatmul.mubr.f32.gmra.mrb[0].mxu0 %v2041
          %v2497 = vpop.f32.mrb[0].mxu0
          %v2498 = vadd.f32 0.0, %v2497
          %v2499 = vpop.f32.mrb[0].mxu0
          %2500 = vmatprep.mubr.f32.mxu0 %v2046
          %2501 = vmatmul.mubr.f32.gmra.mrb[0].mxu0 %v2045
          %v2502 = vpop.f32.mrb[0].mxu0
          %v2503 = vadd.f32 0.0, %v2502
          %v2504 = vpop.f32.mrb[0].mxu0
          %2505 = vmatprep.mubr.f32.mxu0 %v2050
          %2506 = vmatmul.mubr.f32.gmra.mrb[0].mxu0 %v2049
          %v2507 = vpop.f32.mrb[0].mxu0
          %v2508 = vadd.f32 0.0, %v2507
          %v2509 = vpop.f32.mrb[0].mxu0
          %2510 = vmatprep.mubr.f32.mxu0 %v2054
          %2511 = vmatmul.mubr.f32.gmra.mrb[0].mxu0 %v2053
          %v2512 = vpop.f32.mrb[0].mxu0
          %v2513 = vadd.f32 0.0, %v2512
          %v2514 = vpop.f32.mrb[0].mxu0
          %2515 = vmatprep.mubr.f32.mxu0 %v2058
          %2516 = vmatmul.mubr.f32.gmra.mrb[0].mxu0 %v2057
          %v2517 = vpop.f32.mrb[0].mxu0
          %v2518 = vadd.f32 0.0, %v2517
          %v2519 = vpop.f32.mrb[0].mxu0
          %2520 = vmatprep.mubr.f32.mxu0 %v2062
          %2521 = vmatmul.mubr.f32.gmra.mrb[0].mxu0 %v2061
          %v2522 = vpop.f32.mrb[0].mxu0
          %v2523 = vadd.f32 0.0, %v2522
          %v2524 = vpop.f32.mrb[0].mxu0
          %2525 = vmatprep.mubr.f32.mxu0 %v2066
          %2526 = vmatmul.mubr.f32.gmra.mrb[0].mxu0 %v2065
          %v2527 = vpop.f32.mrb[0].mxu0
          %v2528 = vadd.f32 0.0, %v2527
          %v2529 = vpop.f32.mrb[0].mxu0
          %2530 = vmatprep.mubr.f32.mxu0 %v2070
          %2531 = vmatmul.mubr.f32.gmra.mrb[0].mxu0 %v2069
          %v2532 = vpop.f32.mrb[0].mxu0
          %v2533 = vadd.f32 0.0, %v2532
          %v2534 = vpop.f32.mrb[0].mxu0
          %2535 = vmatprep.mubr.f32.mxu0 %v2074
          %2536 = vmatmul.mubr.f32.gmra.mrb[0].mxu0 %v2073
          %v2537 = vpop.f32.mrb[0].mxu0
          %v2538 = vadd.f32 0.0, %v2537
          %v2539 = vpop.f32.mrb[0].mxu0
          %2540 = vmatprep.mubr.f32.mxu0 %v2078
          %2541 = vmatmul.mubr.f32.gmra.mrb[0].mxu0 %v2077
          %v2542 = vpop.f32.mrb[0].mxu0
          %v2543 = vadd.f32 0.0, %v2542
          %v2544 = vpop.f32.mrb[0].mxu0
          %2545 = vmatprep.mubr.f32.mxu0 %v2082
          %2546 = vmatmul.mubr.f32.gmra.mrb[0].mxu0 %v2081
          %v2547 = vpop.f32.mrb[0].mxu0
          %v2548 = vadd.f32 0.0, %v2547
          %v2549 = vpop.f32.mrb[0].mxu0
          %2550 = vmatprep.mubr.f32.mxu0 %v2086
          %2551 = vmatmul.mubr.f32.gmra.mrb[0].mxu0 %v2085
          %v2552 = vpop.f32.mrb[0].mxu0
          %v2553 = vadd.f32 0.0, %v2552
          %v2554 = vpop.f32.mrb[0].mxu0
          %2555 = vmatprep.mubr.f32.mxu0 %v2090
          %2556 = vmatmul.mubr.f32.gmra.mrb[0].mxu0 %v2089
          %v2557 = vpop.f32.mrb[0].mxu0
          %v2558 = vadd.f32 0.0, %v2557
          %v2559 = vpop.f32.mrb[0].mxu0
          %2560 = vmatprep.mubr.f32.mxu0 %v2094
          %2561 = vmatmul.mubr.f32.gmra.mrb[0].mxu0 %v2093
          %v2562 = vpop.f32.mrb[0].mxu0
          %v2563 = vadd.f32 0.0, %v2562
          %v2564 = vpop.f32.mrb[0].mxu0
          %2565 = vmatprep.mubr.f32.mxu0 %v2098
          %2566 = vmatmul.mubr.f32.gmra.mrb[0].mxu0 %v2097
          %v2567 = vpop.f32.mrb[0].mxu0
          %v2568 = vadd.f32 0.0, %v2567
          %v2569 = vpop.f32.mrb[0].mxu0
          %2570 = vmatprep.mubr.f32.mxu0 %v2102
          %2571 = vmatmul.mubr.f32.gmra.mrb[0].mxu0 %v2101
          %v2572 = vpop.f32.mrb[0].mxu0
          %v2573 = vadd.f32 0.0, %v2572
          %v2574 = vpop.f32.mrb[0].mxu0
          %2575 = vmatprep.mubr.f32.mxu0 %v2106
          %2576 = vmatmul.mubr.f32.gmra.mrb[0].mxu0 %v2105
          %v2577 = vpop.f32.mrb[0].mxu0
          %v2578 = vadd.f32 0.0, %v2577
          %v2579 = vpop.f32.mrb[0].mxu0
          %2580 = vmatprep.mubr.f32.mxu0 %v2110
          %2581 = vmatmul.mubr.f32.gmra.mrb[0].mxu0 %v2109
          %v2582 = vpop.f32.mrb[0].mxu0
          %v2583 = vadd.f32 0.0, %v2582
          %v2584 = vpop.f32.mrb[0].mxu0
          %2585 = vmatprep.mubr.f32.mxu0 %v2114
          %2586 = vmatmul.mubr.f32.gmra.mrb[0].mxu0 %v2113
          %v2587 = vpop.f32.mrb[0].mxu0
          %v2588 = vadd.f32 0.0, %v2587
          %v2589 = vpop.f32.mrb[0].mxu0
          %2590 = vmatprep.mubr.f32.mxu0 %v2118
          %2591 = vmatmul.mubr.f32.gmra.mrb[0].mxu0 %v2117
          %v2592 = vpop.f32.mrb[0].mxu0
          %v2593 = vadd.f32 0.0, %v2592
          %v2594 = vpop.f32.mrb[0].mxu0
          %2595 = vmatprep.mubr.f32.mxu0 %v2122
          %2596 = vmatmul.mubr.f32.gmra.mrb[0].mxu0 %v2121
          %v2597 = vpop.f32.mrb[0].mxu0
          %v2598 = vadd.f32 0.0, %v2597
          %v2599 = vpop.f32.mrb[0].mxu0
          %2600 = vmatprep.mubr.f32.mxu0 %v2126
          %2601 = vmatmul.mubr.f32.gmra.mrb[0].mxu0 %v2125
          %v2602 = vpop.f32.mrb[0].mxu0
          %v2603 = vadd.f32 0.0, %v2602
          %v2604 = vpop.f32.mrb[0].mxu0
          %2605 = vmatprep.mubr.f32.mxu0 %v2130
          %2606 = vmatmul.mubr.f32.gmra.mrb[0].mxu0 %v2129
          %v2607 = vpop.f32.mrb[0].mxu0
          %v2608 = vadd.f32 0.0, %v2607
          %v2609 = vpop.f32.mrb[0].mxu0
          %2610 = vmatprep.mubr.f32.mxu0 %v2134
          %2611 = vmatmul.mubr.f32.gmra.mrb[0].mxu0 %v2133
          %v2612 = vpop.f32.mrb[0].mxu0
          %v2613 = vadd.f32 0.0, %v2612
          %v2614 = vpop.f32.mrb[0].mxu0
          %2615 = vmatprep.mubr.f32.mxu0 %v2138
          %2616 = vmatmul.mubr.f32.gmra.mrb[0].mxu0 %v2137
          %v2617 = vpop.f32.mrb[0].mxu0
          %v2618 = vadd.f32 0.0, %v2617
          %v2619 = vpop.f32.mrb[0].mxu0
          %2620 = vmatprep.mubr.f32.mxu0 %v2142
          %2621 = vmatmul.mubr.f32.gmra.mrb[0].mxu0 %v2141
          %v2622 = vpop.f32.mrb[0].mxu0
          %v2623 = vadd.f32 0.0, %v2622
          %v2624 = vpop.f32.mrb[0].mxu0
          %2625 = vmatprep.mubr.f32.mxu0 %v2146
          %2626 = vmatmul.mubr.f32.gmra.mrb[0].mxu0 %v2145
          %v2627 = vpop.f32.mrb[0].mxu0
          %v2628 = vadd.f32 0.0, %v2627
          %v2629 = vpop.f32.mrb[0].mxu0
          %2630 = vmatprep.mubr.f32.mxu0 %v2150
          %2631 = vmatmul.mubr.f32.gmra.mrb[0].mxu0 %v2149
          %v2632 = vpop.f32.mrb[0].mxu0
          %v2633 = vadd.f32 0.0, %v2632
          %v2634 = vpop.f32.mrb[0].mxu0
          %2635 = vmatprep.mubr.f32.mxu0 %v2154
          %2636 = vmatmul.mubr.f32.gmra.mrb[0].mxu0 %v2153
          %v2637 = vpop.f32.mrb[0].mxu0
          %v2638 = vadd.f32 0.0, %v2637
          %v2639 = vpop.f32.mrb[0].mxu0
          %2640 = vmatprep.mubr.f32.mxu0 %v2158
          %2641 = vmatmul.mubr.f32.gmra.mrb[0].mxu0 %v2157
          %v2642 = vpop.f32.mrb[0].mxu0
          %v2643 = vadd.f32 0.0, %v2642
          %v2644 = vpop.f32.mrb[0].mxu0
          %2645 = vmatprep.mubr.f32.mxu0 %v2162
          %2646 = vmatmul.mubr.f32.gmra.mrb[0].mxu0 %v2161
          %v2647 = vpop.f32.mrb[0].mxu0
          %v2648 = vadd.f32 0.0, %v2647
          %v2649 = vpop.f32.mrb[0].mxu0
          %2650 = vmatprep.mubr.f32.mxu0 %v2166
          %2651 = vmatmul.mubr.f32.gmra.mrb[0].mxu0 %v2165
          %v2652 = vpop.f32.mrb[0].mxu0
          %v2653 = vadd.f32 0.0, %v2652
          %v2654 = vpop.f32.mrb[0].mxu0
          %2655 = vmatprep.mubr.f32.mxu0 %v2170
          %2656 = vmatmul.mubr.f32.gmra.mrb[0].mxu0 %v2169
          %v2657 = vpop.f32.mrb[0].mxu0
          %v2658 = vadd.f32 0.0, %v2657
          %v2659 = vpop.f32.mrb[0].mxu0
          %2660 = vmatprep.mubr.f32.mxu0 %v2174
          %2661 = vmatmul.mubr.f32.gmra.mrb[0].mxu0 %v2173
          %v2662 = vpop.f32.mrb[0].mxu0
          %v2663 = vadd.f32 0.0, %v2662
          %v2664 = vpop.f32.mrb[0].mxu0
          %2665 = vmatprep.mubr.f32.mxu0 %v2178
          %2666 = vmatmul.mubr.f32.gmra.mrb[0].mxu0 %v2177
          %v2667 = vpop.f32.mrb[0].mxu0
          %v2668 = vadd.f32 0.0, %v2667
          %v2669 = vpop.f32.mrb[0].mxu0
          %2670 = vmatprep.mubr.f32.mxu0 %v2182
          %2671 = vmatmul.mubr.f32.gmra.mrb[0].mxu0 %v2181
          %v2672 = vpop.f32.mrb[0].mxu0
          %v2673 = vadd.f32 0.0, %v2672
          %v2674 = vpop.f32.mrb[0].mxu0
          %2675 = vmatprep.mubr.f32.mxu0 %v2186
          %2676 = vmatmul.mubr.f32.gmra.mrb[0].mxu0 %v2185
          %v2677 = vpop.f32.mrb[0].mxu0
          %v2678 = vadd.f32 0.0, %v2677
          %v2679 = vpop.f32.mrb[0].mxu0
          %2680 = vmatprep.mubr.f32.mxu0 %v2190
          %2681 = vmatmul.mubr.f32.gmra.mrb[0].mxu0 %v2189
          %v2682 = vpop.f32.mrb[0].mxu0
          %v2683 = vadd.f32 0.0, %v2682
          %v2684 = vpop.f32.mrb[0].mxu0
          %2685 = vmatprep.mubr.f32.mxu0 %v2194
          %2686 = vmatmul.mubr.f32.gmra.mrb[0].mxu0 %v2193
          %v2687 = vpop.f32.mrb[0].mxu0
          %v2688 = vadd.f32 0.0, %v2687
          %v2689 = vpop.f32.mrb[0].mxu0
          %2690 = vmatprep.mubr.f32.mxu0 %v2198
          %2691 = vmatmul.mubr.f32.gmra.mrb[0].mxu0 %v2197
          %v2692 = vpop.f32.mrb[0].mxu0
          %v2693 = vadd.f32 0.0, %v2692
          %v2694 = vpop.f32.mrb[0].mxu0
          %2695 = vmatprep.mubr.f32.mxu0 %v2202
          %2696 = vmatmul.mubr.f32.gmra.mrb[0].mxu0 %v2201
          %v2697 = vpop.f32.mrb[0].mxu0
          %v2698 = vadd.f32 0.0, %v2697
          %v2699 = vpop.f32.mrb[0].mxu0
          %2700 = vmatprep.mubr.f32.mxu0 %v2206
          %2701 = vmatmul.mubr.f32.gmra.mrb[0].mxu0 %v2205
          %v2702 = vpop.f32.mrb[0].mxu0
          %v2703 = vadd.f32 0.0, %v2702
          %v2704 = vpop.f32.mrb[0].mxu0
          %2705 = vmatprep.mubr.f32.mxu0 %v2210
          %2706 = vmatmul.mubr.f32.gmra.mrb[0].mxu0 %v2209
          %v2707 = vpop.f32.mrb[0].mxu0
          %v2708 = vadd.f32 0.0, %v2707
          %v2709 = vpop.f32.mrb[0].mxu0
          %2710 = vmatprep.mubr.f32.mxu0 %v2214
          %2711 = vmatmul.mubr.f32.gmra.mrb[0].mxu0 %v2213
          %v2712 = vpop.f32.mrb[0].mxu0
          %v2713 = vadd.f32 0.0, %v2712
          %v2714 = vpop.f32.mrb[0].mxu0
          %2715 = vmatprep.mubr.f32.mxu0 %v2218
          %2716 = vmatmul.mubr.f32.gmra.mrb[0].mxu0 %v2217
          %v2717 = vpop.f32.mrb[0].mxu0
          %v2718 = vadd.f32 0.0, %v2717
          %v2719 = vpop.f32.mrb[0].mxu0
          %2720 = vmatprep.mubr.f32.mxu0 %v2222
          %2721 = vmatmul.mubr.f32.gmra.mrb[0].mxu0 %v2221
          %v2722 = vpop.f32.mrb[0].mxu0
          %v2723 = vadd.f32 0.0, %v2722
          %v2724 = vpop.f32.mrb[0].mxu0
          %2725 = vmatprep.mubr.f32.mxu0 %v2226
          %2726 = vmatmul.mubr.f32.gmra.mrb[0].mxu0 %v2225
          %v2727 = vpop.f32.mrb[0].mxu0
          %v2728 = vadd.f32 0.0, %v2727
          %v2729 = vpop.f32.mrb[0].mxu0
          %2730 = vmatprep.mubr.f32.mxu0 %v2230
          %2731 = vmatmul.mubr.f32.gmra.mrb[0].mxu0 %v2229
          %v2732 = vpop.f32.mrb[0].mxu0
          %v2733 = vadd.f32 0.0, %v2732
          %v2734 = vpop.f32.mrb[0].mxu0
          %2735 = vmatprep.mubr.f32.mxu0 %v2234
          %2736 = vmatmul.mubr.f32.gmra.mrb[0].mxu0 %v2233
          %v2737 = vpop.f32.mrb[0].mxu0
          %v2738 = vadd.f32 0.0, %v2737
          %v2739 = vpop.f32.mrb[0].mxu0
          %2740 = vmatprep.mubr.f32.mxu0 %v2238
          %2741 = vmatmul.mubr.f32.gmra.mrb[0].mxu0 %v2237
          %v2742 = vpop.f32.mrb[0].mxu0
          %v2743 = vadd.f32 0.0, %v2742
          %v2744 = vpop.f32.mrb[0].mxu0
          %2745 = vmatprep.mubr.f32.mxu0 %v2242
          %2746 = vmatmul.mubr.f32.gmra.mrb[0].mxu0 %v2241
          %v2747 = vpop.f32.mrb[0].mxu0
          %v2748 = vadd.f32 0.0, %v2747
          %v2749 = vpop.f32.mrb[0].mxu0
          %2750 = vmatprep.mubr.f32.mxu0 %v2246
          %2751 = vmatmul.mubr.f32.gmra.mrb[0].mxu0 %v2245
          %v2752 = vpop.f32.mrb[0].mxu0
          %v2753 = vadd.f32 0.0, %v2752
          %v2754 = vpop.f32.mrb[0].mxu0
          %2755 = vmatprep.mubr.f32.mxu0 %v2250
          %2756 = vmatmul.mubr.f32.gmra.mrb[0].mxu0 %v2249
          %v2757 = vpop.f32.mrb[0].mxu0
          %v2758 = vadd.f32 0.0, %v2757
          %v2759 = vpop.f32.mrb[0].mxu0
          %2760 = vmatprep.mubr.f32.mxu0 %v2254
          %2761 = vmatmul.mubr.f32.gmra.mrb[0].mxu0 %v2253
          %v2762 = vpop.f32.mrb[0].mxu0
          %v2763 = vadd.f32 0.0, %v2762
          %v2764 = vpop.f32.mrb[0].mxu0
          %2765 = vmatprep.mubr.f32.mxu0 %v2258
          %2766 = vmatmul.mubr.f32.gmra.mrb[0].mxu0 %v2257
          %v2767 = vpop.f32.mrb[0].mxu0
          %v2768 = vadd.f32 0.0, %v2767
          %v2769 = vpop.f32.mrb[0].mxu0
          %2770 = vmatprep.mubr.f32.mxu0 %v2262
          %2771 = vmatmul.mubr.f32.gmra.mrb[0].mxu0 %v2261
          %v2772 = vpop.f32.mrb[0].mxu0
          %v2773 = vadd.f32 0.0, %v2772
          %v2774 = vpop.f32.mrb[0].mxu0
          %2775 = vmatprep.mubr.f32.mxu0 %v2266
          %2776 = vmatmul.mubr.f32.gmra.mrb[0].mxu0 %v2265
          %v2777 = vpop.f32.mrb[0].mxu0
          %v2778 = vadd.f32 0.0, %v2777
          %v2779 = vpop.f32.mrb[0].mxu0
          %2780 = vmatprep.mubr.f32.mxu0 %v2270
          %2781 = vmatmul.mubr.f32.gmra.mrb[0].mxu0 %v2269
          %v2782 = vpop.f32.mrb[0].mxu0
          %v2783 = vadd.f32 0.0, %v2782
          %v2784 = vpop.f32.mrb[0].mxu0
          %2785 = vdwg.mxu0
          %2786 = vmatprep.subr.mxu0 0.0
          %2787 = vmatpush1.msra.mxu0 %v2369
          %2788 = vmatprep.subr.mxu0 0.0
          %2789 = vmatpush1.msra.mxu0 %v2370
          %2790 = vmatprep.subr.mxu0 0.0
          %2791 = vmatpush1.msra.mxu0 %v2371
          %2792 = vmatprep.subr.mxu0 0.0
          %2793 = vmatpush1.msra.mxu0 %v2372
          %2794 = vmatprep.subr.mxu0 0.0
          %2795 = vmatpush1.msra.mxu0 %v2373
          %2796 = vmatprep.subr.mxu0 0.0
          %2797 = vmatpush1.msra.mxu0 %v2374
          %2798 = vmatprep.subr.mxu0 0.0
          %2799 = vmatpush1.msra.mxu0 %v2375
          %2800 = vmatprep.subr.mxu0 0.0
          %2801 = vmatpush1.msra.mxu0 %v2376
          %2802 = vmatprep.subr.mxu0 0.0
          %2803 = vmatpush1.msra.mxu0 %v2377
          %2804 = vmatprep.subr.mxu0 0.0
          %2805 = vmatpush1.msra.mxu0 %v2378
          %2806 = vmatprep.subr.mxu0 0.0
          %2807 = vmatpush1.msra.mxu0 %v2379
          %2808 = vmatprep.subr.mxu0 0.0
          %2809 = vmatpush1.msra.mxu0 %v2380
          %2810 = vmatprep.subr.mxu0 0.0
          %2811 = vmatpush1.msra.mxu0 %v2381
          %2812 = vmatprep.subr.mxu0 0.0
          %2813 = vmatpush1.msra.mxu0 %v2382
          %2814 = vmatprep.subr.mxu0 0.0
          %2815 = vmatpush1.msra.mxu0 %v2383
          %2816 = vmatprep.subr.mxu0 0.0
          %2817 = vmatpush1.msra.mxu0 %v2384
          %2818 = vmatprep.subr.mxu0 0.0
          %2819 = vmatpush1.msra.mxu0 %v2385
          %2820 = vmatprep.subr.mxu0 0.0
          %2821 = vmatpush1.msra.mxu0 %v2386
          %2822 = vmatprep.subr.mxu0 0.0
          %2823 = vmatpush1.msra.mxu0 %v2387
          %2824 = vmatprep.subr.mxu0 0.0
          %2825 = vmatpush1.msra.mxu0 %v2388
          %2826 = vmatprep.subr.mxu0 0.0
          %2827 = vmatpush1.msra.mxu0 %v2389
          %2828 = vmatprep.subr.mxu0 0.0
          %2829 = vmatpush1.msra.mxu0 %v2390
          %2830 = vmatprep.subr.mxu0 0.0
          %2831 = vmatpush1.msra.mxu0 %v2391
          %2832 = vmatprep.subr.mxu0 0.0
          %2833 = vmatpush1.msra.mxu0 %v2392
          %2834 = vmatprep.subr.mxu0 0.0
          %2835 = vmatpush1.msra.mxu0 %v2393
          %2836 = vmatprep.subr.mxu0 0.0
          %2837 = vmatpush1.msra.mxu0 %v2394
          %2838 = vmatprep.subr.mxu0 0.0
          %2839 = vmatpush1.msra.mxu0 %v2395
          %2840 = vmatprep.subr.mxu0 0.0
          %2841 = vmatpush1.msra.mxu0 %v2396
          %2842 = vmatprep.subr.mxu0 0.0
          %2843 = vmatpush1.msra.mxu0 %v2397
          %2844 = vmatprep.subr.mxu0 0.0
          %2845 = vmatpush1.msra.mxu0 %v2398
          %2846 = vmatprep.subr.mxu0 0.0
          %2847 = vmatpush1.msra.mxu0 %v2399
          %2848 = vmatprep.subr.mxu0 0.0
          %2849 = vmatpush1.msra.mxu0 %v2400
          %2850 = vmatprep.mubr.f32.mxu0 %v2020
          %2851 = vmatmul.mubr.f32.gmra.mrb[0].mxu0 %v2019
          %v2852 = vpop.f32.mrb[0].mxu0
          %v2853 = vadd.f32 %v2468, %v2852
          %v2854 = vpop.f32.mrb[0].mxu0
          %2855 = vmatprep.mubr.f32.mxu0 %v2024
          %2856 = vmatmul.mubr.f32.gmra.mrb[0].mxu0 %v2023
          %v2857 = vpop.f32.mrb[0].mxu0
          %v2858 = vadd.f32 %v2473, %v2857
          %v2859 = vpop.f32.mrb[0].mxu0
          %2860 = vmatprep.mubr.f32.mxu0 %v2028
          %2861 = vmatmul.mubr.f32.gmra.mrb[0].mxu0 %v2027
          %v2862 = vpop.f32.mrb[0].mxu0
          %v2863 = vadd.f32 %v2478, %v2862
          %v2864 = vpop.f32.mrb[0].mxu0
          %2865 = vmatprep.mubr.f32.mxu0 %v2032
          %2866 = vmatmul.mubr.f32.gmra.mrb[0].mxu0 %v2031
          %v2867 = vpop.f32.mrb[0].mxu0
          %v2868 = vadd.f32 %v2483, %v2867
          %v2869 = vpop.f32.mrb[0].mxu0
          %2870 = vmatprep.mubr.f32.mxu0 %v2036
          %2871 = vmatmul.mubr.f32.gmra.mrb[0].mxu0 %v2035
          %v2872 = vpop.f32.mrb[0].mxu0
          %v2873 = vadd.f32 %v2488, %v2872
          %v2874 = vpop.f32.mrb[0].mxu0
          %2875 = vmatprep.mubr.f32.mxu0 %v2040
          %2876 = vmatmul.mubr.f32.gmra.mrb[0].mxu0 %v2039
          %v2877 = vpop.f32.mrb[0].mxu0
          %v2878 = vadd.f32 %v2493, %v2877
          %v2879 = vpop.f32.mrb[0].mxu0
          %2880 = vmatprep.mubr.f32.mxu0 %v2044
          %2881 = vmatmul.mubr.f32.gmra.mrb[0].mxu0 %v2043
          %v2882 = vpop.f32.mrb[0].mxu0
          %v2883 = vadd.f32 %v2498, %v2882
          %v2884 = vpop.f32.mrb[0].mxu0
          %2885 = vmatprep.mubr.f32.mxu0 %v2048
          %2886 = vmatmul.mubr.f32.gmra.mrb[0].mxu0 %v2047
          %v2887 = vpop.f32.mrb[0].mxu0
          %v2888 = vadd.f32 %v2503, %v2887
          %v2889 = vpop.f32.mrb[0].mxu0
          %2890 = vmatprep.mubr.f32.mxu0 %v2052
          %2891 = vmatmul.mubr.f32.gmra.mrb[0].mxu0 %v2051
          %v2892 = vpop.f32.mrb[0].mxu0
          %v2893 = vadd.f32 %v2508, %v2892
          %v2894 = vpop.f32.mrb[0].mxu0
          %2895 = vmatprep.mubr.f32.mxu0 %v2056
          %2896 = vmatmul.mubr.f32.gmra.mrb[0].mxu0 %v2055
          %v2897 = vpop.f32.mrb[0].mxu0
          %v2898 = vadd.f32 %v2513, %v2897
          %v2899 = vpop.f32.mrb[0].mxu0
          %2900 = vmatprep.mubr.f32.mxu0 %v2060
          %2901 = vmatmul.mubr.f32.gmra.mrb[0].mxu0 %v2059
          %v2902 = vpop.f32.mrb[0].mxu0
          %v2903 = vadd.f32 %v2518, %v2902
          %v2904 = vpop.f32.mrb[0].mxu0
          %2905 = vmatprep.mubr.f32.mxu0 %v2064
          %2906 = vmatmul.mubr.f32.gmra.mrb[0].mxu0 %v2063
          %v2907 = vpop.f32.mrb[0].mxu0
          %v2908 = vadd.f32 %v2523, %v2907
          %v2909 = vpop.f32.mrb[0].mxu0
          %2910 = vmatprep.mubr.f32.mxu0 %v2068
          %2911 = vmatmul.mubr.f32.gmra.mrb[0].mxu0 %v2067
          %v2912 = vpop.f32.mrb[0].mxu0
          %v2913 = vadd.f32 %v2528, %v2912
          %v2914 = vpop.f32.mrb[0].mxu0
          %2915 = vmatprep.mubr.f32.mxu0 %v2072
          %2916 = vmatmul.mubr.f32.gmra.mrb[0].mxu0 %v2071
          %v2917 = vpop.f32.mrb[0].mxu0
          %v2918 = vadd.f32 %v2533, %v2917
          %v2919 = vpop.f32.mrb[0].mxu0
          %2920 = vmatprep.mubr.f32.mxu0 %v2076
          %2921 = vmatmul.mubr.f32.gmra.mrb[0].mxu0 %v2075
          %v2922 = vpop.f32.mrb[0].mxu0
          %v2923 = vadd.f32 %v2538, %v2922
          %v2924 = vpop.f32.mrb[0].mxu0
          %2925 = vmatprep.mubr.f32.mxu0 %v2080
          %2926 = vmatmul.mubr.f32.gmra.mrb[0].mxu0 %v2079
          %v2927 = vpop.f32.mrb[0].mxu0
          %v2928 = vadd.f32 %v2543, %v2927
          %v2929 = vpop.f32.mrb[0].mxu0
          %2930 = vmatprep.mubr.f32.mxu0 %v2084
          %2931 = vmatmul.mubr.f32.gmra.mrb[0].mxu0 %v2083
          %v2932 = vpop.f32.mrb[0].mxu0
          %v2933 = vadd.f32 %v2548, %v2932
          %v2934 = vpop.f32.mrb[0].mxu0
          %2935 = vmatprep.mubr.f32.mxu0 %v2088
          %2936 = vmatmul.mubr.f32.gmra.mrb[0].mxu0 %v2087
          %v2937 = vpop.f32.mrb[0].mxu0
          %v2938 = vadd.f32 %v2553, %v2937
          %v2939 = vpop.f32.mrb[0].mxu0
          %2940 = vmatprep.mubr.f32.mxu0 %v2092
          %2941 = vmatmul.mubr.f32.gmra.mrb[0].mxu0 %v2091
          %v2942 = vpop.f32.mrb[0].mxu0
          %v2943 = vadd.f32 %v2558, %v2942
          %v2944 = vpop.f32.mrb[0].mxu0
          %2945 = vmatprep.mubr.f32.mxu0 %v2096
          %2946 = vmatmul.mubr.f32.gmra.mrb[0].mxu0 %v2095
          %v2947 = vpop.f32.mrb[0].mxu0
          %v2948 = vadd.f32 %v2563, %v2947
          %v2949 = vpop.f32.mrb[0].mxu0
          %2950 = vmatprep.mubr.f32.mxu0 %v2100
          %2951 = vmatmul.mubr.f32.gmra.mrb[0].mxu0 %v2099
          %v2952 = vpop.f32.mrb[0].mxu0
          %v2953 = vadd.f32 %v2568, %v2952
          %v2954 = vpop.f32.mrb[0].mxu0
          %2955 = vmatprep.mubr.f32.mxu0 %v2104
          %2956 = vmatmul.mubr.f32.gmra.mrb[0].mxu0 %v2103
          %v2957 = vpop.f32.mrb[0].mxu0
          %v2958 = vadd.f32 %v2573, %v2957
          %v2959 = vpop.f32.mrb[0].mxu0
          %2960 = vmatprep.mubr.f32.mxu0 %v2108
          %2961 = vmatmul.mubr.f32.gmra.mrb[0].mxu0 %v2107
          %v2962 = vpop.f32.mrb[0].mxu0
          %v2963 = vadd.f32 %v2578, %v2962
          %v2964 = vpop.f32.mrb[0].mxu0
          %2965 = vmatprep.mubr.f32.mxu0 %v2112
          %2966 = vmatmul.mubr.f32.gmra.mrb[0].mxu0 %v2111
          %v2967 = vpop.f32.mrb[0].mxu0
          %v2968 = vadd.f32 %v2583, %v2967
          %v2969 = vpop.f32.mrb[0].mxu0
          %2970 = vmatprep.mubr.f32.mxu0 %v2116
          %2971 = vmatmul.mubr.f32.gmra.mrb[0].mxu0 %v2115
          %v2972 = vpop.f32.mrb[0].mxu0
          %v2973 = vadd.f32 %v2588, %v2972
          %v2974 = vpop.f32.mrb[0].mxu0
          %2975 = vmatprep.mubr.f32.mxu0 %v2120
          %2976 = vmatmul.mubr.f32.gmra.mrb[0].mxu0 %v2119
          %v2977 = vpop.f32.mrb[0].mxu0
          %v2978 = vadd.f32 %v2593, %v2977
          %v2979 = vpop.f32.mrb[0].mxu0
          %2980 = vmatprep.mubr.f32.mxu0 %v2124
          %2981 = vmatmul.mubr.f32.gmra.mrb[0].mxu0 %v2123
          %v2982 = vpop.f32.mrb[0].mxu0
          %v2983 = vadd.f32 %v2598, %v2982
          %v2984 = vpop.f32.mrb[0].mxu0
          %2985 = vmatprep.mubr.f32.mxu0 %v2128
          %2986 = vmatmul.mubr.f32.gmra.mrb[0].mxu0 %v2127
          %v2987 = vpop.f32.mrb[0].mxu0
          %v2988 = vadd.f32 %v2603, %v2987
          %v2989 = vpop.f32.mrb[0].mxu0
          %2990 = vmatprep.mubr.f32.mxu0 %v2132
          %2991 = vmatmul.mubr.f32.gmra.mrb[0].mxu0 %v2131
          %v2992 = vpop.f32.mrb[0].mxu0
          %v2993 = vadd.f32 %v2608, %v2992
          %v2994 = vpop.f32.mrb[0].mxu0
          %2995 = vmatprep.mubr.f32.mxu0 %v2136
          %2996 = vmatmul.mubr.f32.gmra.mrb[0].mxu0 %v2135
          %v2997 = vpop.f32.mrb[0].mxu0
          %v2998 = vadd.f32 %v2613, %v2997
          %v2999 = vpop.f32.mrb[0].mxu0
          %3000 = vmatprep.mubr.f32.mxu0 %v2140
          %3001 = vmatmul.mubr.f32.gmra.mrb[0].mxu0 %v2139
          %v3002 = vpop.f32.mrb[0].mxu0
          %v3003 = vadd.f32 %v2618, %v3002
          %v3004 = vpop.f32.mrb[0].mxu0
          %3005 = vmatprep.mubr.f32.mxu0 %v2144
          %3006 = vmatmul.mubr.f32.gmra.mrb[0].mxu0 %v2143
          %v3007 = vpop.f32.mrb[0].mxu0
          %v3008 = vadd.f32 %v2623, %v3007
          %v3009 = vpop.f32.mrb[0].mxu0
          %3010 = vmatprep.mubr.f32.mxu0 %v2148
          %3011 = vmatmul.mubr.f32.gmra.mrb[0].mxu0 %v2147
          %v3012 = vpop.f32.mrb[0].mxu0
          %v3013 = vadd.f32 %v2628, %v3012
          %v3014 = vpop.f32.mrb[0].mxu0
          %3015 = vmatprep.mubr.f32.mxu0 %v2152
          %3016 = vmatmul.mubr.f32.gmra.mrb[0].mxu0 %v2151
          %v3017 = vpop.f32.mrb[0].mxu0
          %v3018 = vadd.f32 %v2633, %v3017
          %v3019 = vpop.f32.mrb[0].mxu0
          %3020 = vmatprep.mubr.f32.mxu0 %v2156
          %3021 = vmatmul.mubr.f32.gmra.mrb[0].mxu0 %v2155
          %v3022 = vpop.f32.mrb[0].mxu0
          %v3023 = vadd.f32 %v2638, %v3022
          %v3024 = vpop.f32.mrb[0].mxu0
          %3025 = vmatprep.mubr.f32.mxu0 %v2160
          %3026 = vmatmul.mubr.f32.gmra.mrb[0].mxu0 %v2159
          %v3027 = vpop.f32.mrb[0].mxu0
          %v3028 = vadd.f32 %v2643, %v3027
          %v3029 = vpop.f32.mrb[0].mxu0
          %3030 = vmatprep.mubr.f32.mxu0 %v2164
          %3031 = vmatmul.mubr.f32.gmra.mrb[0].mxu0 %v2163
          %v3032 = vpop.f32.mrb[0].mxu0
          %v3033 = vadd.f32 %v2648, %v3032
          %v3034 = vpop.f32.mrb[0].mxu0
          %3035 = vmatprep.mubr.f32.mxu0 %v2168
          %3036 = vmatmul.mubr.f32.gmra.mrb[0].mxu0 %v2167
          %v3037 = vpop.f32.mrb[0].mxu0
          %v3038 = vadd.f32 %v2653, %v3037
          %v3039 = vpop.f32.mrb[0].mxu0
          %3040 = vmatprep.mubr.f32.mxu0 %v2172
          %3041 = vmatmul.mubr.f32.gmra.mrb[0].mxu0 %v2171
          %v3042 = vpop.f32.mrb[0].mxu0
          %v3043 = vadd.f32 %v2658, %v3042
          %v3044 = vpop.f32.mrb[0].mxu0
          %3045 = vmatprep.mubr.f32.mxu0 %v2176
          %3046 = vmatmul.mubr.f32.gmra.mrb[0].mxu0 %v2175
          %v3047 = vpop.f32.mrb[0].mxu0
          %v3048 = vadd.f32 %v2663, %v3047
          %v3049 = vpop.f32.mrb[0].mxu0
          %3050 = vmatprep.mubr.f32.mxu0 %v2180
          %3051 = vmatmul.mubr.f32.gmra.mrb[0].mxu0 %v2179
          %v3052 = vpop.f32.mrb[0].mxu0
          %v3053 = vadd.f32 %v2668, %v3052
          %v3054 = vpop.f32.mrb[0].mxu0
          %3055 = vmatprep.mubr.f32.mxu0 %v2184
          %3056 = vmatmul.mubr.f32.gmra.mrb[0].mxu0 %v2183
          %v3057 = vpop.f32.mrb[0].mxu0
          %v3058 = vadd.f32 %v2673, %v3057
          %v3059 = vpop.f32.mrb[0].mxu0
          %3060 = vmatprep.mubr.f32.mxu0 %v2188
          %3061 = vmatmul.mubr.f32.gmra.mrb[0].mxu0 %v2187
          %v3062 = vpop.f32.mrb[0].mxu0
          %v3063 = vadd.f32 %v2678, %v3062
          %v3064 = vpop.f32.mrb[0].mxu0
          %3065 = vmatprep.mubr.f32.mxu0 %v2192
          %3066 = vmatmul.mubr.f32.gmra.mrb[0].mxu0 %v2191
          %v3067 = vpop.f32.mrb[0].mxu0
          %v3068 = vadd.f32 %v2683, %v3067
          %v3069 = vpop.f32.mrb[0].mxu0
          %3070 = vmatprep.mubr.f32.mxu0 %v2196
          %3071 = vmatmul.mubr.f32.gmra.mrb[0].mxu0 %v2195
          %v3072 = vpop.f32.mrb[0].mxu0
          %v3073 = vadd.f32 %v2688, %v3072
          %v3074 = vpop.f32.mrb[0].mxu0
          %3075 = vmatprep.mubr.f32.mxu0 %v2200
          %3076 = vmatmul.mubr.f32.gmra.mrb[0].mxu0 %v2199
          %v3077 = vpop.f32.mrb[0].mxu0
          %v3078 = vadd.f32 %v2693, %v3077
          %v3079 = vpop.f32.mrb[0].mxu0
          %3080 = vmatprep.mubr.f32.mxu0 %v2204
          %3081 = vmatmul.mubr.f32.gmra.mrb[0].mxu0 %v2203
          %v3082 = vpop.f32.mrb[0].mxu0
          %v3083 = vadd.f32 %v2698, %v3082
          %v3084 = vpop.f32.mrb[0].mxu0
          %3085 = vmatprep.mubr.f32.mxu0 %v2208
          %3086 = vmatmul.mubr.f32.gmra.mrb[0].mxu0 %v2207
          %v3087 = vpop.f32.mrb[0].mxu0
          %v3088 = vadd.f32 %v2703, %v3087
          %v3089 = vpop.f32.mrb[0].mxu0
          %3090 = vmatprep.mubr.f32.mxu0 %v2212
          %3091 = vmatmul.mubr.f32.gmra.mrb[0].mxu0 %v2211
          %v3092 = vpop.f32.mrb[0].mxu0
          %v3093 = vadd.f32 %v2708, %v3092
          %v3094 = vpop.f32.mrb[0].mxu0
          %3095 = vmatprep.mubr.f32.mxu0 %v2216
          %3096 = vmatmul.mubr.f32.gmra.mrb[0].mxu0 %v2215
          %v3097 = vpop.f32.mrb[0].mxu0
          %v3098 = vadd.f32 %v2713, %v3097
          %v3099 = vpop.f32.mrb[0].mxu0
          %3100 = vmatprep.mubr.f32.mxu0 %v2220
          %3101 = vmatmul.mubr.f32.gmra.mrb[0].mxu0 %v2219
          %v3102 = vpop.f32.mrb[0].mxu0
          %v3103 = vadd.f32 %v2718, %v3102
          %v3104 = vpop.f32.mrb[0].mxu0
          %3105 = vmatprep.mubr.f32.mxu0 %v2224
          %3106 = vmatmul.mubr.f32.gmra.mrb[0].mxu0 %v2223
          %v3107 = vpop.f32.mrb[0].mxu0
          %v3108 = vadd.f32 %v2723, %v3107
          %v3109 = vpop.f32.mrb[0].mxu0
          %3110 = vmatprep.mubr.f32.mxu0 %v2228
          %3111 = vmatmul.mubr.f32.gmra.mrb[0].mxu0 %v2227
          %v3112 = vpop.f32.mrb[0].mxu0
          %v3113 = vadd.f32 %v2728, %v3112
          %v3114 = vpop.f32.mrb[0].mxu0
          %3115 = vmatprep.mubr.f32.mxu0 %v2232
          %3116 = vmatmul.mubr.f32.gmra.mrb[0].mxu0 %v2231
          %v3117 = vpop.f32.mrb[0].mxu0
          %v3118 = vadd.f32 %v2733, %v3117
          %v3119 = vpop.f32.mrb[0].mxu0
          %3120 = vmatprep.mubr.f32.mxu0 %v2236
          %3121 = vmatmul.mubr.f32.gmra.mrb[0].mxu0 %v2235
          %v3122 = vpop.f32.mrb[0].mxu0
          %v3123 = vadd.f32 %v2738, %v3122
          %v3124 = vpop.f32.mrb[0].mxu0
          %3125 = vmatprep.mubr.f32.mxu0 %v2240
          %3126 = vmatmul.mubr.f32.gmra.mrb[0].mxu0 %v2239
          %v3127 = vpop.f32.mrb[0].mxu0
          %v3128 = vadd.f32 %v2743, %v3127
          %v3129 = vpop.f32.mrb[0].mxu0
          %3130 = vmatprep.mubr.f32.mxu0 %v2244
          %3131 = vmatmul.mubr.f32.gmra.mrb[0].mxu0 %v2243
          %v3132 = vpop.f32.mrb[0].mxu0
          %v3133 = vadd.f32 %v2748, %v3132
          %v3134 = vpop.f32.mrb[0].mxu0
          %3135 = vmatprep.mubr.f32.mxu0 %v2248
          %3136 = vmatmul.mubr.f32.gmra.mrb[0].mxu0 %v2247
          %v3137 = vpop.f32.mrb[0].mxu0
          %v3138 = vadd.f32 %v2753, %v3137
          %v3139 = vpop.f32.mrb[0].mxu0
          %3140 = vmatprep.mubr.f32.mxu0 %v2252
          %3141 = vmatmul.mubr.f32.gmra.mrb[0].mxu0 %v2251
          %v3142 = vpop.f32.mrb[0].mxu0
          %v3143 = vadd.f32 %v2758, %v3142
          %v3144 = vpop.f32.mrb[0].mxu0
          %3145 = vmatprep.mubr.f32.mxu0 %v2256
          %3146 = vmatmul.mubr.f32.gmra.mrb[0].mxu0 %v2255
          %v3147 = vpop.f32.mrb[0].mxu0
          %v3148 = vadd.f32 %v2763, %v3147
          %v3149 = vpop.f32.mrb[0].mxu0
          %3150 = vmatprep.mubr.f32.mxu0 %v2260
          %3151 = vmatmul.mubr.f32.gmra.mrb[0].mxu0 %v2259
          %v3152 = vpop.f32.mrb[0].mxu0
          %v3153 = vadd.f32 %v2768, %v3152
          %v3154 = vpop.f32.mrb[0].mxu0
          %3155 = vmatprep.mubr.f32.mxu0 %v2264
          %3156 = vmatmul.mubr.f32.gmra.mrb[0].mxu0 %v2263
          %v3157 = vpop.f32.mrb[0].mxu0
          %v3158 = vadd.f32 %v2773, %v3157
          %v3159 = vpop.f32.mrb[0].mxu0
          %3160 = vmatprep.mubr.f32.mxu0 %v2268
          %3161 = vmatmul.mubr.f32.gmra.mrb[0].mxu0 %v2267
          %v3162 = vpop.f32.mrb[0].mxu0
          %v3163 = vadd.f32 %v2778, %v3162
          %v3164 = vpop.f32.mrb[0].mxu0
          %3165 = vmatprep.mubr.f32.mxu0 %v2272
          %3166 = vmatmul.mubr.f32.gmra.mrb[0].mxu0 %v2271
          %v3167 = vpop.f32.mrb[0].mxu0
          %v3168 = vadd.f32 %v2783, %v3167
          %v3169 = vpop.f32.mrb[0].mxu0
          %3170 = vdwg.mxu0
          %3172 = vset.pattern.permute.xlu0 0
          %3173 = vperm.xlu0 %3172, %v1179
          %v3174 = vpop.permute.xlu0 %3173
          %3177 = vset.pattern.permute.xlu0 0
          %3178 = vperm.xlu0 %3177, %v1180
          %v3179 = vpop.permute.xlu0 %3178
          %3182 = vset.pattern.permute.xlu0 0
          %3183 = vperm.xlu0 %3182, %v1181
          %v3184 = vpop.permute.xlu0 %3183
          %3187 = vset.pattern.permute.xlu0 0
          %3188 = vperm.xlu0 %3187, %v1182
          %v3189 = vpop.permute.xlu0 %3188
          %3192 = vset.pattern.permute.xlu0 0
          %3193 = vperm.xlu0 %3192, %v1183
          %v3194 = vpop.permute.xlu0 %3193
          %3197 = vset.pattern.permute.xlu0 0
          %3198 = vperm.xlu0 %3197, %v1184
          %v3199 = vpop.permute.xlu0 %3198
          %3202 = vset.pattern.permute.xlu0 0
          %3203 = vperm.xlu0 %3202, %v1185
          %v3204 = vpop.permute.xlu0 %3203
          %3207 = vset.pattern.permute.xlu0 0
          %3208 = vperm.xlu0 %3207, %v1186
          %v3209 = vpop.permute.xlu0 %3208
          %3212 = vset.pattern.permute.xlu0 0
          %3213 = vperm.xlu0 %3212, %v1187
          %v3214 = vpop.permute.xlu0 %3213
          %3217 = vset.pattern.permute.xlu0 0
          %3218 = vperm.xlu0 %3217, %v1188
          %v3219 = vpop.permute.xlu0 %3218
          %3222 = vset.pattern.permute.xlu0 0
          %3223 = vperm.xlu0 %3222, %v1189
          %v3224 = vpop.permute.xlu0 %3223
          %3227 = vset.pattern.permute.xlu0 0
          %3228 = vperm.xlu0 %3227, %v1190
          %v3229 = vpop.permute.xlu0 %3228
          %3232 = vset.pattern.permute.xlu0 0
          %3233 = vperm.xlu0 %3232, %v1191
          %v3234 = vpop.permute.xlu0 %3233
          %3237 = vset.pattern.permute.xlu0 0
          %3238 = vperm.xlu0 %3237, %v1192
          %v3239 = vpop.permute.xlu0 %3238
          %3242 = vset.pattern.permute.xlu0 0
          %3243 = vperm.xlu0 %3242, %v1193
          %v3244 = vpop.permute.xlu0 %3243
          %3247 = vset.pattern.permute.xlu0 0
          %3248 = vperm.xlu0 %3247, %v1194
          %v3249 = vpop.permute.xlu0 %3248
          %3252 = vset.pattern.permute.xlu0 0
          %3253 = vperm.xlu0 %3252, %v1195
          %v3254 = vpop.permute.xlu0 %3253
          %3257 = vset.pattern.permute.xlu0 0
          %3258 = vperm.xlu0 %3257, %v1196
          %v3259 = vpop.permute.xlu0 %3258
          %3262 = vset.pattern.permute.xlu0 0
          %3263 = vperm.xlu0 %3262, %v1197
          %v3264 = vpop.permute.xlu0 %3263
          %3267 = vset.pattern.permute.xlu0 0
          %3268 = vperm.xlu0 %3267, %v1198
          %v3269 = vpop.permute.xlu0 %3268
          %3272 = vset.pattern.permute.xlu0 0
          %3273 = vperm.xlu0 %3272, %v1199
          %v3274 = vpop.permute.xlu0 %3273
          %3277 = vset.pattern.permute.xlu0 0
          %3278 = vperm.xlu0 %3277, %v1200
          %v3279 = vpop.permute.xlu0 %3278
          %3282 = vset.pattern.permute.xlu0 0
          %3283 = vperm.xlu0 %3282, %v1201
          %v3284 = vpop.permute.xlu0 %3283
          %3287 = vset.pattern.permute.xlu0 0
          %3288 = vperm.xlu0 %3287, %v1202
          %v3289 = vpop.permute.xlu0 %3288
          %3292 = vset.pattern.permute.xlu0 0
          %3293 = vperm.xlu0 %3292, %v1203
          %v3294 = vpop.permute.xlu0 %3293
          %3297 = vset.pattern.permute.xlu0 0
          %3298 = vperm.xlu0 %3297, %v1204
          %v3299 = vpop.permute.xlu0 %3298
          %3302 = vset.pattern.permute.xlu0 0
          %3303 = vperm.xlu0 %3302, %v1205
          %v3304 = vpop.permute.xlu0 %3303
          %3307 = vset.pattern.permute.xlu0 0
          %3308 = vperm.xlu0 %3307, %v1206
          %v3309 = vpop.permute.xlu0 %3308
          %3312 = vset.pattern.permute.xlu0 0
          %3313 = vperm.xlu0 %3312, %v1207
          %v3314 = vpop.permute.xlu0 %3313
          %3317 = vset.pattern.permute.xlu0 0
          %3318 = vperm.xlu0 %3317, %v1208
          %v3319 = vpop.permute.xlu0 %3318
          %3322 = vset.pattern.permute.xlu0 0
          %3323 = vperm.xlu0 %3322, %v1209
          %v3324 = vpop.permute.xlu0 %3323
          %3327 = vset.pattern.permute.xlu0 0
          %3328 = vperm.xlu0 %3327, %v1210
          %v3329 = vpop.permute.xlu0 %3328
          %3332 = vset.pattern.permute.xlu0 0
          %3333 = vperm.xlu0 %3332, %v1211
          %v3334 = vpop.permute.xlu0 %3333
          %3337 = vset.pattern.permute.xlu0 0
          %3338 = vperm.xlu0 %3337, %v1212
          %v3339 = vpop.permute.xlu0 %3338
          %3342 = vset.pattern.permute.xlu0 0
          %3343 = vperm.xlu0 %3342, %v1213
          %v3344 = vpop.permute.xlu0 %3343
          %3347 = vset.pattern.permute.xlu0 0
          %3348 = vperm.xlu0 %3347, %v1214
          %v3349 = vpop.permute.xlu0 %3348
          %3352 = vset.pattern.permute.xlu0 0
          %3353 = vperm.xlu0 %3352, %v1215
          %v3354 = vpop.permute.xlu0 %3353
          %3357 = vset.pattern.permute.xlu0 0
          %3358 = vperm.xlu0 %3357, %v1216
          %v3359 = vpop.permute.xlu0 %3358
          %3362 = vset.pattern.permute.xlu0 0
          %3363 = vperm.xlu0 %3362, %v1217
          %v3364 = vpop.permute.xlu0 %3363
          %3367 = vset.pattern.permute.xlu0 0
          %3368 = vperm.xlu0 %3367, %v1218
          %v3369 = vpop.permute.xlu0 %3368
          %3372 = vset.pattern.permute.xlu0 0
          %3373 = vperm.xlu0 %3372, %v1219
          %v3374 = vpop.permute.xlu0 %3373
          %3377 = vset.pattern.permute.xlu0 0
          %3378 = vperm.xlu0 %3377, %v1220
          %v3379 = vpop.permute.xlu0 %3378
          %3382 = vset.pattern.permute.xlu0 0
          %3383 = vperm.xlu0 %3382, %v1221
          %v3384 = vpop.permute.xlu0 %3383
          %3387 = vset.pattern.permute.xlu0 0
          %3388 = vperm.xlu0 %3387, %v1222
          %v3389 = vpop.permute.xlu0 %3388
          %3392 = vset.pattern.permute.xlu0 0
          %3393 = vperm.xlu0 %3392, %v1223
          %v3394 = vpop.permute.xlu0 %3393
          %3397 = vset.pattern.permute.xlu0 0
          %3398 = vperm.xlu0 %3397, %v1224
          %v3399 = vpop.permute.xlu0 %3398
          %3402 = vset.pattern.permute.xlu0 0
          %3403 = vperm.xlu0 %3402, %v1225
          %v3404 = vpop.permute.xlu0 %3403
          %3407 = vset.pattern.permute.xlu0 0
          %3408 = vperm.xlu0 %3407, %v1226
          %v3409 = vpop.permute.xlu0 %3408
          %3412 = vset.pattern.permute.xlu0 0
          %3413 = vperm.xlu0 %3412, %v1227
          %v3414 = vpop.permute.xlu0 %3413
          %3417 = vset.pattern.permute.xlu0 0
          %3418 = vperm.xlu0 %3417, %v1228
          %v3419 = vpop.permute.xlu0 %3418
          %3422 = vset.pattern.permute.xlu0 0
          %3423 = vperm.xlu0 %3422, %v1229
          %v3424 = vpop.permute.xlu0 %3423
          %3427 = vset.pattern.permute.xlu0 0
          %3428 = vperm.xlu0 %3427, %v1230
          %v3429 = vpop.permute.xlu0 %3428
          %3432 = vset.pattern.permute.xlu0 0
          %3433 = vperm.xlu0 %3432, %v1231
          %v3434 = vpop.permute.xlu0 %3433
          %3437 = vset.pattern.permute.xlu0 0
          %3438 = vperm.xlu0 %3437, %v1232
          %v3439 = vpop.permute.xlu0 %3438
          %3442 = vset.pattern.permute.xlu0 0
          %3443 = vperm.xlu0 %3442, %v1233
          %v3444 = vpop.permute.xlu0 %3443
          %3447 = vset.pattern.permute.xlu0 0
          %3448 = vperm.xlu0 %3447, %v1234
          %v3449 = vpop.permute.xlu0 %3448
          %3452 = vset.pattern.permute.xlu0 0
          %3453 = vperm.xlu0 %3452, %v1235
          %v3454 = vpop.permute.xlu0 %3453
          %3457 = vset.pattern.permute.xlu0 0
          %3458 = vperm.xlu0 %3457, %v1236
          %v3459 = vpop.permute.xlu0 %3458
          %3462 = vset.pattern.permute.xlu0 0
          %3463 = vperm.xlu0 %3462, %v1237
          %v3464 = vpop.permute.xlu0 %3463
          %3467 = vset.pattern.permute.xlu0 0
          %3468 = vperm.xlu0 %3467, %v1238
          %v3469 = vpop.permute.xlu0 %3468
          %3472 = vset.pattern.permute.xlu0 0
          %3473 = vperm.xlu0 %3472, %v1239
          %v3474 = vpop.permute.xlu0 %3473
          %3477 = vset.pattern.permute.xlu0 0
          %3478 = vperm.xlu0 %3477, %v1240
          %v3479 = vpop.permute.xlu0 %3478
          %3482 = vset.pattern.permute.xlu0 0
          %3483 = vperm.xlu0 %3482, %v1241
          %v3484 = vpop.permute.xlu0 %3483
          %3487 = vset.pattern.permute.xlu0 0
          %3488 = vperm.xlu0 %3487, %v1242
          %v3489 = vpop.permute.xlu0 %3488
          %v3491 = vmul.f32 %v3174, %v2853
          %v3492 = vmul.f32 %v3179, %v2858
          %v3493 = vmul.f32 %v3184, %v2863
          %v3494 = vmul.f32 %v3189, %v2868
          %v3495 = vmul.f32 %v3194, %v2873
          %v3496 = vmul.f32 %v3199, %v2878
          %v3497 = vmul.f32 %v3204, %v2883
          %v3498 = vmul.f32 %v3209, %v2888
          %v3499 = vmul.f32 %v3214, %v2893
          %v3500 = vmul.f32 %v3219, %v2898
          %v3501 = vmul.f32 %v3224, %v2903
          %v3502 = vmul.f32 %v3229, %v2908
          %v3503 = vmul.f32 %v3234, %v2913
          %v3504 = vmul.f32 %v3239, %v2918
          %v3505 = vmul.f32 %v3244, %v2923
          %v3506 = vmul.f32 %v3249, %v2928
          %v3507 = vmul.f32 %v3254, %v2933
          %v3508 = vmul.f32 %v3259, %v2938
          %v3509 = vmul.f32 %v3264, %v2943
          %v3510 = vmul.f32 %v3269, %v2948
          %v3511 = vmul.f32 %v3274, %v2953
          %v3512 = vmul.f32 %v3279, %v2958
          %v3513 = vmul.f32 %v3284, %v2963
          %v3514 = vmul.f32 %v3289, %v2968
          %v3515 = vmul.f32 %v3294, %v2973
          %v3516 = vmul.f32 %v3299, %v2978
          %v3517 = vmul.f32 %v3304, %v2983
          %v3518 = vmul.f32 %v3309, %v2988
          %v3519 = vmul.f32 %v3314, %v2993
          %v3520 = vmul.f32 %v3319, %v2998
          %v3521 = vmul.f32 %v3324, %v3003
          %v3522 = vmul.f32 %v3329, %v3008
          %v3523 = vmul.f32 %v3334, %v3013
          %v3524 = vmul.f32 %v3339, %v3018
          %v3525 = vmul.f32 %v3344, %v3023
          %v3526 = vmul.f32 %v3349, %v3028
          %v3527 = vmul.f32 %v3354, %v3033
          %v3528 = vmul.f32 %v3359, %v3038
          %v3529 = vmul.f32 %v3364, %v3043
          %v3530 = vmul.f32 %v3369, %v3048
          %v3531 = vmul.f32 %v3374, %v3053
          %v3532 = vmul.f32 %v3379, %v3058
          %v3533 = vmul.f32 %v3384, %v3063
          %v3534 = vmul.f32 %v3389, %v3068
          %v3535 = vmul.f32 %v3394, %v3073
          %v3536 = vmul.f32 %v3399, %v3078
          %v3537 = vmul.f32 %v3404, %v3083
          %v3538 = vmul.f32 %v3409, %v3088
          %v3539 = vmul.f32 %v3414, %v3093
          %v3540 = vmul.f32 %v3419, %v3098
          %v3541 = vmul.f32 %v3424, %v3103
          %v3542 = vmul.f32 %v3429, %v3108
          %v3543 = vmul.f32 %v3434, %v3113
          %v3544 = vmul.f32 %v3439, %v3118
          %v3545 = vmul.f32 %v3444, %v3123
          %v3546 = vmul.f32 %v3449, %v3128
          %v3547 = vmul.f32 %v3454, %v3133
          %v3548 = vmul.f32 %v3459, %v3138
          %v3549 = vmul.f32 %v3464, %v3143
          %v3550 = vmul.f32 %v3469, %v3148
          %v3551 = vmul.f32 %v3474, %v3153
          %v3552 = vmul.f32 %v3479, %v3158
          %v3553 = vmul.f32 %v3484, %v3163
          %v3554 = vmul.f32 %v3489, %v3168
          %v3555 = vadd.f32 %v2273, %v3491
          %v3556 = vadd.f32 %v2274, %v3492
          %v3557 = vadd.f32 %v2275, %v3493
          %v3558 = vadd.f32 %v2276, %v3494
          %v3559 = vadd.f32 %v2277, %v3495
          %v3560 = vadd.f32 %v2278, %v3496
          %v3561 = vadd.f32 %v2279, %v3497
          %v3562 = vadd.f32 %v2280, %v3498
          %v3563 = vadd.f32 %v2281, %v3499
          %v3564 = vadd.f32 %v2282, %v3500
          %v3565 = vadd.f32 %v2283, %v3501
          %v3566 = vadd.f32 %v2284, %v3502
          %v3567 = vadd.f32 %v2285, %v3503
          %v3568 = vadd.f32 %v2286, %v3504
          %v3569 = vadd.f32 %v2287, %v3505
          %v3570 = vadd.f32 %v2288, %v3506
          %v3571 = vadd.f32 %v2289, %v3507
          %v3572 = vadd.f32 %v2290, %v3508
          %v3573 = vadd.f32 %v2291, %v3509
          %v3574 = vadd.f32 %v2292, %v3510
          %v3575 = vadd.f32 %v2293, %v3511
          %v3576 = vadd.f32 %v2294, %v3512
          %v3577 = vadd.f32 %v2295, %v3513
          %v3578 = vadd.f32 %v2296, %v3514
          %v3579 = vadd.f32 %v2297, %v3515
          %v3580 = vadd.f32 %v2298, %v3516
          %v3581 = vadd.f32 %v2299, %v3517
          %v3582 = vadd.f32 %v2300, %v3518
          %v3583 = vadd.f32 %v2301, %v3519
          %v3584 = vadd.f32 %v2302, %v3520
          %v3585 = vadd.f32 %v2303, %v3521
          %v3586 = vadd.f32 %v2304, %v3522
          %v3587 = vadd.f32 %v2305, %v3523
          %v3588 = vadd.f32 %v2306, %v3524
          %v3589 = vadd.f32 %v2307, %v3525
          %v3590 = vadd.f32 %v2308, %v3526
          %v3591 = vadd.f32 %v2309, %v3527
          %v3592 = vadd.f32 %v2310, %v3528
          %v3593 = vadd.f32 %v2311, %v3529
          %v3594 = vadd.f32 %v2312, %v3530
          %v3595 = vadd.f32 %v2313, %v3531
          %v3596 = vadd.f32 %v2314, %v3532
          %v3597 = vadd.f32 %v2315, %v3533
          %v3598 = vadd.f32 %v2316, %v3534
          %v3599 = vadd.f32 %v2317, %v3535
          %v3600 = vadd.f32 %v2318, %v3536
          %v3601 = vadd.f32 %v2319, %v3537
          %v3602 = vadd.f32 %v2320, %v3538
          %v3603 = vadd.f32 %v2321, %v3539
          %v3604 = vadd.f32 %v2322, %v3540
          %v3605 = vadd.f32 %v2323, %v3541
          %v3606 = vadd.f32 %v2324, %v3542
          %v3607 = vadd.f32 %v2325, %v3543
          %v3608 = vadd.f32 %v2326, %v3544
          %v3609 = vadd.f32 %v2327, %v3545
          %v3610 = vadd.f32 %v2328, %v3546
          %v3611 = vadd.f32 %v2329, %v3547
          %v3612 = vadd.f32 %v2330, %v3548
          %v3613 = vadd.f32 %v2331, %v3549
          %v3614 = vadd.f32 %v2332, %v3550
          %v3615 = vadd.f32 %v2333, %v3551
          %v3616 = vadd.f32 %v2334, %v3552
          %v3617 = vadd.f32 %v2335, %v3553
          %v3618 = vadd.f32 %v2336, %v3554
          %s3619 = scalar_lea.vmem %s985, 512 [#allocation5]
          %v3620 = vld [vmem:[%s3619] sm:$0xff]
          %v3621 = vld [vmem:[%s3619 + $0x8] sm:$0xff]
          %v3622 = vld [vmem:[%s3619 + $0x10] sm:$0xff]
          %v3623 = vld [vmem:[%s3619 + $0x18] sm:$0xff]
          %v3624 = vld [vmem:[%s3619 + $0x20] sm:$0xff]
          %v3625 = vld [vmem:[%s3619 + $0x28] sm:$0xff]
          %v3626 = vld [vmem:[%s3619 + $0x30] sm:$0xff]
          %v3627 = vld [vmem:[%s3619 + $0x38] sm:$0xff]
          %v3628 = vld [vmem:[%s3619 + $0x40] sm:$0xff]
          %v3629 = vld [vmem:[%s3619 + $0x48] sm:$0xff]
          %v3630 = vld [vmem:[%s3619 + $0x50] sm:$0xff]
          %v3631 = vld [vmem:[%s3619 + $0x58] sm:$0xff]
          %v3632 = vld [vmem:[%s3619 + $0x60] sm:$0xff]
          %v3633 = vld [vmem:[%s3619 + $0x68] sm:$0xff]
          %v3634 = vld [vmem:[%s3619 + $0x70] sm:$0xff]
          %v3635 = vld [vmem:[%s3619 + $0x78] sm:$0xff]
          %v3636 = vld [vmem:[%s3619 + $0x80] sm:$0xff]
          %v3637 = vld [vmem:[%s3619 + $0x88] sm:$0xff]
          %v3638 = vld [vmem:[%s3619 + $0x90] sm:$0xff]
          %v3639 = vld [vmem:[%s3619 + $0x98] sm:$0xff]
          %v3640 = vld [vmem:[%s3619 + $0xa0] sm:$0xff]
          %v3641 = vld [vmem:[%s3619 + $0xa8] sm:$0xff]
          %v3642 = vld [vmem:[%s3619 + $0xb0] sm:$0xff]
          %v3643 = vld [vmem:[%s3619 + $0xb8] sm:$0xff]
          %v3644 = vld [vmem:[%s3619 + $0xc0] sm:$0xff]
          %v3645 = vld [vmem:[%s3619 + $0xc8] sm:$0xff]
          %v3646 = vld [vmem:[%s3619 + $0xd0] sm:$0xff]
          %v3647 = vld [vmem:[%s3619 + $0xd8] sm:$0xff]
          %v3648 = vld [vmem:[%s3619 + $0xe0] sm:$0xff]
          %v3649 = vld [vmem:[%s3619 + $0xe8] sm:$0xff]
          %v3650 = vld [vmem:[%s3619 + $0xf0] sm:$0xff]
          %v3651 = vld [vmem:[%s3619 + $0xf8] sm:$0xff]
          %v3652 = vld [vmem:[%s3619 + $0x100] sm:$0xff]
          %v3653 = vld [vmem:[%s3619 + $0x108] sm:$0xff]
          %v3654 = vld [vmem:[%s3619 + $0x110] sm:$0xff]
          %v3655 = vld [vmem:[%s3619 + $0x118] sm:$0xff]
          %v3656 = vld [vmem:[%s3619 + $0x120] sm:$0xff]
          %v3657 = vld [vmem:[%s3619 + $0x128] sm:$0xff]
          %v3658 = vld [vmem:[%s3619 + $0x130] sm:$0xff]
          %v3659 = vld [vmem:[%s3619 + $0x138] sm:$0xff]
          %v3660 = vld [vmem:[%s3619 + $0x140] sm:$0xff]
          %v3661 = vld [vmem:[%s3619 + $0x148] sm:$0xff]
          %v3662 = vld [vmem:[%s3619 + $0x150] sm:$0xff]
          %v3663 = vld [vmem:[%s3619 + $0x158] sm:$0xff]
          %v3664 = vld [vmem:[%s3619 + $0x160] sm:$0xff]
          %v3665 = vld [vmem:[%s3619 + $0x168] sm:$0xff]
          %v3666 = vld [vmem:[%s3619 + $0x170] sm:$0xff]
          %v3667 = vld [vmem:[%s3619 + $0x178] sm:$0xff]
          %v3668 = vld [vmem:[%s3619 + $0x180] sm:$0xff]
          %v3669 = vld [vmem:[%s3619 + $0x188] sm:$0xff]
          %v3670 = vld [vmem:[%s3619 + $0x190] sm:$0xff]
          %v3671 = vld [vmem:[%s3619 + $0x198] sm:$0xff]
          %v3672 = vld [vmem:[%s3619 + $0x1a0] sm:$0xff]
          %v3673 = vld [vmem:[%s3619 + $0x1a8] sm:$0xff]
          %v3674 = vld [vmem:[%s3619 + $0x1b0] sm:$0xff]
          %v3675 = vld [vmem:[%s3619 + $0x1b8] sm:$0xff]
          %v3676 = vld [vmem:[%s3619 + $0x1c0] sm:$0xff]
          %v3677 = vld [vmem:[%s3619 + $0x1c8] sm:$0xff]
          %v3678 = vld [vmem:[%s3619 + $0x1d0] sm:$0xff]
          %v3679 = vld [vmem:[%s3619 + $0x1d8] sm:$0xff]
          %v3680 = vld [vmem:[%s3619 + $0x1e0] sm:$0xff]
          %v3681 = vld [vmem:[%s3619 + $0x1e8] sm:$0xff]
          %v3682 = vld [vmem:[%s3619 + $0x1f0] sm:$0xff]
          %v3683 = vld [vmem:[%s3619 + $0x1f8] sm:$0xff]
          %3684 = vmatprep.subr.mxu0 0.0
          %3685 = vmatpush1.msra.mxu0 %v3620
          %3686 = vmatprep.subr.mxu0 0.0
          %3687 = vmatpush1.msra.mxu0 %v3621
          %3688 = vmatprep.subr.mxu0 0.0
          %3689 = vmatpush1.msra.mxu0 %v3622
          %3690 = vmatprep.subr.mxu0 0.0
          %3691 = vmatpush1.msra.mxu0 %v3623
          %3692 = vmatprep.subr.mxu0 0.0
          %3693 = vmatpush1.msra.mxu0 %v3624
          %3694 = vmatprep.subr.mxu0 0.0
          %3695 = vmatpush1.msra.mxu0 %v3625
          %3696 = vmatprep.subr.mxu0 0.0
          %3697 = vmatpush1.msra.mxu0 %v3626
          %3698 = vmatprep.subr.mxu0 0.0
          %3699 = vmatpush1.msra.mxu0 %v3627
          %3700 = vmatprep.subr.mxu0 0.0
          %3701 = vmatpush1.msra.mxu0 %v3628
          %3702 = vmatprep.subr.mxu0 0.0
          %3703 = vmatpush1.msra.mxu0 %v3629
          %3704 = vmatprep.subr.mxu0 0.0
          %3705 = vmatpush1.msra.mxu0 %v3630
          %3706 = vmatprep.subr.mxu0 0.0
          %3707 = vmatpush1.msra.mxu0 %v3631
          %3708 = vmatprep.subr.mxu0 0.0
          %3709 = vmatpush1.msra.mxu0 %v3632
          %3710 = vmatprep.subr.mxu0 0.0
          %3711 = vmatpush1.msra.mxu0 %v3633
          %3712 = vmatprep.subr.mxu0 0.0
          %3713 = vmatpush1.msra.mxu0 %v3634
          %3714 = vmatprep.subr.mxu0 0.0
          %3715 = vmatpush1.msra.mxu0 %v3635
          %3716 = vmatprep.subr.mxu0 0.0
          %3717 = vmatpush1.msra.mxu0 %v3636
          %3718 = vmatprep.subr.mxu0 0.0
          %3719 = vmatpush1.msra.mxu0 %v3637
          %3720 = vmatprep.subr.mxu0 0.0
          %3721 = vmatpush1.msra.mxu0 %v3638
          %3722 = vmatprep.subr.mxu0 0.0
          %3723 = vmatpush1.msra.mxu0 %v3639
          %3724 = vmatprep.subr.mxu0 0.0
          %3725 = vmatpush1.msra.mxu0 %v3640
          %3726 = vmatprep.subr.mxu0 0.0
          %3727 = vmatpush1.msra.mxu0 %v3641
          %3728 = vmatprep.subr.mxu0 0.0
          %3729 = vmatpush1.msra.mxu0 %v3642
          %3730 = vmatprep.subr.mxu0 0.0
          %3731 = vmatpush1.msra.mxu0 %v3643
          %3732 = vmatprep.subr.mxu0 0.0
          %3733 = vmatpush1.msra.mxu0 %v3644
          %3734 = vmatprep.subr.mxu0 0.0
          %3735 = vmatpush1.msra.mxu0 %v3645
          %3736 = vmatprep.subr.mxu0 0.0
          %3737 = vmatpush1.msra.mxu0 %v3646
          %3738 = vmatprep.subr.mxu0 0.0
          %3739 = vmatpush1.msra.mxu0 %v3647
          %3740 = vmatprep.subr.mxu0 0.0
          %3741 = vmatpush1.msra.mxu0 %v3648
          %3742 = vmatprep.subr.mxu0 0.0
          %3743 = vmatpush1.msra.mxu0 %v3649
          %3744 = vmatprep.subr.mxu0 0.0
          %3745 = vmatpush1.msra.mxu0 %v3650
          %3746 = vmatprep.subr.mxu0 0.0
          %3747 = vmatpush1.msra.mxu0 %v3651
          %3748 = vmatprep.mubr.f32.mxu0 %v2018
          %3749 = vmatmul.mubr.f32.gmra.mrb[0].mxu0 %v2017
          %v3750 = vpop.f32.mrb[0].mxu0
          %v3751 = vadd.f32 0.0, %v3750
          %v3752 = vpop.f32.mrb[0].mxu0
          %3753 = vmatprep.mubr.f32.mxu0 %v2022
          %3754 = vmatmul.mubr.f32.gmra.mrb[0].mxu0 %v2021
          %v3755 = vpop.f32.mrb[0].mxu0
          %v3756 = vadd.f32 0.0, %v3755
          %v3757 = vpop.f32.mrb[0].mxu0
          %3758 = vmatprep.mubr.f32.mxu0 %v2026
          %3759 = vmatmul.mubr.f32.gmra.mrb[0].mxu0 %v2025
          %v3760 = vpop.f32.mrb[0].mxu0
          %v3761 = vadd.f32 0.0, %v3760
          %v3762 = vpop.f32.mrb[0].mxu0
          %3763 = vmatprep.mubr.f32.mxu0 %v2030
          %3764 = vmatmul.mubr.f32.gmra.mrb[0].mxu0 %v2029
          %v3765 = vpop.f32.mrb[0].mxu0
          %v3766 = vadd.f32 0.0, %v3765
          %v3767 = vpop.f32.mrb[0].mxu0
          %3768 = vmatprep.mubr.f32.mxu0 %v2034
          %3769 = vmatmul.mubr.f32.gmra.mrb[0].mxu0 %v2033
          %v3770 = vpop.f32.mrb[0].mxu0
          %v3771 = vadd.f32 0.0, %v3770
          %v3772 = vpop.f32.mrb[0].mxu0
          %3773 = vmatprep.mubr.f32.mxu0 %v2038
          %3774 = vmatmul.mubr.f32.gmra.mrb[0].mxu0 %v2037
          %v3775 = vpop.f32.mrb[0].mxu0
          %v3776 = vadd.f32 0.0, %v3775
          %v3777 = vpop.f32.mrb[0].mxu0
          %3778 = vmatprep.mubr.f32.mxu0 %v2042
          %3779 = vmatmul.mubr.f32.gmra.mrb[0].mxu0 %v2041
          %v3780 = vpop.f32.mrb[0].mxu0
          %v3781 = vadd.f32 0.0, %v3780
          %v3782 = vpop.f32.mrb[0].mxu0
          %3783 = vmatprep.mubr.f32.mxu0 %v2046
          %3784 = vmatmul.mubr.f32.gmra.mrb[0].mxu0 %v2045
          %v3785 = vpop.f32.mrb[0].mxu0
          %v3786 = vadd.f32 0.0, %v3785
          %v3787 = vpop.f32.mrb[0].mxu0
          %3788 = vmatprep.mubr.f32.mxu0 %v2050
          %3789 = vmatmul.mubr.f32.gmra.mrb[0].mxu0 %v2049
          %v3790 = vpop.f32.mrb[0].mxu0
          %v3791 = vadd.f32 0.0, %v3790
          %v3792 = vpop.f32.mrb[0].mxu0
          %3793 = vmatprep.mubr.f32.mxu0 %v2054
          %3794 = vmatmul.mubr.f32.gmra.mrb[0].mxu0 %v2053
          %v3795 = vpop.f32.mrb[0].mxu0
          %v3796 = vadd.f32 0.0, %v3795
          %v3797 = vpop.f32.mrb[0].mxu0
          %3798 = vmatprep.mubr.f32.mxu0 %v2058
          %3799 = vmatmul.mubr.f32.gmra.mrb[0].mxu0 %v2057
          %v3800 = vpop.f32.mrb[0].mxu0
          %v3801 = vadd.f32 0.0, %v3800
          %v3802 = vpop.f32.mrb[0].mxu0
          %3803 = vmatprep.mubr.f32.mxu0 %v2062
          %3804 = vmatmul.mubr.f32.gmra.mrb[0].mxu0 %v2061
          %v3805 = vpop.f32.mrb[0].mxu0
          %v3806 = vadd.f32 0.0, %v3805
          %v3807 = vpop.f32.mrb[0].mxu0
          %3808 = vmatprep.mubr.f32.mxu0 %v2066
          %3809 = vmatmul.mubr.f32.gmra.mrb[0].mxu0 %v2065
          %v3810 = vpop.f32.mrb[0].mxu0
          %v3811 = vadd.f32 0.0, %v3810
          %v3812 = vpop.f32.mrb[0].mxu0
          %3813 = vmatprep.mubr.f32.mxu0 %v2070
          %3814 = vmatmul.mubr.f32.gmra.mrb[0].mxu0 %v2069
          %v3815 = vpop.f32.mrb[0].mxu0
          %v3816 = vadd.f32 0.0, %v3815
          %v3817 = vpop.f32.mrb[0].mxu0
          %3818 = vmatprep.mubr.f32.mxu0 %v2074
          %3819 = vmatmul.mubr.f32.gmra.mrb[0].mxu0 %v2073
          %v3820 = vpop.f32.mrb[0].mxu0
          %v3821 = vadd.f32 0.0, %v3820
          %v3822 = vpop.f32.mrb[0].mxu0
          %3823 = vmatprep.mubr.f32.mxu0 %v2078
          %3824 = vmatmul.mubr.f32.gmra.mrb[0].mxu0 %v2077
          %v3825 = vpop.f32.mrb[0].mxu0
          %v3826 = vadd.f32 0.0, %v3825
          %v3827 = vpop.f32.mrb[0].mxu0
          %3828 = vmatprep.mubr.f32.mxu0 %v2082
          %3829 = vmatmul.mubr.f32.gmra.mrb[0].mxu0 %v2081
          %v3830 = vpop.f32.mrb[0].mxu0
          %v3831 = vadd.f32 0.0, %v3830
          %v3832 = vpop.f32.mrb[0].mxu0
          %3833 = vmatprep.mubr.f32.mxu0 %v2086
          %3834 = vmatmul.mubr.f32.gmra.mrb[0].mxu0 %v2085
          %v3835 = vpop.f32.mrb[0].mxu0
          %v3836 = vadd.f32 0.0, %v3835
          %v3837 = vpop.f32.mrb[0].mxu0
          %3838 = vmatprep.mubr.f32.mxu0 %v2090
          %3839 = vmatmul.mubr.f32.gmra.mrb[0].mxu0 %v2089
          %v3840 = vpop.f32.mrb[0].mxu0
          %v3841 = vadd.f32 0.0, %v3840
          %v3842 = vpop.f32.mrb[0].mxu0
          %3843 = vmatprep.mubr.f32.mxu0 %v2094
          %3844 = vmatmul.mubr.f32.gmra.mrb[0].mxu0 %v2093
          %v3845 = vpop.f32.mrb[0].mxu0
          %v3846 = vadd.f32 0.0, %v3845
          %v3847 = vpop.f32.mrb[0].mxu0
          %3848 = vmatprep.mubr.f32.mxu0 %v2098
          %3849 = vmatmul.mubr.f32.gmra.mrb[0].mxu0 %v2097
          %v3850 = vpop.f32.mrb[0].mxu0
          %v3851 = vadd.f32 0.0, %v3850
          %v3852 = vpop.f32.mrb[0].mxu0
          %3853 = vmatprep.mubr.f32.mxu0 %v2102
          %3854 = vmatmul.mubr.f32.gmra.mrb[0].mxu0 %v2101
          %v3855 = vpop.f32.mrb[0].mxu0
          %v3856 = vadd.f32 0.0, %v3855
          %v3857 = vpop.f32.mrb[0].mxu0
          %3858 = vmatprep.mubr.f32.mxu0 %v2106
          %3859 = vmatmul.mubr.f32.gmra.mrb[0].mxu0 %v2105
          %v3860 = vpop.f32.mrb[0].mxu0
          %v3861 = vadd.f32 0.0, %v3860
          %v3862 = vpop.f32.mrb[0].mxu0
          %3863 = vmatprep.mubr.f32.mxu0 %v2110
          %3864 = vmatmul.mubr.f32.gmra.mrb[0].mxu0 %v2109
          %v3865 = vpop.f32.mrb[0].mxu0
          %v3866 = vadd.f32 0.0, %v3865
          %v3867 = vpop.f32.mrb[0].mxu0
          %3868 = vmatprep.mubr.f32.mxu0 %v2114
          %3869 = vmatmul.mubr.f32.gmra.mrb[0].mxu0 %v2113
          %v3870 = vpop.f32.mrb[0].mxu0
          %v3871 = vadd.f32 0.0, %v3870
          %v3872 = vpop.f32.mrb[0].mxu0
          %3873 = vmatprep.mubr.f32.mxu0 %v2118
          %3874 = vmatmul.mubr.f32.gmra.mrb[0].mxu0 %v2117
          %v3875 = vpop.f32.mrb[0].mxu0
          %v3876 = vadd.f32 0.0, %v3875
          %v3877 = vpop.f32.mrb[0].mxu0
          %3878 = vmatprep.mubr.f32.mxu0 %v2122
          %3879 = vmatmul.mubr.f32.gmra.mrb[0].mxu0 %v2121
          %v3880 = vpop.f32.mrb[0].mxu0
          %v3881 = vadd.f32 0.0, %v3880
          %v3882 = vpop.f32.mrb[0].mxu0
          %3883 = vmatprep.mubr.f32.mxu0 %v2126
          %3884 = vmatmul.mubr.f32.gmra.mrb[0].mxu0 %v2125
          %v3885 = vpop.f32.mrb[0].mxu0
          %v3886 = vadd.f32 0.0, %v3885
          %v3887 = vpop.f32.mrb[0].mxu0
          %3888 = vmatprep.mubr.f32.mxu0 %v2130
          %3889 = vmatmul.mubr.f32.gmra.mrb[0].mxu0 %v2129
          %v3890 = vpop.f32.mrb[0].mxu0
          %v3891 = vadd.f32 0.0, %v3890
          %v3892 = vpop.f32.mrb[0].mxu0
          %3893 = vmatprep.mubr.f32.mxu0 %v2134
          %3894 = vmatmul.mubr.f32.gmra.mrb[0].mxu0 %v2133
          %v3895 = vpop.f32.mrb[0].mxu0
          %v3896 = vadd.f32 0.0, %v3895
          %v3897 = vpop.f32.mrb[0].mxu0
          %3898 = vmatprep.mubr.f32.mxu0 %v2138
          %3899 = vmatmul.mubr.f32.gmra.mrb[0].mxu0 %v2137
          %v3900 = vpop.f32.mrb[0].mxu0
          %v3901 = vadd.f32 0.0, %v3900
          %v3902 = vpop.f32.mrb[0].mxu0
          %3903 = vmatprep.mubr.f32.mxu0 %v2142
          %3904 = vmatmul.mubr.f32.gmra.mrb[0].mxu0 %v2141
          %v3905 = vpop.f32.mrb[0].mxu0
          %v3906 = vadd.f32 0.0, %v3905
          %v3907 = vpop.f32.mrb[0].mxu0
          %3908 = vmatprep.mubr.f32.mxu0 %v2146
          %3909 = vmatmul.mubr.f32.gmra.mrb[0].mxu0 %v2145
          %v3910 = vpop.f32.mrb[0].mxu0
          %v3911 = vadd.f32 0.0, %v3910
          %v3912 = vpop.f32.mrb[0].mxu0
          %3913 = vmatprep.mubr.f32.mxu0 %v2150
          %3914 = vmatmul.mubr.f32.gmra.mrb[0].mxu0 %v2149
          %v3915 = vpop.f32.mrb[0].mxu0
          %v3916 = vadd.f32 0.0, %v3915
          %v3917 = vpop.f32.mrb[0].mxu0
          %3918 = vmatprep.mubr.f32.mxu0 %v2154
          %3919 = vmatmul.mubr.f32.gmra.mrb[0].mxu0 %v2153
          %v3920 = vpop.f32.mrb[0].mxu0
          %v3921 = vadd.f32 0.0, %v3920
          %v3922 = vpop.f32.mrb[0].mxu0
          %3923 = vmatprep.mubr.f32.mxu0 %v2158
          %3924 = vmatmul.mubr.f32.gmra.mrb[0].mxu0 %v2157
          %v3925 = vpop.f32.mrb[0].mxu0
          %v3926 = vadd.f32 0.0, %v3925
          %v3927 = vpop.f32.mrb[0].mxu0
          %3928 = vmatprep.mubr.f32.mxu0 %v2162
          %3929 = vmatmul.mubr.f32.gmra.mrb[0].mxu0 %v2161
          %v3930 = vpop.f32.mrb[0].mxu0
          %v3931 = vadd.f32 0.0, %v3930
          %v3932 = vpop.f32.mrb[0].mxu0
          %3933 = vmatprep.mubr.f32.mxu0 %v2166
          %3934 = vmatmul.mubr.f32.gmra.mrb[0].mxu0 %v2165
          %v3935 = vpop.f32.mrb[0].mxu0
          %v3936 = vadd.f32 0.0, %v3935
          %v3937 = vpop.f32.mrb[0].mxu0
          %3938 = vmatprep.mubr.f32.mxu0 %v2170
          %3939 = vmatmul.mubr.f32.gmra.mrb[0].mxu0 %v2169
          %v3940 = vpop.f32.mrb[0].mxu0
          %v3941 = vadd.f32 0.0, %v3940
          %v3942 = vpop.f32.mrb[0].mxu0
          %3943 = vmatprep.mubr.f32.mxu0 %v2174
          %3944 = vmatmul.mubr.f32.gmra.mrb[0].mxu0 %v2173
          %v3945 = vpop.f32.mrb[0].mxu0
          %v3946 = vadd.f32 0.0, %v3945
          %v3947 = vpop.f32.mrb[0].mxu0
          %3948 = vmatprep.mubr.f32.mxu0 %v2178
          %3949 = vmatmul.mubr.f32.gmra.mrb[0].mxu0 %v2177
          %v3950 = vpop.f32.mrb[0].mxu0
          %v3951 = vadd.f32 0.0, %v3950
          %v3952 = vpop.f32.mrb[0].mxu0
          %3953 = vmatprep.mubr.f32.mxu0 %v2182
          %3954 = vmatmul.mubr.f32.gmra.mrb[0].mxu0 %v2181
          %v3955 = vpop.f32.mrb[0].mxu0
          %v3956 = vadd.f32 0.0, %v3955
          %v3957 = vpop.f32.mrb[0].mxu0
          %3958 = vmatprep.mubr.f32.mxu0 %v2186
          %3959 = vmatmul.mubr.f32.gmra.mrb[0].mxu0 %v2185
          %v3960 = vpop.f32.mrb[0].mxu0
          %v3961 = vadd.f32 0.0, %v3960
          %v3962 = vpop.f32.mrb[0].mxu0
          %3963 = vmatprep.mubr.f32.mxu0 %v2190
          %3964 = vmatmul.mubr.f32.gmra.mrb[0].mxu0 %v2189
          %v3965 = vpop.f32.mrb[0].mxu0
          %v3966 = vadd.f32 0.0, %v3965
          %v3967 = vpop.f32.mrb[0].mxu0
          %3968 = vmatprep.mubr.f32.mxu0 %v2194
          %3969 = vmatmul.mubr.f32.gmra.mrb[0].mxu0 %v2193
          %v3970 = vpop.f32.mrb[0].mxu0
          %v3971 = vadd.f32 0.0, %v3970
          %v3972 = vpop.f32.mrb[0].mxu0
          %3973 = vmatprep.mubr.f32.mxu0 %v2198
          %3974 = vmatmul.mubr.f32.gmra.mrb[0].mxu0 %v2197
          %v3975 = vpop.f32.mrb[0].mxu0
          %v3976 = vadd.f32 0.0, %v3975
          %v3977 = vpop.f32.mrb[0].mxu0
          %3978 = vmatprep.mubr.f32.mxu0 %v2202
          %3979 = vmatmul.mubr.f32.gmra.mrb[0].mxu0 %v2201
          %v3980 = vpop.f32.mrb[0].mxu0
          %v3981 = vadd.f32 0.0, %v3980
          %v3982 = vpop.f32.mrb[0].mxu0
          %3983 = vmatprep.mubr.f32.mxu0 %v2206
          %3984 = vmatmul.mubr.f32.gmra.mrb[0].mxu0 %v2205
          %v3985 = vpop.f32.mrb[0].mxu0
          %v3986 = vadd.f32 0.0, %v3985
          %v3987 = vpop.f32.mrb[0].mxu0
          %3988 = vmatprep.mubr.f32.mxu0 %v2210
          %3989 = vmatmul.mubr.f32.gmra.mrb[0].mxu0 %v2209
          %v3990 = vpop.f32.mrb[0].mxu0
          %v3991 = vadd.f32 0.0, %v3990
          %v3992 = vpop.f32.mrb[0].mxu0
          %3993 = vmatprep.mubr.f32.mxu0 %v2214
          %3994 = vmatmul.mubr.f32.gmra.mrb[0].mxu0 %v2213
          %v3995 = vpop.f32.mrb[0].mxu0
          %v3996 = vadd.f32 0.0, %v3995
          %v3997 = vpop.f32.mrb[0].mxu0
          %3998 = vmatprep.mubr.f32.mxu0 %v2218
          %3999 = vmatmul.mubr.f32.gmra.mrb[0].mxu0 %v2217
          %v4000 = vpop.f32.mrb[0].mxu0
          %v4001 = vadd.f32 0.0, %v4000
          %v4002 = vpop.f32.mrb[0].mxu0
          %4003 = vmatprep.mubr.f32.mxu0 %v2222
          %4004 = vmatmul.mubr.f32.gmra.mrb[0].mxu0 %v2221
          %v4005 = vpop.f32.mrb[0].mxu0
          %v4006 = vadd.f32 0.0, %v4005
          %v4007 = vpop.f32.mrb[0].mxu0
          %4008 = vmatprep.mubr.f32.mxu0 %v2226
          %4009 = vmatmul.mubr.f32.gmra.mrb[0].mxu0 %v2225
          %v4010 = vpop.f32.mrb[0].mxu0
          %v4011 = vadd.f32 0.0, %v4010
          %v4012 = vpop.f32.mrb[0].mxu0
          %4013 = vmatprep.mubr.f32.mxu0 %v2230
          %4014 = vmatmul.mubr.f32.gmra.mrb[0].mxu0 %v2229
          %v4015 = vpop.f32.mrb[0].mxu0
          %v4016 = vadd.f32 0.0, %v4015
          %v4017 = vpop.f32.mrb[0].mxu0
          %4018 = vmatprep.mubr.f32.mxu0 %v2234
          %4019 = vmatmul.mubr.f32.gmra.mrb[0].mxu0 %v2233
          %v4020 = vpop.f32.mrb[0].mxu0
          %v4021 = vadd.f32 0.0, %v4020
          %v4022 = vpop.f32.mrb[0].mxu0
          %4023 = vmatprep.mubr.f32.mxu0 %v2238
          %4024 = vmatmul.mubr.f32.gmra.mrb[0].mxu0 %v2237
          %v4025 = vpop.f32.mrb[0].mxu0
          %v4026 = vadd.f32 0.0, %v4025
          %v4027 = vpop.f32.mrb[0].mxu0
          %4028 = vmatprep.mubr.f32.mxu0 %v2242
          %4029 = vmatmul.mubr.f32.gmra.mrb[0].mxu0 %v2241
          %v4030 = vpop.f32.mrb[0].mxu0
          %v4031 = vadd.f32 0.0, %v4030
          %v4032 = vpop.f32.mrb[0].mxu0
          %4033 = vmatprep.mubr.f32.mxu0 %v2246
          %4034 = vmatmul.mubr.f32.gmra.mrb[0].mxu0 %v2245
          %v4035 = vpop.f32.mrb[0].mxu0
          %v4036 = vadd.f32 0.0, %v4035
          %v4037 = vpop.f32.mrb[0].mxu0
          %4038 = vmatprep.mubr.f32.mxu0 %v2250
          %4039 = vmatmul.mubr.f32.gmra.mrb[0].mxu0 %v2249
          %v4040 = vpop.f32.mrb[0].mxu0
          %v4041 = vadd.f32 0.0, %v4040
          %v4042 = vpop.f32.mrb[0].mxu0
          %4043 = vmatprep.mubr.f32.mxu0 %v2254
          %4044 = vmatmul.mubr.f32.gmra.mrb[0].mxu0 %v2253
          %v4045 = vpop.f32.mrb[0].mxu0
          %v4046 = vadd.f32 0.0, %v4045
          %v4047 = vpop.f32.mrb[0].mxu0
          %4048 = vmatprep.mubr.f32.mxu0 %v2258
          %4049 = vmatmul.mubr.f32.gmra.mrb[0].mxu0 %v2257
          %v4050 = vpop.f32.mrb[0].mxu0
          %v4051 = vadd.f32 0.0, %v4050
          %v4052 = vpop.f32.mrb[0].mxu0
          %4053 = vmatprep.mubr.f32.mxu0 %v2262
          %4054 = vmatmul.mubr.f32.gmra.mrb[0].mxu0 %v2261
          %v4055 = vpop.f32.mrb[0].mxu0
          %v4056 = vadd.f32 0.0, %v4055
          %v4057 = vpop.f32.mrb[0].mxu0
          %4058 = vmatprep.mubr.f32.mxu0 %v2266
          %4059 = vmatmul.mubr.f32.gmra.mrb[0].mxu0 %v2265
          %v4060 = vpop.f32.mrb[0].mxu0
          %v4061 = vadd.f32 0.0, %v4060
          %v4062 = vpop.f32.mrb[0].mxu0
          %4063 = vmatprep.mubr.f32.mxu0 %v2270
          %4064 = vmatmul.mubr.f32.gmra.mrb[0].mxu0 %v2269
          %v4065 = vpop.f32.mrb[0].mxu0
          %v4066 = vadd.f32 0.0, %v4065
          %v4067 = vpop.f32.mrb[0].mxu0
          %4068 = vdwg.mxu0
          %4069 = vmatprep.subr.mxu0 0.0
          %4070 = vmatpush1.msra.mxu0 %v3652
          %4071 = vmatprep.subr.mxu0 0.0
          %4072 = vmatpush1.msra.mxu0 %v3653
          %4073 = vmatprep.subr.mxu0 0.0
          %4074 = vmatpush1.msra.mxu0 %v3654
          %4075 = vmatprep.subr.mxu0 0.0
          %4076 = vmatpush1.msra.mxu0 %v3655
          %4077 = vmatprep.subr.mxu0 0.0
          %4078 = vmatpush1.msra.mxu0 %v3656
          %4079 = vmatprep.subr.mxu0 0.0
          %4080 = vmatpush1.msra.mxu0 %v3657
          %4081 = vmatprep.subr.mxu0 0.0
          %4082 = vmatpush1.msra.mxu0 %v3658
          %4083 = vmatprep.subr.mxu0 0.0
          %4084 = vmatpush1.msra.mxu0 %v3659
          %4085 = vmatprep.subr.mxu0 0.0
          %4086 = vmatpush1.msra.mxu0 %v3660
          %4087 = vmatprep.subr.mxu0 0.0
          %4088 = vmatpush1.msra.mxu0 %v3661
          %4089 = vmatprep.subr.mxu0 0.0
          %4090 = vmatpush1.msra.mxu0 %v3662
          %4091 = vmatprep.subr.mxu0 0.0
          %4092 = vmatpush1.msra.mxu0 %v3663
          %4093 = vmatprep.subr.mxu0 0.0
          %4094 = vmatpush1.msra.mxu0 %v3664
          %4095 = vmatprep.subr.mxu0 0.0
          %4096 = vmatpush1.msra.mxu0 %v3665
          %4097 = vmatprep.subr.mxu0 0.0
          %4098 = vmatpush1.msra.mxu0 %v3666
          %4099 = vmatprep.subr.mxu0 0.0
          %4100 = vmatpush1.msra.mxu0 %v3667
          %4101 = vmatprep.subr.mxu0 0.0
          %4102 = vmatpush1.msra.mxu0 %v3668
          %4103 = vmatprep.subr.mxu0 0.0
          %4104 = vmatpush1.msra.mxu0 %v3669
          %4105 = vmatprep.subr.mxu0 0.0
          %4106 = vmatpush1.msra.mxu0 %v3670
          %4107 = vmatprep.subr.mxu0 0.0
          %4108 = vmatpush1.msra.mxu0 %v3671
          %4109 = vmatprep.subr.mxu0 0.0
          %4110 = vmatpush1.msra.mxu0 %v3672
          %4111 = vmatprep.subr.mxu0 0.0
          %4112 = vmatpush1.msra.mxu0 %v3673
          %4113 = vmatprep.subr.mxu0 0.0
          %4114 = vmatpush1.msra.mxu0 %v3674
          %4115 = vmatprep.subr.mxu0 0.0
          %4116 = vmatpush1.msra.mxu0 %v3675
          %4117 = vmatprep.subr.mxu0 0.0
          %4118 = vmatpush1.msra.mxu0 %v3676
          %4119 = vmatprep.subr.mxu0 0.0
          %4120 = vmatpush1.msra.mxu0 %v3677
          %4121 = vmatprep.subr.mxu0 0.0
          %4122 = vmatpush1.msra.mxu0 %v3678
          %4123 = vmatprep.subr.mxu0 0.0
          %4124 = vmatpush1.msra.mxu0 %v3679
          %4125 = vmatprep.subr.mxu0 0.0
          %4126 = vmatpush1.msra.mxu0 %v3680
          %4127 = vmatprep.subr.mxu0 0.0
          %4128 = vmatpush1.msra.mxu0 %v3681
          %4129 = vmatprep.subr.mxu0 0.0
          %4130 = vmatpush1.msra.mxu0 %v3682
          %4131 = vmatprep.subr.mxu0 0.0
          %4132 = vmatpush1.msra.mxu0 %v3683
          %4133 = vmatprep.mubr.f32.mxu0 %v2020
          %4134 = vmatmul.mubr.f32.gmra.mrb[0].mxu0 %v2019
          %v4135 = vpop.f32.mrb[0].mxu0
          %v4136 = vadd.f32 %v3751, %v4135
          %v4137 = vpop.f32.mrb[0].mxu0
          %4138 = vmatprep.mubr.f32.mxu0 %v2024
          %4139 = vmatmul.mubr.f32.gmra.mrb[0].mxu0 %v2023
          %v4140 = vpop.f32.mrb[0].mxu0
          %v4141 = vadd.f32 %v3756, %v4140
          %v4142 = vpop.f32.mrb[0].mxu0
          %4143 = vmatprep.mubr.f32.mxu0 %v2028
          %4144 = vmatmul.mubr.f32.gmra.mrb[0].mxu0 %v2027
          %v4145 = vpop.f32.mrb[0].mxu0
          %v4146 = vadd.f32 %v3761, %v4145
          %v4147 = vpop.f32.mrb[0].mxu0
          %4148 = vmatprep.mubr.f32.mxu0 %v2032
          %4149 = vmatmul.mubr.f32.gmra.mrb[0].mxu0 %v2031
          %v4150 = vpop.f32.mrb[0].mxu0
          %v4151 = vadd.f32 %v3766, %v4150
          %v4152 = vpop.f32.mrb[0].mxu0
          %4153 = vmatprep.mubr.f32.mxu0 %v2036
          %4154 = vmatmul.mubr.f32.gmra.mrb[0].mxu0 %v2035
          %v4155 = vpop.f32.mrb[0].mxu0
          %v4156 = vadd.f32 %v3771, %v4155
          %v4157 = vpop.f32.mrb[0].mxu0
          %4158 = vmatprep.mubr.f32.mxu0 %v2040
          %4159 = vmatmul.mubr.f32.gmra.mrb[0].mxu0 %v2039
          %v4160 = vpop.f32.mrb[0].mxu0
          %v4161 = vadd.f32 %v3776, %v4160
          %v4162 = vpop.f32.mrb[0].mxu0
          %4163 = vmatprep.mubr.f32.mxu0 %v2044
          %4164 = vmatmul.mubr.f32.gmra.mrb[0].mxu0 %v2043
          %v4165 = vpop.f32.mrb[0].mxu0
          %v4166 = vadd.f32 %v3781, %v4165
          %v4167 = vpop.f32.mrb[0].mxu0
          %4168 = vmatprep.mubr.f32.mxu0 %v2048
          %4169 = vmatmul.mubr.f32.gmra.mrb[0].mxu0 %v2047
          %v4170 = vpop.f32.mrb[0].mxu0
          %v4171 = vadd.f32 %v3786, %v4170
          %v4172 = vpop.f32.mrb[0].mxu0
          %4173 = vmatprep.mubr.f32.mxu0 %v2052
          %4174 = vmatmul.mubr.f32.gmra.mrb[0].mxu0 %v2051
          %v4175 = vpop.f32.mrb[0].mxu0
          %v4176 = vadd.f32 %v3791, %v4175
          %v4177 = vpop.f32.mrb[0].mxu0
          %4178 = vmatprep.mubr.f32.mxu0 %v2056
          %4179 = vmatmul.mubr.f32.gmra.mrb[0].mxu0 %v2055
          %v4180 = vpop.f32.mrb[0].mxu0
          %v4181 = vadd.f32 %v3796, %v4180
          %v4182 = vpop.f32.mrb[0].mxu0
          %4183 = vmatprep.mubr.f32.mxu0 %v2060
          %4184 = vmatmul.mubr.f32.gmra.mrb[0].mxu0 %v2059
          %v4185 = vpop.f32.mrb[0].mxu0
          %v4186 = vadd.f32 %v3801, %v4185
          %v4187 = vpop.f32.mrb[0].mxu0
          %4188 = vmatprep.mubr.f32.mxu0 %v2064
          %4189 = vmatmul.mubr.f32.gmra.mrb[0].mxu0 %v2063
          %v4190 = vpop.f32.mrb[0].mxu0
          %v4191 = vadd.f32 %v3806, %v4190
          %v4192 = vpop.f32.mrb[0].mxu0
          %4193 = vmatprep.mubr.f32.mxu0 %v2068
          %4194 = vmatmul.mubr.f32.gmra.mrb[0].mxu0 %v2067
          %v4195 = vpop.f32.mrb[0].mxu0
          %v4196 = vadd.f32 %v3811, %v4195
          %v4197 = vpop.f32.mrb[0].mxu0
          %4198 = vmatprep.mubr.f32.mxu0 %v2072
          %4199 = vmatmul.mubr.f32.gmra.mrb[0].mxu0 %v2071
          %v4200 = vpop.f32.mrb[0].mxu0
          %v4201 = vadd.f32 %v3816, %v4200
          %v4202 = vpop.f32.mrb[0].mxu0
          %4203 = vmatprep.mubr.f32.mxu0 %v2076
          %4204 = vmatmul.mubr.f32.gmra.mrb[0].mxu0 %v2075
          %v4205 = vpop.f32.mrb[0].mxu0
          %v4206 = vadd.f32 %v3821, %v4205
          %v4207 = vpop.f32.mrb[0].mxu0
          %4208 = vmatprep.mubr.f32.mxu0 %v2080
          %4209 = vmatmul.mubr.f32.gmra.mrb[0].mxu0 %v2079
          %v4210 = vpop.f32.mrb[0].mxu0
          %v4211 = vadd.f32 %v3826, %v4210
          %v4212 = vpop.f32.mrb[0].mxu0
          %4213 = vmatprep.mubr.f32.mxu0 %v2084
          %4214 = vmatmul.mubr.f32.gmra.mrb[0].mxu0 %v2083
          %v4215 = vpop.f32.mrb[0].mxu0
          %v4216 = vadd.f32 %v3831, %v4215
          %v4217 = vpop.f32.mrb[0].mxu0
          %4218 = vmatprep.mubr.f32.mxu0 %v2088
          %4219 = vmatmul.mubr.f32.gmra.mrb[0].mxu0 %v2087
          %v4220 = vpop.f32.mrb[0].mxu0
          %v4221 = vadd.f32 %v3836, %v4220
          %v4222 = vpop.f32.mrb[0].mxu0
          %4223 = vmatprep.mubr.f32.mxu0 %v2092
          %4224 = vmatmul.mubr.f32.gmra.mrb[0].mxu0 %v2091
          %v4225 = vpop.f32.mrb[0].mxu0
          %v4226 = vadd.f32 %v3841, %v4225
          %v4227 = vpop.f32.mrb[0].mxu0
          %4228 = vmatprep.mubr.f32.mxu0 %v2096
          %4229 = vmatmul.mubr.f32.gmra.mrb[0].mxu0 %v2095
          %v4230 = vpop.f32.mrb[0].mxu0
          %v4231 = vadd.f32 %v3846, %v4230
          %v4232 = vpop.f32.mrb[0].mxu0
          %4233 = vmatprep.mubr.f32.mxu0 %v2100
          %4234 = vmatmul.mubr.f32.gmra.mrb[0].mxu0 %v2099
          %v4235 = vpop.f32.mrb[0].mxu0
          %v4236 = vadd.f32 %v3851, %v4235
          %v4237 = vpop.f32.mrb[0].mxu0
          %4238 = vmatprep.mubr.f32.mxu0 %v2104
          %4239 = vmatmul.mubr.f32.gmra.mrb[0].mxu0 %v2103
          %v4240 = vpop.f32.mrb[0].mxu0
          %v4241 = vadd.f32 %v3856, %v4240
          %v4242 = vpop.f32.mrb[0].mxu0
          %4243 = vmatprep.mubr.f32.mxu0 %v2108
          %4244 = vmatmul.mubr.f32.gmra.mrb[0].mxu0 %v2107
          %v4245 = vpop.f32.mrb[0].mxu0
          %v4246 = vadd.f32 %v3861, %v4245
          %v4247 = vpop.f32.mrb[0].mxu0
          %4248 = vmatprep.mubr.f32.mxu0 %v2112
          %4249 = vmatmul.mubr.f32.gmra.mrb[0].mxu0 %v2111
          %v4250 = vpop.f32.mrb[0].mxu0
          %v4251 = vadd.f32 %v3866, %v4250
          %v4252 = vpop.f32.mrb[0].mxu0
          %4253 = vmatprep.mubr.f32.mxu0 %v2116
          %4254 = vmatmul.mubr.f32.gmra.mrb[0].mxu0 %v2115
          %v4255 = vpop.f32.mrb[0].mxu0
          %v4256 = vadd.f32 %v3871, %v4255
          %v4257 = vpop.f32.mrb[0].mxu0
          %4258 = vmatprep.mubr.f32.mxu0 %v2120
          %4259 = vmatmul.mubr.f32.gmra.mrb[0].mxu0 %v2119
          %v4260 = vpop.f32.mrb[0].mxu0
          %v4261 = vadd.f32 %v3876, %v4260
          %v4262 = vpop.f32.mrb[0].mxu0
          %4263 = vmatprep.mubr.f32.mxu0 %v2124
          %4264 = vmatmul.mubr.f32.gmra.mrb[0].mxu0 %v2123
          %v4265 = vpop.f32.mrb[0].mxu0
          %v4266 = vadd.f32 %v3881, %v4265
          %v4267 = vpop.f32.mrb[0].mxu0
          %4268 = vmatprep.mubr.f32.mxu0 %v2128
          %4269 = vmatmul.mubr.f32.gmra.mrb[0].mxu0 %v2127
          %v4270 = vpop.f32.mrb[0].mxu0
          %v4271 = vadd.f32 %v3886, %v4270
          %v4272 = vpop.f32.mrb[0].mxu0
          %4273 = vmatprep.mubr.f32.mxu0 %v2132
          %4274 = vmatmul.mubr.f32.gmra.mrb[0].mxu0 %v2131
          %v4275 = vpop.f32.mrb[0].mxu0
          %v4276 = vadd.f32 %v3891, %v4275
          %v4277 = vpop.f32.mrb[0].mxu0
          %4278 = vmatprep.mubr.f32.mxu0 %v2136
          %4279 = vmatmul.mubr.f32.gmra.mrb[0].mxu0 %v2135
          %v4280 = vpop.f32.mrb[0].mxu0
          %v4281 = vadd.f32 %v3896, %v4280
          %v4282 = vpop.f32.mrb[0].mxu0
          %4283 = vmatprep.mubr.f32.mxu0 %v2140
          %4284 = vmatmul.mubr.f32.gmra.mrb[0].mxu0 %v2139
          %v4285 = vpop.f32.mrb[0].mxu0
          %v4286 = vadd.f32 %v3901, %v4285
          %v4287 = vpop.f32.mrb[0].mxu0
          %4288 = vmatprep.mubr.f32.mxu0 %v2144
          %4289 = vmatmul.mubr.f32.gmra.mrb[0].mxu0 %v2143
          %v4290 = vpop.f32.mrb[0].mxu0
          %v4291 = vadd.f32 %v3906, %v4290
          %v4292 = vpop.f32.mrb[0].mxu0
          %4293 = vmatprep.mubr.f32.mxu0 %v2148
          %4294 = vmatmul.mubr.f32.gmra.mrb[0].mxu0 %v2147
          %v4295 = vpop.f32.mrb[0].mxu0
          %v4296 = vadd.f32 %v3911, %v4295
          %v4297 = vpop.f32.mrb[0].mxu0
          %4298 = vmatprep.mubr.f32.mxu0 %v2152
          %4299 = vmatmul.mubr.f32.gmra.mrb[0].mxu0 %v2151
          %v4300 = vpop.f32.mrb[0].mxu0
          %v4301 = vadd.f32 %v3916, %v4300
          %v4302 = vpop.f32.mrb[0].mxu0
          %4303 = vmatprep.mubr.f32.mxu0 %v2156
          %4304 = vmatmul.mubr.f32.gmra.mrb[0].mxu0 %v2155
          %v4305 = vpop.f32.mrb[0].mxu0
          %v4306 = vadd.f32 %v3921, %v4305
          %v4307 = vpop.f32.mrb[0].mxu0
          %4308 = vmatprep.mubr.f32.mxu0 %v2160
          %4309 = vmatmul.mubr.f32.gmra.mrb[0].mxu0 %v2159
          %v4310 = vpop.f32.mrb[0].mxu0
          %v4311 = vadd.f32 %v3926, %v4310
          %v4312 = vpop.f32.mrb[0].mxu0
          %4313 = vmatprep.mubr.f32.mxu0 %v2164
          %4314 = vmatmul.mubr.f32.gmra.mrb[0].mxu0 %v2163
          %v4315 = vpop.f32.mrb[0].mxu0
          %v4316 = vadd.f32 %v3931, %v4315
          %v4317 = vpop.f32.mrb[0].mxu0
          %4318 = vmatprep.mubr.f32.mxu0 %v2168
          %4319 = vmatmul.mubr.f32.gmra.mrb[0].mxu0 %v2167
          %v4320 = vpop.f32.mrb[0].mxu0
          %v4321 = vadd.f32 %v3936, %v4320
          %v4322 = vpop.f32.mrb[0].mxu0
          %4323 = vmatprep.mubr.f32.mxu0 %v2172
          %4324 = vmatmul.mubr.f32.gmra.mrb[0].mxu0 %v2171
          %v4325 = vpop.f32.mrb[0].mxu0
          %v4326 = vadd.f32 %v3941, %v4325
          %v4327 = vpop.f32.mrb[0].mxu0
          %4328 = vmatprep.mubr.f32.mxu0 %v2176
          %4329 = vmatmul.mubr.f32.gmra.mrb[0].mxu0 %v2175
          %v4330 = vpop.f32.mrb[0].mxu0
          %v4331 = vadd.f32 %v3946, %v4330
          %v4332 = vpop.f32.mrb[0].mxu0
          %4333 = vmatprep.mubr.f32.mxu0 %v2180
          %4334 = vmatmul.mubr.f32.gmra.mrb[0].mxu0 %v2179
          %v4335 = vpop.f32.mrb[0].mxu0
          %v4336 = vadd.f32 %v3951, %v4335
          %v4337 = vpop.f32.mrb[0].mxu0
          %4338 = vmatprep.mubr.f32.mxu0 %v2184
          %4339 = vmatmul.mubr.f32.gmra.mrb[0].mxu0 %v2183
          %v4340 = vpop.f32.mrb[0].mxu0
          %v4341 = vadd.f32 %v3956, %v4340
          %v4342 = vpop.f32.mrb[0].mxu0
          %4343 = vmatprep.mubr.f32.mxu0 %v2188
          %4344 = vmatmul.mubr.f32.gmra.mrb[0].mxu0 %v2187
          %v4345 = vpop.f32.mrb[0].mxu0
          %v4346 = vadd.f32 %v3961, %v4345
          %v4347 = vpop.f32.mrb[0].mxu0
          %4348 = vmatprep.mubr.f32.mxu0 %v2192
          %4349 = vmatmul.mubr.f32.gmra.mrb[0].mxu0 %v2191
          %v4350 = vpop.f32.mrb[0].mxu0
          %v4351 = vadd.f32 %v3966, %v4350
          %v4352 = vpop.f32.mrb[0].mxu0
          %4353 = vmatprep.mubr.f32.mxu0 %v2196
          %4354 = vmatmul.mubr.f32.gmra.mrb[0].mxu0 %v2195
          %v4355 = vpop.f32.mrb[0].mxu0
          %v4356 = vadd.f32 %v3971, %v4355
          %v4357 = vpop.f32.mrb[0].mxu0
          %4358 = vmatprep.mubr.f32.mxu0 %v2200
          %4359 = vmatmul.mubr.f32.gmra.mrb[0].mxu0 %v2199
          %v4360 = vpop.f32.mrb[0].mxu0
          %v4361 = vadd.f32 %v3976, %v4360
          %v4362 = vpop.f32.mrb[0].mxu0
          %4363 = vmatprep.mubr.f32.mxu0 %v2204
          %4364 = vmatmul.mubr.f32.gmra.mrb[0].mxu0 %v2203
          %v4365 = vpop.f32.mrb[0].mxu0
          %v4366 = vadd.f32 %v3981, %v4365
          %v4367 = vpop.f32.mrb[0].mxu0
          %4368 = vmatprep.mubr.f32.mxu0 %v2208
          %4369 = vmatmul.mubr.f32.gmra.mrb[0].mxu0 %v2207
          %v4370 = vpop.f32.mrb[0].mxu0
          %v4371 = vadd.f32 %v3986, %v4370
          %v4372 = vpop.f32.mrb[0].mxu0
          %4373 = vmatprep.mubr.f32.mxu0 %v2212
          %4374 = vmatmul.mubr.f32.gmra.mrb[0].mxu0 %v2211
          %v4375 = vpop.f32.mrb[0].mxu0
          %v4376 = vadd.f32 %v3991, %v4375
          %v4377 = vpop.f32.mrb[0].mxu0
          %4378 = vmatprep.mubr.f32.mxu0 %v2216
          %4379 = vmatmul.mubr.f32.gmra.mrb[0].mxu0 %v2215
          %v4380 = vpop.f32.mrb[0].mxu0
          %v4381 = vadd.f32 %v3996, %v4380
          %v4382 = vpop.f32.mrb[0].mxu0
          %4383 = vmatprep.mubr.f32.mxu0 %v2220
          %4384 = vmatmul.mubr.f32.gmra.mrb[0].mxu0 %v2219
          %v4385 = vpop.f32.mrb[0].mxu0
          %v4386 = vadd.f32 %v4001, %v4385
          %v4387 = vpop.f32.mrb[0].mxu0
          %4388 = vmatprep.mubr.f32.mxu0 %v2224
          %4389 = vmatmul.mubr.f32.gmra.mrb[0].mxu0 %v2223
          %v4390 = vpop.f32.mrb[0].mxu0
          %v4391 = vadd.f32 %v4006, %v4390
          %v4392 = vpop.f32.mrb[0].mxu0
          %4393 = vmatprep.mubr.f32.mxu0 %v2228
          %4394 = vmatmul.mubr.f32.gmra.mrb[0].mxu0 %v2227
          %v4395 = vpop.f32.mrb[0].mxu0
          %v4396 = vadd.f32 %v4011, %v4395
          %v4397 = vpop.f32.mrb[0].mxu0
          %4398 = vmatprep.mubr.f32.mxu0 %v2232
          %4399 = vmatmul.mubr.f32.gmra.mrb[0].mxu0 %v2231
          %v4400 = vpop.f32.mrb[0].mxu0
          %v4401 = vadd.f32 %v4016, %v4400
          %v4402 = vpop.f32.mrb[0].mxu0
          %4403 = vmatprep.mubr.f32.mxu0 %v2236
          %4404 = vmatmul.mubr.f32.gmra.mrb[0].mxu0 %v2235
          %v4405 = vpop.f32.mrb[0].mxu0
          %v4406 = vadd.f32 %v4021, %v4405
          %v4407 = vpop.f32.mrb[0].mxu0
          %4408 = vmatprep.mubr.f32.mxu0 %v2240
          %4409 = vmatmul.mubr.f32.gmra.mrb[0].mxu0 %v2239
          %v4410 = vpop.f32.mrb[0].mxu0
          %v4411 = vadd.f32 %v4026, %v4410
          %v4412 = vpop.f32.mrb[0].mxu0
          %4413 = vmatprep.mubr.f32.mxu0 %v2244
          %4414 = vmatmul.mubr.f32.gmra.mrb[0].mxu0 %v2243
          %v4415 = vpop.f32.mrb[0].mxu0
          %v4416 = vadd.f32 %v4031, %v4415
          %v4417 = vpop.f32.mrb[0].mxu0
          %4418 = vmatprep.mubr.f32.mxu0 %v2248
          %4419 = vmatmul.mubr.f32.gmra.mrb[0].mxu0 %v2247
          %v4420 = vpop.f32.mrb[0].mxu0
          %v4421 = vadd.f32 %v4036, %v4420
          %v4422 = vpop.f32.mrb[0].mxu0
          %4423 = vmatprep.mubr.f32.mxu0 %v2252
          %4424 = vmatmul.mubr.f32.gmra.mrb[0].mxu0 %v2251
          %v4425 = vpop.f32.mrb[0].mxu0
          %v4426 = vadd.f32 %v4041, %v4425
          %v4427 = vpop.f32.mrb[0].mxu0
          %4428 = vmatprep.mubr.f32.mxu0 %v2256
          %4429 = vmatmul.mubr.f32.gmra.mrb[0].mxu0 %v2255
          %v4430 = vpop.f32.mrb[0].mxu0
          %v4431 = vadd.f32 %v4046, %v4430
          %v4432 = vpop.f32.mrb[0].mxu0
          %4433 = vmatprep.mubr.f32.mxu0 %v2260
          %4434 = vmatmul.mubr.f32.gmra.mrb[0].mxu0 %v2259
          %v4435 = vpop.f32.mrb[0].mxu0
          %v4436 = vadd.f32 %v4051, %v4435
          %v4437 = vpop.f32.mrb[0].mxu0
          %4438 = vmatprep.mubr.f32.mxu0 %v2264
          %4439 = vmatmul.mubr.f32.gmra.mrb[0].mxu0 %v2263
          %v4440 = vpop.f32.mrb[0].mxu0
          %v4441 = vadd.f32 %v4056, %v4440
          %v4442 = vpop.f32.mrb[0].mxu0
          %4443 = vmatprep.mubr.f32.mxu0 %v2268
          %4444 = vmatmul.mubr.f32.gmra.mrb[0].mxu0 %v2267
          %v4445 = vpop.f32.mrb[0].mxu0
          %v4446 = vadd.f32 %v4061, %v4445
          %v4447 = vpop.f32.mrb[0].mxu0
          %4448 = vmatprep.mubr.f32.mxu0 %v2272
          %4449 = vmatmul.mubr.f32.gmra.mrb[0].mxu0 %v2271
          %v4450 = vpop.f32.mrb[0].mxu0
          %v4451 = vadd.f32 %v4066, %v4450
          %v4452 = vpop.f32.mrb[0].mxu0
          %4453 = vdwg.mxu0
          %4454 = vset.pattern.permute.xlu0 1
          %4455 = vperm.xlu0 %4454, %v1179
          %v4456 = vpop.permute.xlu0 %4455
          %4458 = vset.pattern.permute.xlu0 1
          %4459 = vperm.xlu0 %4458, %v1180
          %v4460 = vpop.permute.xlu0 %4459
          %4462 = vset.pattern.permute.xlu0 1
          %4463 = vperm.xlu0 %4462, %v1181
          %v4464 = vpop.permute.xlu0 %4463
          %4466 = vset.pattern.permute.xlu0 1
          %4467 = vperm.xlu0 %4466, %v1182
          %v4468 = vpop.permute.xlu0 %4467
          %4470 = vset.pattern.permute.xlu0 1
          %4471 = vperm.xlu0 %4470, %v1183
          %v4472 = vpop.permute.xlu0 %4471
          %4474 = vset.pattern.permute.xlu0 1
          %4475 = vperm.xlu0 %4474, %v1184
          %v4476 = vpop.permute.xlu0 %4475
          %4478 = vset.pattern.permute.xlu0 1
          %4479 = vperm.xlu0 %4478, %v1185
          %v4480 = vpop.permute.xlu0 %4479
          %4482 = vset.pattern.permute.xlu0 1
          %4483 = vperm.xlu0 %4482, %v1186
          %v4484 = vpop.permute.xlu0 %4483
          %4486 = vset.pattern.permute.xlu0 1
          %4487 = vperm.xlu0 %4486, %v1187
          %v4488 = vpop.permute.xlu0 %4487
          %4490 = vset.pattern.permute.xlu0 1
          %4491 = vperm.xlu0 %4490, %v1188
          %v4492 = vpop.permute.xlu0 %4491
          %4494 = vset.pattern.permute.xlu0 1
          %4495 = vperm.xlu0 %4494, %v1189
          %v4496 = vpop.permute.xlu0 %4495
          %4498 = vset.pattern.permute.xlu0 1
          %4499 = vperm.xlu0 %4498, %v1190
          %v4500 = vpop.permute.xlu0 %4499
          %4502 = vset.pattern.permute.xlu0 1
          %4503 = vperm.xlu0 %4502, %v1191
          %v4504 = vpop.permute.xlu0 %4503
          %4506 = vset.pattern.permute.xlu0 1
          %4507 = vperm.xlu0 %4506, %v1192
          %v4508 = vpop.permute.xlu0 %4507
          %4510 = vset.pattern.permute.xlu0 1
          %4511 = vperm.xlu0 %4510, %v1193
          %v4512 = vpop.permute.xlu0 %4511
          %4514 = vset.pattern.permute.xlu0 1
          %4515 = vperm.xlu0 %4514, %v1194
          %v4516 = vpop.permute.xlu0 %4515
          %4518 = vset.pattern.permute.xlu0 1
          %4519 = vperm.xlu0 %4518, %v1195
          %v4520 = vpop.permute.xlu0 %4519
          %4522 = vset.pattern.permute.xlu0 1
          %4523 = vperm.xlu0 %4522, %v1196
          %v4524 = vpop.permute.xlu0 %4523
          %4526 = vset.pattern.permute.xlu0 1
          %4527 = vperm.xlu0 %4526, %v1197
          %v4528 = vpop.permute.xlu0 %4527
          %4530 = vset.pattern.permute.xlu0 1
          %4531 = vperm.xlu0 %4530, %v1198
          %v4532 = vpop.permute.xlu0 %4531
          %4534 = vset.pattern.permute.xlu0 1
          %4535 = vperm.xlu0 %4534, %v1199
          %v4536 = vpop.permute.xlu0 %4535
          %4538 = vset.pattern.permute.xlu0 1
          %4539 = vperm.xlu0 %4538, %v1200
          %v4540 = vpop.permute.xlu0 %4539
          %4542 = vset.pattern.permute.xlu0 1
          %4543 = vperm.xlu0 %4542, %v1201
          %v4544 = vpop.permute.xlu0 %4543
          %4546 = vset.pattern.permute.xlu0 1
          %4547 = vperm.xlu0 %4546, %v1202
          %v4548 = vpop.permute.xlu0 %4547
          %4550 = vset.pattern.permute.xlu0 1
          %4551 = vperm.xlu0 %4550, %v1203
          %v4552 = vpop.permute.xlu0 %4551
          %4554 = vset.pattern.permute.xlu0 1
          %4555 = vperm.xlu0 %4554, %v1204
          %v4556 = vpop.permute.xlu0 %4555
          %4558 = vset.pattern.permute.xlu0 1
          %4559 = vperm.xlu0 %4558, %v1205
          %v4560 = vpop.permute.xlu0 %4559
          %4562 = vset.pattern.permute.xlu0 1
          %4563 = vperm.xlu0 %4562, %v1206
          %v4564 = vpop.permute.xlu0 %4563
          %4566 = vset.pattern.permute.xlu0 1
          %4567 = vperm.xlu0 %4566, %v1207
          %v4568 = vpop.permute.xlu0 %4567
          %4570 = vset.pattern.permute.xlu0 1
          %4571 = vperm.xlu0 %4570, %v1208
          %v4572 = vpop.permute.xlu0 %4571
          %4574 = vset.pattern.permute.xlu0 1
          %4575 = vperm.xlu0 %4574, %v1209
          %v4576 = vpop.permute.xlu0 %4575
          %4578 = vset.pattern.permute.xlu0 1
          %4579 = vperm.xlu0 %4578, %v1210
          %v4580 = vpop.permute.xlu0 %4579
          %4582 = vset.pattern.permute.xlu0 1
          %4583 = vperm.xlu0 %4582, %v1211
          %v4584 = vpop.permute.xlu0 %4583
          %4586 = vset.pattern.permute.xlu0 1
          %4587 = vperm.xlu0 %4586, %v1212
          %v4588 = vpop.permute.xlu0 %4587
          %4590 = vset.pattern.permute.xlu0 1
          %4591 = vperm.xlu0 %4590, %v1213
          %v4592 = vpop.permute.xlu0 %4591
          %4594 = vset.pattern.permute.xlu0 1
          %4595 = vperm.xlu0 %4594, %v1214
          %v4596 = vpop.permute.xlu0 %4595
          %4598 = vset.pattern.permute.xlu0 1
          %4599 = vperm.xlu0 %4598, %v1215
          %v4600 = vpop.permute.xlu0 %4599
          %4602 = vset.pattern.permute.xlu0 1
          %4603 = vperm.xlu0 %4602, %v1216
          %v4604 = vpop.permute.xlu0 %4603
          %4606 = vset.pattern.permute.xlu0 1
          %4607 = vperm.xlu0 %4606, %v1217
          %v4608 = vpop.permute.xlu0 %4607
          %4610 = vset.pattern.permute.xlu0 1
          %4611 = vperm.xlu0 %4610, %v1218
          %v4612 = vpop.permute.xlu0 %4611
          %4614 = vset.pattern.permute.xlu0 1
          %4615 = vperm.xlu0 %4614, %v1219
          %v4616 = vpop.permute.xlu0 %4615
          %4618 = vset.pattern.permute.xlu0 1
          %4619 = vperm.xlu0 %4618, %v1220
          %v4620 = vpop.permute.xlu0 %4619
          %4622 = vset.pattern.permute.xlu0 1
          %4623 = vperm.xlu0 %4622, %v1221
          %v4624 = vpop.permute.xlu0 %4623
          %4626 = vset.pattern.permute.xlu0 1
          %4627 = vperm.xlu0 %4626, %v1222
          %v4628 = vpop.permute.xlu0 %4627
          %4630 = vset.pattern.permute.xlu0 1
          %4631 = vperm.xlu0 %4630, %v1223
          %v4632 = vpop.permute.xlu0 %4631
          %4634 = vset.pattern.permute.xlu0 1
          %4635 = vperm.xlu0 %4634, %v1224
          %v4636 = vpop.permute.xlu0 %4635
          %4638 = vset.pattern.permute.xlu0 1
          %4639 = vperm.xlu0 %4638, %v1225
          %v4640 = vpop.permute.xlu0 %4639
          %4642 = vset.pattern.permute.xlu0 1
          %4643 = vperm.xlu0 %4642, %v1226
          %v4644 = vpop.permute.xlu0 %4643
          %4646 = vset.pattern.permute.xlu0 1
          %4647 = vperm.xlu0 %4646, %v1227
          %v4648 = vpop.permute.xlu0 %4647
          %4650 = vset.pattern.permute.xlu0 1
          %4651 = vperm.xlu0 %4650, %v1228
          %v4652 = vpop.permute.xlu0 %4651
          %4654 = vset.pattern.permute.xlu0 1
          %4655 = vperm.xlu0 %4654, %v1229
          %v4656 = vpop.permute.xlu0 %4655
          %4658 = vset.pattern.permute.xlu0 1
          %4659 = vperm.xlu0 %4658, %v1230
          %v4660 = vpop.permute.xlu0 %4659
          %4662 = vset.pattern.permute.xlu0 1
          %4663 = vperm.xlu0 %4662, %v1231
          %v4664 = vpop.permute.xlu0 %4663
          %4666 = vset.pattern.permute.xlu0 1
          %4667 = vperm.xlu0 %4666, %v1232
          %v4668 = vpop.permute.xlu0 %4667
          %4670 = vset.pattern.permute.xlu0 1
          %4671 = vperm.xlu0 %4670, %v1233
          %v4672 = vpop.permute.xlu0 %4671
          %4674 = vset.pattern.permute.xlu0 1
          %4675 = vperm.xlu0 %4674, %v1234
          %v4676 = vpop.permute.xlu0 %4675
          %4678 = vset.pattern.permute.xlu0 1
          %4679 = vperm.xlu0 %4678, %v1235
          %v4680 = vpop.permute.xlu0 %4679
          %4682 = vset.pattern.permute.xlu0 1
          %4683 = vperm.xlu0 %4682, %v1236
          %v4684 = vpop.permute.xlu0 %4683
          %4686 = vset.pattern.permute.xlu0 1
          %4687 = vperm.xlu0 %4686, %v1237
          %v4688 = vpop.permute.xlu0 %4687
          %4690 = vset.pattern.permute.xlu0 1
          %4691 = vperm.xlu0 %4690, %v1238
          %v4692 = vpop.permute.xlu0 %4691
          %4694 = vset.pattern.permute.xlu0 1
          %4695 = vperm.xlu0 %4694, %v1239
          %v4696 = vpop.permute.xlu0 %4695
          %4698 = vset.pattern.permute.xlu0 1
          %4699 = vperm.xlu0 %4698, %v1240
          %v4700 = vpop.permute.xlu0 %4699
          %4702 = vset.pattern.permute.xlu0 1
          %4703 = vperm.xlu0 %4702, %v1241
          %v4704 = vpop.permute.xlu0 %4703
          %4706 = vset.pattern.permute.xlu0 1
          %4707 = vperm.xlu0 %4706, %v1242
          %v4708 = vpop.permute.xlu0 %4707
          %v4710 = vmul.f32 %v4456, %v4136
          %v4711 = vmul.f32 %v4460, %v4141
          %v4712 = vmul.f32 %v4464, %v4146
          %v4713 = vmul.f32 %v4468, %v4151
          %v4714 = vmul.f32 %v4472, %v4156
          %v4715 = vmul.f32 %v4476, %v4161
          %v4716 = vmul.f32 %v4480, %v4166
          %v4717 = vmul.f32 %v4484, %v4171
          %v4718 = vmul.f32 %v4488, %v4176
          %v4719 = vmul.f32 %v4492, %v4181
          %v4720 = vmul.f32 %v4496, %v4186
          %v4721 = vmul.f32 %v4500, %v4191
          %v4722 = vmul.f32 %v4504, %v4196
          %v4723 = vmul.f32 %v4508, %v4201
          %v4724 = vmul.f32 %v4512, %v4206
          %v4725 = vmul.f32 %v4516, %v4211
          %v4726 = vmul.f32 %v4520, %v4216
          %v4727 = vmul.f32 %v4524, %v4221
          %v4728 = vmul.f32 %v4528, %v4226
          %v4729 = vmul.f32 %v4532, %v4231
          %v4730 = vmul.f32 %v4536, %v4236
          %v4731 = vmul.f32 %v4540, %v4241
          %v4732 = vmul.f32 %v4544, %v4246
          %v4733 = vmul.f32 %v4548, %v4251
          %v4734 = vmul.f32 %v4552, %v4256
          %v4735 = vmul.f32 %v4556, %v4261
          %v4736 = vmul.f32 %v4560, %v4266
          %v4737 = vmul.f32 %v4564, %v4271
          %v4738 = vmul.f32 %v4568, %v4276
          %v4739 = vmul.f32 %v4572, %v4281
          %v4740 = vmul.f32 %v4576, %v4286
          %v4741 = vmul.f32 %v4580, %v4291
          %v4742 = vmul.f32 %v4584, %v4296
          %v4743 = vmul.f32 %v4588, %v4301
          %v4744 = vmul.f32 %v4592, %v4306
          %v4745 = vmul.f32 %v4596, %v4311
          %v4746 = vmul.f32 %v4600, %v4316
          %v4747 = vmul.f32 %v4604, %v4321
          %v4748 = vmul.f32 %v4608, %v4326
          %v4749 = vmul.f32 %v4612, %v4331
          %v4750 = vmul.f32 %v4616, %v4336
          %v4751 = vmul.f32 %v4620, %v4341
          %v4752 = vmul.f32 %v4624, %v4346
          %v4753 = vmul.f32 %v4628, %v4351
          %v4754 = vmul.f32 %v4632, %v4356
          %v4755 = vmul.f32 %v4636, %v4361
          %v4756 = vmul.f32 %v4640, %v4366
          %v4757 = vmul.f32 %v4644, %v4371
          %v4758 = vmul.f32 %v4648, %v4376
          %v4759 = vmul.f32 %v4652, %v4381
          %v4760 = vmul.f32 %v4656, %v4386
          %v4761 = vmul.f32 %v4660, %v4391
          %v4762 = vmul.f32 %v4664, %v4396
          %v4763 = vmul.f32 %v4668, %v4401
          %v4764 = vmul.f32 %v4672, %v4406
          %v4765 = vmul.f32 %v4676, %v4411
          %v4766 = vmul.f32 %v4680, %v4416
          %v4767 = vmul.f32 %v4684, %v4421
          %v4768 = vmul.f32 %v4688, %v4426
          %v4769 = vmul.f32 %v4692, %v4431
          %v4770 = vmul.f32 %v4696, %v4436
          %v4771 = vmul.f32 %v4700, %v4441
          %v4772 = vmul.f32 %v4704, %v4446
          %v4773 = vmul.f32 %v4708, %v4451
          %v4774 = vadd.f32 %v3555, %v4710
          %v4775 = vadd.f32 %v3556, %v4711
          %v4776 = vadd.f32 %v3557, %v4712
          %v4777 = vadd.f32 %v3558, %v4713
          %v4778 = vadd.f32 %v3559, %v4714
          %v4779 = vadd.f32 %v3560, %v4715
          %v4780 = vadd.f32 %v3561, %v4716
          %v4781 = vadd.f32 %v3562, %v4717
          %v4782 = vadd.f32 %v3563, %v4718
          %v4783 = vadd.f32 %v3564, %v4719
          %v4784 = vadd.f32 %v3565, %v4720
          %v4785 = vadd.f32 %v3566, %v4721
          %v4786 = vadd.f32 %v3567, %v4722
          %v4787 = vadd.f32 %v3568, %v4723
          %v4788 = vadd.f32 %v3569, %v4724
          %v4789 = vadd.f32 %v3570, %v4725
          %v4790 = vadd.f32 %v3571, %v4726
          %v4791 = vadd.f32 %v3572, %v4727
          %v4792 = vadd.f32 %v3573, %v4728
          %v4793 = vadd.f32 %v3574, %v4729
          %v4794 = vadd.f32 %v3575, %v4730
          %v4795 = vadd.f32 %v3576, %v4731
          %v4796 = vadd.f32 %v3577, %v4732
          %v4797 = vadd.f32 %v3578, %v4733
          %v4798 = vadd.f32 %v3579, %v4734
          %v4799 = vadd.f32 %v3580, %v4735
          %v4800 = vadd.f32 %v3581, %v4736
          %v4801 = vadd.f32 %v3582, %v4737
          %v4802 = vadd.f32 %v3583, %v4738
          %v4803 = vadd.f32 %v3584, %v4739
          %v4804 = vadd.f32 %v3585, %v4740
          %v4805 = vadd.f32 %v3586, %v4741
          %v4806 = vadd.f32 %v3587, %v4742
          %v4807 = vadd.f32 %v3588, %v4743
          %v4808 = vadd.f32 %v3589, %v4744
          %v4809 = vadd.f32 %v3590, %v4745
          %v4810 = vadd.f32 %v3591, %v4746
          %v4811 = vadd.f32 %v3592, %v4747
          %v4812 = vadd.f32 %v3593, %v4748
          %v4813 = vadd.f32 %v3594, %v4749
          %v4814 = vadd.f32 %v3595, %v4750
          %v4815 = vadd.f32 %v3596, %v4751
          %v4816 = vadd.f32 %v3597, %v4752
          %v4817 = vadd.f32 %v3598, %v4753
          %v4818 = vadd.f32 %v3599, %v4754
          %v4819 = vadd.f32 %v3600, %v4755
          %v4820 = vadd.f32 %v3601, %v4756
          %v4821 = vadd.f32 %v3602, %v4757
          %v4822 = vadd.f32 %v3603, %v4758
          %v4823 = vadd.f32 %v3604, %v4759
          %v4824 = vadd.f32 %v3605, %v4760
          %v4825 = vadd.f32 %v3606, %v4761
          %v4826 = vadd.f32 %v3607, %v4762
          %v4827 = vadd.f32 %v3608, %v4763
          %v4828 = vadd.f32 %v3609, %v4764
          %v4829 = vadd.f32 %v3610, %v4765
          %v4830 = vadd.f32 %v3611, %v4766
          %v4831 = vadd.f32 %v3612, %v4767
          %v4832 = vadd.f32 %v3613, %v4768
          %v4833 = vadd.f32 %v3614, %v4769
          %v4834 = vadd.f32 %v3615, %v4770
          %v4835 = vadd.f32 %v3616, %v4771
          %v4836 = vadd.f32 %v3617, %v4772
          %v4837 = vadd.f32 %v3618, %v4773
          %s4838 = scalar_lea.vmem %s985, 1024 [#allocation5]
          %v4839 = vld [vmem:[%s4838] sm:$0xff]
          %v4840 = vld [vmem:[%s4838 + $0x8] sm:$0xff]
          %v4841 = vld [vmem:[%s4838 + $0x10] sm:$0xff]
          %v4842 = vld [vmem:[%s4838 + $0x18] sm:$0xff]
          %v4843 = vld [vmem:[%s4838 + $0x20] sm:$0xff]
          %v4844 = vld [vmem:[%s4838 + $0x28] sm:$0xff]
          %v4845 = vld [vmem:[%s4838 + $0x30] sm:$0xff]
          %v4846 = vld [vmem:[%s4838 + $0x38] sm:$0xff]
          %v4847 = vld [vmem:[%s4838 + $0x40] sm:$0xff]
          %v4848 = vld [vmem:[%s4838 + $0x48] sm:$0xff]
          %v4849 = vld [vmem:[%s4838 + $0x50] sm:$0xff]
          %v4850 = vld [vmem:[%s4838 + $0x58] sm:$0xff]
          %v4851 = vld [vmem:[%s4838 + $0x60] sm:$0xff]
          %v4852 = vld [vmem:[%s4838 + $0x68] sm:$0xff]
          %v4853 = vld [vmem:[%s4838 + $0x70] sm:$0xff]
          %v4854 = vld [vmem:[%s4838 + $0x78] sm:$0xff]
          %v4855 = vld [vmem:[%s4838 + $0x80] sm:$0xff]
          %v4856 = vld [vmem:[%s4838 + $0x88] sm:$0xff]
          %v4857 = vld [vmem:[%s4838 + $0x90] sm:$0xff]
          %v4858 = vld [vmem:[%s4838 + $0x98] sm:$0xff]
          %v4859 = vld [vmem:[%s4838 + $0xa0] sm:$0xff]
          %v4860 = vld [vmem:[%s4838 + $0xa8] sm:$0xff]
          %v4861 = vld [vmem:[%s4838 + $0xb0] sm:$0xff]
          %v4862 = vld [vmem:[%s4838 + $0xb8] sm:$0xff]
          %v4863 = vld [vmem:[%s4838 + $0xc0] sm:$0xff]
          %v4864 = vld [vmem:[%s4838 + $0xc8] sm:$0xff]
          %v4865 = vld [vmem:[%s4838 + $0xd0] sm:$0xff]
          %v4866 = vld [vmem:[%s4838 + $0xd8] sm:$0xff]
          %v4867 = vld [vmem:[%s4838 + $0xe0] sm:$0xff]
          %v4868 = vld [vmem:[%s4838 + $0xe8] sm:$0xff]
          %v4869 = vld [vmem:[%s4838 + $0xf0] sm:$0xff]
          %v4870 = vld [vmem:[%s4838 + $0xf8] sm:$0xff]
          %v4871 = vld [vmem:[%s4838 + $0x100] sm:$0xff]
          %v4872 = vld [vmem:[%s4838 + $0x108] sm:$0xff]
          %v4873 = vld [vmem:[%s4838 + $0x110] sm:$0xff]
          %v4874 = vld [vmem:[%s4838 + $0x118] sm:$0xff]
          %v4875 = vld [vmem:[%s4838 + $0x120] sm:$0xff]
          %v4876 = vld [vmem:[%s4838 + $0x128] sm:$0xff]
          %v4877 = vld [vmem:[%s4838 + $0x130] sm:$0xff]
          %v4878 = vld [vmem:[%s4838 + $0x138] sm:$0xff]
          %v4879 = vld [vmem:[%s4838 + $0x140] sm:$0xff]
          %v4880 = vld [vmem:[%s4838 + $0x148] sm:$0xff]
          %v4881 = vld [vmem:[%s4838 + $0x150] sm:$0xff]
          %v4882 = vld [vmem:[%s4838 + $0x158] sm:$0xff]
          %v4883 = vld [vmem:[%s4838 + $0x160] sm:$0xff]
          %v4884 = vld [vmem:[%s4838 + $0x168] sm:$0xff]
          %v4885 = vld [vmem:[%s4838 + $0x170] sm:$0xff]
          %v4886 = vld [vmem:[%s4838 + $0x178] sm:$0xff]
          %v4887 = vld [vmem:[%s4838 + $0x180] sm:$0xff]
          %v4888 = vld [vmem:[%s4838 + $0x188] sm:$0xff]
          %v4889 = vld [vmem:[%s4838 + $0x190] sm:$0xff]
          %v4890 = vld [vmem:[%s4838 + $0x198] sm:$0xff]
          %v4891 = vld [vmem:[%s4838 + $0x1a0] sm:$0xff]
          %v4892 = vld [vmem:[%s4838 + $0x1a8] sm:$0xff]
          %v4893 = vld [vmem:[%s4838 + $0x1b0] sm:$0xff]
          %v4894 = vld [vmem:[%s4838 + $0x1b8] sm:$0xff]
          %v4895 = vld [vmem:[%s4838 + $0x1c0] sm:$0xff]
          %v4896 = vld [vmem:[%s4838 + $0x1c8] sm:$0xff]
          %v4897 = vld [vmem:[%s4838 + $0x1d0] sm:$0xff]
          %v4898 = vld [vmem:[%s4838 + $0x1d8] sm:$0xff]
          %v4899 = vld [vmem:[%s4838 + $0x1e0] sm:$0xff]
          %v4900 = vld [vmem:[%s4838 + $0x1e8] sm:$0xff]
          %v4901 = vld [vmem:[%s4838 + $0x1f0] sm:$0xff]
          %v4902 = vld [vmem:[%s4838 + $0x1f8] sm:$0xff]
          %4903 = vmatprep.subr.mxu0 0.0
          %4904 = vmatpush1.msra.mxu0 %v4839
          %4905 = vmatprep.subr.mxu0 0.0
          %4906 = vmatpush1.msra.mxu0 %v4840
          %4907 = vmatprep.subr.mxu0 0.0
          %4908 = vmatpush1.msra.mxu0 %v4841
          %4909 = vmatprep.subr.mxu0 0.0
          %4910 = vmatpush1.msra.mxu0 %v4842
          %4911 = vmatprep.subr.mxu0 0.0
          %4912 = vmatpush1.msra.mxu0 %v4843
          %4913 = vmatprep.subr.mxu0 0.0
          %4914 = vmatpush1.msra.mxu0 %v4844
          %4915 = vmatprep.subr.mxu0 0.0
          %4916 = vmatpush1.msra.mxu0 %v4845
          %4917 = vmatprep.subr.mxu0 0.0
          %4918 = vmatpush1.msra.mxu0 %v4846
          %4919 = vmatprep.subr.mxu0 0.0
          %4920 = vmatpush1.msra.mxu0 %v4847
          %4921 = vmatprep.subr.mxu0 0.0
          %4922 = vmatpush1.msra.mxu0 %v4848
          %4923 = vmatprep.subr.mxu0 0.0
          %4924 = vmatpush1.msra.mxu0 %v4849
          %4925 = vmatprep.subr.mxu0 0.0
          %4926 = vmatpush1.msra.mxu0 %v4850
          %4927 = vmatprep.subr.mxu0 0.0
          %4928 = vmatpush1.msra.mxu0 %v4851
          %4929 = vmatprep.subr.mxu0 0.0
          %4930 = vmatpush1.msra.mxu0 %v4852
          %4931 = vmatprep.subr.mxu0 0.0
          %4932 = vmatpush1.msra.mxu0 %v4853
          %4933 = vmatprep.subr.mxu0 0.0
          %4934 = vmatpush1.msra.mxu0 %v4854
          %4935 = vmatprep.subr.mxu0 0.0
          %4936 = vmatpush1.msra.mxu0 %v4855
          %4937 = vmatprep.subr.mxu0 0.0
          %4938 = vmatpush1.msra.mxu0 %v4856
          %4939 = vmatprep.subr.mxu0 0.0
          %4940 = vmatpush1.msra.mxu0 %v4857
          %4941 = vmatprep.subr.mxu0 0.0
          %4942 = vmatpush1.msra.mxu0 %v4858
          %4943 = vmatprep.subr.mxu0 0.0
          %4944 = vmatpush1.msra.mxu0 %v4859
          %4945 = vmatprep.subr.mxu0 0.0
          %4946 = vmatpush1.msra.mxu0 %v4860
          %4947 = vmatprep.subr.mxu0 0.0
          %4948 = vmatpush1.msra.mxu0 %v4861
          %4949 = vmatprep.subr.mxu0 0.0
          %4950 = vmatpush1.msra.mxu0 %v4862
          %4951 = vmatprep.subr.mxu0 0.0
          %4952 = vmatpush1.msra.mxu0 %v4863
          %4953 = vmatprep.subr.mxu0 0.0
          %4954 = vmatpush1.msra.mxu0 %v4864
          %4955 = vmatprep.subr.mxu0 0.0
          %4956 = vmatpush1.msra.mxu0 %v4865
          %4957 = vmatprep.subr.mxu0 0.0
          %4958 = vmatpush1.msra.mxu0 %v4866
          %4959 = vmatprep.subr.mxu0 0.0
          %4960 = vmatpush1.msra.mxu0 %v4867
          %4961 = vmatprep.subr.mxu0 0.0
          %4962 = vmatpush1.msra.mxu0 %v4868
          %4963 = vmatprep.subr.mxu0 0.0
          %4964 = vmatpush1.msra.mxu0 %v4869
          %4965 = vmatprep.subr.mxu0 0.0
          %4966 = vmatpush1.msra.mxu0 %v4870
          %4967 = vmatprep.mubr.f32.mxu0 %v2018
          %4968 = vmatmul.mubr.f32.gmra.mrb[0].mxu0 %v2017
          %v4969 = vpop.f32.mrb[0].mxu0
          %v4970 = vadd.f32 0.0, %v4969
          %v4971 = vpop.f32.mrb[0].mxu0
          %4972 = vmatprep.mubr.f32.mxu0 %v2022
          %4973 = vmatmul.mubr.f32.gmra.mrb[0].mxu0 %v2021
          %v4974 = vpop.f32.mrb[0].mxu0
          %v4975 = vadd.f32 0.0, %v4974
          %v4976 = vpop.f32.mrb[0].mxu0
          %4977 = vmatprep.mubr.f32.mxu0 %v2026
          %4978 = vmatmul.mubr.f32.gmra.mrb[0].mxu0 %v2025
          %v4979 = vpop.f32.mrb[0].mxu0
          %v4980 = vadd.f32 0.0, %v4979
          %v4981 = vpop.f32.mrb[0].mxu0
          %4982 = vmatprep.mubr.f32.mxu0 %v2030
          %4983 = vmatmul.mubr.f32.gmra.mrb[0].mxu0 %v2029
          %v4984 = vpop.f32.mrb[0].mxu0
          %v4985 = vadd.f32 0.0, %v4984
          %v4986 = vpop.f32.mrb[0].mxu0
          %4987 = vmatprep.mubr.f32.mxu0 %v2034
          %4988 = vmatmul.mubr.f32.gmra.mrb[0].mxu0 %v2033
          %v4989 = vpop.f32.mrb[0].mxu0
          %v4990 = vadd.f32 0.0, %v4989
          %v4991 = vpop.f32.mrb[0].mxu0
          %4992 = vmatprep.mubr.f32.mxu0 %v2038
          %4993 = vmatmul.mubr.f32.gmra.mrb[0].mxu0 %v2037
          %v4994 = vpop.f32.mrb[0].mxu0
          %v4995 = vadd.f32 0.0, %v4994
          %v4996 = vpop.f32.mrb[0].mxu0
          %4997 = vmatprep.mubr.f32.mxu0 %v2042
          %4998 = vmatmul.mubr.f32.gmra.mrb[0].mxu0 %v2041
          %v4999 = vpop.f32.mrb[0].mxu0
          %v5000 = vadd.f32 0.0, %v4999
          %v5001 = vpop.f32.mrb[0].mxu0
          %5002 = vmatprep.mubr.f32.mxu0 %v2046
          %5003 = vmatmul.mubr.f32.gmra.mrb[0].mxu0 %v2045
          %v5004 = vpop.f32.mrb[0].mxu0
          %v5005 = vadd.f32 0.0, %v5004
          %v5006 = vpop.f32.mrb[0].mxu0
          %5007 = vmatprep.mubr.f32.mxu0 %v2050
          %5008 = vmatmul.mubr.f32.gmra.mrb[0].mxu0 %v2049
          %v5009 = vpop.f32.mrb[0].mxu0
          %v5010 = vadd.f32 0.0, %v5009
          %v5011 = vpop.f32.mrb[0].mxu0
          %5012 = vmatprep.mubr.f32.mxu0 %v2054
          %5013 = vmatmul.mubr.f32.gmra.mrb[0].mxu0 %v2053
          %v5014 = vpop.f32.mrb[0].mxu0
          %v5015 = vadd.f32 0.0, %v5014
          %v5016 = vpop.f32.mrb[0].mxu0
          %5017 = vmatprep.mubr.f32.mxu0 %v2058
          %5018 = vmatmul.mubr.f32.gmra.mrb[0].mxu0 %v2057
          %v5019 = vpop.f32.mrb[0].mxu0
          %v5020 = vadd.f32 0.0, %v5019
          %v5021 = vpop.f32.mrb[0].mxu0
          %5022 = vmatprep.mubr.f32.mxu0 %v2062
          %5023 = vmatmul.mubr.f32.gmra.mrb[0].mxu0 %v2061
          %v5024 = vpop.f32.mrb[0].mxu0
          %v5025 = vadd.f32 0.0, %v5024
          %v5026 = vpop.f32.mrb[0].mxu0
          %5027 = vmatprep.mubr.f32.mxu0 %v2066
          %5028 = vmatmul.mubr.f32.gmra.mrb[0].mxu0 %v2065
          %v5029 = vpop.f32.mrb[0].mxu0
          %v5030 = vadd.f32 0.0, %v5029
          %v5031 = vpop.f32.mrb[0].mxu0
          %5032 = vmatprep.mubr.f32.mxu0 %v2070
          %5033 = vmatmul.mubr.f32.gmra.mrb[0].mxu0 %v2069
          %v5034 = vpop.f32.mrb[0].mxu0
          %v5035 = vadd.f32 0.0, %v5034
          %v5036 = vpop.f32.mrb[0].mxu0
          %5037 = vmatprep.mubr.f32.mxu0 %v2074
          %5038 = vmatmul.mubr.f32.gmra.mrb[0].mxu0 %v2073
          %v5039 = vpop.f32.mrb[0].mxu0
          %v5040 = vadd.f32 0.0, %v5039
          %v5041 = vpop.f32.mrb[0].mxu0
          %5042 = vmatprep.mubr.f32.mxu0 %v2078
          %5043 = vmatmul.mubr.f32.gmra.mrb[0].mxu0 %v2077
          %v5044 = vpop.f32.mrb[0].mxu0
          %v5045 = vadd.f32 0.0, %v5044
          %v5046 = vpop.f32.mrb[0].mxu0
          %5047 = vmatprep.mubr.f32.mxu0 %v2082
          %5048 = vmatmul.mubr.f32.gmra.mrb[0].mxu0 %v2081
          %v5049 = vpop.f32.mrb[0].mxu0
          %v5050 = vadd.f32 0.0, %v5049
          %v5051 = vpop.f32.mrb[0].mxu0
          %5052 = vmatprep.mubr.f32.mxu0 %v2086
          %5053 = vmatmul.mubr.f32.gmra.mrb[0].mxu0 %v2085
          %v5054 = vpop.f32.mrb[0].mxu0
          %v5055 = vadd.f32 0.0, %v5054
          %v5056 = vpop.f32.mrb[0].mxu0
          %5057 = vmatprep.mubr.f32.mxu0 %v2090
          %5058 = vmatmul.mubr.f32.gmra.mrb[0].mxu0 %v2089
          %v5059 = vpop.f32.mrb[0].mxu0
          %v5060 = vadd.f32 0.0, %v5059
          %v5061 = vpop.f32.mrb[0].mxu0
          %5062 = vmatprep.mubr.f32.mxu0 %v2094
          %5063 = vmatmul.mubr.f32.gmra.mrb[0].mxu0 %v2093
          %v5064 = vpop.f32.mrb[0].mxu0
          %v5065 = vadd.f32 0.0, %v5064
          %v5066 = vpop.f32.mrb[0].mxu0
          %5067 = vmatprep.mubr.f32.mxu0 %v2098
          %5068 = vmatmul.mubr.f32.gmra.mrb[0].mxu0 %v2097
          %v5069 = vpop.f32.mrb[0].mxu0
          %v5070 = vadd.f32 0.0, %v5069
          %v5071 = vpop.f32.mrb[0].mxu0
          %5072 = vmatprep.mubr.f32.mxu0 %v2102
          %5073 = vmatmul.mubr.f32.gmra.mrb[0].mxu0 %v2101
          %v5074 = vpop.f32.mrb[0].mxu0
          %v5075 = vadd.f32 0.0, %v5074
          %v5076 = vpop.f32.mrb[0].mxu0
          %5077 = vmatprep.mubr.f32.mxu0 %v2106
          %5078 = vmatmul.mubr.f32.gmra.mrb[0].mxu0 %v2105
          %v5079 = vpop.f32.mrb[0].mxu0
          %v5080 = vadd.f32 0.0, %v5079
          %v5081 = vpop.f32.mrb[0].mxu0
          %5082 = vmatprep.mubr.f32.mxu0 %v2110
          %5083 = vmatmul.mubr.f32.gmra.mrb[0].mxu0 %v2109
          %v5084 = vpop.f32.mrb[0].mxu0
          %v5085 = vadd.f32 0.0, %v5084
          %v5086 = vpop.f32.mrb[0].mxu0
          %5087 = vmatprep.mubr.f32.mxu0 %v2114
          %5088 = vmatmul.mubr.f32.gmra.mrb[0].mxu0 %v2113
          %v5089 = vpop.f32.mrb[0].mxu0
          %v5090 = vadd.f32 0.0, %v5089
          %v5091 = vpop.f32.mrb[0].mxu0
          %5092 = vmatprep.mubr.f32.mxu0 %v2118
          %5093 = vmatmul.mubr.f32.gmra.mrb[0].mxu0 %v2117
          %v5094 = vpop.f32.mrb[0].mxu0
          %v5095 = vadd.f32 0.0, %v5094
          %v5096 = vpop.f32.mrb[0].mxu0
          %5097 = vmatprep.mubr.f32.mxu0 %v2122
          %5098 = vmatmul.mubr.f32.gmra.mrb[0].mxu0 %v2121
          %v5099 = vpop.f32.mrb[0].mxu0
          %v5100 = vadd.f32 0.0, %v5099
          %v5101 = vpop.f32.mrb[0].mxu0
          %5102 = vmatprep.mubr.f32.mxu0 %v2126
          %5103 = vmatmul.mubr.f32.gmra.mrb[0].mxu0 %v2125
          %v5104 = vpop.f32.mrb[0].mxu0
          %v5105 = vadd.f32 0.0, %v5104
          %v5106 = vpop.f32.mrb[0].mxu0
          %5107 = vmatprep.mubr.f32.mxu0 %v2130
          %5108 = vmatmul.mubr.f32.gmra.mrb[0].mxu0 %v2129
          %v5109 = vpop.f32.mrb[0].mxu0
          %v5110 = vadd.f32 0.0, %v5109
          %v5111 = vpop.f32.mrb[0].mxu0
          %5112 = vmatprep.mubr.f32.mxu0 %v2134
          %5113 = vmatmul.mubr.f32.gmra.mrb[0].mxu0 %v2133
          %v5114 = vpop.f32.mrb[0].mxu0
          %v5115 = vadd.f32 0.0, %v5114
          %v5116 = vpop.f32.mrb[0].mxu0
          %5117 = vmatprep.mubr.f32.mxu0 %v2138
          %5118 = vmatmul.mubr.f32.gmra.mrb[0].mxu0 %v2137
          %v5119 = vpop.f32.mrb[0].mxu0
          %v5120 = vadd.f32 0.0, %v5119
          %v5121 = vpop.f32.mrb[0].mxu0
          %5122 = vmatprep.mubr.f32.mxu0 %v2142
          %5123 = vmatmul.mubr.f32.gmra.mrb[0].mxu0 %v2141
          %v5124 = vpop.f32.mrb[0].mxu0
          %v5125 = vadd.f32 0.0, %v5124
          %v5126 = vpop.f32.mrb[0].mxu0
          %5127 = vmatprep.mubr.f32.mxu0 %v2146
          %5128 = vmatmul.mubr.f32.gmra.mrb[0].mxu0 %v2145
          %v5129 = vpop.f32.mrb[0].mxu0
          %v5130 = vadd.f32 0.0, %v5129
          %v5131 = vpop.f32.mrb[0].mxu0
          %5132 = vmatprep.mubr.f32.mxu0 %v2150
          %5133 = vmatmul.mubr.f32.gmra.mrb[0].mxu0 %v2149
          %v5134 = vpop.f32.mrb[0].mxu0
          %v5135 = vadd.f32 0.0, %v5134
          %v5136 = vpop.f32.mrb[0].mxu0
          %5137 = vmatprep.mubr.f32.mxu0 %v2154
          %5138 = vmatmul.mubr.f32.gmra.mrb[0].mxu0 %v2153
          %v5139 = vpop.f32.mrb[0].mxu0
          %v5140 = vadd.f32 0.0, %v5139
          %v5141 = vpop.f32.mrb[0].mxu0
          %5142 = vmatprep.mubr.f32.mxu0 %v2158
          %5143 = vmatmul.mubr.f32.gmra.mrb[0].mxu0 %v2157
          %v5144 = vpop.f32.mrb[0].mxu0
          %v5145 = vadd.f32 0.0, %v5144
          %v5146 = vpop.f32.mrb[0].mxu0
          %5147 = vmatprep.mubr.f32.mxu0 %v2162
          %5148 = vmatmul.mubr.f32.gmra.mrb[0].mxu0 %v2161
          %v5149 = vpop.f32.mrb[0].mxu0
          %v5150 = vadd.f32 0.0, %v5149
          %v5151 = vpop.f32.mrb[0].mxu0
          %5152 = vmatprep.mubr.f32.mxu0 %v2166
          %5153 = vmatmul.mubr.f32.gmra.mrb[0].mxu0 %v2165
          %v5154 = vpop.f32.mrb[0].mxu0
          %v5155 = vadd.f32 0.0, %v5154
          %v5156 = vpop.f32.mrb[0].mxu0
          %5157 = vmatprep.mubr.f32.mxu0 %v2170
          %5158 = vmatmul.mubr.f32.gmra.mrb[0].mxu0 %v2169
          %v5159 = vpop.f32.mrb[0].mxu0
          %v5160 = vadd.f32 0.0, %v5159
          %v5161 = vpop.f32.mrb[0].mxu0
          %5162 = vmatprep.mubr.f32.mxu0 %v2174
          %5163 = vmatmul.mubr.f32.gmra.mrb[0].mxu0 %v2173
          %v5164 = vpop.f32.mrb[0].mxu0
          %v5165 = vadd.f32 0.0, %v5164
          %v5166 = vpop.f32.mrb[0].mxu0
          %5167 = vmatprep.mubr.f32.mxu0 %v2178
          %5168 = vmatmul.mubr.f32.gmra.mrb[0].mxu0 %v2177
          %v5169 = vpop.f32.mrb[0].mxu0
          %v5170 = vadd.f32 0.0, %v5169
          %v5171 = vpop.f32.mrb[0].mxu0
          %5172 = vmatprep.mubr.f32.mxu0 %v2182
          %5173 = vmatmul.mubr.f32.gmra.mrb[0].mxu0 %v2181
          %v5174 = vpop.f32.mrb[0].mxu0
          %v5175 = vadd.f32 0.0, %v5174
          %v5176 = vpop.f32.mrb[0].mxu0
          %5177 = vmatprep.mubr.f32.mxu0 %v2186
          %5178 = vmatmul.mubr.f32.gmra.mrb[0].mxu0 %v2185
          %v5179 = vpop.f32.mrb[0].mxu0
          %v5180 = vadd.f32 0.0, %v5179
          %v5181 = vpop.f32.mrb[0].mxu0
          %5182 = vmatprep.mubr.f32.mxu0 %v2190
          %5183 = vmatmul.mubr.f32.gmra.mrb[0].mxu0 %v2189
          %v5184 = vpop.f32.mrb[0].mxu0
          %v5185 = vadd.f32 0.0, %v5184
          %v5186 = vpop.f32.mrb[0].mxu0
          %5187 = vmatprep.mubr.f32.mxu0 %v2194
          %5188 = vmatmul.mubr.f32.gmra.mrb[0].mxu0 %v2193
          %v5189 = vpop.f32.mrb[0].mxu0
          %v5190 = vadd.f32 0.0, %v5189
          %v5191 = vpop.f32.mrb[0].mxu0
          %5192 = vmatprep.mubr.f32.mxu0 %v2198
          %5193 = vmatmul.mubr.f32.gmra.mrb[0].mxu0 %v2197
          %v5194 = vpop.f32.mrb[0].mxu0
          %v5195 = vadd.f32 0.0, %v5194
          %v5196 = vpop.f32.mrb[0].mxu0
          %5197 = vmatprep.mubr.f32.mxu0 %v2202
          %5198 = vmatmul.mubr.f32.gmra.mrb[0].mxu0 %v2201
          %v5199 = vpop.f32.mrb[0].mxu0
          %v5200 = vadd.f32 0.0, %v5199
          %v5201 = vpop.f32.mrb[0].mxu0
          %5202 = vmatprep.mubr.f32.mxu0 %v2206
          %5203 = vmatmul.mubr.f32.gmra.mrb[0].mxu0 %v2205
          %v5204 = vpop.f32.mrb[0].mxu0
          %v5205 = vadd.f32 0.0, %v5204
          %v5206 = vpop.f32.mrb[0].mxu0
          %5207 = vmatprep.mubr.f32.mxu0 %v2210
          %5208 = vmatmul.mubr.f32.gmra.mrb[0].mxu0 %v2209
          %v5209 = vpop.f32.mrb[0].mxu0
          %v5210 = vadd.f32 0.0, %v5209
          %v5211 = vpop.f32.mrb[0].mxu0
          %5212 = vmatprep.mubr.f32.mxu0 %v2214
          %5213 = vmatmul.mubr.f32.gmra.mrb[0].mxu0 %v2213
          %v5214 = vpop.f32.mrb[0].mxu0
          %v5215 = vadd.f32 0.0, %v5214
          %v5216 = vpop.f32.mrb[0].mxu0
          %5217 = vmatprep.mubr.f32.mxu0 %v2218
          %5218 = vmatmul.mubr.f32.gmra.mrb[0].mxu0 %v2217
          %v5219 = vpop.f32.mrb[0].mxu0
          %v5220 = vadd.f32 0.0, %v5219
          %v5221 = vpop.f32.mrb[0].mxu0
          %5222 = vmatprep.mubr.f32.mxu0 %v2222
          %5223 = vmatmul.mubr.f32.gmra.mrb[0].mxu0 %v2221
          %v5224 = vpop.f32.mrb[0].mxu0
          %v5225 = vadd.f32 0.0, %v5224
          %v5226 = vpop.f32.mrb[0].mxu0
          %5227 = vmatprep.mubr.f32.mxu0 %v2226
          %5228 = vmatmul.mubr.f32.gmra.mrb[0].mxu0 %v2225
          %v5229 = vpop.f32.mrb[0].mxu0
          %v5230 = vadd.f32 0.0, %v5229
          %v5231 = vpop.f32.mrb[0].mxu0
          %5232 = vmatprep.mubr.f32.mxu0 %v2230
          %5233 = vmatmul.mubr.f32.gmra.mrb[0].mxu0 %v2229
          %v5234 = vpop.f32.mrb[0].mxu0
          %v5235 = vadd.f32 0.0, %v5234
          %v5236 = vpop.f32.mrb[0].mxu0
          %5237 = vmatprep.mubr.f32.mxu0 %v2234
          %5238 = vmatmul.mubr.f32.gmra.mrb[0].mxu0 %v2233
          %v5239 = vpop.f32.mrb[0].mxu0
          %v5240 = vadd.f32 0.0, %v5239
          %v5241 = vpop.f32.mrb[0].mxu0
          %5242 = vmatprep.mubr.f32.mxu0 %v2238
          %5243 = vmatmul.mubr.f32.gmra.mrb[0].mxu0 %v2237
          %v5244 = vpop.f32.mrb[0].mxu0
          %v5245 = vadd.f32 0.0, %v5244
          %v5246 = vpop.f32.mrb[0].mxu0
          %5247 = vmatprep.mubr.f32.mxu0 %v2242
          %5248 = vmatmul.mubr.f32.gmra.mrb[0].mxu0 %v2241
          %v5249 = vpop.f32.mrb[0].mxu0
          %v5250 = vadd.f32 0.0, %v5249
          %v5251 = vpop.f32.mrb[0].mxu0
          %5252 = vmatprep.mubr.f32.mxu0 %v2246
          %5253 = vmatmul.mubr.f32.gmra.mrb[0].mxu0 %v2245
          %v5254 = vpop.f32.mrb[0].mxu0
          %v5255 = vadd.f32 0.0, %v5254
          %v5256 = vpop.f32.mrb[0].mxu0
          %5257 = vmatprep.mubr.f32.mxu0 %v2250
          %5258 = vmatmul.mubr.f32.gmra.mrb[0].mxu0 %v2249
          %v5259 = vpop.f32.mrb[0].mxu0
          %v5260 = vadd.f32 0.0, %v5259
          %v5261 = vpop.f32.mrb[0].mxu0
          %5262 = vmatprep.mubr.f32.mxu0 %v2254
          %5263 = vmatmul.mubr.f32.gmra.mrb[0].mxu0 %v2253
          %v5264 = vpop.f32.mrb[0].mxu0
          %v5265 = vadd.f32 0.0, %v5264
          %v5266 = vpop.f32.mrb[0].mxu0
          %5267 = vmatprep.mubr.f32.mxu0 %v2258
          %5268 = vmatmul.mubr.f32.gmra.mrb[0].mxu0 %v2257
          %v5269 = vpop.f32.mrb[0].mxu0
          %v5270 = vadd.f32 0.0, %v5269
          %v5271 = vpop.f32.mrb[0].mxu0
          %5272 = vmatprep.mubr.f32.mxu0 %v2262
          %5273 = vmatmul.mubr.f32.gmra.mrb[0].mxu0 %v2261
          %v5274 = vpop.f32.mrb[0].mxu0
          %v5275 = vadd.f32 0.0, %v5274
          %v5276 = vpop.f32.mrb[0].mxu0
          %5277 = vmatprep.mubr.f32.mxu0 %v2266
          %5278 = vmatmul.mubr.f32.gmra.mrb[0].mxu0 %v2265
          %v5279 = vpop.f32.mrb[0].mxu0
          %v5280 = vadd.f32 0.0, %v5279
          %v5281 = vpop.f32.mrb[0].mxu0
          %5282 = vmatprep.mubr.f32.mxu0 %v2270
          %5283 = vmatmul.mubr.f32.gmra.mrb[0].mxu0 %v2269
          %v5284 = vpop.f32.mrb[0].mxu0
          %v5285 = vadd.f32 0.0, %v5284
          %v5286 = vpop.f32.mrb[0].mxu0
          %5287 = vdwg.mxu0
          %5288 = vmatprep.subr.mxu0 0.0
          %5289 = vmatpush1.msra.mxu0 %v4871
          %5290 = vmatprep.subr.mxu0 0.0
          %5291 = vmatpush1.msra.mxu0 %v4872
          %5292 = vmatprep.subr.mxu0 0.0
          %5293 = vmatpush1.msra.mxu0 %v4873
          %5294 = vmatprep.subr.mxu0 0.0
          %5295 = vmatpush1.msra.mxu0 %v4874
          %5296 = vmatprep.subr.mxu0 0.0
          %5297 = vmatpush1.msra.mxu0 %v4875
          %5298 = vmatprep.subr.mxu0 0.0
          %5299 = vmatpush1.msra.mxu0 %v4876
          %5300 = vmatprep.subr.mxu0 0.0
          %5301 = vmatpush1.msra.mxu0 %v4877
          %5302 = vmatprep.subr.mxu0 0.0
          %5303 = vmatpush1.msra.mxu0 %v4878
          %5304 = vmatprep.subr.mxu0 0.0
          %5305 = vmatpush1.msra.mxu0 %v4879
          %5306 = vmatprep.subr.mxu0 0.0
          %5307 = vmatpush1.msra.mxu0 %v4880
          %5308 = vmatprep.subr.mxu0 0.0
          %5309 = vmatpush1.msra.mxu0 %v4881
          %5310 = vmatprep.subr.mxu0 0.0
          %5311 = vmatpush1.msra.mxu0 %v4882
          %5312 = vmatprep.subr.mxu0 0.0
          %5313 = vmatpush1.msra.mxu0 %v4883
          %5314 = vmatprep.subr.mxu0 0.0
          %5315 = vmatpush1.msra.mxu0 %v4884
          %5316 = vmatprep.subr.mxu0 0.0
          %5317 = vmatpush1.msra.mxu0 %v4885
          %5318 = vmatprep.subr.mxu0 0.0
          %5319 = vmatpush1.msra.mxu0 %v4886
          %5320 = vmatprep.subr.mxu0 0.0
          %5321 = vmatpush1.msra.mxu0 %v4887
          %5322 = vmatprep.subr.mxu0 0.0
          %5323 = vmatpush1.msra.mxu0 %v4888
          %5324 = vmatprep.subr.mxu0 0.0
          %5325 = vmatpush1.msra.mxu0 %v4889
          %5326 = vmatprep.subr.mxu0 0.0
          %5327 = vmatpush1.msra.mxu0 %v4890
          %5328 = vmatprep.subr.mxu0 0.0
          %5329 = vmatpush1.msra.mxu0 %v4891
          %5330 = vmatprep.subr.mxu0 0.0
          %5331 = vmatpush1.msra.mxu0 %v4892
          %5332 = vmatprep.subr.mxu0 0.0
          %5333 = vmatpush1.msra.mxu0 %v4893
          %5334 = vmatprep.subr.mxu0 0.0
          %5335 = vmatpush1.msra.mxu0 %v4894
          %5336 = vmatprep.subr.mxu0 0.0
          %5337 = vmatpush1.msra.mxu0 %v4895
          %5338 = vmatprep.subr.mxu0 0.0
          %5339 = vmatpush1.msra.mxu0 %v4896
          %5340 = vmatprep.subr.mxu0 0.0
          %5341 = vmatpush1.msra.mxu0 %v4897
          %5342 = vmatprep.subr.mxu0 0.0
          %5343 = vmatpush1.msra.mxu0 %v4898
          %5344 = vmatprep.subr.mxu0 0.0
          %5345 = vmatpush1.msra.mxu0 %v4899
          %5346 = vmatprep.subr.mxu0 0.0
          %5347 = vmatpush1.msra.mxu0 %v4900
          %5348 = vmatprep.subr.mxu0 0.0
          %5349 = vmatpush1.msra.mxu0 %v4901
          %5350 = vmatprep.subr.mxu0 0.0
          %5351 = vmatpush1.msra.mxu0 %v4902
          %5352 = vmatprep.mubr.f32.mxu0 %v2020
          %5353 = vmatmul.mubr.f32.gmra.mrb[0].mxu0 %v2019
          %v5354 = vpop.f32.mrb[0].mxu0
          %v5355 = vadd.f32 %v4970, %v5354
          %v5356 = vpop.f32.mrb[0].mxu0
          %5357 = vmatprep.mubr.f32.mxu0 %v2024
          %5358 = vmatmul.mubr.f32.gmra.mrb[0].mxu0 %v2023
          %v5359 = vpop.f32.mrb[0].mxu0
          %v5360 = vadd.f32 %v4975, %v5359
          %v5361 = vpop.f32.mrb[0].mxu0
          %5362 = vmatprep.mubr.f32.mxu0 %v2028
          %5363 = vmatmul.mubr.f32.gmra.mrb[0].mxu0 %v2027
          %v5364 = vpop.f32.mrb[0].mxu0
          %v5365 = vadd.f32 %v4980, %v5364
          %v5366 = vpop.f32.mrb[0].mxu0
          %5367 = vmatprep.mubr.f32.mxu0 %v2032
          %5368 = vmatmul.mubr.f32.gmra.mrb[0].mxu0 %v2031
          %v5369 = vpop.f32.mrb[0].mxu0
          %v5370 = vadd.f32 %v4985, %v5369
          %v5371 = vpop.f32.mrb[0].mxu0
          %5372 = vmatprep.mubr.f32.mxu0 %v2036
          %5373 = vmatmul.mubr.f32.gmra.mrb[0].mxu0 %v2035
          %v5374 = vpop.f32.mrb[0].mxu0
          %v5375 = vadd.f32 %v4990, %v5374
          %v5376 = vpop.f32.mrb[0].mxu0
          %5377 = vmatprep.mubr.f32.mxu0 %v2040
          %5378 = vmatmul.mubr.f32.gmra.mrb[0].mxu0 %v2039
          %v5379 = vpop.f32.mrb[0].mxu0
          %v5380 = vadd.f32 %v4995, %v5379
          %v5381 = vpop.f32.mrb[0].mxu0
          %5382 = vmatprep.mubr.f32.mxu0 %v2044
          %5383 = vmatmul.mubr.f32.gmra.mrb[0].mxu0 %v2043
          %v5384 = vpop.f32.mrb[0].mxu0
          %v5385 = vadd.f32 %v5000, %v5384
          %v5386 = vpop.f32.mrb[0].mxu0
          %5387 = vmatprep.mubr.f32.mxu0 %v2048
          %5388 = vmatmul.mubr.f32.gmra.mrb[0].mxu0 %v2047
          %v5389 = vpop.f32.mrb[0].mxu0
          %v5390 = vadd.f32 %v5005, %v5389
          %v5391 = vpop.f32.mrb[0].mxu0
          %5392 = vmatprep.mubr.f32.mxu0 %v2052
          %5393 = vmatmul.mubr.f32.gmra.mrb[0].mxu0 %v2051
          %v5394 = vpop.f32.mrb[0].mxu0
          %v5395 = vadd.f32 %v5010, %v5394
          %v5396 = vpop.f32.mrb[0].mxu0
          %5397 = vmatprep.mubr.f32.mxu0 %v2056
          %5398 = vmatmul.mubr.f32.gmra.mrb[0].mxu0 %v2055
          %v5399 = vpop.f32.mrb[0].mxu0
          %v5400 = vadd.f32 %v5015, %v5399
          %v5401 = vpop.f32.mrb[0].mxu0
          %5402 = vmatprep.mubr.f32.mxu0 %v2060
          %5403 = vmatmul.mubr.f32.gmra.mrb[0].mxu0 %v2059
          %v5404 = vpop.f32.mrb[0].mxu0
          %v5405 = vadd.f32 %v5020, %v5404
          %v5406 = vpop.f32.mrb[0].mxu0
          %5407 = vmatprep.mubr.f32.mxu0 %v2064
          %5408 = vmatmul.mubr.f32.gmra.mrb[0].mxu0 %v2063
          %v5409 = vpop.f32.mrb[0].mxu0
          %v5410 = vadd.f32 %v5025, %v5409
          %v5411 = vpop.f32.mrb[0].mxu0
          %5412 = vmatprep.mubr.f32.mxu0 %v2068
          %5413 = vmatmul.mubr.f32.gmra.mrb[0].mxu0 %v2067
          %v5414 = vpop.f32.mrb[0].mxu0
          %v5415 = vadd.f32 %v5030, %v5414
          %v5416 = vpop.f32.mrb[0].mxu0
          %5417 = vmatprep.mubr.f32.mxu0 %v2072
          %5418 = vmatmul.mubr.f32.gmra.mrb[0].mxu0 %v2071
          %v5419 = vpop.f32.mrb[0].mxu0
          %v5420 = vadd.f32 %v5035, %v5419
          %v5421 = vpop.f32.mrb[0].mxu0
          %5422 = vmatprep.mubr.f32.mxu0 %v2076
          %5423 = vmatmul.mubr.f32.gmra.mrb[0].mxu0 %v2075
          %v5424 = vpop.f32.mrb[0].mxu0
          %v5425 = vadd.f32 %v5040, %v5424
          %v5426 = vpop.f32.mrb[0].mxu0
          %5427 = vmatprep.mubr.f32.mxu0 %v2080
          %5428 = vmatmul.mubr.f32.gmra.mrb[0].mxu0 %v2079
          %v5429 = vpop.f32.mrb[0].mxu0
          %v5430 = vadd.f32 %v5045, %v5429
          %v5431 = vpop.f32.mrb[0].mxu0
          %5432 = vmatprep.mubr.f32.mxu0 %v2084
          %5433 = vmatmul.mubr.f32.gmra.mrb[0].mxu0 %v2083
          %v5434 = vpop.f32.mrb[0].mxu0
          %v5435 = vadd.f32 %v5050, %v5434
          %v5436 = vpop.f32.mrb[0].mxu0
          %5437 = vmatprep.mubr.f32.mxu0 %v2088
          %5438 = vmatmul.mubr.f32.gmra.mrb[0].mxu0 %v2087
          %v5439 = vpop.f32.mrb[0].mxu0
          %v5440 = vadd.f32 %v5055, %v5439
          %v5441 = vpop.f32.mrb[0].mxu0
          %5442 = vmatprep.mubr.f32.mxu0 %v2092
          %5443 = vmatmul.mubr.f32.gmra.mrb[0].mxu0 %v2091
          %v5444 = vpop.f32.mrb[0].mxu0
          %v5445 = vadd.f32 %v5060, %v5444
          %v5446 = vpop.f32.mrb[0].mxu0
          %5447 = vmatprep.mubr.f32.mxu0 %v2096
          %5448 = vmatmul.mubr.f32.gmra.mrb[0].mxu0 %v2095
          %v5449 = vpop.f32.mrb[0].mxu0
          %v5450 = vadd.f32 %v5065, %v5449
          %v5451 = vpop.f32.mrb[0].mxu0
          %5452 = vmatprep.mubr.f32.mxu0 %v2100
          %5453 = vmatmul.mubr.f32.gmra.mrb[0].mxu0 %v2099
          %v5454 = vpop.f32.mrb[0].mxu0
          %v5455 = vadd.f32 %v5070, %v5454
          %v5456 = vpop.f32.mrb[0].mxu0
          %5457 = vmatprep.mubr.f32.mxu0 %v2104
          %5458 = vmatmul.mubr.f32.gmra.mrb[0].mxu0 %v2103
          %v5459 = vpop.f32.mrb[0].mxu0
          %v5460 = vadd.f32 %v5075, %v5459
          %v5461 = vpop.f32.mrb[0].mxu0
          %5462 = vmatprep.mubr.f32.mxu0 %v2108
          %5463 = vmatmul.mubr.f32.gmra.mrb[0].mxu0 %v2107
          %v5464 = vpop.f32.mrb[0].mxu0
          %v5465 = vadd.f32 %v5080, %v5464
          %v5466 = vpop.f32.mrb[0].mxu0
          %5467 = vmatprep.mubr.f32.mxu0 %v2112
          %5468 = vmatmul.mubr.f32.gmra.mrb[0].mxu0 %v2111
          %v5469 = vpop.f32.mrb[0].mxu0
          %v5470 = vadd.f32 %v5085, %v5469
          %v5471 = vpop.f32.mrb[0].mxu0
          %5472 = vmatprep.mubr.f32.mxu0 %v2116
          %5473 = vmatmul.mubr.f32.gmra.mrb[0].mxu0 %v2115
          %v5474 = vpop.f32.mrb[0].mxu0
          %v5475 = vadd.f32 %v5090, %v5474
          %v5476 = vpop.f32.mrb[0].mxu0
          %5477 = vmatprep.mubr.f32.mxu0 %v2120
          %5478 = vmatmul.mubr.f32.gmra.mrb[0].mxu0 %v2119
          %v5479 = vpop.f32.mrb[0].mxu0
          %v5480 = vadd.f32 %v5095, %v5479
          %v5481 = vpop.f32.mrb[0].mxu0
          %5482 = vmatprep.mubr.f32.mxu0 %v2124
          %5483 = vmatmul.mubr.f32.gmra.mrb[0].mxu0 %v2123
          %v5484 = vpop.f32.mrb[0].mxu0
          %v5485 = vadd.f32 %v5100, %v5484
          %v5486 = vpop.f32.mrb[0].mxu0
          %5487 = vmatprep.mubr.f32.mxu0 %v2128
          %5488 = vmatmul.mubr.f32.gmra.mrb[0].mxu0 %v2127
          %v5489 = vpop.f32.mrb[0].mxu0
          %v5490 = vadd.f32 %v5105, %v5489
          %v5491 = vpop.f32.mrb[0].mxu0
          %5492 = vmatprep.mubr.f32.mxu0 %v2132
          %5493 = vmatmul.mubr.f32.gmra.mrb[0].mxu0 %v2131
          %v5494 = vpop.f32.mrb[0].mxu0
          %v5495 = vadd.f32 %v5110, %v5494
          %v5496 = vpop.f32.mrb[0].mxu0
          %5497 = vmatprep.mubr.f32.mxu0 %v2136
          %5498 = vmatmul.mubr.f32.gmra.mrb[0].mxu0 %v2135
          %v5499 = vpop.f32.mrb[0].mxu0
          %v5500 = vadd.f32 %v5115, %v5499
          %v5501 = vpop.f32.mrb[0].mxu0
          %5502 = vmatprep.mubr.f32.mxu0 %v2140
          %5503 = vmatmul.mubr.f32.gmra.mrb[0].mxu0 %v2139
          %v5504 = vpop.f32.mrb[0].mxu0
          %v5505 = vadd.f32 %v5120, %v5504
          %v5506 = vpop.f32.mrb[0].mxu0
          %5507 = vmatprep.mubr.f32.mxu0 %v2144
          %5508 = vmatmul.mubr.f32.gmra.mrb[0].mxu0 %v2143
          %v5509 = vpop.f32.mrb[0].mxu0
          %v5510 = vadd.f32 %v5125, %v5509
          %v5511 = vpop.f32.mrb[0].mxu0
          %5512 = vmatprep.mubr.f32.mxu0 %v2148
          %5513 = vmatmul.mubr.f32.gmra.mrb[0].mxu0 %v2147
          %v5514 = vpop.f32.mrb[0].mxu0
          %v5515 = vadd.f32 %v5130, %v5514
          %v5516 = vpop.f32.mrb[0].mxu0
          %5517 = vmatprep.mubr.f32.mxu0 %v2152
          %5518 = vmatmul.mubr.f32.gmra.mrb[0].mxu0 %v2151
          %v5519 = vpop.f32.mrb[0].mxu0
          %v5520 = vadd.f32 %v5135, %v5519
          %v5521 = vpop.f32.mrb[0].mxu0
          %5522 = vmatprep.mubr.f32.mxu0 %v2156
          %5523 = vmatmul.mubr.f32.gmra.mrb[0].mxu0 %v2155
          %v5524 = vpop.f32.mrb[0].mxu0
          %v5525 = vadd.f32 %v5140, %v5524
          %v5526 = vpop.f32.mrb[0].mxu0
          %5527 = vmatprep.mubr.f32.mxu0 %v2160
          %5528 = vmatmul.mubr.f32.gmra.mrb[0].mxu0 %v2159
          %v5529 = vpop.f32.mrb[0].mxu0
          %v5530 = vadd.f32 %v5145, %v5529
          %v5531 = vpop.f32.mrb[0].mxu0
          %5532 = vmatprep.mubr.f32.mxu0 %v2164
          %5533 = vmatmul.mubr.f32.gmra.mrb[0].mxu0 %v2163
          %v5534 = vpop.f32.mrb[0].mxu0
          %v5535 = vadd.f32 %v5150, %v5534
          %v5536 = vpop.f32.mrb[0].mxu0
          %5537 = vmatprep.mubr.f32.mxu0 %v2168
          %5538 = vmatmul.mubr.f32.gmra.mrb[0].mxu0 %v2167
          %v5539 = vpop.f32.mrb[0].mxu0
          %v5540 = vadd.f32 %v5155, %v5539
          %v5541 = vpop.f32.mrb[0].mxu0
          %5542 = vmatprep.mubr.f32.mxu0 %v2172
          %5543 = vmatmul.mubr.f32.gmra.mrb[0].mxu0 %v2171
          %v5544 = vpop.f32.mrb[0].mxu0
          %v5545 = vadd.f32 %v5160, %v5544
          %v5546 = vpop.f32.mrb[0].mxu0
          %5547 = vmatprep.mubr.f32.mxu0 %v2176
          %5548 = vmatmul.mubr.f32.gmra.mrb[0].mxu0 %v2175
          %v5549 = vpop.f32.mrb[0].mxu0
          %v5550 = vadd.f32 %v5165, %v5549
          %v5551 = vpop.f32.mrb[0].mxu0
          %5552 = vmatprep.mubr.f32.mxu0 %v2180
          %5553 = vmatmul.mubr.f32.gmra.mrb[0].mxu0 %v2179
          %v5554 = vpop.f32.mrb[0].mxu0
          %v5555 = vadd.f32 %v5170, %v5554
          %v5556 = vpop.f32.mrb[0].mxu0
          %5557 = vmatprep.mubr.f32.mxu0 %v2184
          %5558 = vmatmul.mubr.f32.gmra.mrb[0].mxu0 %v2183
          %v5559 = vpop.f32.mrb[0].mxu0
          %v5560 = vadd.f32 %v5175, %v5559
          %v5561 = vpop.f32.mrb[0].mxu0
          %5562 = vmatprep.mubr.f32.mxu0 %v2188
          %5563 = vmatmul.mubr.f32.gmra.mrb[0].mxu0 %v2187
          %v5564 = vpop.f32.mrb[0].mxu0
          %v5565 = vadd.f32 %v5180, %v5564
          %v5566 = vpop.f32.mrb[0].mxu0
          %5567 = vmatprep.mubr.f32.mxu0 %v2192
          %5568 = vmatmul.mubr.f32.gmra.mrb[0].mxu0 %v2191
          %v5569 = vpop.f32.mrb[0].mxu0
          %v5570 = vadd.f32 %v5185, %v5569
          %v5571 = vpop.f32.mrb[0].mxu0
          %5572 = vmatprep.mubr.f32.mxu0 %v2196
          %5573 = vmatmul.mubr.f32.gmra.mrb[0].mxu0 %v2195
          %v5574 = vpop.f32.mrb[0].mxu0
          %v5575 = vadd.f32 %v5190, %v5574
          %v5576 = vpop.f32.mrb[0].mxu0
          %5577 = vmatprep.mubr.f32.mxu0 %v2200
          %5578 = vmatmul.mubr.f32.gmra.mrb[0].mxu0 %v2199
          %v5579 = vpop.f32.mrb[0].mxu0
          %v5580 = vadd.f32 %v5195, %v5579
          %v5581 = vpop.f32.mrb[0].mxu0
          %5582 = vmatprep.mubr.f32.mxu0 %v2204
          %5583 = vmatmul.mubr.f32.gmra.mrb[0].mxu0 %v2203
          %v5584 = vpop.f32.mrb[0].mxu0
          %v5585 = vadd.f32 %v5200, %v5584
          %v5586 = vpop.f32.mrb[0].mxu0
          %5587 = vmatprep.mubr.f32.mxu0 %v2208
          %5588 = vmatmul.mubr.f32.gmra.mrb[0].mxu0 %v2207
          %v5589 = vpop.f32.mrb[0].mxu0
          %v5590 = vadd.f32 %v5205, %v5589
          %v5591 = vpop.f32.mrb[0].mxu0
          %5592 = vmatprep.mubr.f32.mxu0 %v2212
          %5593 = vmatmul.mubr.f32.gmra.mrb[0].mxu0 %v2211
          %v5594 = vpop.f32.mrb[0].mxu0
          %v5595 = vadd.f32 %v5210, %v5594
          %v5596 = vpop.f32.mrb[0].mxu0
          %5597 = vmatprep.mubr.f32.mxu0 %v2216
          %5598 = vmatmul.mubr.f32.gmra.mrb[0].mxu0 %v2215
          %v5599 = vpop.f32.mrb[0].mxu0
          %v5600 = vadd.f32 %v5215, %v5599
          %v5601 = vpop.f32.mrb[0].mxu0
          %5602 = vmatprep.mubr.f32.mxu0 %v2220
          %5603 = vmatmul.mubr.f32.gmra.mrb[0].mxu0 %v2219
          %v5604 = vpop.f32.mrb[0].mxu0
          %v5605 = vadd.f32 %v5220, %v5604
          %v5606 = vpop.f32.mrb[0].mxu0
          %5607 = vmatprep.mubr.f32.mxu0 %v2224
          %5608 = vmatmul.mubr.f32.gmra.mrb[0].mxu0 %v2223
          %v5609 = vpop.f32.mrb[0].mxu0
          %v5610 = vadd.f32 %v5225, %v5609
          %v5611 = vpop.f32.mrb[0].mxu0
          %5612 = vmatprep.mubr.f32.mxu0 %v2228
          %5613 = vmatmul.mubr.f32.gmra.mrb[0].mxu0 %v2227
          %v5614 = vpop.f32.mrb[0].mxu0
          %v5615 = vadd.f32 %v5230, %v5614
          %v5616 = vpop.f32.mrb[0].mxu0
          %5617 = vmatprep.mubr.f32.mxu0 %v2232
          %5618 = vmatmul.mubr.f32.gmra.mrb[0].mxu0 %v2231
          %v5619 = vpop.f32.mrb[0].mxu0
          %v5620 = vadd.f32 %v5235, %v5619
          %v5621 = vpop.f32.mrb[0].mxu0
          %5622 = vmatprep.mubr.f32.mxu0 %v2236
          %5623 = vmatmul.mubr.f32.gmra.mrb[0].mxu0 %v2235
          %v5624 = vpop.f32.mrb[0].mxu0
          %v5625 = vadd.f32 %v5240, %v5624
          %v5626 = vpop.f32.mrb[0].mxu0
          %5627 = vmatprep.mubr.f32.mxu0 %v2240
          %5628 = vmatmul.mubr.f32.gmra.mrb[0].mxu0 %v2239
          %v5629 = vpop.f32.mrb[0].mxu0
          %v5630 = vadd.f32 %v5245, %v5629
          %v5631 = vpop.f32.mrb[0].mxu0
          %5632 = vmatprep.mubr.f32.mxu0 %v2244
          %5633 = vmatmul.mubr.f32.gmra.mrb[0].mxu0 %v2243
          %v5634 = vpop.f32.mrb[0].mxu0
          %v5635 = vadd.f32 %v5250, %v5634
          %v5636 = vpop.f32.mrb[0].mxu0
          %5637 = vmatprep.mubr.f32.mxu0 %v2248
          %5638 = vmatmul.mubr.f32.gmra.mrb[0].mxu0 %v2247
          %v5639 = vpop.f32.mrb[0].mxu0
          %v5640 = vadd.f32 %v5255, %v5639
          %v5641 = vpop.f32.mrb[0].mxu0
          %5642 = vmatprep.mubr.f32.mxu0 %v2252
          %5643 = vmatmul.mubr.f32.gmra.mrb[0].mxu0 %v2251
          %v5644 = vpop.f32.mrb[0].mxu0
          %v5645 = vadd.f32 %v5260, %v5644
          %v5646 = vpop.f32.mrb[0].mxu0
          %5647 = vmatprep.mubr.f32.mxu0 %v2256
          %5648 = vmatmul.mubr.f32.gmra.mrb[0].mxu0 %v2255
          %v5649 = vpop.f32.mrb[0].mxu0
          %v5650 = vadd.f32 %v5265, %v5649
          %v5651 = vpop.f32.mrb[0].mxu0
          %5652 = vmatprep.mubr.f32.mxu0 %v2260
          %5653 = vmatmul.mubr.f32.gmra.mrb[0].mxu0 %v2259
          %v5654 = vpop.f32.mrb[0].mxu0
          %v5655 = vadd.f32 %v5270, %v5654
          %v5656 = vpop.f32.mrb[0].mxu0
          %5657 = vmatprep.mubr.f32.mxu0 %v2264
          %5658 = vmatmul.mubr.f32.gmra.mrb[0].mxu0 %v2263
          %v5659 = vpop.f32.mrb[0].mxu0
          %v5660 = vadd.f32 %v5275, %v5659
          %v5661 = vpop.f32.mrb[0].mxu0
          %5662 = vmatprep.mubr.f32.mxu0 %v2268
          %5663 = vmatmul.mubr.f32.gmra.mrb[0].mxu0 %v2267
          %v5664 = vpop.f32.mrb[0].mxu0
          %v5665 = vadd.f32 %v5280, %v5664
          %v5666 = vpop.f32.mrb[0].mxu0
          %5667 = vmatprep.mubr.f32.mxu0 %v2272
          %5668 = vmatmul.mubr.f32.gmra.mrb[0].mxu0 %v2271
          %v5669 = vpop.f32.mrb[0].mxu0
          %v5670 = vadd.f32 %v5285, %v5669
          %v5671 = vpop.f32.mrb[0].mxu0
          %5672 = vdwg.mxu0
          %5673 = vset.pattern.permute.xlu0 2
          %5674 = vperm.xlu0 %5673, %v1179
          %v5675 = vpop.permute.xlu0 %5674
          %5677 = vset.pattern.permute.xlu0 2
          %5678 = vperm.xlu0 %5677, %v1180
          %v5679 = vpop.permute.xlu0 %5678
          %5681 = vset.pattern.permute.xlu0 2
          %5682 = vperm.xlu0 %5681, %v1181
          %v5683 = vpop.permute.xlu0 %5682
          %5685 = vset.pattern.permute.xlu0 2
          %5686 = vperm.xlu0 %5685, %v1182
          %v5687 = vpop.permute.xlu0 %5686
          %5689 = vset.pattern.permute.xlu0 2
          %5690 = vperm.xlu0 %5689, %v1183
          %v5691 = vpop.permute.xlu0 %5690
          %5693 = vset.pattern.permute.xlu0 2
          %5694 = vperm.xlu0 %5693, %v1184
          %v5695 = vpop.permute.xlu0 %5694
          %5697 = vset.pattern.permute.xlu0 2
          %5698 = vperm.xlu0 %5697, %v1185
          %v5699 = vpop.permute.xlu0 %5698
          %5701 = vset.pattern.permute.xlu0 2
          %5702 = vperm.xlu0 %5701, %v1186
          %v5703 = vpop.permute.xlu0 %5702
          %5705 = vset.pattern.permute.xlu0 2
          %5706 = vperm.xlu0 %5705, %v1187
          %v5707 = vpop.permute.xlu0 %5706
          %5709 = vset.pattern.permute.xlu0 2
          %5710 = vperm.xlu0 %5709, %v1188
          %v5711 = vpop.permute.xlu0 %5710
          %5713 = vset.pattern.permute.xlu0 2
          %5714 = vperm.xlu0 %5713, %v1189
          %v5715 = vpop.permute.xlu0 %5714
          %5717 = vset.pattern.permute.xlu0 2
          %5718 = vperm.xlu0 %5717, %v1190
          %v5719 = vpop.permute.xlu0 %5718
          %5721 = vset.pattern.permute.xlu0 2
          %5722 = vperm.xlu0 %5721, %v1191
          %v5723 = vpop.permute.xlu0 %5722
          %5725 = vset.pattern.permute.xlu0 2
          %5726 = vperm.xlu0 %5725, %v1192
          %v5727 = vpop.permute.xlu0 %5726
          %5729 = vset.pattern.permute.xlu0 2
          %5730 = vperm.xlu0 %5729, %v1193
          %v5731 = vpop.permute.xlu0 %5730
          %5733 = vset.pattern.permute.xlu0 2
          %5734 = vperm.xlu0 %5733, %v1194
          %v5735 = vpop.permute.xlu0 %5734
          %5737 = vset.pattern.permute.xlu0 2
          %5738 = vperm.xlu0 %5737, %v1195
          %v5739 = vpop.permute.xlu0 %5738
          %5741 = vset.pattern.permute.xlu0 2
          %5742 = vperm.xlu0 %5741, %v1196
          %v5743 = vpop.permute.xlu0 %5742
          %5745 = vset.pattern.permute.xlu0 2
          %5746 = vperm.xlu0 %5745, %v1197
          %v5747 = vpop.permute.xlu0 %5746
          %5749 = vset.pattern.permute.xlu0 2
          %5750 = vperm.xlu0 %5749, %v1198
          %v5751 = vpop.permute.xlu0 %5750
          %5753 = vset.pattern.permute.xlu0 2
          %5754 = vperm.xlu0 %5753, %v1199
          %v5755 = vpop.permute.xlu0 %5754
          %5757 = vset.pattern.permute.xlu0 2
          %5758 = vperm.xlu0 %5757, %v1200
          %v5759 = vpop.permute.xlu0 %5758
          %5761 = vset.pattern.permute.xlu0 2
          %5762 = vperm.xlu0 %5761, %v1201
          %v5763 = vpop.permute.xlu0 %5762
          %5765 = vset.pattern.permute.xlu0 2
          %5766 = vperm.xlu0 %5765, %v1202
          %v5767 = vpop.permute.xlu0 %5766
          %5769 = vset.pattern.permute.xlu0 2
          %5770 = vperm.xlu0 %5769, %v1203
          %v5771 = vpop.permute.xlu0 %5770
          %5773 = vset.pattern.permute.xlu0 2
          %5774 = vperm.xlu0 %5773, %v1204
          %v5775 = vpop.permute.xlu0 %5774
          %5777 = vset.pattern.permute.xlu0 2
          %5778 = vperm.xlu0 %5777, %v1205
          %v5779 = vpop.permute.xlu0 %5778
          %5781 = vset.pattern.permute.xlu0 2
          %5782 = vperm.xlu0 %5781, %v1206
          %v5783 = vpop.permute.xlu0 %5782
          %5785 = vset.pattern.permute.xlu0 2
          %5786 = vperm.xlu0 %5785, %v1207
          %v5787 = vpop.permute.xlu0 %5786
          %5789 = vset.pattern.permute.xlu0 2
          %5790 = vperm.xlu0 %5789, %v1208
          %v5791 = vpop.permute.xlu0 %5790
          %5793 = vset.pattern.permute.xlu0 2
          %5794 = vperm.xlu0 %5793, %v1209
          %v5795 = vpop.permute.xlu0 %5794
          %5797 = vset.pattern.permute.xlu0 2
          %5798 = vperm.xlu0 %5797, %v1210
          %v5799 = vpop.permute.xlu0 %5798
          %5801 = vset.pattern.permute.xlu0 2
          %5802 = vperm.xlu0 %5801, %v1211
          %v5803 = vpop.permute.xlu0 %5802
          %5805 = vset.pattern.permute.xlu0 2
          %5806 = vperm.xlu0 %5805, %v1212
          %v5807 = vpop.permute.xlu0 %5806
          %5809 = vset.pattern.permute.xlu0 2
          %5810 = vperm.xlu0 %5809, %v1213
          %v5811 = vpop.permute.xlu0 %5810
          %5813 = vset.pattern.permute.xlu0 2
          %5814 = vperm.xlu0 %5813, %v1214
          %v5815 = vpop.permute.xlu0 %5814
          %5817 = vset.pattern.permute.xlu0 2
          %5818 = vperm.xlu0 %5817, %v1215
          %v5819 = vpop.permute.xlu0 %5818
          %5821 = vset.pattern.permute.xlu0 2
          %5822 = vperm.xlu0 %5821, %v1216
          %v5823 = vpop.permute.xlu0 %5822
          %5825 = vset.pattern.permute.xlu0 2
          %5826 = vperm.xlu0 %5825, %v1217
          %v5827 = vpop.permute.xlu0 %5826
          %5829 = vset.pattern.permute.xlu0 2
          %5830 = vperm.xlu0 %5829, %v1218
          %v5831 = vpop.permute.xlu0 %5830
          %5833 = vset.pattern.permute.xlu0 2
          %5834 = vperm.xlu0 %5833, %v1219
          %v5835 = vpop.permute.xlu0 %5834
          %5837 = vset.pattern.permute.xlu0 2
          %5838 = vperm.xlu0 %5837, %v1220
          %v5839 = vpop.permute.xlu0 %5838
          %5841 = vset.pattern.permute.xlu0 2
          %5842 = vperm.xlu0 %5841, %v1221
          %v5843 = vpop.permute.xlu0 %5842
          %5845 = vset.pattern.permute.xlu0 2
          %5846 = vperm.xlu0 %5845, %v1222
          %v5847 = vpop.permute.xlu0 %5846
          %5849 = vset.pattern.permute.xlu0 2
          %5850 = vperm.xlu0 %5849, %v1223
          %v5851 = vpop.permute.xlu0 %5850
          %5853 = vset.pattern.permute.xlu0 2
          %5854 = vperm.xlu0 %5853, %v1224
          %v5855 = vpop.permute.xlu0 %5854
          %5857 = vset.pattern.permute.xlu0 2
          %5858 = vperm.xlu0 %5857, %v1225
          %v5859 = vpop.permute.xlu0 %5858
          %5861 = vset.pattern.permute.xlu0 2
          %5862 = vperm.xlu0 %5861, %v1226
          %v5863 = vpop.permute.xlu0 %5862
          %5865 = vset.pattern.permute.xlu0 2
          %5866 = vperm.xlu0 %5865, %v1227
          %v5867 = vpop.permute.xlu0 %5866
          %5869 = vset.pattern.permute.xlu0 2
          %5870 = vperm.xlu0 %5869, %v1228
          %v5871 = vpop.permute.xlu0 %5870
          %5873 = vset.pattern.permute.xlu0 2
          %5874 = vperm.xlu0 %5873, %v1229
          %v5875 = vpop.permute.xlu0 %5874
          %5877 = vset.pattern.permute.xlu0 2
          %5878 = vperm.xlu0 %5877, %v1230
          %v5879 = vpop.permute.xlu0 %5878
          %5881 = vset.pattern.permute.xlu0 2
          %5882 = vperm.xlu0 %5881, %v1231
          %v5883 = vpop.permute.xlu0 %5882
          %5885 = vset.pattern.permute.xlu0 2
          %5886 = vperm.xlu0 %5885, %v1232
          %v5887 = vpop.permute.xlu0 %5886
          %5889 = vset.pattern.permute.xlu0 2
          %5890 = vperm.xlu0 %5889, %v1233
          %v5891 = vpop.permute.xlu0 %5890
          %5893 = vset.pattern.permute.xlu0 2
          %5894 = vperm.xlu0 %5893, %v1234
          %v5895 = vpop.permute.xlu0 %5894
          %5897 = vset.pattern.permute.xlu0 2
          %5898 = vperm.xlu0 %5897, %v1235
          %v5899 = vpop.permute.xlu0 %5898
          %5901 = vset.pattern.permute.xlu0 2
          %5902 = vperm.xlu0 %5901, %v1236
          %v5903 = vpop.permute.xlu0 %5902
          %5905 = vset.pattern.permute.xlu0 2
          %5906 = vperm.xlu0 %5905, %v1237
          %v5907 = vpop.permute.xlu0 %5906
          %5909 = vset.pattern.permute.xlu0 2
          %5910 = vperm.xlu0 %5909, %v1238
          %v5911 = vpop.permute.xlu0 %5910
          %5913 = vset.pattern.permute.xlu0 2
          %5914 = vperm.xlu0 %5913, %v1239
          %v5915 = vpop.permute.xlu0 %5914
          %5917 = vset.pattern.permute.xlu0 2
          %5918 = vperm.xlu0 %5917, %v1240
          %v5919 = vpop.permute.xlu0 %5918
          %5921 = vset.pattern.permute.xlu0 2
          %5922 = vperm.xlu0 %5921, %v1241
          %v5923 = vpop.permute.xlu0 %5922
          %5925 = vset.pattern.permute.xlu0 2
          %5926 = vperm.xlu0 %5925, %v1242
          %v5927 = vpop.permute.xlu0 %5926
          %v5929 = vmul.f32 %v5675, %v5355
          %v5930 = vmul.f32 %v5679, %v5360
          %v5931 = vmul.f32 %v5683, %v5365
          %v5932 = vmul.f32 %v5687, %v5370
          %v5933 = vmul.f32 %v5691, %v5375
          %v5934 = vmul.f32 %v5695, %v5380
          %v5935 = vmul.f32 %v5699, %v5385
          %v5936 = vmul.f32 %v5703, %v5390
          %v5937 = vmul.f32 %v5707, %v5395
          %v5938 = vmul.f32 %v5711, %v5400
          %v5939 = vmul.f32 %v5715, %v5405
          %v5940 = vmul.f32 %v5719, %v5410
          %v5941 = vmul.f32 %v5723, %v5415
          %v5942 = vmul.f32 %v5727, %v5420
          %v5943 = vmul.f32 %v5731, %v5425
          %v5944 = vmul.f32 %v5735, %v5430
          %v5945 = vmul.f32 %v5739, %v5435
          %v5946 = vmul.f32 %v5743, %v5440
          %v5947 = vmul.f32 %v5747, %v5445
          %v5948 = vmul.f32 %v5751, %v5450
          %v5949 = vmul.f32 %v5755, %v5455
          %v5950 = vmul.f32 %v5759, %v5460
          %v5951 = vmul.f32 %v5763, %v5465
          %v5952 = vmul.f32 %v5767, %v5470
          %v5953 = vmul.f32 %v5771, %v5475
          %v5954 = vmul.f32 %v5775, %v5480
          %v5955 = vmul.f32 %v5779, %v5485
          %v5956 = vmul.f32 %v5783, %v5490
          %v5957 = vmul.f32 %v5787, %v5495
          %v5958 = vmul.f32 %v5791, %v5500
          %v5959 = vmul.f32 %v5795, %v5505
          %v5960 = vmul.f32 %v5799, %v5510
          %v5961 = vmul.f32 %v5803, %v5515
          %v5962 = vmul.f32 %v5807, %v5520
          %v5963 = vmul.f32 %v5811, %v5525
          %v5964 = vmul.f32 %v5815, %v5530
          %v5965 = vmul.f32 %v5819, %v5535
          %v5966 = vmul.f32 %v5823, %v5540
          %v5967 = vmul.f32 %v5827, %v5545
          %v5968 = vmul.f32 %v5831, %v5550
          %v5969 = vmul.f32 %v5835, %v5555
          %v5970 = vmul.f32 %v5839, %v5560
          %v5971 = vmul.f32 %v5843, %v5565
          %v5972 = vmul.f32 %v5847, %v5570
          %v5973 = vmul.f32 %v5851, %v5575
          %v5974 = vmul.f32 %v5855, %v5580
          %v5975 = vmul.f32 %v5859, %v5585
          %v5976 = vmul.f32 %v5863, %v5590
          %v5977 = vmul.f32 %v5867, %v5595
          %v5978 = vmul.f32 %v5871, %v5600
          %v5979 = vmul.f32 %v5875, %v5605
          %v5980 = vmul.f32 %v5879, %v5610
          %v5981 = vmul.f32 %v5883, %v5615
          %v5982 = vmul.f32 %v5887, %v5620
          %v5983 = vmul.f32 %v5891, %v5625
          %v5984 = vmul.f32 %v5895, %v5630
          %v5985 = vmul.f32 %v5899, %v5635
          %v5986 = vmul.f32 %v5903, %v5640
          %v5987 = vmul.f32 %v5907, %v5645
          %v5988 = vmul.f32 %v5911, %v5650
          %v5989 = vmul.f32 %v5915, %v5655
          %v5990 = vmul.f32 %v5919, %v5660
          %v5991 = vmul.f32 %v5923, %v5665
          %v5992 = vmul.f32 %v5927, %v5670
          %v5993 = vadd.f32 %v4774, %v5929
          %v5994 = vadd.f32 %v4775, %v5930
          %v5995 = vadd.f32 %v4776, %v5931
          %v5996 = vadd.f32 %v4777, %v5932
          %v5997 = vadd.f32 %v4778, %v5933
          %v5998 = vadd.f32 %v4779, %v5934
          %v5999 = vadd.f32 %v4780, %v5935
          %v6000 = vadd.f32 %v4781, %v5936
          %v6001 = vadd.f32 %v4782, %v5937
          %v6002 = vadd.f32 %v4783, %v5938
          %v6003 = vadd.f32 %v4784, %v5939
          %v6004 = vadd.f32 %v4785, %v5940
          %v6005 = vadd.f32 %v4786, %v5941
          %v6006 = vadd.f32 %v4787, %v5942
          %v6007 = vadd.f32 %v4788, %v5943
          %v6008 = vadd.f32 %v4789, %v5944
          %v6009 = vadd.f32 %v4790, %v5945
          %v6010 = vadd.f32 %v4791, %v5946
          %v6011 = vadd.f32 %v4792, %v5947
          %v6012 = vadd.f32 %v4793, %v5948
          %v6013 = vadd.f32 %v4794, %v5949
          %v6014 = vadd.f32 %v4795, %v5950
          %v6015 = vadd.f32 %v4796, %v5951
          %v6016 = vadd.f32 %v4797, %v5952
          %v6017 = vadd.f32 %v4798, %v5953
          %v6018 = vadd.f32 %v4799, %v5954
          %v6019 = vadd.f32 %v4800, %v5955
          %v6020 = vadd.f32 %v4801, %v5956
          %v6021 = vadd.f32 %v4802, %v5957
          %v6022 = vadd.f32 %v4803, %v5958
          %v6023 = vadd.f32 %v4804, %v5959
          %v6024 = vadd.f32 %v4805, %v5960
          %v6025 = vadd.f32 %v4806, %v5961
          %v6026 = vadd.f32 %v4807, %v5962
          %v6027 = vadd.f32 %v4808, %v5963
          %v6028 = vadd.f32 %v4809, %v5964
          %v6029 = vadd.f32 %v4810, %v5965
          %v6030 = vadd.f32 %v4811, %v5966
          %v6031 = vadd.f32 %v4812, %v5967
          %v6032 = vadd.f32 %v4813, %v5968
          %v6033 = vadd.f32 %v4814, %v5969
          %v6034 = vadd.f32 %v4815, %v5970
          %v6035 = vadd.f32 %v4816, %v5971
          %v6036 = vadd.f32 %v4817, %v5972
          %v6037 = vadd.f32 %v4818, %v5973
          %v6038 = vadd.f32 %v4819, %v5974
          %v6039 = vadd.f32 %v4820, %v5975
          %v6040 = vadd.f32 %v4821, %v5976
          %v6041 = vadd.f32 %v4822, %v5977
          %v6042 = vadd.f32 %v4823, %v5978
          %v6043 = vadd.f32 %v4824, %v5979
          %v6044 = vadd.f32 %v4825, %v5980
          %v6045 = vadd.f32 %v4826, %v5981
          %v6046 = vadd.f32 %v4827, %v5982
          %v6047 = vadd.f32 %v4828, %v5983
          %v6048 = vadd.f32 %v4829, %v5984
          %v6049 = vadd.f32 %v4830, %v5985
          %v6050 = vadd.f32 %v4831, %v5986
          %v6051 = vadd.f32 %v4832, %v5987
          %v6052 = vadd.f32 %v4833, %v5988
          %v6053 = vadd.f32 %v4834, %v5989
          %v6054 = vadd.f32 %v4835, %v5990
          %v6055 = vadd.f32 %v4836, %v5991
          %v6056 = vadd.f32 %v4837, %v5992
          %6057 = vst [vmem:[#allocation2] sm:$0xff] %v5993
          %6058 = vst [vmem:[#allocation2 + $0x8] sm:$0xff] %v5994
          %6059 = vst [vmem:[#allocation2 + $0x10] sm:$0xff] %v5995
          %6060 = vst [vmem:[#allocation2 + $0x18] sm:$0xff] %v5996
          %6061 = vst [vmem:[#allocation2 + $0x20] sm:$0xff] %v5997
          %6062 = vst [vmem:[#allocation2 + $0x28] sm:$0xff] %v5998
          %6063 = vst [vmem:[#allocation2 + $0x30] sm:$0xff] %v5999
          %6064 = vst [vmem:[#allocation2 + $0x38] sm:$0xff] %v6000
          %6065 = vst [vmem:[#allocation2 + $0x40] sm:$0xff] %v6001
          %6066 = vst [vmem:[#allocation2 + $0x48] sm:$0xff] %v6002
          %6067 = vst [vmem:[#allocation2 + $0x50] sm:$0xff] %v6003
          %6068 = vst [vmem:[#allocation2 + $0x58] sm:$0xff] %v6004
          %6069 = vst [vmem:[#allocation2 + $0x60] sm:$0xff] %v6005
          %6070 = vst [vmem:[#allocation2 + $0x68] sm:$0xff] %v6006
          %6071 = vst [vmem:[#allocation2 + $0x70] sm:$0xff] %v6007
          %6072 = vst [vmem:[#allocation2 + $0x78] sm:$0xff] %v6008
          %6073 = vst [vmem:[#allocation2 + $0x80] sm:$0xff] %v6009
          %6074 = vst [vmem:[#allocation2 + $0x88] sm:$0xff] %v6010
          %6075 = vst [vmem:[#allocation2 + $0x90] sm:$0xff] %v6011
          %6076 = vst [vmem:[#allocation2 + $0x98] sm:$0xff] %v6012
          %6077 = vst [vmem:[#allocation2 + $0xa0] sm:$0xff] %v6013
          %6078 = vst [vmem:[#allocation2 + $0xa8] sm:$0xff] %v6014
          %6079 = vst [vmem:[#allocation2 + $0xb0] sm:$0xff] %v6015
          %6080 = vst [vmem:[#allocation2 + $0xb8] sm:$0xff] %v6016
          %6081 = vst [vmem:[#allocation2 + $0xc0] sm:$0xff] %v6017
          %6082 = vst [vmem:[#allocation2 + $0xc8] sm:$0xff] %v6018
          %6083 = vst [vmem:[#allocation2 + $0xd0] sm:$0xff] %v6019
          %6084 = vst [vmem:[#allocation2 + $0xd8] sm:$0xff] %v6020
          %6085 = vst [vmem:[#allocation2 + $0xe0] sm:$0xff] %v6021
          %6086 = vst [vmem:[#allocation2 + $0xe8] sm:$0xff] %v6022
          %6087 = vst [vmem:[#allocation2 + $0xf0] sm:$0xff] %v6023
          %6088 = vst [vmem:[#allocation2 + $0xf8] sm:$0xff] %v6024
          %6089 = vst [vmem:[#allocation2 + $0x100] sm:$0xff] %v6025
          %6090 = vst [vmem:[#allocation2 + $0x108] sm:$0xff] %v6026
          %6091 = vst [vmem:[#allocation2 + $0x110] sm:$0xff] %v6027
          %6092 = vst [vmem:[#allocation2 + $0x118] sm:$0xff] %v6028
          %6093 = vst [vmem:[#allocation2 + $0x120] sm:$0xff] %v6029
          %6094 = vst [vmem:[#allocation2 + $0x128] sm:$0xff] %v6030
          %6095 = vst [vmem:[#allocation2 + $0x130] sm:$0xff] %v6031
          %6096 = vst [vmem:[#allocation2 + $0x138] sm:$0xff] %v6032
          %6097 = vst [vmem:[#allocation2 + $0x140] sm:$0xff] %v6033
          %6098 = vst [vmem:[#allocation2 + $0x148] sm:$0xff] %v6034
          %6099 = vst [vmem:[#allocation2 + $0x150] sm:$0xff] %v6035
          %6100 = vst [vmem:[#allocation2 + $0x158] sm:$0xff] %v6036
          %6101 = vst [vmem:[#allocation2 + $0x160] sm:$0xff] %v6037
          %6102 = vst [vmem:[#allocation2 + $0x168] sm:$0xff] %v6038
          %6103 = vst [vmem:[#allocation2 + $0x170] sm:$0xff] %v6039
          %6104 = vst [vmem:[#allocation2 + $0x178] sm:$0xff] %v6040
          %6105 = vst [vmem:[#allocation2 + $0x180] sm:$0xff] %v6041
          %6106 = vst [vmem:[#allocation2 + $0x188] sm:$0xff] %v6042
          %6107 = vst [vmem:[#allocation2 + $0x190] sm:$0xff] %v6043
          %6108 = vst [vmem:[#allocation2 + $0x198] sm:$0xff] %v6044
          %6109 = vst [vmem:[#allocation2 + $0x1a0] sm:$0xff] %v6045
          %6110 = vst [vmem:[#allocation2 + $0x1a8] sm:$0xff] %v6046
          %6111 = vst [vmem:[#allocation2 + $0x1b0] sm:$0xff] %v6047
          %6112 = vst [vmem:[#allocation2 + $0x1b8] sm:$0xff] %v6048
          %6113 = vst [vmem:[#allocation2 + $0x1c0] sm:$0xff] %v6049
          %6114 = vst [vmem:[#allocation2 + $0x1c8] sm:$0xff] %v6050
          %6115 = vst [vmem:[#allocation2 + $0x1d0] sm:$0xff] %v6051
          %6116 = vst [vmem:[#allocation2 + $0x1d8] sm:$0xff] %v6052
          %6117 = vst [vmem:[#allocation2 + $0x1e0] sm:$0xff] %v6053
          %6118 = vst [vmem:[#allocation2 + $0x1e8] sm:$0xff] %v6054
          %6119 = vst [vmem:[#allocation2 + $0x1f0] sm:$0xff] %v6055
          %6120 = vst [vmem:[#allocation2 + $0x1f8] sm:$0xff] %v6056
        $region78: #{tpu_custom_call.1} parent=65 // pred_fallthru
          _
        %p6121 = scmp.eq.s32.totalorder %s26, 1
        // Predicated region
        $region79: #{tpu_custom_call.1} parent=65 // pred_check
          %p6122 = pneg %p6121
        $region80: #{tpu_custom_call.1} parent=65 // pred_check_branch
          %6124 = sbr.rel (%p6122) target = $region82
        $region81: #{tpu_custom_call.1} parent=65 // pred_region
          %v6125 = vld [vmem:[#allocation2] sm:$0xff]
          %v6126 = vld [vmem:[#allocation2 + $0x8] sm:$0xff]
          %v6127 = vld [vmem:[#allocation2 + $0x10] sm:$0xff]
          %v6128 = vld [vmem:[#allocation2 + $0x18] sm:$0xff]
          %v6129 = vld [vmem:[#allocation2 + $0x20] sm:$0xff]
          %v6130 = vld [vmem:[#allocation2 + $0x28] sm:$0xff]
          %v6131 = vld [vmem:[#allocation2 + $0x30] sm:$0xff]
          %v6132 = vld [vmem:[#allocation2 + $0x38] sm:$0xff]
          %v6133 = vld [vmem:[#allocation2 + $0x40] sm:$0xff]
          %v6134 = vld [vmem:[#allocation2 + $0x48] sm:$0xff]
          %v6135 = vld [vmem:[#allocation2 + $0x50] sm:$0xff]
          %v6136 = vld [vmem:[#allocation2 + $0x58] sm:$0xff]
          %v6137 = vld [vmem:[#allocation2 + $0x60] sm:$0xff]
          %v6138 = vld [vmem:[#allocation2 + $0x68] sm:$0xff]
          %v6139 = vld [vmem:[#allocation2 + $0x70] sm:$0xff]
          %v6140 = vld [vmem:[#allocation2 + $0x78] sm:$0xff]
          %v6141 = vld [vmem:[#allocation2 + $0x80] sm:$0xff]
          %v6142 = vld [vmem:[#allocation2 + $0x88] sm:$0xff]
          %v6143 = vld [vmem:[#allocation2 + $0x90] sm:$0xff]
          %v6144 = vld [vmem:[#allocation2 + $0x98] sm:$0xff]
          %v6145 = vld [vmem:[#allocation2 + $0xa0] sm:$0xff]
          %v6146 = vld [vmem:[#allocation2 + $0xa8] sm:$0xff]
          %v6147 = vld [vmem:[#allocation2 + $0xb0] sm:$0xff]
          %v6148 = vld [vmem:[#allocation2 + $0xb8] sm:$0xff]
          %v6149 = vld [vmem:[#allocation2 + $0xc0] sm:$0xff]
          %v6150 = vld [vmem:[#allocation2 + $0xc8] sm:$0xff]
          %v6151 = vld [vmem:[#allocation2 + $0xd0] sm:$0xff]
          %v6152 = vld [vmem:[#allocation2 + $0xd8] sm:$0xff]
          %v6153 = vld [vmem:[#allocation2 + $0xe0] sm:$0xff]
          %v6154 = vld [vmem:[#allocation2 + $0xe8] sm:$0xff]
          %v6155 = vld [vmem:[#allocation2 + $0xf0] sm:$0xff]
          %v6156 = vld [vmem:[#allocation2 + $0xf8] sm:$0xff]
          %v6157 = vld [vmem:[#allocation2 + $0x100] sm:$0xff]
          %v6158 = vld [vmem:[#allocation2 + $0x108] sm:$0xff]
          %v6159 = vld [vmem:[#allocation2 + $0x110] sm:$0xff]
          %v6160 = vld [vmem:[#allocation2 + $0x118] sm:$0xff]
          %v6161 = vld [vmem:[#allocation2 + $0x120] sm:$0xff]
          %v6162 = vld [vmem:[#allocation2 + $0x128] sm:$0xff]
          %v6163 = vld [vmem:[#allocation2 + $0x130] sm:$0xff]
          %v6164 = vld [vmem:[#allocation2 + $0x138] sm:$0xff]
          %v6165 = vld [vmem:[#allocation2 + $0x140] sm:$0xff]
          %v6166 = vld [vmem:[#allocation2 + $0x148] sm:$0xff]
          %v6167 = vld [vmem:[#allocation2 + $0x150] sm:$0xff]
          %v6168 = vld [vmem:[#allocation2 + $0x158] sm:$0xff]
          %v6169 = vld [vmem:[#allocation2 + $0x160] sm:$0xff]
          %v6170 = vld [vmem:[#allocation2 + $0x168] sm:$0xff]
          %v6171 = vld [vmem:[#allocation2 + $0x170] sm:$0xff]
          %v6172 = vld [vmem:[#allocation2 + $0x178] sm:$0xff]
          %v6173 = vld [vmem:[#allocation2 + $0x180] sm:$0xff]
          %v6174 = vld [vmem:[#allocation2 + $0x188] sm:$0xff]
          %v6175 = vld [vmem:[#allocation2 + $0x190] sm:$0xff]
          %v6176 = vld [vmem:[#allocation2 + $0x198] sm:$0xff]
          %v6177 = vld [vmem:[#allocation2 + $0x1a0] sm:$0xff]
          %v6178 = vld [vmem:[#allocation2 + $0x1a8] sm:$0xff]
          %v6179 = vld [vmem:[#allocation2 + $0x1b0] sm:$0xff]
          %v6180 = vld [vmem:[#allocation2 + $0x1b8] sm:$0xff]
          %v6181 = vld [vmem:[#allocation2 + $0x1c0] sm:$0xff]
          %v6182 = vld [vmem:[#allocation2 + $0x1c8] sm:$0xff]
          %v6183 = vld [vmem:[#allocation2 + $0x1d0] sm:$0xff]
          %v6184 = vld [vmem:[#allocation2 + $0x1d8] sm:$0xff]
          %v6185 = vld [vmem:[#allocation2 + $0x1e0] sm:$0xff]
          %v6186 = vld [vmem:[#allocation2 + $0x1e8] sm:$0xff]
          %v6187 = vld [vmem:[#allocation2 + $0x1f0] sm:$0xff]
          %v6188 = vld [vmem:[#allocation2 + $0x1f8] sm:$0xff]
          %vm6189 = vcmask 23552
          %6190 = vst.msk [vmem:[%s1033] sm:$0xff] %vm6189, %v6125
          %6191 = vst.msk [vmem:[%s1033 + $0x8] sm:$0xff] %vm6189, %v6126
          %6192 = vst.msk [vmem:[%s1033 + $0x10] sm:$0xff] %vm6189, %v6127
          %6193 = vst.msk [vmem:[%s1033 + $0x18] sm:$0xff] %vm6189, %v6128
          %6194 = vst.msk [vmem:[%s1033 + $0x20] sm:$0xff] %vm6189, %v6129
          %6195 = vst.msk [vmem:[%s1033 + $0x28] sm:$0xff] %vm6189, %v6130
          %6196 = vst.msk [vmem:[%s1033 + $0x30] sm:$0xff] %vm6189, %v6131
          %6197 = vst.msk [vmem:[%s1033 + $0x38] sm:$0xff] %vm6189, %v6132
          %6198 = vst.msk [vmem:[%s1033 + $0x40] sm:$0xff] %vm6189, %v6133
          %6199 = vst.msk [vmem:[%s1033 + $0x48] sm:$0xff] %vm6189, %v6134
          %6200 = vst.msk [vmem:[%s1033 + $0x50] sm:$0xff] %vm6189, %v6135
          %6201 = vst.msk [vmem:[%s1033 + $0x58] sm:$0xff] %vm6189, %v6136
          %6202 = vst.msk [vmem:[%s1033 + $0x60] sm:$0xff] %vm6189, %v6137
          %6203 = vst.msk [vmem:[%s1033 + $0x68] sm:$0xff] %vm6189, %v6138
          %6204 = vst.msk [vmem:[%s1033 + $0x70] sm:$0xff] %vm6189, %v6139
          %6205 = vst.msk [vmem:[%s1033 + $0x78] sm:$0xff] %vm6189, %v6140
          %6206 = vst.msk [vmem:[%s1033 + $0x80] sm:$0xff] %vm6189, %v6141
          %6207 = vst.msk [vmem:[%s1033 + $0x88] sm:$0xff] %vm6189, %v6142
          %6208 = vst.msk [vmem:[%s1033 + $0x90] sm:$0xff] %vm6189, %v6143
          %6209 = vst.msk [vmem:[%s1033 + $0x98] sm:$0xff] %vm6189, %v6144
          %6210 = vst.msk [vmem:[%s1033 + $0xa0] sm:$0xff] %vm6189, %v6145
          %6211 = vst.msk [vmem:[%s1033 + $0xa8] sm:$0xff] %vm6189, %v6146
          %6212 = vst.msk [vmem:[%s1033 + $0xb0] sm:$0xff] %vm6189, %v6147
          %6213 = vst.msk [vmem:[%s1033 + $0xb8] sm:$0xff] %vm6189, %v6148
          %6214 = vst.msk [vmem:[%s1033 + $0xc0] sm:$0xff] %vm6189, %v6149
          %6215 = vst.msk [vmem:[%s1033 + $0xc8] sm:$0xff] %vm6189, %v6150
          %6216 = vst.msk [vmem:[%s1033 + $0xd0] sm:$0xff] %vm6189, %v6151
          %6217 = vst.msk [vmem:[%s1033 + $0xd8] sm:$0xff] %vm6189, %v6152
          %6218 = vst.msk [vmem:[%s1033 + $0xe0] sm:$0xff] %vm6189, %v6153
          %6219 = vst.msk [vmem:[%s1033 + $0xe8] sm:$0xff] %vm6189, %v6154
          %6220 = vst.msk [vmem:[%s1033 + $0xf0] sm:$0xff] %vm6189, %v6155
          %6221 = vst.msk [vmem:[%s1033 + $0xf8] sm:$0xff] %vm6189, %v6156
          %6222 = vst.msk [vmem:[%s1033 + $0x100] sm:$0xff] %vm6189, %v6157
          %6223 = vst.msk [vmem:[%s1033 + $0x108] sm:$0xff] %vm6189, %v6158
          %6224 = vst.msk [vmem:[%s1033 + $0x110] sm:$0xff] %vm6189, %v6159
          %6225 = vst.msk [vmem:[%s1033 + $0x118] sm:$0xff] %vm6189, %v6160
          %6226 = vst.msk [vmem:[%s1033 + $0x120] sm:$0xff] %vm6189, %v6161
          %6227 = vst.msk [vmem:[%s1033 + $0x128] sm:$0xff] %vm6189, %v6162
          %6228 = vst.msk [vmem:[%s1033 + $0x130] sm:$0xff] %vm6189, %v6163
          %6229 = vst.msk [vmem:[%s1033 + $0x138] sm:$0xff] %vm6189, %v6164
          %6230 = vst.msk [vmem:[%s1033 + $0x140] sm:$0xff] %vm6189, %v6165
          %6231 = vst.msk [vmem:[%s1033 + $0x148] sm:$0xff] %vm6189, %v6166
          %6232 = vst.msk [vmem:[%s1033 + $0x150] sm:$0xff] %vm6189, %v6167
          %6233 = vst.msk [vmem:[%s1033 + $0x158] sm:$0xff] %vm6189, %v6168
          %6234 = vst.msk [vmem:[%s1033 + $0x160] sm:$0xff] %vm6189, %v6169
          %6235 = vst.msk [vmem:[%s1033 + $0x168] sm:$0xff] %vm6189, %v6170
          %6236 = vst.msk [vmem:[%s1033 + $0x170] sm:$0xff] %vm6189, %v6171
          %6237 = vst.msk [vmem:[%s1033 + $0x178] sm:$0xff] %vm6189, %v6172
          %6238 = vst.msk [vmem:[%s1033 + $0x180] sm:$0xff] %vm6189, %v6173
          %6239 = vst.msk [vmem:[%s1033 + $0x188] sm:$0xff] %vm6189, %v6174
          %6240 = vst.msk [vmem:[%s1033 + $0x190] sm:$0xff] %vm6189, %v6175
          %6241 = vst.msk [vmem:[%s1033 + $0x198] sm:$0xff] %vm6189, %v6176
          %6242 = vst.msk [vmem:[%s1033 + $0x1a0] sm:$0xff] %vm6189, %v6177
          %6243 = vst.msk [vmem:[%s1033 + $0x1a8] sm:$0xff] %vm6189, %v6178
          %6244 = vst.msk [vmem:[%s1033 + $0x1b0] sm:$0xff] %vm6189, %v6179
          %6245 = vst.msk [vmem:[%s1033 + $0x1b8] sm:$0xff] %vm6189, %v6180
          %6246 = vst.msk [vmem:[%s1033 + $0x1c0] sm:$0xff] %vm6189, %v6181
          %6247 = vst.msk [vmem:[%s1033 + $0x1c8] sm:$0xff] %vm6189, %v6182
          %6248 = vst.msk [vmem:[%s1033 + $0x1d0] sm:$0xff] %vm6189, %v6183
          %6249 = vst.msk [vmem:[%s1033 + $0x1d8] sm:$0xff] %vm6189, %v6184
          %6250 = vst.msk [vmem:[%s1033 + $0x1e0] sm:$0xff] %vm6189, %v6185
          %6251 = vst.msk [vmem:[%s1033 + $0x1e8] sm:$0xff] %vm6189, %v6186
          %6252 = vst.msk [vmem:[%s1033 + $0x1f0] sm:$0xff] %vm6189, %v6187
          %6253 = vst.msk [vmem:[%s1033 + $0x1f8] sm:$0xff] %vm6189, %v6188
        $region82: #{tpu_custom_call.1} parent=65 // pred_fallthru
          _
        %s6254 = smul.u32 64, %s25
        %p6255 = scmp.lt.s32.totalorder %s6254, 511
        %s6256 = scalar_select %p6255, %s6254, 511
        %s6257 = smul.addr %s6256, 8
        %s6258 = scalar_lea.vmem %s4, %s6257
        // Predicated region
        $region83: #{tpu_custom_call.1} parent=65 // pred_check
          %p6259 = pneg %p129
        $region84: #{tpu_custom_call.1} parent=65 // pred_check_branch
          %6261 = sbr.rel (%p6259) target = $region86
        $region85: #{tpu_custom_call.1} parent=65 // pred_region
          %s6262 = smul.u32 64, %s25
        $region86: #{tpu_custom_call.1} parent=65 // pred_fallthru
          _
      $region66: #{tpu_custom_call.1} parent=5 // pred_fallthru
        _
      %p6263 = scmp.le.s32.totalorder 2, %s16
      // Predicated region
      $region87: #{tpu_custom_call.1} parent=5 // pred_check
        %p6264 = pneg %p6263
      $region88: #{tpu_custom_call.1} parent=5 // pred_check_branch
        %6266 = sbr.rel (%p6264) target = $region90
      $region89: #{tpu_custom_call.1} parent=5 // pred_region
        %s6267 = ssub.s32 %s16, 2
        // Predicated region
        $region91: #{tpu_custom_call.1} parent=89 // pred_check
          %p6268 = pneg %p135
        $region92: #{tpu_custom_call.1} parent=89 // pred_check_branch
          %6270 = sbr.rel (%p6268) target = $region94
        $region93: #{tpu_custom_call.1} parent=89 // pred_region
          %s6271 = smul.u32 64, %s27
          %p6272 = scmp.lt.s32.totalorder %s6271, 511
          %s6273 = scalar_select %p6272, %s6271, 511
          %s6274 = smul.addr %s6273, 8
          %s6275 = scalar_lea.vmem %s4, %s6274
        $region94: #{tpu_custom_call.1} parent=89 // pred_fallthru
          _
      $region90: #{tpu_custom_call.1} parent=5 // pred_fallthru
        _
    $region6: #{tpu_custom_call.1} parent=1 // loop_footer
      %s20 = sadd.s32 1, %s16
    $region7: #{tpu_custom_call.1} parent=1 // loop_footer_branch
      %15 = sbr.rel target = $region3
    $region8: #{tpu_custom_call.1} parent=1 // loop_exit
      _

</llo_original>
